<compile_context>
chip_gen: v6e
topology: v6e:2x2x1
jax: 0.10.0
libtpu: 0.0.40
codegen_flags: <defaults>
</compile_context>

<pallas_src>
import jax
import jax.numpy as jnp
from jax.experimental import pallas as pl
from jax.experimental.pallas import tpu as pltpu


def ntn_kernel(x_ref, y_ref, w3_ref, vx_ref, vy_ref, vb_ref, u_ref, o_ref):
    Bt, M, D = x_ref.shape
    N = y_ref.shape[1]
    r = vx_ref.shape[1]

    x = x_ref[...]                                   # (Bt, M, D) f32
    y = y_ref[...]                                   # (Bt, N, D) f32
    xf = x.reshape(Bt * M, D)                        # sublane-stack of the Bt pairs
    yf = y.reshape(Bt * N, D)

    # Shared-weight feed-forward term for all Bt pairs in one MXU issue,
    # V bias hoisted onto the x term.
    ffx = jnp.dot(xf, vx_ref[...], preferred_element_type=jnp.float32) + vb_ref[...]   # (Bt*M, r)

    xp2_rows = []
    yp2_rows = []
    # Per-pair bilinear + softmax part.  Bt and r are small & static; keep the
    # Python unroll (switch to lax.fori_loop(..., unroll=True) if they grow).
    for b in range(Bt):
        x_b = xf[b * M:(b + 1) * M, :]               # (M, D)  sublane slice (aligned)
        y_b = y[b]                                   # (N, D)
        ffx_b = ffx[b * M:(b + 1) * M, :]            # (M, r)  sublane slice (aligned)

        # wyT_b[k*D + d, j] = sum_e W[k, d, e] * y_b[j, e]   -> (r*D, N)
        # One MXU issue with M-dim = r*D rows; per-k slices below are sublane
        # slices (8-aligned), so the inner loop does no lane relayouts.
        wyT_b = jax.lax.dot_general(w3_ref[...], y_b, (((1,), (1,)), ((), ())),
                                    preferred_element_type=jnp.float32)    # (r*D, N)
        # ffyT_b[k, j] = (y_b @ Vy)[j, k] produced directly in (r, N) layout,
        # so row k broadcasts over sublanes of `pre` (no transpose needed).
        ffyT_b = jax.lax.dot_general(vy_ref[...], y_b, (((0,), (1,)), ((), ())),
                                     preferred_element_type=jnp.float32)   # (r, N)

        # score[i, j] = u^T tanh( x_i^T W_k y_j + V[x_i ; y_j] + b )
        s = jnp.zeros((M, N), jnp.float32)
        for k in range(r):
            bil = jnp.dot(x_b, wyT_b[k * D:(k + 1) * D, :],
                          preferred_element_type=jnp.float32)               # (M, N)
            pre = bil + ffx_b[:, k:k + 1] + ffyT_b[k:k + 1, :]
            if r != 1:
                s = s + u_ref[k] * jnp.tanh(pre)
            else:
                # PyTorch module skips tanh and u when r == 1.
                s = s + pre

        # One shared exp for both softmaxes (any constant shift is exact).
        e = jnp.exp(s - jnp.max(s))                                         # (M, N)
        col_of_a1 = jnp.sum(e / jnp.sum(e, axis=1, keepdims=True),
                            axis=0, keepdims=True)                          # (1, N)
        row_of_a2 = jnp.sum(e / jnp.sum(e, axis=0, keepdims=True),
                            axis=1, keepdims=True)                          # (M, 1)

        # x'_2 = colsum(A1) @ y / M ;  y'_2 = sum_i rowsum(A2)_i * x_i / N
        xp2_rows.append(jnp.dot(col_of_a1, y_b,
                                preferred_element_type=jnp.float32))        # (1, D)
        yp2_rows.append(jnp.sum(row_of_a2 * x_b, axis=0, keepdims=True))    # (1, D)

    inv_m = 1.0 / M
    inv_n = 1.0 / N
    # Rows of A1 / columns of A2 sum to 1 exactly -> these terms are plain means.
    xp1 = jnp.sum(x, axis=1) * inv_m                                        # (Bt, D)
    yp1 = jnp.sum(y, axis=1) * inv_n                                        # (Bt, D)
    xp2 = jnp.concatenate(xp2_rows, axis=0) * inv_m                         # (Bt, D)
    yp2 = jnp.concatenate(yp2_rows, axis=0) * inv_n                         # (Bt, D)

    # Single unmasked lane-dense store of the whole (Bt, 4D) slab.
    o_ref[...] = jnp.concatenate([xp1, xp2, yp1, yp2], axis=1).astype(o_ref.dtype)


def neural_tensor_network(x, y, W, Vx, Vy, vb, u, *, block_pairs=8):
    """Batched NTN: x (B, M, D), y (B, N, D); parameters shared across pairs.

    Returns (B, 4*D) = [x_prime (2D) ; y_prime (2D)] per pair.
    """
    B, M, D = x.shape
    N = y.shape[1]
    r = W.shape[0]
    Bt = min(block_pairs, B)
    assert B % Bt == 0, "batch must be divisible by the per-step pair tile"

    # Host-side stack of the r (D, D) bilinear slabs along SUBLANES:
    # W3[k*D + d, e] = W[k, d, e]  -> per-k slices inside the kernel are
    # sublane slices (no lane relayout).
    W3 = W.reshape(r * D, D).astype(jnp.float32)
    vb2 = vb.reshape(1, r).astype(jnp.float32)
    u1 = u.reshape(r).astype(jnp.float32)

    const2 = lambda g: (0, 0)
    out = pl.pallas_call(
        ntn_kernel,
        out_shape=jax.ShapeDtypeStruct((B, 4 * D), jnp.float32),
        grid=(B // Bt,),
        in_specs=[
            pl.BlockSpec((Bt, M, D), lambda g: (g, 0, 0)),        # x (Bt pairs / step)
            pl.BlockSpec((Bt, N, D), lambda g: (g, 0, 0)),        # y
            pl.BlockSpec((r * D, D), const2),                     # W3 (sublane-stacked)
            pl.BlockSpec((D, r), const2),                         # Vx
            pl.BlockSpec((D, r), const2),                         # Vy
            pl.BlockSpec((1, r), const2),                         # V bias (VMEM)
            pl.BlockSpec((r,), lambda g: (0,),
                         memory_space=pltpu.MemorySpace.SMEM),    # u (1-D scalars)
        ],
        out_specs=pl.BlockSpec((Bt, 4 * D), lambda g: (g, 0)),
        compiler_params=pltpu.CompilerParams(
            dimension_semantics=("parallel",)),                   # both TCs on v7x
    )(x, y, W3, Vx, Vy, vb2, u1)
    return out


def ntn_reference(x, y, W, Vx, Vy, vb, u):
    """Pure-JAX reference for a single (x, y) pair mirroring the PyTorch forward."""
    M, D = x.shape
    N = y.shape[0]
    r = W.shape[0]
    bil = jnp.einsum("md,kde,ne->mnk", x, W, y)
    ff = (x @ Vx)[:, None, :] + (y @ Vy)[None, :, :] + vb
    score = bil + ff
    if r != 1:
        score = jnp.tanh(score) @ u
    else:
        score = score[..., 0]
    a1 = jax.nn.softmax(score, axis=1)
    a2 = jax.nn.softmax(score, axis=0)
    xp = jnp.concatenate([a1.sum(1) @ x, a1.sum(0) @ y]) / M
    yp = jnp.concatenate([a2.sum(0) @ y, a2.sum(1) @ x]) / N
    return jnp.concatenate([xp, yp]).reshape(1, -1)


if __name__ == "__main__":
    B, M, N, D, r = 16, 8, 8, 32, 4
    key = jax.random.PRNGKey(0)
    kx, ky, kw, kvx, kvy, kvb, ku = jax.random.split(key, 7)

    x = jax.random.normal(kx, (B, M, D), jnp.float32)
    y = jax.random.normal(ky, (B, N, D), jnp.float32)
    W = 0.1 * jax.random.normal(kw, (r, D, D), jnp.float32)
    Vx = 0.1 * jax.random.normal(kvx, (D, r), jnp.float32)
    Vy = 0.1 * jax.random.normal(kvy, (D, r), jnp.float32)
    vb = 0.1 * jax.random.normal(kvb, (r,), jnp.float32)
    u = 0.1 * jax.random.normal(ku, (r,), jnp.float32)

    out = jax.block_until_ready(
        neural_tensor_network(x, y, W, Vx, Vy, vb, u, block_pairs=8))
    assert out.shape == (B, 4 * D), out.shape

    for b in range(B):
        ref = ntn_reference(x[b], y[b], W, Vx, Vy, vb, u)
        assert jnp.allclose(out[b], ref[0], rtol=2e-5, atol=2e-5), (b, out[b], ref)
    print("KERNEL_OK")
</pallas_src>

<mosaic_0001>
module attributes {stable_mosaic.version = 11 : i64} {
  func.func @ntn_kernel(%arg0: i32, %arg1: memref<8x8x32xf32, #tpu.memory_space<vmem>>, %arg2: memref<8x8x32xf32, #tpu.memory_space<vmem>>, %arg3: memref<128x32xf32, #tpu.memory_space<vmem>>, %arg4: memref<32x4xf32, #tpu.memory_space<vmem>>, %arg5: memref<32x4xf32, #tpu.memory_space<vmem>>, %arg6: memref<1x4xf32, #tpu.memory_space<vmem>>, %arg7: memref<4xf32, #tpu.memory_space<smem>>, %arg8: memref<8x128xf32, #tpu.memory_space<vmem>>) attributes {dimension_semantics = [#tpu.dimension_semantics<parallel>], iteration_bounds = array<i64: 2>, scalar_prefetch = 0 : i64, scratch_operands = 0 : i64, tpu.core_type = #tpu.core_type<tc>, window_params = [{transform_indices = @transform_0, window_bounds = array<i64: 8, 8, 32>}, {transform_indices = @transform_1, window_bounds = array<i64: 8, 8, 32>}, {pipeline_mode = #tpu.pipeline_mode<synchronous>, transform_indices = @transform_2, window_bounds = array<i64: 128, 32>}, {pipeline_mode = #tpu.pipeline_mode<synchronous>, transform_indices = @transform_3, window_bounds = array<i64: 32, 4>}, {pipeline_mode = #tpu.pipeline_mode<synchronous>, transform_indices = @transform_4, window_bounds = array<i64: 32, 4>}, {pipeline_mode = #tpu.pipeline_mode<synchronous>, transform_indices = @transform_5, window_bounds = array<i64: 1, 4>}, {transform_indices = @transform_6, window_bounds = array<i64: 4>}, {transform_indices = @transform_7, window_bounds = array<i64: 8, 128>}]} {
    %c0 = arith.constant 0 : index
    %c0_0 = arith.constant 0 : index
    %c0_1 = arith.constant 0 : index
    %0 = vector.load %arg1[%c0, %c0_0, %c0_1] : memref<8x8x32xf32, #tpu.memory_space<vmem>>, vector<8x8x32xf32>
    %c0_2 = arith.constant 0 : index
    %c0_3 = arith.constant 0 : index
    %c0_4 = arith.constant 0 : index
    %1 = vector.load %arg2[%c0_2, %c0_3, %c0_4] : memref<8x8x32xf32, #tpu.memory_space<vmem>>, vector<8x8x32xf32>
    %2 = vector.shape_cast %0 : vector<8x8x32xf32> to vector<64x32xf32>
    %c0_5 = arith.constant 0 : index
    %c0_6 = arith.constant 0 : index
    %3 = vector.load %arg4[%c0_5, %c0_6] : memref<32x4xf32, #tpu.memory_space<vmem>>, vector<32x4xf32>
    %cst = arith.constant dense<0.000000e+00> : vector<64x4xf32>
    %4 = tpu.matmul %2, %3, %cst {dimension_numbers = #tpu.dot_dimension_numbers<[1], [0], [0], [1], [0, 0, 1, 1], [], []>} : vector<64x32xf32>, vector<32x4xf32>, vector<64x4xf32> -> vector<64x4xf32>
    %c0_7 = arith.constant 0 : index
    %c0_8 = arith.constant 0 : index
    %5 = vector.load %arg6[%c0_7, %c0_8] : memref<1x4xf32, #tpu.memory_space<vmem>>, vector<1x4xf32>
    %6 = vector.broadcast %5 : vector<1x4xf32> to vector<64x4xf32>
    %7 = arith.addf %4, %6 : vector<64x4xf32>
    %8 = vector.extract_strided_slice %2 {offsets = [0, 0], sizes = [8, 32], strides = [1, 1]} : vector<64x32xf32> to vector<8x32xf32>
    %9 = vector.extract_strided_slice %1 {offsets = [0, 0, 0], sizes = [1, 8, 32], strides = [1, 1, 1]} : vector<8x8x32xf32> to vector<1x8x32xf32>
    %10 = vector.shape_cast %9 : vector<1x8x32xf32> to vector<8x32xf32>
    %11 = vector.extract_strided_slice %7 {offsets = [0, 0], sizes = [8, 4], strides = [1, 1]} : vector<64x4xf32> to vector<8x4xf32>
    %c0_9 = arith.constant 0 : index
    %c0_10 = arith.constant 0 : index
    %12 = vector.load %arg3[%c0_9, %c0_10] : memref<128x32xf32, #tpu.memory_space<vmem>>, vector<128x32xf32>
    %cst_11 = arith.constant dense<0.000000e+00> : vector<128x8xf32>
    %13 = tpu.matmul %12, %10, %cst_11 {dimension_numbers = #tpu.dot_dimension_numbers<[1], [1], [0], [0], [0, 0, 1, 0], [], []>} : vector<128x32xf32>, vector<8x32xf32>, vector<128x8xf32> -> vector<128x8xf32>
    %c0_12 = arith.constant 0 : index
    %c0_13 = arith.constant 0 : index
    %14 = vector.load %arg5[%c0_12, %c0_13] : memref<32x4xf32, #tpu.memory_space<vmem>>, vector<32x4xf32>
    %cst_14 = arith.constant dense<0.000000e+00> : vector<4x8xf32>
    %15 = tpu.matmul %14, %10, %cst_14 {dimension_numbers = #tpu.dot_dimension_numbers<[0], [1], [1], [0], [0, 1, 1, 0], [], []>} : vector<32x4xf32>, vector<8x32xf32>, vector<4x8xf32> -> vector<4x8xf32>
    %cst_15 = arith.constant 0.000000e+00 : f32
    %16 = vector.broadcast %cst_15 : f32 to vector<8x8xf32>
    %17 = vector.extract_strided_slice %13 {offsets = [0, 0], sizes = [32, 8], strides = [1, 1]} : vector<128x8xf32> to vector<32x8xf32>
    %cst_16 = arith.constant dense<0.000000e+00> : vector<8x8xf32>
    %18 = tpu.matmul %8, %17, %cst_16 {dimension_numbers = #tpu.dot_dimension_numbers<[1], [0], [0], [1], [0, 0, 1, 1], [], []>} : vector<8x32xf32>, vector<32x8xf32>, vector<8x8xf32> -> vector<8x8xf32>
    %19 = vector.extract_strided_slice %11 {offsets = [0, 0], sizes = [8, 1], strides = [1, 1]} : vector<8x4xf32> to vector<8x1xf32>
    %20 = vector.broadcast %19 : vector<8x1xf32> to vector<8x8xf32>
    %21 = arith.addf %18, %20 : vector<8x8xf32>
    %22 = vector.extract_strided_slice %15 {offsets = [0, 0], sizes = [1, 8], strides = [1, 1]} : vector<4x8xf32> to vector<1x8xf32>
    %23 = vector.broadcast %22 : vector<1x8xf32> to vector<8x8xf32>
    %24 = arith.addf %21, %23 : vector<8x8xf32>
    %c0_17 = arith.constant 0 : index
    %25 = memref.load %arg7[%c0_17] : memref<4xf32, #tpu.memory_space<smem>>
    %26 = math.tanh %24 : vector<8x8xf32>
    %27 = vector.broadcast %25 : f32 to vector<8x8xf32>
    %28 = arith.mulf %27, %26 : vector<8x8xf32>
    %29 = arith.addf %16, %28 : vector<8x8xf32>
    %30 = vector.extract_strided_slice %13 {offsets = [32, 0], sizes = [32, 8], strides = [1, 1]} : vector<128x8xf32> to vector<32x8xf32>
    %cst_18 = arith.constant dense<0.000000e+00> : vector<8x8xf32>
    %31 = tpu.matmul %8, %30, %cst_18 {dimension_numbers = #tpu.dot_dimension_numbers<[1], [0], [0], [1], [0, 0, 1, 1], [], []>} : vector<8x32xf32>, vector<32x8xf32>, vector<8x8xf32> -> vector<8x8xf32>
    %32 = vector.extract_strided_slice %11 {offsets = [0, 1], sizes = [8, 1], strides = [1, 1]} : vector<8x4xf32> to vector<8x1xf32>
    %33 = vector.broadcast %32 : vector<8x1xf32> to vector<8x8xf32>
    %34 = arith.addf %31, %33 : vector<8x8xf32>
    %35 = vector.extract_strided_slice %15 {offsets = [1, 0], sizes = [1, 8], strides = [1, 1]} : vector<4x8xf32> to vector<1x8xf32>
    %36 = vector.broadcast %35 : vector<1x8xf32> to vector<8x8xf32>
    %37 = arith.addf %34, %36 : vector<8x8xf32>
    %c1 = arith.constant 1 : index
    %38 = memref.load %arg7[%c1] : memref<4xf32, #tpu.memory_space<smem>>
    %39 = math.tanh %37 : vector<8x8xf32>
    %40 = vector.broadcast %38 : f32 to vector<8x8xf32>
    %41 = arith.mulf %40, %39 : vector<8x8xf32>
    %42 = arith.addf %29, %41 : vector<8x8xf32>
    %43 = vector.extract_strided_slice %13 {offsets = [64, 0], sizes = [32, 8], strides = [1, 1]} : vector<128x8xf32> to vector<32x8xf32>
    %cst_19 = arith.constant dense<0.000000e+00> : vector<8x8xf32>
    %44 = tpu.matmul %8, %43, %cst_19 {dimension_numbers = #tpu.dot_dimension_numbers<[1], [0], [0], [1], [0, 0, 1, 1], [], []>} : vector<8x32xf32>, vector<32x8xf32>, vector<8x8xf32> -> vector<8x8xf32>
    %45 = vector.extract_strided_slice %11 {offsets = [0, 2], sizes = [8, 1], strides = [1, 1]} : vector<8x4xf32> to vector<8x1xf32>
    %46 = vector.broadcast %45 : vector<8x1xf32> to vector<8x8xf32>
    %47 = arith.addf %44, %46 : vector<8x8xf32>
    %48 = vector.extract_strided_slice %15 {offsets = [2, 0], sizes = [1, 8], strides = [1, 1]} : vector<4x8xf32> to vector<1x8xf32>
    %49 = vector.broadcast %48 : vector<1x8xf32> to vector<8x8xf32>
    %50 = arith.addf %47, %49 : vector<8x8xf32>
    %c2 = arith.constant 2 : index
    %51 = memref.load %arg7[%c2] : memref<4xf32, #tpu.memory_space<smem>>
    %52 = math.tanh %50 : vector<8x8xf32>
    %53 = vector.broadcast %51 : f32 to vector<8x8xf32>
    %54 = arith.mulf %53, %52 : vector<8x8xf32>
    %55 = arith.addf %42, %54 : vector<8x8xf32>
    %56 = vector.extract_strided_slice %13 {offsets = [96, 0], sizes = [32, 8], strides = [1, 1]} : vector<128x8xf32> to vector<32x8xf32>
    %cst_20 = arith.constant dense<0.000000e+00> : vector<8x8xf32>
    %57 = tpu.matmul %8, %56, %cst_20 {dimension_numbers = #tpu.dot_dimension_numbers<[1], [0], [0], [1], [0, 0, 1, 1], [], []>} : vector<8x32xf32>, vector<32x8xf32>, vector<8x8xf32> -> vector<8x8xf32>
    %58 = vector.extract_strided_slice %11 {offsets = [0, 3], sizes = [8, 1], strides = [1, 1]} : vector<8x4xf32> to vector<8x1xf32>
    %59 = vector.broadcast %58 : vector<8x1xf32> to vector<8x8xf32>
    %60 = arith.addf %57, %59 : vector<8x8xf32>
    %61 = vector.extract_strided_slice %15 {offsets = [3, 0], sizes = [1, 8], strides = [1, 1]} : vector<4x8xf32> to vector<1x8xf32>
    %62 = vector.broadcast %61 : vector<1x8xf32> to vector<8x8xf32>
    %63 = arith.addf %60, %62 : vector<8x8xf32>
    %c3 = arith.constant 3 : index
    %64 = memref.load %arg7[%c3] : memref<4xf32, #tpu.memory_space<smem>>
    %65 = math.tanh %63 : vector<8x8xf32>
    %66 = vector.broadcast %64 : f32 to vector<8x8xf32>
    %67 = arith.mulf %66, %65 : vector<8x8xf32>
    %68 = arith.addf %55, %67 : vector<8x8xf32>
    %69 = vector.shape_cast %68 : vector<8x8xf32> to vector<1x8x8xf32>
    %cst_21 = arith.constant dense<0xFF800000> : vector<1xf32>
    %70 = vector.multi_reduction <maximumf>, %69, %cst_21 [1, 2] : vector<1x8x8xf32> to vector<1xf32>
    %71 = vector.shape_cast %70 : vector<1xf32> to vector<1x1x1xf32>
    %72 = vector.extract %71[0, 0, 0] : f32 from vector<1x1x1xf32>
    %73 = vector.broadcast %72 : f32 to vector<8x8xf32>
    %74 = arith.subf %68, %73 : vector<8x8xf32>
    %75 = math.exp %74 : vector<8x8xf32>
    %cst_22 = arith.constant dense<0.000000e+00> : vector<8xf32>
    %76 = vector.multi_reduction <add>, %75, %cst_22 [1] : vector<8x8xf32> to vector<8xf32>
    %77 = vector.shape_cast %76 : vector<8xf32> to vector<8x1xf32>
    %78 = vector.broadcast %77 : vector<8x1xf32> to vector<8x8xf32>
    %79 = arith.divf %75, %78 : vector<8x8xf32>
    %cst_23 = arith.constant dense<0.000000e+00> : vector<8xf32>
    %80 = vector.multi_reduction <add>, %79, %cst_23 [0] : vector<8x8xf32> to vector<8xf32>
    %81 = vector.shape_cast %80 : vector<8xf32> to vector<1x8xf32>
    %cst_24 = arith.constant dense<0.000000e+00> : vector<8xf32>
    %82 = vector.multi_reduction <add>, %75, %cst_24 [0] : vector<8x8xf32> to vector<8xf32>
    %83 = vector.shape_cast %82 : vector<8xf32> to vector<1x8xf32>
    %84 = vector.broadcast %83 : vector<1x8xf32> to vector<8x8xf32>
    %85 = arith.divf %75, %84 : vector<8x8xf32>
    %cst_25 = arith.constant dense<0.000000e+00> : vector<8xf32>
    %86 = vector.multi_reduction <add>, %85, %cst_25 [1] : vector<8x8xf32> to vector<8xf32>
    %87 = vector.shape_cast %86 : vector<8xf32> to vector<8x1xf32>
    %cst_26 = arith.constant dense<0.000000e+00> : vector<1x32xf32>
    %88 = tpu.matmul %81, %10, %cst_26 {dimension_numbers = #tpu.dot_dimension_numbers<[1], [0], [0], [1], [0, 0, 1, 1], [], []>} : vector<1x8xf32>, vector<8x32xf32>, vector<1x32xf32> -> vector<1x32xf32>
    %89 = vector.broadcast %87 : vector<8x1xf32> to vector<8x32xf32>
    %90 = arith.mulf %89, %8 : vector<8x32xf32>
    %cst_27 = arith.constant dense<0.000000e+00> : vector<32xf32>
    %91 = vector.multi_reduction <add>, %90, %cst_27 [0] : vector<8x32xf32> to vector<32xf32>
    %92 = vector.shape_cast %91 : vector<32xf32> to vector<1x32xf32>
    %93 = vector.extract_strided_slice %2 {offsets = [8, 0], sizes = [8, 32], strides = [1, 1]} : vector<64x32xf32> to vector<8x32xf32>
    %94 = vector.extract_strided_slice %1 {offsets = [1, 0, 0], sizes = [1, 8, 32], strides = [1, 1, 1]} : vector<8x8x32xf32> to vector<1x8x32xf32>
    %95 = vector.shape_cast %94 : vector<1x8x32xf32> to vector<8x32xf32>
    %96 = vector.extract_strided_slice %7 {offsets = [8, 0], sizes = [8, 4], strides = [1, 1]} : vector<64x4xf32> to vector<8x4xf32>
    %c0_28 = arith.constant 0 : index
    %c0_29 = arith.constant 0 : index
    %97 = vector.load %arg3[%c0_28, %c0_29] : memref<128x32xf32, #tpu.memory_space<vmem>>, vector<128x32xf32>
    %cst_30 = arith.constant dense<0.000000e+00> : vector<128x8xf32>
    %98 = tpu.matmul %97, %95, %cst_30 {dimension_numbers = #tpu.dot_dimension_numbers<[1], [1], [0], [0], [0, 0, 1, 0], [], []>} : vector<128x32xf32>, vector<8x32xf32>, vector<128x8xf32> -> vector<128x8xf32>
    %c0_31 = arith.constant 0 : index
    %c0_32 = arith.constant 0 : index
    %99 = vector.load %arg5[%c0_31, %c0_32] : memref<32x4xf32, #tpu.memory_space<vmem>>, vector<32x4xf32>
    %cst_33 = arith.constant dense<0.000000e+00> : vector<4x8xf32>
    %100 = tpu.matmul %99, %95, %cst_33 {dimension_numbers = #tpu.dot_dimension_numbers<[0], [1], [1], [0], [0, 1, 1, 0], [], []>} : vector<32x4xf32>, vector<8x32xf32>, vector<4x8xf32> -> vector<4x8xf32>
    %cst_34 = arith.constant 0.000000e+00 : f32
    %101 = vector.broadcast %cst_34 : f32 to vector<8x8xf32>
    %102 = vector.extract_strided_slice %98 {offsets = [0, 0], sizes = [32, 8], strides = [1, 1]} : vector<128x8xf32> to vector<32x8xf32>
    %cst_35 = arith.constant dense<0.000000e+00> : vector<8x8xf32>
    %103 = tpu.matmul %93, %102, %cst_35 {dimension_numbers = #tpu.dot_dimension_numbers<[1], [0], [0], [1], [0, 0, 1, 1], [], []>} : vector<8x32xf32>, vector<32x8xf32>, vector<8x8xf32> -> vector<8x8xf32>
    %104 = vector.extract_strided_slice %96 {offsets = [0, 0], sizes = [8, 1], strides = [1, 1]} : vector<8x4xf32> to vector<8x1xf32>
    %105 = vector.broadcast %104 : vector<8x1xf32> to vector<8x8xf32>
    %106 = arith.addf %103, %105 : vector<8x8xf32>
    %107 = vector.extract_strided_slice %100 {offsets = [0, 0], sizes = [1, 8], strides = [1, 1]} : vector<4x8xf32> to vector<1x8xf32>
    %108 = vector.broadcast %107 : vector<1x8xf32> to vector<8x8xf32>
    %109 = arith.addf %106, %108 : vector<8x8xf32>
    %c0_36 = arith.constant 0 : index
    %110 = memref.load %arg7[%c0_36] : memref<4xf32, #tpu.memory_space<smem>>
    %111 = math.tanh %109 : vector<8x8xf32>
    %112 = vector.broadcast %110 : f32 to vector<8x8xf32>
    %113 = arith.mulf %112, %111 : vector<8x8xf32>
    %114 = arith.addf %101, %113 : vector<8x8xf32>
    %115 = vector.extract_strided_slice %98 {offsets = [32, 0], sizes = [32, 8], strides = [1, 1]} : vector<128x8xf32> to vector<32x8xf32>
    %cst_37 = arith.constant dense<0.000000e+00> : vector<8x8xf32>
    %116 = tpu.matmul %93, %115, %cst_37 {dimension_numbers = #tpu.dot_dimension_numbers<[1], [0], [0], [1], [0, 0, 1, 1], [], []>} : vector<8x32xf32>, vector<32x8xf32>, vector<8x8xf32> -> vector<8x8xf32>
    %117 = vector.extract_strided_slice %96 {offsets = [0, 1], sizes = [8, 1], strides = [1, 1]} : vector<8x4xf32> to vector<8x1xf32>
    %118 = vector.broadcast %117 : vector<8x1xf32> to vector<8x8xf32>
    %119 = arith.addf %116, %118 : vector<8x8xf32>
    %120 = vector.extract_strided_slice %100 {offsets = [1, 0], sizes = [1, 8], strides = [1, 1]} : vector<4x8xf32> to vector<1x8xf32>
    %121 = vector.broadcast %120 : vector<1x8xf32> to vector<8x8xf32>
    %122 = arith.addf %119, %121 : vector<8x8xf32>
    %c1_38 = arith.constant 1 : index
    %123 = memref.load %arg7[%c1_38] : memref<4xf32, #tpu.memory_space<smem>>
    %124 = math.tanh %122 : vector<8x8xf32>
    %125 = vector.broadcast %123 : f32 to vector<8x8xf32>
    %126 = arith.mulf %125, %124 : vector<8x8xf32>
    %127 = arith.addf %114, %126 : vector<8x8xf32>
    %128 = vector.extract_strided_slice %98 {offsets = [64, 0], sizes = [32, 8], strides = [1, 1]} : vector<128x8xf32> to vector<32x8xf32>
    %cst_39 = arith.constant dense<0.000000e+00> : vector<8x8xf32>
    %129 = tpu.matmul %93, %128, %cst_39 {dimension_numbers = #tpu.dot_dimension_numbers<[1], [0], [0], [1], [0, 0, 1, 1], [], []>} : vector<8x32xf32>, vector<32x8xf32>, vector<8x8xf32> -> vector<8x8xf32>
    %130 = vector.extract_strided_slice %96 {offsets = [0, 2], sizes = [8, 1], strides = [1, 1]} : vector<8x4xf32> to vector<8x1xf32>
    %131 = vector.broadcast %130 : vector<8x1xf32> to vector<8x8xf32>
    %132 = arith.addf %129, %131 : vector<8x8xf32>
    %133 = vector.extract_strided_slice %100 {offsets = [2, 0], sizes = [1, 8], strides = [1, 1]} : vector<4x8xf32> to vector<1x8xf32>
    %134 = vector.broadcast %133 : vector<1x8xf32> to vector<8x8xf32>
    %135 = arith.addf %132, %134 : vector<8x8xf32>
    %c2_40 = arith.constant 2 : index
    %136 = memref.load %arg7[%c2_40] : memref<4xf32, #tpu.memory_space<smem>>
    %137 = math.tanh %135 : vector<8x8xf32>
    %138 = vector.broadcast %136 : f32 to vector<8x8xf32>
    %139 = arith.mulf %138, %137 : vector<8x8xf32>
    %140 = arith.addf %127, %139 : vector<8x8xf32>
    %141 = vector.extract_strided_slice %98 {offsets = [96, 0], sizes = [32, 8], strides = [1, 1]} : vector<128x8xf32> to vector<32x8xf32>
    %cst_41 = arith.constant dense<0.000000e+00> : vector<8x8xf32>
    %142 = tpu.matmul %93, %141, %cst_41 {dimension_numbers = #tpu.dot_dimension_numbers<[1], [0], [0], [1], [0, 0, 1, 1], [], []>} : vector<8x32xf32>, vector<32x8xf32>, vector<8x8xf32> -> vector<8x8xf32>
    %143 = vector.extract_strided_slice %96 {offsets = [0, 3], sizes = [8, 1], strides = [1, 1]} : vector<8x4xf32> to vector<8x1xf32>
    %144 = vector.broadcast %143 : vector<8x1xf32> to vector<8x8xf32>
    %145 = arith.addf %142, %144 : vector<8x8xf32>
    %146 = vector.extract_strided_slice %100 {offsets = [3, 0], sizes = [1, 8], strides = [1, 1]} : vector<4x8xf32> to vector<1x8xf32>
    %147 = vector.broadcast %146 : vector<1x8xf32> to vector<8x8xf32>
    %148 = arith.addf %145, %147 : vector<8x8xf32>
    %c3_42 = arith.constant 3 : index
    %149 = memref.load %arg7[%c3_42] : memref<4xf32, #tpu.memory_space<smem>>
    %150 = math.tanh %148 : vector<8x8xf32>
    %151 = vector.broadcast %149 : f32 to vector<8x8xf32>
    %152 = arith.mulf %151, %150 : vector<8x8xf32>
    %153 = arith.addf %140, %152 : vector<8x8xf32>
    %154 = vector.shape_cast %153 : vector<8x8xf32> to vector<1x8x8xf32>
    %cst_43 = arith.constant dense<0xFF800000> : vector<1xf32>
    %155 = vector.multi_reduction <maximumf>, %154, %cst_43 [1, 2] : vector<1x8x8xf32> to vector<1xf32>
    %156 = vector.shape_cast %155 : vector<1xf32> to vector<1x1x1xf32>
    %157 = vector.extract %156[0, 0, 0] : f32 from vector<1x1x1xf32>
    %158 = vector.broadcast %157 : f32 to vector<8x8xf32>
    %159 = arith.subf %153, %158 : vector<8x8xf32>
    %160 = math.exp %159 : vector<8x8xf32>
    %cst_44 = arith.constant dense<0.000000e+00> : vector<8xf32>
    %161 = vector.multi_reduction <add>, %160, %cst_44 [1] : vector<8x8xf32> to vector<8xf32>
    %162 = vector.shape_cast %161 : vector<8xf32> to vector<8x1xf32>
    %163 = vector.broadcast %162 : vector<8x1xf32> to vector<8x8xf32>
    %164 = arith.divf %160, %163 : vector<8x8xf32>
    %cst_45 = arith.constant dense<0.000000e+00> : vector<8xf32>
    %165 = vector.multi_reduction <add>, %164, %cst_45 [0] : vector<8x8xf32> to vector<8xf32>
    %166 = vector.shape_cast %165 : vector<8xf32> to vector<1x8xf32>
    %cst_46 = arith.constant dense<0.000000e+00> : vector<8xf32>
    %167 = vector.multi_reduction <add>, %160, %cst_46 [0] : vector<8x8xf32> to vector<8xf32>
    %168 = vector.shape_cast %167 : vector<8xf32> to vector<1x8xf32>
    %169 = vector.broadcast %168 : vector<1x8xf32> to vector<8x8xf32>
    %170 = arith.divf %160, %169 : vector<8x8xf32>
    %cst_47 = arith.constant dense<0.000000e+00> : vector<8xf32>
    %171 = vector.multi_reduction <add>, %170, %cst_47 [1] : vector<8x8xf32> to vector<8xf32>
    %172 = vector.shape_cast %171 : vector<8xf32> to vector<8x1xf32>
    %cst_48 = arith.constant dense<0.000000e+00> : vector<1x32xf32>
    %173 = tpu.matmul %166, %95, %cst_48 {dimension_numbers = #tpu.dot_dimension_numbers<[1], [0], [0], [1], [0, 0, 1, 1], [], []>} : vector<1x8xf32>, vector<8x32xf32>, vector<1x32xf32> -> vector<1x32xf32>
    %174 = vector.broadcast %172 : vector<8x1xf32> to vector<8x32xf32>
    %175 = arith.mulf %174, %93 : vector<8x32xf32>
    %cst_49 = arith.constant dense<0.000000e+00> : vector<32xf32>
    %176 = vector.multi_reduction <add>, %175, %cst_49 [0] : vector<8x32xf32> to vector<32xf32>
    %177 = vector.shape_cast %176 : vector<32xf32> to vector<1x32xf32>
    %178 = vector.extract_strided_slice %2 {offsets = [16, 0], sizes = [8, 32], strides = [1, 1]} : vector<64x32xf32> to vector<8x32xf32>
    %179 = vector.extract_strided_slice %1 {offsets = [2, 0, 0], sizes = [1, 8, 32], strides = [1, 1, 1]} : vector<8x8x32xf32> to vector<1x8x32xf32>
    %180 = vector.shape_cast %179 : vector<1x8x32xf32> to vector<8x32xf32>
    %181 = vector.extract_strided_slice %7 {offsets = [16, 0], sizes = [8, 4], strides = [1, 1]} : vector<64x4xf32> to vector<8x4xf32>
    %c0_50 = arith.constant 0 : index
    %c0_51 = arith.constant 0 : index
    %182 = vector.load %arg3[%c0_50, %c0_51] : memref<128x32xf32, #tpu.memory_space<vmem>>, vector<128x32xf32>
    %cst_52 = arith.constant dense<0.000000e+00> : vector<128x8xf32>
    %183 = tpu.matmul %182, %180, %cst_52 {dimension_numbers = #tpu.dot_dimension_numbers<[1], [1], [0], [0], [0, 0, 1, 0], [], []>} : vector<128x32xf32>, vector<8x32xf32>, vector<128x8xf32> -> vector<128x8xf32>
    %c0_53 = arith.constant 0 : index
    %c0_54 = arith.constant 0 : index
    %184 = vector.load %arg5[%c0_53, %c0_54] : memref<32x4xf32, #tpu.memory_space<vmem>>, vector<32x4xf32>
    %cst_55 = arith.constant dense<0.000000e+00> : vector<4x8xf32>
    %185 = tpu.matmul %184, %180, %cst_55 {dimension_numbers = #tpu.dot_dimension_numbers<[0], [1], [1], [0], [0, 1, 1, 0], [], []>} : vector<32x4xf32>, vector<8x32xf32>, vector<4x8xf32> -> vector<4x8xf32>
    %cst_56 = arith.constant 0.000000e+00 : f32
    %186 = vector.broadcast %cst_56 : f32 to vector<8x8xf32>
    %187 = vector.extract_strided_slice %183 {offsets = [0, 0], sizes = [32, 8], strides = [1, 1]} : vector<128x8xf32> to vector<32x8xf32>
    %cst_57 = arith.constant dense<0.000000e+00> : vector<8x8xf32>
    %188 = tpu.matmul %178, %187, %cst_57 {dimension_numbers = #tpu.dot_dimension_numbers<[1], [0], [0], [1], [0, 0, 1, 1], [], []>} : vector<8x32xf32>, vector<32x8xf32>, vector<8x8xf32> -> vector<8x8xf32>
    %189 = vector.extract_strided_slice %181 {offsets = [0, 0], sizes = [8, 1], strides = [1, 1]} : vector<8x4xf32> to vector<8x1xf32>
    %190 = vector.broadcast %189 : vector<8x1xf32> to vector<8x8xf32>
    %191 = arith.addf %188, %190 : vector<8x8xf32>
    %192 = vector.extract_strided_slice %185 {offsets = [0, 0], sizes = [1, 8], strides = [1, 1]} : vector<4x8xf32> to vector<1x8xf32>
    %193 = vector.broadcast %192 : vector<1x8xf32> to vector<8x8xf32>
    %194 = arith.addf %191, %193 : vector<8x8xf32>
    %c0_58 = arith.constant 0 : index
    %195 = memref.load %arg7[%c0_58] : memref<4xf32, #tpu.memory_space<smem>>
    %196 = math.tanh %194 : vector<8x8xf32>
    %197 = vector.broadcast %195 : f32 to vector<8x8xf32>
    %198 = arith.mulf %197, %196 : vector<8x8xf32>
    %199 = arith.addf %186, %198 : vector<8x8xf32>
    %200 = vector.extract_strided_slice %183 {offsets = [32, 0], sizes = [32, 8], strides = [1, 1]} : vector<128x8xf32> to vector<32x8xf32>
    %cst_59 = arith.constant dense<0.000000e+00> : vector<8x8xf32>
    %201 = tpu.matmul %178, %200, %cst_59 {dimension_numbers = #tpu.dot_dimension_numbers<[1], [0], [0], [1], [0, 0, 1, 1], [], []>} : vector<8x32xf32>, vector<32x8xf32>, vector<8x8xf32> -> vector<8x8xf32>
    %202 = vector.extract_strided_slice %181 {offsets = [0, 1], sizes = [8, 1], strides = [1, 1]} : vector<8x4xf32> to vector<8x1xf32>
    %203 = vector.broadcast %202 : vector<8x1xf32> to vector<8x8xf32>
    %204 = arith.addf %201, %203 : vector<8x8xf32>
    %205 = vector.extract_strided_slice %185 {offsets = [1, 0], sizes = [1, 8], strides = [1, 1]} : vector<4x8xf32> to vector<1x8xf32>
    %206 = vector.broadcast %205 : vector<1x8xf32> to vector<8x8xf32>
    %207 = arith.addf %204, %206 : vector<8x8xf32>
    %c1_60 = arith.constant 1 : index
    %208 = memref.load %arg7[%c1_60] : memref<4xf32, #tpu.memory_space<smem>>
    %209 = math.tanh %207 : vector<8x8xf32>
    %210 = vector.broadcast %208 : f32 to vector<8x8xf32>
    %211 = arith.mulf %210, %209 : vector<8x8xf32>
    %212 = arith.addf %199, %211 : vector<8x8xf32>
    %213 = vector.extract_strided_slice %183 {offsets = [64, 0], sizes = [32, 8], strides = [1, 1]} : vector<128x8xf32> to vector<32x8xf32>
    %cst_61 = arith.constant dense<0.000000e+00> : vector<8x8xf32>
    %214 = tpu.matmul %178, %213, %cst_61 {dimension_numbers = #tpu.dot_dimension_numbers<[1], [0], [0], [1], [0, 0, 1, 1], [], []>} : vector<8x32xf32>, vector<32x8xf32>, vector<8x8xf32> -> vector<8x8xf32>
    %215 = vector.extract_strided_slice %181 {offsets = [0, 2], sizes = [8, 1], strides = [1, 1]} : vector<8x4xf32> to vector<8x1xf32>
    %216 = vector.broadcast %215 : vector<8x1xf32> to vector<8x8xf32>
    %217 = arith.addf %214, %216 : vector<8x8xf32>
    %218 = vector.extract_strided_slice %185 {offsets = [2, 0], sizes = [1, 8], strides = [1, 1]} : vector<4x8xf32> to vector<1x8xf32>
    %219 = vector.broadcast %218 : vector<1x8xf32> to vector<8x8xf32>
    %220 = arith.addf %217, %219 : vector<8x8xf32>
    %c2_62 = arith.constant 2 : index
    %221 = memref.load %arg7[%c2_62] : memref<4xf32, #tpu.memory_space<smem>>
    %222 = math.tanh %220 : vector<8x8xf32>
    %223 = vector.broadcast %221 : f32 to vector<8x8xf32>
    %224 = arith.mulf %223, %222 : vector<8x8xf32>
    %225 = arith.addf %212, %224 : vector<8x8xf32>
    %226 = vector.extract_strided_slice %183 {offsets = [96, 0], sizes = [32, 8], strides = [1, 1]} : vector<128x8xf32> to vector<32x8xf32>
    %cst_63 = arith.constant dense<0.000000e+00> : vector<8x8xf32>
    %227 = tpu.matmul %178, %226, %cst_63 {dimension_numbers = #tpu.dot_dimension_numbers<[1], [0], [0], [1], [0, 0, 1, 1], [], []>} : vector<8x32xf32>, vector<32x8xf32>, vector<8x8xf32> -> vector<8x8xf32>
    %228 = vector.extract_strided_slice %181 {offsets = [0, 3], sizes = [8, 1], strides = [1, 1]} : vector<8x4xf32> to vector<8x1xf32>
    %229 = vector.broadcast %228 : vector<8x1xf32> to vector<8x8xf32>
    %230 = arith.addf %227, %229 : vector<8x8xf32>
    %231 = vector.extract_strided_slice %185 {offsets = [3, 0], sizes = [1, 8], strides = [1, 1]} : vector<4x8xf32> to vector<1x8xf32>
    %232 = vector.broadcast %231 : vector<1x8xf32> to vector<8x8xf32>
    %233 = arith.addf %230, %232 : vector<8x8xf32>
    %c3_64 = arith.constant 3 : index
    %234 = memref.load %arg7[%c3_64] : memref<4xf32, #tpu.memory_space<smem>>
    %235 = math.tanh %233 : vector<8x8xf32>
    %236 = vector.broadcast %234 : f32 to vector<8x8xf32>
    %237 = arith.mulf %236, %235 : vector<8x8xf32>
    %238 = arith.addf %225, %237 : vector<8x8xf32>
    %239 = vector.shape_cast %238 : vector<8x8xf32> to vector<1x8x8xf32>
    %cst_65 = arith.constant dense<0xFF800000> : vector<1xf32>
    %240 = vector.multi_reduction <maximumf>, %239, %cst_65 [1, 2] : vector<1x8x8xf32> to vector<1xf32>
    %241 = vector.shape_cast %240 : vector<1xf32> to vector<1x1x1xf32>
    %242 = vector.extract %241[0, 0, 0] : f32 from vector<1x1x1xf32>
    %243 = vector.broadcast %242 : f32 to vector<8x8xf32>
    %244 = arith.subf %238, %243 : vector<8x8xf32>
    %245 = math.exp %244 : vector<8x8xf32>
    %cst_66 = arith.constant dense<0.000000e+00> : vector<8xf32>
    %246 = vector.multi_reduction <add>, %245, %cst_66 [1] : vector<8x8xf32> to vector<8xf32>
    %247 = vector.shape_cast %246 : vector<8xf32> to vector<8x1xf32>
    %248 = vector.broadcast %247 : vector<8x1xf32> to vector<8x8xf32>
    %249 = arith.divf %245, %248 : vector<8x8xf32>
    %cst_67 = arith.constant dense<0.000000e+00> : vector<8xf32>
    %250 = vector.multi_reduction <add>, %249, %cst_67 [0] : vector<8x8xf32> to vector<8xf32>
    %251 = vector.shape_cast %250 : vector<8xf32> to vector<1x8xf32>
    %cst_68 = arith.constant dense<0.000000e+00> : vector<8xf32>
    %252 = vector.multi_reduction <add>, %245, %cst_68 [0] : vector<8x8xf32> to vector<8xf32>
    %253 = vector.shape_cast %252 : vector<8xf32> to vector<1x8xf32>
    %254 = vector.broadcast %253 : vector<1x8xf32> to vector<8x8xf32>
    %255 = arith.divf %245, %254 : vector<8x8xf32>
    %cst_69 = arith.constant dense<0.000000e+00> : vector<8xf32>
    %256 = vector.multi_reduction <add>, %255, %cst_69 [1] : vector<8x8xf32> to vector<8xf32>
    %257 = vector.shape_cast %256 : vector<8xf32> to vector<8x1xf32>
    %cst_70 = arith.constant dense<0.000000e+00> : vector<1x32xf32>
    %258 = tpu.matmul %251, %180, %cst_70 {dimension_numbers = #tpu.dot_dimension_numbers<[1], [0], [0], [1], [0, 0, 1, 1], [], []>} : vector<1x8xf32>, vector<8x32xf32>, vector<1x32xf32> -> vector<1x32xf32>
    %259 = vector.broadcast %257 : vector<8x1xf32> to vector<8x32xf32>
    %260 = arith.mulf %259, %178 : vector<8x32xf32>
    %cst_71 = arith.constant dense<0.000000e+00> : vector<32xf32>
    %261 = vector.multi_reduction <add>, %260, %cst_71 [0] : vector<8x32xf32> to vector<32xf32>
    %262 = vector.shape_cast %261 : vector<32xf32> to vector<1x32xf32>
    %263 = vector.extract_strided_slice %2 {offsets = [24, 0], sizes = [8, 32], strides = [1, 1]} : vector<64x32xf32> to vector<8x32xf32>
    %264 = vector.extract_strided_slice %1 {offsets = [3, 0, 0], sizes = [1, 8, 32], strides = [1, 1, 1]} : vector<8x8x32xf32> to vector<1x8x32xf32>
    %265 = vector.shape_cast %264 : vector<1x8x32xf32> to vector<8x32xf32>
    %266 = vector.extract_strided_slice %7 {offsets = [24, 0], sizes = [8, 4], strides = [1, 1]} : vector<64x4xf32> to vector<8x4xf32>
    %c0_72 = arith.constant 0 : index
    %c0_73 = arith.constant 0 : index
    %267 = vector.load %arg3[%c0_72, %c0_73] : memref<128x32xf32, #tpu.memory_space<vmem>>, vector<128x32xf32>
    %cst_74 = arith.constant dense<0.000000e+00> : vector<128x8xf32>
    %268 = tpu.matmul %267, %265, %cst_74 {dimension_numbers = #tpu.dot_dimension_numbers<[1], [1], [0], [0], [0, 0, 1, 0], [], []>} : vector<128x32xf32>, vector<8x32xf32>, vector<128x8xf32> -> vector<128x8xf32>
    %c0_75 = arith.constant 0 : index
    %c0_76 = arith.constant 0 : index
    %269 = vector.load %arg5[%c0_75, %c0_76] : memref<32x4xf32, #tpu.memory_space<vmem>>, vector<32x4xf32>
    %cst_77 = arith.constant dense<0.000000e+00> : vector<4x8xf32>
    %270 = tpu.matmul %269, %265, %cst_77 {dimension_numbers = #tpu.dot_dimension_numbers<[0], [1], [1], [0], [0, 1, 1, 0], [], []>} : vector<32x4xf32>, vector<8x32xf32>, vector<4x8xf32> -> vector<4x8xf32>
    %cst_78 = arith.constant 0.000000e+00 : f32
    %271 = vector.broadcast %cst_78 : f32 to vector<8x8xf32>
    %272 = vector.extract_strided_slice %268 {offsets = [0, 0], sizes = [32, 8], strides = [1, 1]} : vector<128x8xf32> to vector<32x8xf32>
    %cst_79 = arith.constant dense<0.000000e+00> : vector<8x8xf32>
    %273 = tpu.matmul %263, %272, %cst_79 {dimension_numbers = #tpu.dot_dimension_numbers<[1], [0], [0], [1], [0, 0, 1, 1], [], []>} : vector<8x32xf32>, vector<32x8xf32>, vector<8x8xf32> -> vector<8x8xf32>
    %274 = vector.extract_strided_slice %266 {offsets = [0, 0], sizes = [8, 1], strides = [1, 1]} : vector<8x4xf32> to vector<8x1xf32>
    %275 = vector.broadcast %274 : vector<8x1xf32> to vector<8x8xf32>
    %276 = arith.addf %273, %275 : vector<8x8xf32>
    %277 = vector.extract_strided_slice %270 {offsets = [0, 0], sizes = [1, 8], strides = [1, 1]} : vector<4x8xf32> to vector<1x8xf32>
    %278 = vector.broadcast %277 : vector<1x8xf32> to vector<8x8xf32>
    %279 = arith.addf %276, %278 : vector<8x8xf32>
    %c0_80 = arith.constant 0 : index
    %280 = memref.load %arg7[%c0_80] : memref<4xf32, #tpu.memory_space<smem>>
    %281 = math.tanh %279 : vector<8x8xf32>
    %282 = vector.broadcast %280 : f32 to vector<8x8xf32>
    %283 = arith.mulf %282, %281 : vector<8x8xf32>
    %284 = arith.addf %271, %283 : vector<8x8xf32>
    %285 = vector.extract_strided_slice %268 {offsets = [32, 0], sizes = [32, 8], strides = [1, 1]} : vector<128x8xf32> to vector<32x8xf32>
    %cst_81 = arith.constant dense<0.000000e+00> : vector<8x8xf32>
    %286 = tpu.matmul %263, %285, %cst_81 {dimension_numbers = #tpu.dot_dimension_numbers<[1], [0], [0], [1], [0, 0, 1, 1], [], []>} : vector<8x32xf32>, vector<32x8xf32>, vector<8x8xf32> -> vector<8x8xf32>
    %287 = vector.extract_strided_slice %266 {offsets = [0, 1], sizes = [8, 1], strides = [1, 1]} : vector<8x4xf32> to vector<8x1xf32>
    %288 = vector.broadcast %287 : vector<8x1xf32> to vector<8x8xf32>
    %289 = arith.addf %286, %288 : vector<8x8xf32>
    %290 = vector.extract_strided_slice %270 {offsets = [1, 0], sizes = [1, 8], strides = [1, 1]} : vector<4x8xf32> to vector<1x8xf32>
    %291 = vector.broadcast %290 : vector<1x8xf32> to vector<8x8xf32>
    %292 = arith.addf %289, %291 : vector<8x8xf32>
    %c1_82 = arith.constant 1 : index
    %293 = memref.load %arg7[%c1_82] : memref<4xf32, #tpu.memory_space<smem>>
    %294 = math.tanh %292 : vector<8x8xf32>
    %295 = vector.broadcast %293 : f32 to vector<8x8xf32>
    %296 = arith.mulf %295, %294 : vector<8x8xf32>
    %297 = arith.addf %284, %296 : vector<8x8xf32>
    %298 = vector.extract_strided_slice %268 {offsets = [64, 0], sizes = [32, 8], strides = [1, 1]} : vector<128x8xf32> to vector<32x8xf32>
    %cst_83 = arith.constant dense<0.000000e+00> : vector<8x8xf32>
    %299 = tpu.matmul %263, %298, %cst_83 {dimension_numbers = #tpu.dot_dimension_numbers<[1], [0], [0], [1], [0, 0, 1, 1], [], []>} : vector<8x32xf32>, vector<32x8xf32>, vector<8x8xf32> -> vector<8x8xf32>
    %300 = vector.extract_strided_slice %266 {offsets = [0, 2], sizes = [8, 1], strides = [1, 1]} : vector<8x4xf32> to vector<8x1xf32>
    %301 = vector.broadcast %300 : vector<8x1xf32> to vector<8x8xf32>
    %302 = arith.addf %299, %301 : vector<8x8xf32>
    %303 = vector.extract_strided_slice %270 {offsets = [2, 0], sizes = [1, 8], strides = [1, 1]} : vector<4x8xf32> to vector<1x8xf32>
    %304 = vector.broadcast %303 : vector<1x8xf32> to vector<8x8xf32>
    %305 = arith.addf %302, %304 : vector<8x8xf32>
    %c2_84 = arith.constant 2 : index
    %306 = memref.load %arg7[%c2_84] : memref<4xf32, #tpu.memory_space<smem>>
    %307 = math.tanh %305 : vector<8x8xf32>
    %308 = vector.broadcast %306 : f32 to vector<8x8xf32>
    %309 = arith.mulf %308, %307 : vector<8x8xf32>
    %310 = arith.addf %297, %309 : vector<8x8xf32>
    %311 = vector.extract_strided_slice %268 {offsets = [96, 0], sizes = [32, 8], strides = [1, 1]} : vector<128x8xf32> to vector<32x8xf32>
    %cst_85 = arith.constant dense<0.000000e+00> : vector<8x8xf32>
    %312 = tpu.matmul %263, %311, %cst_85 {dimension_numbers = #tpu.dot_dimension_numbers<[1], [0], [0], [1], [0, 0, 1, 1], [], []>} : vector<8x32xf32>, vector<32x8xf32>, vector<8x8xf32> -> vector<8x8xf32>
    %313 = vector.extract_strided_slice %266 {offsets = [0, 3], sizes = [8, 1], strides = [1, 1]} : vector<8x4xf32> to vector<8x1xf32>
    %314 = vector.broadcast %313 : vector<8x1xf32> to vector<8x8xf32>
    %315 = arith.addf %312, %314 : vector<8x8xf32>
    %316 = vector.extract_strided_slice %270 {offsets = [3, 0], sizes = [1, 8], strides = [1, 1]} : vector<4x8xf32> to vector<1x8xf32>
    %317 = vector.broadcast %316 : vector<1x8xf32> to vector<8x8xf32>
    %318 = arith.addf %315, %317 : vector<8x8xf32>
    %c3_86 = arith.constant 3 : index
    %319 = memref.load %arg7[%c3_86] : memref<4xf32, #tpu.memory_space<smem>>
    %320 = math.tanh %318 : vector<8x8xf32>
    %321 = vector.broadcast %319 : f32 to vector<8x8xf32>
    %322 = arith.mulf %321, %320 : vector<8x8xf32>
    %323 = arith.addf %310, %322 : vector<8x8xf32>
    %324 = vector.shape_cast %323 : vector<8x8xf32> to vector<1x8x8xf32>
    %cst_87 = arith.constant dense<0xFF800000> : vector<1xf32>
    %325 = vector.multi_reduction <maximumf>, %324, %cst_87 [1, 2] : vector<1x8x8xf32> to vector<1xf32>
    %326 = vector.shape_cast %325 : vector<1xf32> to vector<1x1x1xf32>
    %327 = vector.extract %326[0, 0, 0] : f32 from vector<1x1x1xf32>
    %328 = vector.broadcast %327 : f32 to vector<8x8xf32>
    %329 = arith.subf %323, %328 : vector<8x8xf32>
    %330 = math.exp %329 : vector<8x8xf32>
    %cst_88 = arith.constant dense<0.000000e+00> : vector<8xf32>
    %331 = vector.multi_reduction <add>, %330, %cst_88 [1] : vector<8x8xf32> to vector<8xf32>
    %332 = vector.shape_cast %331 : vector<8xf32> to vector<8x1xf32>
    %333 = vector.broadcast %332 : vector<8x1xf32> to vector<8x8xf32>
    %334 = arith.divf %330, %333 : vector<8x8xf32>
    %cst_89 = arith.constant dense<0.000000e+00> : vector<8xf32>
    %335 = vector.multi_reduction <add>, %334, %cst_89 [0] : vector<8x8xf32> to vector<8xf32>
    %336 = vector.shape_cast %335 : vector<8xf32> to vector<1x8xf32>
    %cst_90 = arith.constant dense<0.000000e+00> : vector<8xf32>
    %337 = vector.multi_reduction <add>, %330, %cst_90 [0] : vector<8x8xf32> to vector<8xf32>
    %338 = vector.shape_cast %337 : vector<8xf32> to vector<1x8xf32>
    %339 = vector.broadcast %338 : vector<1x8xf32> to vector<8x8xf32>
    %340 = arith.divf %330, %339 : vector<8x8xf32>
    %cst_91 = arith.constant dense<0.000000e+00> : vector<8xf32>
    %341 = vector.multi_reduction <add>, %340, %cst_91 [1] : vector<8x8xf32> to vector<8xf32>
    %342 = vector.shape_cast %341 : vector<8xf32> to vector<8x1xf32>
    %cst_92 = arith.constant dense<0.000000e+00> : vector<1x32xf32>
    %343 = tpu.matmul %336, %265, %cst_92 {dimension_numbers = #tpu.dot_dimension_numbers<[1], [0], [0], [1], [0, 0, 1, 1], [], []>} : vector<1x8xf32>, vector<8x32xf32>, vector<1x32xf32> -> vector<1x32xf32>
    %344 = vector.broadcast %342 : vector<8x1xf32> to vector<8x32xf32>
    %345 = arith.mulf %344, %263 : vector<8x32xf32>
    %cst_93 = arith.constant dense<0.000000e+00> : vector<32xf32>
    %346 = vector.multi_reduction <add>, %345, %cst_93 [0] : vector<8x32xf32> to vector<32xf32>
    %347 = vector.shape_cast %346 : vector<32xf32> to vector<1x32xf32>
    %348 = vector.extract_strided_slice %2 {offsets = [32, 0], sizes = [8, 32], strides = [1, 1]} : vector<64x32xf32> to vector<8x32xf32>
    %349 = vector.extract_strided_slice %1 {offsets = [4, 0, 0], sizes = [1, 8, 32], strides = [1, 1, 1]} : vector<8x8x32xf32> to vector<1x8x32xf32>
    %350 = vector.shape_cast %349 : vector<1x8x32xf32> to vector<8x32xf32>
    %351 = vector.extract_strided_slice %7 {offsets = [32, 0], sizes = [8, 4], strides = [1, 1]} : vector<64x4xf32> to vector<8x4xf32>
    %c0_94 = arith.constant 0 : index
    %c0_95 = arith.constant 0 : index
    %352 = vector.load %arg3[%c0_94, %c0_95] : memref<128x32xf32, #tpu.memory_space<vmem>>, vector<128x32xf32>
    %cst_96 = arith.constant dense<0.000000e+00> : vector<128x8xf32>
    %353 = tpu.matmul %352, %350, %cst_96 {dimension_numbers = #tpu.dot_dimension_numbers<[1], [1], [0], [0], [0, 0, 1, 0], [], []>} : vector<128x32xf32>, vector<8x32xf32>, vector<128x8xf32> -> vector<128x8xf32>
    %c0_97 = arith.constant 0 : index
    %c0_98 = arith.constant 0 : index
    %354 = vector.load %arg5[%c0_97, %c0_98] : memref<32x4xf32, #tpu.memory_space<vmem>>, vector<32x4xf32>
    %cst_99 = arith.constant dense<0.000000e+00> : vector<4x8xf32>
    %355 = tpu.matmul %354, %350, %cst_99 {dimension_numbers = #tpu.dot_dimension_numbers<[0], [1], [1], [0], [0, 1, 1, 0], [], []>} : vector<32x4xf32>, vector<8x32xf32>, vector<4x8xf32> -> vector<4x8xf32>
    %cst_100 = arith.constant 0.000000e+00 : f32
    %356 = vector.broadcast %cst_100 : f32 to vector<8x8xf32>
    %357 = vector.extract_strided_slice %353 {offsets = [0, 0], sizes = [32, 8], strides = [1, 1]} : vector<128x8xf32> to vector<32x8xf32>
    %cst_101 = arith.constant dense<0.000000e+00> : vector<8x8xf32>
    %358 = tpu.matmul %348, %357, %cst_101 {dimension_numbers = #tpu.dot_dimension_numbers<[1], [0], [0], [1], [0, 0, 1, 1], [], []>} : vector<8x32xf32>, vector<32x8xf32>, vector<8x8xf32> -> vector<8x8xf32>
    %359 = vector.extract_strided_slice %351 {offsets = [0, 0], sizes = [8, 1], strides = [1, 1]} : vector<8x4xf32> to vector<8x1xf32>
    %360 = vector.broadcast %359 : vector<8x1xf32> to vector<8x8xf32>
    %361 = arith.addf %358, %360 : vector<8x8xf32>
    %362 = vector.extract_strided_slice %355 {offsets = [0, 0], sizes = [1, 8], strides = [1, 1]} : vector<4x8xf32> to vector<1x8xf32>
    %363 = vector.broadcast %362 : vector<1x8xf32> to vector<8x8xf32>
    %364 = arith.addf %361, %363 : vector<8x8xf32>
    %c0_102 = arith.constant 0 : index
    %365 = memref.load %arg7[%c0_102] : memref<4xf32, #tpu.memory_space<smem>>
    %366 = math.tanh %364 : vector<8x8xf32>
    %367 = vector.broadcast %365 : f32 to vector<8x8xf32>
    %368 = arith.mulf %367, %366 : vector<8x8xf32>
    %369 = arith.addf %356, %368 : vector<8x8xf32>
    %370 = vector.extract_strided_slice %353 {offsets = [32, 0], sizes = [32, 8], strides = [1, 1]} : vector<128x8xf32> to vector<32x8xf32>
    %cst_103 = arith.constant dense<0.000000e+00> : vector<8x8xf32>
    %371 = tpu.matmul %348, %370, %cst_103 {dimension_numbers = #tpu.dot_dimension_numbers<[1], [0], [0], [1], [0, 0, 1, 1], [], []>} : vector<8x32xf32>, vector<32x8xf32>, vector<8x8xf32> -> vector<8x8xf32>
    %372 = vector.extract_strided_slice %351 {offsets = [0, 1], sizes = [8, 1], strides = [1, 1]} : vector<8x4xf32> to vector<8x1xf32>
    %373 = vector.broadcast %372 : vector<8x1xf32> to vector<8x8xf32>
    %374 = arith.addf %371, %373 : vector<8x8xf32>
    %375 = vector.extract_strided_slice %355 {offsets = [1, 0], sizes = [1, 8], strides = [1, 1]} : vector<4x8xf32> to vector<1x8xf32>
    %376 = vector.broadcast %375 : vector<1x8xf32> to vector<8x8xf32>
    %377 = arith.addf %374, %376 : vector<8x8xf32>
    %c1_104 = arith.constant 1 : index
    %378 = memref.load %arg7[%c1_104] : memref<4xf32, #tpu.memory_space<smem>>
    %379 = math.tanh %377 : vector<8x8xf32>
    %380 = vector.broadcast %378 : f32 to vector<8x8xf32>
    %381 = arith.mulf %380, %379 : vector<8x8xf32>
    %382 = arith.addf %369, %381 : vector<8x8xf32>
    %383 = vector.extract_strided_slice %353 {offsets = [64, 0], sizes = [32, 8], strides = [1, 1]} : vector<128x8xf32> to vector<32x8xf32>
    %cst_105 = arith.constant dense<0.000000e+00> : vector<8x8xf32>
    %384 = tpu.matmul %348, %383, %cst_105 {dimension_numbers = #tpu.dot_dimension_numbers<[1], [0], [0], [1], [0, 0, 1, 1], [], []>} : vector<8x32xf32>, vector<32x8xf32>, vector<8x8xf32> -> vector<8x8xf32>
    %385 = vector.extract_strided_slice %351 {offsets = [0, 2], sizes = [8, 1], strides = [1, 1]} : vector<8x4xf32> to vector<8x1xf32>
    %386 = vector.broadcast %385 : vector<8x1xf32> to vector<8x8xf32>
    %387 = arith.addf %384, %386 : vector<8x8xf32>
    %388 = vector.extract_strided_slice %355 {offsets = [2, 0], sizes = [1, 8], strides = [1, 1]} : vector<4x8xf32> to vector<1x8xf32>
    %389 = vector.broadcast %388 : vector<1x8xf32> to vector<8x8xf32>
    %390 = arith.addf %387, %389 : vector<8x8xf32>
    %c2_106 = arith.constant 2 : index
    %391 = memref.load %arg7[%c2_106] : memref<4xf32, #tpu.memory_space<smem>>
    %392 = math.tanh %390 : vector<8x8xf32>
    %393 = vector.broadcast %391 : f32 to vector<8x8xf32>
    %394 = arith.mulf %393, %392 : vector<8x8xf32>
    %395 = arith.addf %382, %394 : vector<8x8xf32>
    %396 = vector.extract_strided_slice %353 {offsets = [96, 0], sizes = [32, 8], strides = [1, 1]} : vector<128x8xf32> to vector<32x8xf32>
    %cst_107 = arith.constant dense<0.000000e+00> : vector<8x8xf32>
    %397 = tpu.matmul %348, %396, %cst_107 {dimension_numbers = #tpu.dot_dimension_numbers<[1], [0], [0], [1], [0, 0, 1, 1], [], []>} : vector<8x32xf32>, vector<32x8xf32>, vector<8x8xf32> -> vector<8x8xf32>
    %398 = vector.extract_strided_slice %351 {offsets = [0, 3], sizes = [8, 1], strides = [1, 1]} : vector<8x4xf32> to vector<8x1xf32>
    %399 = vector.broadcast %398 : vector<8x1xf32> to vector<8x8xf32>
    %400 = arith.addf %397, %399 : vector<8x8xf32>
    %401 = vector.extract_strided_slice %355 {offsets = [3, 0], sizes = [1, 8], strides = [1, 1]} : vector<4x8xf32> to vector<1x8xf32>
    %402 = vector.broadcast %401 : vector<1x8xf32> to vector<8x8xf32>
    %403 = arith.addf %400, %402 : vector<8x8xf32>
    %c3_108 = arith.constant 3 : index
    %404 = memref.load %arg7[%c3_108] : memref<4xf32, #tpu.memory_space<smem>>
    %405 = math.tanh %403 : vector<8x8xf32>
    %406 = vector.broadcast %404 : f32 to vector<8x8xf32>
    %407 = arith.mulf %406, %405 : vector<8x8xf32>
    %408 = arith.addf %395, %407 : vector<8x8xf32>
    %409 = vector.shape_cast %408 : vector<8x8xf32> to vector<1x8x8xf32>
    %cst_109 = arith.constant dense<0xFF800000> : vector<1xf32>
    %410 = vector.multi_reduction <maximumf>, %409, %cst_109 [1, 2] : vector<1x8x8xf32> to vector<1xf32>
    %411 = vector.shape_cast %410 : vector<1xf32> to vector<1x1x1xf32>
    %412 = vector.extract %411[0, 0, 0] : f32 from vector<1x1x1xf32>
    %413 = vector.broadcast %412 : f32 to vector<8x8xf32>
    %414 = arith.subf %408, %413 : vector<8x8xf32>
    %415 = math.exp %414 : vector<8x8xf32>
    %cst_110 = arith.constant dense<0.000000e+00> : vector<8xf32>
    %416 = vector.multi_reduction <add>, %415, %cst_110 [1] : vector<8x8xf32> to vector<8xf32>
    %417 = vector.shape_cast %416 : vector<8xf32> to vector<8x1xf32>
    %418 = vector.broadcast %417 : vector<8x1xf32> to vector<8x8xf32>
    %419 = arith.divf %415, %418 : vector<8x8xf32>
    %cst_111 = arith.constant dense<0.000000e+00> : vector<8xf32>
    %420 = vector.multi_reduction <add>, %419, %cst_111 [0] : vector<8x8xf32> to vector<8xf32>
    %421 = vector.shape_cast %420 : vector<8xf32> to vector<1x8xf32>
    %cst_112 = arith.constant dense<0.000000e+00> : vector<8xf32>
    %422 = vector.multi_reduction <add>, %415, %cst_112 [0] : vector<8x8xf32> to vector<8xf32>
    %423 = vector.shape_cast %422 : vector<8xf32> to vector<1x8xf32>
    %424 = vector.broadcast %423 : vector<1x8xf32> to vector<8x8xf32>
    %425 = arith.divf %415, %424 : vector<8x8xf32>
    %cst_113 = arith.constant dense<0.000000e+00> : vector<8xf32>
    %426 = vector.multi_reduction <add>, %425, %cst_113 [1] : vector<8x8xf32> to vector<8xf32>
    %427 = vector.shape_cast %426 : vector<8xf32> to vector<8x1xf32>
    %cst_114 = arith.constant dense<0.000000e+00> : vector<1x32xf32>
    %428 = tpu.matmul %421, %350, %cst_114 {dimension_numbers = #tpu.dot_dimension_numbers<[1], [0], [0], [1], [0, 0, 1, 1], [], []>} : vector<1x8xf32>, vector<8x32xf32>, vector<1x32xf32> -> vector<1x32xf32>
    %429 = vector.broadcast %427 : vector<8x1xf32> to vector<8x32xf32>
    %430 = arith.mulf %429, %348 : vector<8x32xf32>
    %cst_115 = arith.constant dense<0.000000e+00> : vector<32xf32>
    %431 = vector.multi_reduction <add>, %430, %cst_115 [0] : vector<8x32xf32> to vector<32xf32>
    %432 = vector.shape_cast %431 : vector<32xf32> to vector<1x32xf32>
    %433 = vector.extract_strided_slice %2 {offsets = [40, 0], sizes = [8, 32], strides = [1, 1]} : vector<64x32xf32> to vector<8x32xf32>
    %434 = vector.extract_strided_slice %1 {offsets = [5, 0, 0], sizes = [1, 8, 32], strides = [1, 1, 1]} : vector<8x8x32xf32> to vector<1x8x32xf32>
    %435 = vector.shape_cast %434 : vector<1x8x32xf32> to vector<8x32xf32>
    %436 = vector.extract_strided_slice %7 {offsets = [40, 0], sizes = [8, 4], strides = [1, 1]} : vector<64x4xf32> to vector<8x4xf32>
    %c0_116 = arith.constant 0 : index
    %c0_117 = arith.constant 0 : index
    %437 = vector.load %arg3[%c0_116, %c0_117] : memref<128x32xf32, #tpu.memory_space<vmem>>, vector<128x32xf32>
    %cst_118 = arith.constant dense<0.000000e+00> : vector<128x8xf32>
    %438 = tpu.matmul %437, %435, %cst_118 {dimension_numbers = #tpu.dot_dimension_numbers<[1], [1], [0], [0], [0, 0, 1, 0], [], []>} : vector<128x32xf32>, vector<8x32xf32>, vector<128x8xf32> -> vector<128x8xf32>
    %c0_119 = arith.constant 0 : index
    %c0_120 = arith.constant 0 : index
    %439 = vector.load %arg5[%c0_119, %c0_120] : memref<32x4xf32, #tpu.memory_space<vmem>>, vector<32x4xf32>
    %cst_121 = arith.constant dense<0.000000e+00> : vector<4x8xf32>
    %440 = tpu.matmul %439, %435, %cst_121 {dimension_numbers = #tpu.dot_dimension_numbers<[0], [1], [1], [0], [0, 1, 1, 0], [], []>} : vector<32x4xf32>, vector<8x32xf32>, vector<4x8xf32> -> vector<4x8xf32>
    %cst_122 = arith.constant 0.000000e+00 : f32
    %441 = vector.broadcast %cst_122 : f32 to vector<8x8xf32>
    %442 = vector.extract_strided_slice %438 {offsets = [0, 0], sizes = [32, 8], strides = [1, 1]} : vector<128x8xf32> to vector<32x8xf32>
    %cst_123 = arith.constant dense<0.000000e+00> : vector<8x8xf32>
    %443 = tpu.matmul %433, %442, %cst_123 {dimension_numbers = #tpu.dot_dimension_numbers<[1], [0], [0], [1], [0, 0, 1, 1], [], []>} : vector<8x32xf32>, vector<32x8xf32>, vector<8x8xf32> -> vector<8x8xf32>
    %444 = vector.extract_strided_slice %436 {offsets = [0, 0], sizes = [8, 1], strides = [1, 1]} : vector<8x4xf32> to vector<8x1xf32>
    %445 = vector.broadcast %444 : vector<8x1xf32> to vector<8x8xf32>
    %446 = arith.addf %443, %445 : vector<8x8xf32>
    %447 = vector.extract_strided_slice %440 {offsets = [0, 0], sizes = [1, 8], strides = [1, 1]} : vector<4x8xf32> to vector<1x8xf32>
    %448 = vector.broadcast %447 : vector<1x8xf32> to vector<8x8xf32>
    %449 = arith.addf %446, %448 : vector<8x8xf32>
    %c0_124 = arith.constant 0 : index
    %450 = memref.load %arg7[%c0_124] : memref<4xf32, #tpu.memory_space<smem>>
    %451 = math.tanh %449 : vector<8x8xf32>
    %452 = vector.broadcast %450 : f32 to vector<8x8xf32>
    %453 = arith.mulf %452, %451 : vector<8x8xf32>
    %454 = arith.addf %441, %453 : vector<8x8xf32>
    %455 = vector.extract_strided_slice %438 {offsets = [32, 0], sizes = [32, 8], strides = [1, 1]} : vector<128x8xf32> to vector<32x8xf32>
    %cst_125 = arith.constant dense<0.000000e+00> : vector<8x8xf32>
    %456 = tpu.matmul %433, %455, %cst_125 {dimension_numbers = #tpu.dot_dimension_numbers<[1], [0], [0], [1], [0, 0, 1, 1], [], []>} : vector<8x32xf32>, vector<32x8xf32>, vector<8x8xf32> -> vector<8x8xf32>
    %457 = vector.extract_strided_slice %436 {offsets = [0, 1], sizes = [8, 1], strides = [1, 1]} : vector<8x4xf32> to vector<8x1xf32>
    %458 = vector.broadcast %457 : vector<8x1xf32> to vector<8x8xf32>
    %459 = arith.addf %456, %458 : vector<8x8xf32>
    %460 = vector.extract_strided_slice %440 {offsets = [1, 0], sizes = [1, 8], strides = [1, 1]} : vector<4x8xf32> to vector<1x8xf32>
    %461 = vector.broadcast %460 : vector<1x8xf32> to vector<8x8xf32>
    %462 = arith.addf %459, %461 : vector<8x8xf32>
    %c1_126 = arith.constant 1 : index
    %463 = memref.load %arg7[%c1_126] : memref<4xf32, #tpu.memory_space<smem>>
    %464 = math.tanh %462 : vector<8x8xf32>
    %465 = vector.broadcast %463 : f32 to vector<8x8xf32>
    %466 = arith.mulf %465, %464 : vector<8x8xf32>
    %467 = arith.addf %454, %466 : vector<8x8xf32>
    %468 = vector.extract_strided_slice %438 {offsets = [64, 0], sizes = [32, 8], strides = [1, 1]} : vector<128x8xf32> to vector<32x8xf32>
    %cst_127 = arith.constant dense<0.000000e+00> : vector<8x8xf32>
    %469 = tpu.matmul %433, %468, %cst_127 {dimension_numbers = #tpu.dot_dimension_numbers<[1], [0], [0], [1], [0, 0, 1, 1], [], []>} : vector<8x32xf32>, vector<32x8xf32>, vector<8x8xf32> -> vector<8x8xf32>
    %470 = vector.extract_strided_slice %436 {offsets = [0, 2], sizes = [8, 1], strides = [1, 1]} : vector<8x4xf32> to vector<8x1xf32>
    %471 = vector.broadcast %470 : vector<8x1xf32> to vector<8x8xf32>
    %472 = arith.addf %469, %471 : vector<8x8xf32>
    %473 = vector.extract_strided_slice %440 {offsets = [2, 0], sizes = [1, 8], strides = [1, 1]} : vector<4x8xf32> to vector<1x8xf32>
    %474 = vector.broadcast %473 : vector<1x8xf32> to vector<8x8xf32>
    %475 = arith.addf %472, %474 : vector<8x8xf32>
    %c2_128 = arith.constant 2 : index
    %476 = memref.load %arg7[%c2_128] : memref<4xf32, #tpu.memory_space<smem>>
    %477 = math.tanh %475 : vector<8x8xf32>
    %478 = vector.broadcast %476 : f32 to vector<8x8xf32>
    %479 = arith.mulf %478, %477 : vector<8x8xf32>
    %480 = arith.addf %467, %479 : vector<8x8xf32>
    %481 = vector.extract_strided_slice %438 {offsets = [96, 0], sizes = [32, 8], strides = [1, 1]} : vector<128x8xf32> to vector<32x8xf32>
    %cst_129 = arith.constant dense<0.000000e+00> : vector<8x8xf32>
    %482 = tpu.matmul %433, %481, %cst_129 {dimension_numbers = #tpu.dot_dimension_numbers<[1], [0], [0], [1], [0, 0, 1, 1], [], []>} : vector<8x32xf32>, vector<32x8xf32>, vector<8x8xf32> -> vector<8x8xf32>
    %483 = vector.extract_strided_slice %436 {offsets = [0, 3], sizes = [8, 1], strides = [1, 1]} : vector<8x4xf32> to vector<8x1xf32>
    %484 = vector.broadcast %483 : vector<8x1xf32> to vector<8x8xf32>
    %485 = arith.addf %482, %484 : vector<8x8xf32>
    %486 = vector.extract_strided_slice %440 {offsets = [3, 0], sizes = [1, 8], strides = [1, 1]} : vector<4x8xf32> to vector<1x8xf32>
    %487 = vector.broadcast %486 : vector<1x8xf32> to vector<8x8xf32>
    %488 = arith.addf %485, %487 : vector<8x8xf32>
    %c3_130 = arith.constant 3 : index
    %489 = memref.load %arg7[%c3_130] : memref<4xf32, #tpu.memory_space<smem>>
    %490 = math.tanh %488 : vector<8x8xf32>
    %491 = vector.broadcast %489 : f32 to vector<8x8xf32>
    %492 = arith.mulf %491, %490 : vector<8x8xf32>
    %493 = arith.addf %480, %492 : vector<8x8xf32>
    %494 = vector.shape_cast %493 : vector<8x8xf32> to vector<1x8x8xf32>
    %cst_131 = arith.constant dense<0xFF800000> : vector<1xf32>
    %495 = vector.multi_reduction <maximumf>, %494, %cst_131 [1, 2] : vector<1x8x8xf32> to vector<1xf32>
    %496 = vector.shape_cast %495 : vector<1xf32> to vector<1x1x1xf32>
    %497 = vector.extract %496[0, 0, 0] : f32 from vector<1x1x1xf32>
    %498 = vector.broadcast %497 : f32 to vector<8x8xf32>
    %499 = arith.subf %493, %498 : vector<8x8xf32>
    %500 = math.exp %499 : vector<8x8xf32>
    %cst_132 = arith.constant dense<0.000000e+00> : vector<8xf32>
    %501 = vector.multi_reduction <add>, %500, %cst_132 [1] : vector<8x8xf32> to vector<8xf32>
    %502 = vector.shape_cast %501 : vector<8xf32> to vector<8x1xf32>
    %503 = vector.broadcast %502 : vector<8x1xf32> to vector<8x8xf32>
    %504 = arith.divf %500, %503 : vector<8x8xf32>
    %cst_133 = arith.constant dense<0.000000e+00> : vector<8xf32>
    %505 = vector.multi_reduction <add>, %504, %cst_133 [0] : vector<8x8xf32> to vector<8xf32>
    %506 = vector.shape_cast %505 : vector<8xf32> to vector<1x8xf32>
    %cst_134 = arith.constant dense<0.000000e+00> : vector<8xf32>
    %507 = vector.multi_reduction <add>, %500, %cst_134 [0] : vector<8x8xf32> to vector<8xf32>
    %508 = vector.shape_cast %507 : vector<8xf32> to vector<1x8xf32>
    %509 = vector.broadcast %508 : vector<1x8xf32> to vector<8x8xf32>
    %510 = arith.divf %500, %509 : vector<8x8xf32>
    %cst_135 = arith.constant dense<0.000000e+00> : vector<8xf32>
    %511 = vector.multi_reduction <add>, %510, %cst_135 [1] : vector<8x8xf32> to vector<8xf32>
    %512 = vector.shape_cast %511 : vector<8xf32> to vector<8x1xf32>
    %cst_136 = arith.constant dense<0.000000e+00> : vector<1x32xf32>
    %513 = tpu.matmul %506, %435, %cst_136 {dimension_numbers = #tpu.dot_dimension_numbers<[1], [0], [0], [1], [0, 0, 1, 1], [], []>} : vector<1x8xf32>, vector<8x32xf32>, vector<1x32xf32> -> vector<1x32xf32>
    %514 = vector.broadcast %512 : vector<8x1xf32> to vector<8x32xf32>
    %515 = arith.mulf %514, %433 : vector<8x32xf32>
    %cst_137 = arith.constant dense<0.000000e+00> : vector<32xf32>
    %516 = vector.multi_reduction <add>, %515, %cst_137 [0] : vector<8x32xf32> to vector<32xf32>
    %517 = vector.shape_cast %516 : vector<32xf32> to vector<1x32xf32>
    %518 = vector.extract_strided_slice %2 {offsets = [48, 0], sizes = [8, 32], strides = [1, 1]} : vector<64x32xf32> to vector<8x32xf32>
    %519 = vector.extract_strided_slice %1 {offsets = [6, 0, 0], sizes = [1, 8, 32], strides = [1, 1, 1]} : vector<8x8x32xf32> to vector<1x8x32xf32>
    %520 = vector.shape_cast %519 : vector<1x8x32xf32> to vector<8x32xf32>
    %521 = vector.extract_strided_slice %7 {offsets = [48, 0], sizes = [8, 4], strides = [1, 1]} : vector<64x4xf32> to vector<8x4xf32>
    %c0_138 = arith.constant 0 : index
    %c0_139 = arith.constant 0 : index
    %522 = vector.load %arg3[%c0_138, %c0_139] : memref<128x32xf32, #tpu.memory_space<vmem>>, vector<128x32xf32>
    %cst_140 = arith.constant dense<0.000000e+00> : vector<128x8xf32>
    %523 = tpu.matmul %522, %520, %cst_140 {dimension_numbers = #tpu.dot_dimension_numbers<[1], [1], [0], [0], [0, 0, 1, 0], [], []>} : vector<128x32xf32>, vector<8x32xf32>, vector<128x8xf32> -> vector<128x8xf32>
    %c0_141 = arith.constant 0 : index
    %c0_142 = arith.constant 0 : index
    %524 = vector.load %arg5[%c0_141, %c0_142] : memref<32x4xf32, #tpu.memory_space<vmem>>, vector<32x4xf32>
    %cst_143 = arith.constant dense<0.000000e+00> : vector<4x8xf32>
    %525 = tpu.matmul %524, %520, %cst_143 {dimension_numbers = #tpu.dot_dimension_numbers<[0], [1], [1], [0], [0, 1, 1, 0], [], []>} : vector<32x4xf32>, vector<8x32xf32>, vector<4x8xf32> -> vector<4x8xf32>
    %cst_144 = arith.constant 0.000000e+00 : f32
    %526 = vector.broadcast %cst_144 : f32 to vector<8x8xf32>
    %527 = vector.extract_strided_slice %523 {offsets = [0, 0], sizes = [32, 8], strides = [1, 1]} : vector<128x8xf32> to vector<32x8xf32>
    %cst_145 = arith.constant dense<0.000000e+00> : vector<8x8xf32>
    %528 = tpu.matmul %518, %527, %cst_145 {dimension_numbers = #tpu.dot_dimension_numbers<[1], [0], [0], [1], [0, 0, 1, 1], [], []>} : vector<8x32xf32>, vector<32x8xf32>, vector<8x8xf32> -> vector<8x8xf32>
    %529 = vector.extract_strided_slice %521 {offsets = [0, 0], sizes = [8, 1], strides = [1, 1]} : vector<8x4xf32> to vector<8x1xf32>
    %530 = vector.broadcast %529 : vector<8x1xf32> to vector<8x8xf32>
    %531 = arith.addf %528, %530 : vector<8x8xf32>
    %532 = vector.extract_strided_slice %525 {offsets = [0, 0], sizes = [1, 8], strides = [1, 1]} : vector<4x8xf32> to vector<1x8xf32>
    %533 = vector.broadcast %532 : vector<1x8xf32> to vector<8x8xf32>
    %534 = arith.addf %531, %533 : vector<8x8xf32>
    %c0_146 = arith.constant 0 : index
    %535 = memref.load %arg7[%c0_146] : memref<4xf32, #tpu.memory_space<smem>>
    %536 = math.tanh %534 : vector<8x8xf32>
    %537 = vector.broadcast %535 : f32 to vector<8x8xf32>
    %538 = arith.mulf %537, %536 : vector<8x8xf32>
    %539 = arith.addf %526, %538 : vector<8x8xf32>
    %540 = vector.extract_strided_slice %523 {offsets = [32, 0], sizes = [32, 8], strides = [1, 1]} : vector<128x8xf32> to vector<32x8xf32>
    %cst_147 = arith.constant dense<0.000000e+00> : vector<8x8xf32>
    %541 = tpu.matmul %518, %540, %cst_147 {dimension_numbers = #tpu.dot_dimension_numbers<[1], [0], [0], [1], [0, 0, 1, 1], [], []>} : vector<8x32xf32>, vector<32x8xf32>, vector<8x8xf32> -> vector<8x8xf32>
    %542 = vector.extract_strided_slice %521 {offsets = [0, 1], sizes = [8, 1], strides = [1, 1]} : vector<8x4xf32> to vector<8x1xf32>
    %543 = vector.broadcast %542 : vector<8x1xf32> to vector<8x8xf32>
    %544 = arith.addf %541, %543 : vector<8x8xf32>
    %545 = vector.extract_strided_slice %525 {offsets = [1, 0], sizes = [1, 8], strides = [1, 1]} : vector<4x8xf32> to vector<1x8xf32>
    %546 = vector.broadcast %545 : vector<1x8xf32> to vector<8x8xf32>
    %547 = arith.addf %544, %546 : vector<8x8xf32>
    %c1_148 = arith.constant 1 : index
    %548 = memref.load %arg7[%c1_148] : memref<4xf32, #tpu.memory_space<smem>>
    %549 = math.tanh %547 : vector<8x8xf32>
    %550 = vector.broadcast %548 : f32 to vector<8x8xf32>
    %551 = arith.mulf %550, %549 : vector<8x8xf32>
    %552 = arith.addf %539, %551 : vector<8x8xf32>
    %553 = vector.extract_strided_slice %523 {offsets = [64, 0], sizes = [32, 8], strides = [1, 1]} : vector<128x8xf32> to vector<32x8xf32>
    %cst_149 = arith.constant dense<0.000000e+00> : vector<8x8xf32>
    %554 = tpu.matmul %518, %553, %cst_149 {dimension_numbers = #tpu.dot_dimension_numbers<[1], [0], [0], [1], [0, 0, 1, 1], [], []>} : vector<8x32xf32>, vector<32x8xf32>, vector<8x8xf32> -> vector<8x8xf32>
    %555 = vector.extract_strided_slice %521 {offsets = [0, 2], sizes = [8, 1], strides = [1, 1]} : vector<8x4xf32> to vector<8x1xf32>
    %556 = vector.broadcast %555 : vector<8x1xf32> to vector<8x8xf32>
    %557 = arith.addf %554, %556 : vector<8x8xf32>
    %558 = vector.extract_strided_slice %525 {offsets = [2, 0], sizes = [1, 8], strides = [1, 1]} : vector<4x8xf32> to vector<1x8xf32>
    %559 = vector.broadcast %558 : vector<1x8xf32> to vector<8x8xf32>
    %560 = arith.addf %557, %559 : vector<8x8xf32>
    %c2_150 = arith.constant 2 : index
    %561 = memref.load %arg7[%c2_150] : memref<4xf32, #tpu.memory_space<smem>>
    %562 = math.tanh %560 : vector<8x8xf32>
    %563 = vector.broadcast %561 : f32 to vector<8x8xf32>
    %564 = arith.mulf %563, %562 : vector<8x8xf32>
    %565 = arith.addf %552, %564 : vector<8x8xf32>
    %566 = vector.extract_strided_slice %523 {offsets = [96, 0], sizes = [32, 8], strides = [1, 1]} : vector<128x8xf32> to vector<32x8xf32>
    %cst_151 = arith.constant dense<0.000000e+00> : vector<8x8xf32>
    %567 = tpu.matmul %518, %566, %cst_151 {dimension_numbers = #tpu.dot_dimension_numbers<[1], [0], [0], [1], [0, 0, 1, 1], [], []>} : vector<8x32xf32>, vector<32x8xf32>, vector<8x8xf32> -> vector<8x8xf32>
    %568 = vector.extract_strided_slice %521 {offsets = [0, 3], sizes = [8, 1], strides = [1, 1]} : vector<8x4xf32> to vector<8x1xf32>
    %569 = vector.broadcast %568 : vector<8x1xf32> to vector<8x8xf32>
    %570 = arith.addf %567, %569 : vector<8x8xf32>
    %571 = vector.extract_strided_slice %525 {offsets = [3, 0], sizes = [1, 8], strides = [1, 1]} : vector<4x8xf32> to vector<1x8xf32>
    %572 = vector.broadcast %571 : vector<1x8xf32> to vector<8x8xf32>
    %573 = arith.addf %570, %572 : vector<8x8xf32>
    %c3_152 = arith.constant 3 : index
    %574 = memref.load %arg7[%c3_152] : memref<4xf32, #tpu.memory_space<smem>>
    %575 = math.tanh %573 : vector<8x8xf32>
    %576 = vector.broadcast %574 : f32 to vector<8x8xf32>
    %577 = arith.mulf %576, %575 : vector<8x8xf32>
    %578 = arith.addf %565, %577 : vector<8x8xf32>
    %579 = vector.shape_cast %578 : vector<8x8xf32> to vector<1x8x8xf32>
    %cst_153 = arith.constant dense<0xFF800000> : vector<1xf32>
    %580 = vector.multi_reduction <maximumf>, %579, %cst_153 [1, 2] : vector<1x8x8xf32> to vector<1xf32>
    %581 = vector.shape_cast %580 : vector<1xf32> to vector<1x1x1xf32>
    %582 = vector.extract %581[0, 0, 0] : f32 from vector<1x1x1xf32>
    %583 = vector.broadcast %582 : f32 to vector<8x8xf32>
    %584 = arith.subf %578, %583 : vector<8x8xf32>
    %585 = math.exp %584 : vector<8x8xf32>
    %cst_154 = arith.constant dense<0.000000e+00> : vector<8xf32>
    %586 = vector.multi_reduction <add>, %585, %cst_154 [1] : vector<8x8xf32> to vector<8xf32>
    %587 = vector.shape_cast %586 : vector<8xf32> to vector<8x1xf32>
    %588 = vector.broadcast %587 : vector<8x1xf32> to vector<8x8xf32>
    %589 = arith.divf %585, %588 : vector<8x8xf32>
    %cst_155 = arith.constant dense<0.000000e+00> : vector<8xf32>
    %590 = vector.multi_reduction <add>, %589, %cst_155 [0] : vector<8x8xf32> to vector<8xf32>
    %591 = vector.shape_cast %590 : vector<8xf32> to vector<1x8xf32>
    %cst_156 = arith.constant dense<0.000000e+00> : vector<8xf32>
    %592 = vector.multi_reduction <add>, %585, %cst_156 [0] : vector<8x8xf32> to vector<8xf32>
    %593 = vector.shape_cast %592 : vector<8xf32> to vector<1x8xf32>
    %594 = vector.broadcast %593 : vector<1x8xf32> to vector<8x8xf32>
    %595 = arith.divf %585, %594 : vector<8x8xf32>
    %cst_157 = arith.constant dense<0.000000e+00> : vector<8xf32>
    %596 = vector.multi_reduction <add>, %595, %cst_157 [1] : vector<8x8xf32> to vector<8xf32>
    %597 = vector.shape_cast %596 : vector<8xf32> to vector<8x1xf32>
    %cst_158 = arith.constant dense<0.000000e+00> : vector<1x32xf32>
    %598 = tpu.matmul %591, %520, %cst_158 {dimension_numbers = #tpu.dot_dimension_numbers<[1], [0], [0], [1], [0, 0, 1, 1], [], []>} : vector<1x8xf32>, vector<8x32xf32>, vector<1x32xf32> -> vector<1x32xf32>
    %599 = vector.broadcast %597 : vector<8x1xf32> to vector<8x32xf32>
    %600 = arith.mulf %599, %518 : vector<8x32xf32>
    %cst_159 = arith.constant dense<0.000000e+00> : vector<32xf32>
    %601 = vector.multi_reduction <add>, %600, %cst_159 [0] : vector<8x32xf32> to vector<32xf32>
    %602 = vector.shape_cast %601 : vector<32xf32> to vector<1x32xf32>
    %603 = vector.extract_strided_slice %2 {offsets = [56, 0], sizes = [8, 32], strides = [1, 1]} : vector<64x32xf32> to vector<8x32xf32>
    %604 = vector.extract_strided_slice %1 {offsets = [7, 0, 0], sizes = [1, 8, 32], strides = [1, 1, 1]} : vector<8x8x32xf32> to vector<1x8x32xf32>
    %605 = vector.shape_cast %604 : vector<1x8x32xf32> to vector<8x32xf32>
    %606 = vector.extract_strided_slice %7 {offsets = [56, 0], sizes = [8, 4], strides = [1, 1]} : vector<64x4xf32> to vector<8x4xf32>
    %c0_160 = arith.constant 0 : index
    %c0_161 = arith.constant 0 : index
    %607 = vector.load %arg3[%c0_160, %c0_161] : memref<128x32xf32, #tpu.memory_space<vmem>>, vector<128x32xf32>
    %cst_162 = arith.constant dense<0.000000e+00> : vector<128x8xf32>
    %608 = tpu.matmul %607, %605, %cst_162 {dimension_numbers = #tpu.dot_dimension_numbers<[1], [1], [0], [0], [0, 0, 1, 0], [], []>} : vector<128x32xf32>, vector<8x32xf32>, vector<128x8xf32> -> vector<128x8xf32>
    %c0_163 = arith.constant 0 : index
    %c0_164 = arith.constant 0 : index
    %609 = vector.load %arg5[%c0_163, %c0_164] : memref<32x4xf32, #tpu.memory_space<vmem>>, vector<32x4xf32>
    %cst_165 = arith.constant dense<0.000000e+00> : vector<4x8xf32>
    %610 = tpu.matmul %609, %605, %cst_165 {dimension_numbers = #tpu.dot_dimension_numbers<[0], [1], [1], [0], [0, 1, 1, 0], [], []>} : vector<32x4xf32>, vector<8x32xf32>, vector<4x8xf32> -> vector<4x8xf32>
    %cst_166 = arith.constant 0.000000e+00 : f32
    %611 = vector.broadcast %cst_166 : f32 to vector<8x8xf32>
    %612 = vector.extract_strided_slice %608 {offsets = [0, 0], sizes = [32, 8], strides = [1, 1]} : vector<128x8xf32> to vector<32x8xf32>
    %cst_167 = arith.constant dense<0.000000e+00> : vector<8x8xf32>
    %613 = tpu.matmul %603, %612, %cst_167 {dimension_numbers = #tpu.dot_dimension_numbers<[1], [0], [0], [1], [0, 0, 1, 1], [], []>} : vector<8x32xf32>, vector<32x8xf32>, vector<8x8xf32> -> vector<8x8xf32>
    %614 = vector.extract_strided_slice %606 {offsets = [0, 0], sizes = [8, 1], strides = [1, 1]} : vector<8x4xf32> to vector<8x1xf32>
    %615 = vector.broadcast %614 : vector<8x1xf32> to vector<8x8xf32>
    %616 = arith.addf %613, %615 : vector<8x8xf32>
    %617 = vector.extract_strided_slice %610 {offsets = [0, 0], sizes = [1, 8], strides = [1, 1]} : vector<4x8xf32> to vector<1x8xf32>
    %618 = vector.broadcast %617 : vector<1x8xf32> to vector<8x8xf32>
    %619 = arith.addf %616, %618 : vector<8x8xf32>
    %c0_168 = arith.constant 0 : index
    %620 = memref.load %arg7[%c0_168] : memref<4xf32, #tpu.memory_space<smem>>
    %621 = math.tanh %619 : vector<8x8xf32>
    %622 = vector.broadcast %620 : f32 to vector<8x8xf32>
    %623 = arith.mulf %622, %621 : vector<8x8xf32>
    %624 = arith.addf %611, %623 : vector<8x8xf32>
    %625 = vector.extract_strided_slice %608 {offsets = [32, 0], sizes = [32, 8], strides = [1, 1]} : vector<128x8xf32> to vector<32x8xf32>
    %cst_169 = arith.constant dense<0.000000e+00> : vector<8x8xf32>
    %626 = tpu.matmul %603, %625, %cst_169 {dimension_numbers = #tpu.dot_dimension_numbers<[1], [0], [0], [1], [0, 0, 1, 1], [], []>} : vector<8x32xf32>, vector<32x8xf32>, vector<8x8xf32> -> vector<8x8xf32>
    %627 = vector.extract_strided_slice %606 {offsets = [0, 1], sizes = [8, 1], strides = [1, 1]} : vector<8x4xf32> to vector<8x1xf32>
    %628 = vector.broadcast %627 : vector<8x1xf32> to vector<8x8xf32>
    %629 = arith.addf %626, %628 : vector<8x8xf32>
    %630 = vector.extract_strided_slice %610 {offsets = [1, 0], sizes = [1, 8], strides = [1, 1]} : vector<4x8xf32> to vector<1x8xf32>
    %631 = vector.broadcast %630 : vector<1x8xf32> to vector<8x8xf32>
    %632 = arith.addf %629, %631 : vector<8x8xf32>
    %c1_170 = arith.constant 1 : index
    %633 = memref.load %arg7[%c1_170] : memref<4xf32, #tpu.memory_space<smem>>
    %634 = math.tanh %632 : vector<8x8xf32>
    %635 = vector.broadcast %633 : f32 to vector<8x8xf32>
    %636 = arith.mulf %635, %634 : vector<8x8xf32>
    %637 = arith.addf %624, %636 : vector<8x8xf32>
    %638 = vector.extract_strided_slice %608 {offsets = [64, 0], sizes = [32, 8], strides = [1, 1]} : vector<128x8xf32> to vector<32x8xf32>
    %cst_171 = arith.constant dense<0.000000e+00> : vector<8x8xf32>
    %639 = tpu.matmul %603, %638, %cst_171 {dimension_numbers = #tpu.dot_dimension_numbers<[1], [0], [0], [1], [0, 0, 1, 1], [], []>} : vector<8x32xf32>, vector<32x8xf32>, vector<8x8xf32> -> vector<8x8xf32>
    %640 = vector.extract_strided_slice %606 {offsets = [0, 2], sizes = [8, 1], strides = [1, 1]} : vector<8x4xf32> to vector<8x1xf32>
    %641 = vector.broadcast %640 : vector<8x1xf32> to vector<8x8xf32>
    %642 = arith.addf %639, %641 : vector<8x8xf32>
    %643 = vector.extract_strided_slice %610 {offsets = [2, 0], sizes = [1, 8], strides = [1, 1]} : vector<4x8xf32> to vector<1x8xf32>
    %644 = vector.broadcast %643 : vector<1x8xf32> to vector<8x8xf32>
    %645 = arith.addf %642, %644 : vector<8x8xf32>
    %c2_172 = arith.constant 2 : index
    %646 = memref.load %arg7[%c2_172] : memref<4xf32, #tpu.memory_space<smem>>
    %647 = math.tanh %645 : vector<8x8xf32>
    %648 = vector.broadcast %646 : f32 to vector<8x8xf32>
    %649 = arith.mulf %648, %647 : vector<8x8xf32>
    %650 = arith.addf %637, %649 : vector<8x8xf32>
    %651 = vector.extract_strided_slice %608 {offsets = [96, 0], sizes = [32, 8], strides = [1, 1]} : vector<128x8xf32> to vector<32x8xf32>
    %cst_173 = arith.constant dense<0.000000e+00> : vector<8x8xf32>
    %652 = tpu.matmul %603, %651, %cst_173 {dimension_numbers = #tpu.dot_dimension_numbers<[1], [0], [0], [1], [0, 0, 1, 1], [], []>} : vector<8x32xf32>, vector<32x8xf32>, vector<8x8xf32> -> vector<8x8xf32>
    %653 = vector.extract_strided_slice %606 {offsets = [0, 3], sizes = [8, 1], strides = [1, 1]} : vector<8x4xf32> to vector<8x1xf32>
    %654 = vector.broadcast %653 : vector<8x1xf32> to vector<8x8xf32>
    %655 = arith.addf %652, %654 : vector<8x8xf32>
    %656 = vector.extract_strided_slice %610 {offsets = [3, 0], sizes = [1, 8], strides = [1, 1]} : vector<4x8xf32> to vector<1x8xf32>
    %657 = vector.broadcast %656 : vector<1x8xf32> to vector<8x8xf32>
    %658 = arith.addf %655, %657 : vector<8x8xf32>
    %c3_174 = arith.constant 3 : index
    %659 = memref.load %arg7[%c3_174] : memref<4xf32, #tpu.memory_space<smem>>
    %660 = math.tanh %658 : vector<8x8xf32>
    %661 = vector.broadcast %659 : f32 to vector<8x8xf32>
    %662 = arith.mulf %661, %660 : vector<8x8xf32>
    %663 = arith.addf %650, %662 : vector<8x8xf32>
    %664 = vector.shape_cast %663 : vector<8x8xf32> to vector<1x8x8xf32>
    %cst_175 = arith.constant dense<0xFF800000> : vector<1xf32>
    %665 = vector.multi_reduction <maximumf>, %664, %cst_175 [1, 2] : vector<1x8x8xf32> to vector<1xf32>
    %666 = vector.shape_cast %665 : vector<1xf32> to vector<1x1x1xf32>
    %667 = vector.extract %666[0, 0, 0] : f32 from vector<1x1x1xf32>
    %668 = vector.broadcast %667 : f32 to vector<8x8xf32>
    %669 = arith.subf %663, %668 : vector<8x8xf32>
    %670 = math.exp %669 : vector<8x8xf32>
    %cst_176 = arith.constant dense<0.000000e+00> : vector<8xf32>
    %671 = vector.multi_reduction <add>, %670, %cst_176 [1] : vector<8x8xf32> to vector<8xf32>
    %672 = vector.shape_cast %671 : vector<8xf32> to vector<8x1xf32>
    %673 = vector.broadcast %672 : vector<8x1xf32> to vector<8x8xf32>
    %674 = arith.divf %670, %673 : vector<8x8xf32>
    %cst_177 = arith.constant dense<0.000000e+00> : vector<8xf32>
    %675 = vector.multi_reduction <add>, %674, %cst_177 [0] : vector<8x8xf32> to vector<8xf32>
    %676 = vector.shape_cast %675 : vector<8xf32> to vector<1x8xf32>
    %cst_178 = arith.constant dense<0.000000e+00> : vector<8xf32>
    %677 = vector.multi_reduction <add>, %670, %cst_178 [0] : vector<8x8xf32> to vector<8xf32>
    %678 = vector.shape_cast %677 : vector<8xf32> to vector<1x8xf32>
    %679 = vector.broadcast %678 : vector<1x8xf32> to vector<8x8xf32>
    %680 = arith.divf %670, %679 : vector<8x8xf32>
    %cst_179 = arith.constant dense<0.000000e+00> : vector<8xf32>
    %681 = vector.multi_reduction <add>, %680, %cst_179 [1] : vector<8x8xf32> to vector<8xf32>
    %682 = vector.shape_cast %681 : vector<8xf32> to vector<8x1xf32>
    %cst_180 = arith.constant dense<0.000000e+00> : vector<1x32xf32>
    %683 = tpu.matmul %676, %605, %cst_180 {dimension_numbers = #tpu.dot_dimension_numbers<[1], [0], [0], [1], [0, 0, 1, 1], [], []>} : vector<1x8xf32>, vector<8x32xf32>, vector<1x32xf32> -> vector<1x32xf32>
    %684 = vector.broadcast %682 : vector<8x1xf32> to vector<8x32xf32>
    %685 = arith.mulf %684, %603 : vector<8x32xf32>
    %cst_181 = arith.constant dense<0.000000e+00> : vector<32xf32>
    %686 = vector.multi_reduction <add>, %685, %cst_181 [0] : vector<8x32xf32> to vector<32xf32>
    %687 = vector.shape_cast %686 : vector<32xf32> to vector<1x32xf32>
    %cst_182 = arith.constant dense<0.000000e+00> : vector<8x32xf32>
    %688 = vector.multi_reduction <add>, %0, %cst_182 [1] : vector<8x8x32xf32> to vector<8x32xf32>
    %cst_183 = arith.constant 1.250000e-01 : f32
    %689 = vector.broadcast %cst_183 : f32 to vector<8x32xf32>
    %690 = arith.mulf %688, %689 : vector<8x32xf32>
    %cst_184 = arith.constant dense<0.000000e+00> : vector<8x32xf32>
    %691 = vector.multi_reduction <add>, %1, %cst_184 [1] : vector<8x8x32xf32> to vector<8x32xf32>
    %cst_185 = arith.constant 1.250000e-01 : f32
    %692 = vector.broadcast %cst_185 : f32 to vector<8x32xf32>
    %693 = arith.mulf %691, %692 : vector<8x32xf32>
    %694 = tpu.concatenate %88, %173, %258, %343, %428, %513, %598, %683 in 0 : vector<1x32xf32>, vector<1x32xf32>, vector<1x32xf32>, vector<1x32xf32>, vector<1x32xf32>, vector<1x32xf32>, vector<1x32xf32>, vector<1x32xf32> -> vector<8x32xf32>
    %cst_186 = arith.constant 1.250000e-01 : f32
    %695 = vector.broadcast %cst_186 : f32 to vector<8x32xf32>
    %696 = arith.mulf %694, %695 : vector<8x32xf32>
    %697 = tpu.concatenate %92, %177, %262, %347, %432, %517, %602, %687 in 0 : vector<1x32xf32>, vector<1x32xf32>, vector<1x32xf32>, vector<1x32xf32>, vector<1x32xf32>, vector<1x32xf32>, vector<1x32xf32>, vector<1x32xf32> -> vector<8x32xf32>
    %cst_187 = arith.constant 1.250000e-01 : f32
    %698 = vector.broadcast %cst_187 : f32 to vector<8x32xf32>
    %699 = arith.mulf %697, %698 : vector<8x32xf32>
    %700 = tpu.concatenate %690, %696, %693, %699 in 1 : vector<8x32xf32>, vector<8x32xf32>, vector<8x32xf32>, vector<8x32xf32> -> vector<8x128xf32>
    %c0_188 = arith.constant 0 : index
    %c0_189 = arith.constant 0 : index
    %701 = vector.load %arg8[%c0_188, %c0_189] : memref<8x128xf32, #tpu.memory_space<vmem>>, vector<8x128xf32>
    tpu.vector_store %arg8[%c0_188, %c0_189], %700 {strides = array<i32>} : memref<8x128xf32, #tpu.memory_space<vmem>>, vector<8x128xf32>,
    return
  }
  func.func @transform_0(%arg0: i32) -> (i32, i32, i32) {
    %c0_i32 = arith.constant 0 : i32
    %c0_i32_0 = arith.constant 0 : i32
    %c0_i32_1 = arith.constant 0 : i32
    return %arg0, %c0_i32, %c0_i32_0 : i32, i32, i32
  }
  func.func @transform_1(%arg0: i32) -> (i32, i32, i32) {
    %c0_i32 = arith.constant 0 : i32
    %c0_i32_0 = arith.constant 0 : i32
    %c0_i32_1 = arith.constant 0 : i32
    return %arg0, %c0_i32, %c0_i32_0 : i32, i32, i32
  }
  func.func @transform_2(%arg0: i32) -> (i32, i32) {
    %c0_i32 = arith.constant 0 : i32
    %c0_i32_0 = arith.constant 0 : i32
    %c0_i32_1 = arith.constant 0 : i32
    return %c0_i32, %c0_i32_0 : i32, i32
  }
  func.func @transform_3(%arg0: i32) -> (i32, i32) {
    %c0_i32 = arith.constant 0 : i32
    %c0_i32_0 = arith.constant 0 : i32
    %c0_i32_1 = arith.constant 0 : i32
    return %c0_i32, %c0_i32_0 : i32, i32
  }
  func.func @transform_4(%arg0: i32) -> (i32, i32) {
    %c0_i32 = arith.constant 0 : i32
    %c0_i32_0 = arith.constant 0 : i32
    %c0_i32_1 = arith.constant 0 : i32
    return %c0_i32, %c0_i32_0 : i32, i32
  }
  func.func @transform_5(%arg0: i32) -> (i32, i32) {
    %c0_i32 = arith.constant 0 : i32
    %c0_i32_0 = arith.constant 0 : i32
    %c0_i32_1 = arith.constant 0 : i32
    return %c0_i32, %c0_i32_0 : i32, i32
  }
  func.func @transform_6(%arg0: i32) -> i32 {
    %c0_i32 = arith.constant 0 : i32
    %c0_i32_0 = arith.constant 0 : i32
    return %c0_i32 : i32
  }
  func.func @transform_7(%arg0: i32) -> (i32, i32) {
    %c0_i32 = arith.constant 0 : i32
    %c0_i32_0 = arith.constant 0 : i32
    return %arg0, %c0_i32 : i32, i32
  }
}

</mosaic_0001>

<llo_original>
// kernel: tpu_custom_call.1
$region0: #{tpu_custom_call.1}
  #allocation0 [shape = 'u32[]', space=smem, size = 0x4, offset = 0x4, fixed_abs, tag = 'smem constant byte address 0x4 - core index']
  #allocation1 [shape = 'u32[144,128]{1,0:T(1,128)}', space=vmem, size = 0x12000, scoped, tag = 'internal scratch']
  %s0 = inlined_call_operand.vmem [shape: f32[16,8,32], index: 0, kind: input, shape index: {}]
  %s1 = inlined_call_operand.hbm [shape: f32[16,8,32], index: 1, kind: input, shape index: {}]
  %s2 = inlined_call_operand.vmem [shape: f32[128,32], index: 2, kind: input, shape index: {}]
  %s3 = inlined_call_operand.vmem [shape: f32[32,4], index: 3, kind: input, shape index: {}]
  %s4 = inlined_call_operand.vmem [shape: f32[32,4], index: 4, kind: input, shape index: {}]
  %s5 = inlined_call_operand.vmem [shape: f32[1,4], index: 5, kind: input, shape index: {}]
  %s6 = inlined_call_operand.vmem [shape: f32[4], index: 6, kind: input, shape index: {}]
  %s7 = inlined_call_operand.hbm [shape: f32[16,128], index: 7, kind: output, shape index: {}]
  %s8 = sld [smem:[#allocation0]]
  $region69: #{tpu_custom_call.1} parent=0
    _
  %s10 = ssub.s32 1, %s8
  %s11 = scalar_select 0, %s10, %s8
  $region1: #{tpu_custom_call.1} parent=0
    #allocation2 [shape = 'u8[65536]{0}', space=vmem, size = 0x10000, scoped, tag = 'input window, operand 1']
    #allocation3 [shape = 's32[2]{0}', space=sflag, size = 0x8, scoped, tag = 'scoped memory for tpu_custom_call.1']
    #allocation4 [shape = 's32[2]{0}', space=sflag, size = 0x8, scoped, tag = 'scoped memory for tpu_custom_call.1']
    #allocation5 [shape = 's32[2]{0}', space=sflag, size = 0x8, scoped, tag = 'scoped memory for tpu_custom_call.1']
    #allocation6 [shape = 'u8[512]{0}', space=smem, size = 0x200, scoped, tag = 'input window, operand 6, single buffered']
    #allocation7 [shape = 'u8[8192]{0}', space=vmem, size = 0x2000, scoped, tag = 'output window, operand 0']
    %12 = vsyncpa [#allocation3], 0
    %s13 = scalar_lea.sflag [#allocation3], 1
    %14 = vsyncpa %s13, 0
    %15 = vsyncpa [#allocation5], 0
    %16 = vsyncpa [#allocation4], 0
    %s17 = scalar_lea.sflag [#allocation4], 1
    %18 = vsyncpa %s17, 0
    loop: start=0, step=1, limit=4
    $region2: #{tpu_custom_call.1} parent=1 // loop_pre_header
      _
    $region3: #{tpu_custom_call.1} parent=1 // loop_header
      %s20 = sphi 0, %s24
      %p21 = scmp.ge.s32.totalorder %s20, 4
      %s30 = sphi 0, %s32
      %s33 = sphi 0, %s30
      %s34 = sphi 0, %s33
      %s50 = sphi 0, %s34
      %s56 = sphi 0, %s58
      %s59 = sphi 0, %s56
      %s60 = sphi 0, %s59
      %s76 = sphi 0, %s60
      %s80 = sphi 0, %s80
      %s82 = sphi 0, %s80
      %s83 = sphi 0, %s82
      %s97 = sphi 0, %s83
      %s101 = sphi 0, %s101
      %s103 = sphi 0, %s101
      %s104 = sphi 0, %s103
      %s118 = sphi 0, %s104
      %s122 = sphi 0, %s122
      %s124 = sphi 0, %s122
      %s125 = sphi 0, %s124
      %s139 = sphi 0, %s125
      %s143 = sphi 0, %s143
      %s145 = sphi 0, %s143
      %s146 = sphi 0, %s145
      %s160 = sphi 0, %s146
      %s164 = sphi 0, %s164
      %s166 = sphi 0, %s164
      %s167 = sphi 0, %s166
      %s181 = sphi 0, %s167
      %s187 = sphi 0, %s189
      %s190 = sphi 0, %s187
      %s191 = sphi 0, %s190
      %s207 = sphi 0, %s191
    $region4: #{tpu_custom_call.1} parent=1 // loop_header_branch
      %23 = sbr.rel (%p21) target = $region8
    $region5: #{tpu_custom_call.1} parent=1 // loop_body
      %s25 = ssub.s32 %s20, 1
      %s26 = ssub.s32 %s20, 2
      %s27 = sadd.s32 %s20, 1
      %s28 = ssub.s32 %s20, %s27
      %p29 = scmp.eq.s32.totalorder %s28, 0
      %s31 = sadd.s32 %s30, 1
      %s32 = scalar_select %p29, %s30, %s31
      %p35 = pneg %p29
      %p36 = scmp.eq.s32.totalorder %s20, 1
      %p37 = por %p35, %p36
      %p38 = scmp.ne.s32.totalorder %s30, %s33
      %p39 = scmp.eq.s32.totalorder %s20, 0
      %p40 = por %p38, %p39
      %p41 = scmp.ne.s32.totalorder %s30, %s33
      %p42 = scmp.eq.s32.totalorder %s25, 1
      %p43 = por %p41, %p42
      %p44 = scmp.ne.s32.totalorder %s33, %s34
      %p45 = scmp.eq.s32.totalorder %s25, 0
      %p46 = por %p44, %p45
      %p47 = scmp.ne.s32.totalorder %s33, %s34
      %p48 = scmp.eq.s32.totalorder %s26, 1
      %p49 = por %p47, %p48
      %p51 = scmp.ne.s32.totalorder %s34, %s50
      %p52 = scmp.eq.s32.totalorder %s26, 0
      %p53 = por %p51, %p52
      %s54 = ssub.s32 %s20, %s27
      %p55 = scmp.eq.s32.totalorder %s54, 0
      %s57 = sadd.s32 %s56, 1
      %s58 = scalar_select %p55, %s56, %s57
      %p61 = pneg %p55
      %p62 = scmp.eq.s32.totalorder %s20, 1
      %p63 = por %p61, %p62
      %p64 = scmp.ne.s32.totalorder %s56, %s59
      %p65 = scmp.eq.s32.totalorder %s20, 0
      %p66 = por %p64, %p65
      %p67 = scmp.ne.s32.totalorder %s56, %s59
      %p68 = scmp.eq.s32.totalorder %s25, 1
      %p69 = por %p67, %p68
      %p70 = scmp.ne.s32.totalorder %s59, %s60
      %p71 = scmp.eq.s32.totalorder %s25, 0
      %p72 = por %p70, %p71
      %p73 = scmp.ne.s32.totalorder %s59, %s60
      %p74 = scmp.eq.s32.totalorder %s26, 1
      %p75 = por %p73, %p74
      %p77 = scmp.ne.s32.totalorder %s60, %s76
      %p78 = scmp.eq.s32.totalorder %s26, 0
      %p79 = por %p77, %p78
      %s81 = sadd.s32 %s80, 1
      %p84 = scmp.eq.s32.totalorder %s20, 1
      %p85 = scmp.ne.s32.totalorder %s80, %s82
      %p86 = scmp.eq.s32.totalorder %s20, 0
      %p87 = por %p85, %p86
      %p88 = scmp.ne.s32.totalorder %s80, %s82
      %p89 = scmp.eq.s32.totalorder %s25, 1
      %p90 = por %p88, %p89
      %p91 = scmp.ne.s32.totalorder %s82, %s83
      %p92 = scmp.eq.s32.totalorder %s25, 0
      %p93 = por %p91, %p92
      %p94 = scmp.ne.s32.totalorder %s82, %s83
      %p95 = scmp.eq.s32.totalorder %s26, 1
      %p96 = por %p94, %p95
      %p98 = scmp.ne.s32.totalorder %s83, %s97
      %p99 = scmp.eq.s32.totalorder %s26, 0
      %p100 = por %p98, %p99
      %s102 = sadd.s32 %s101, 1
      %p105 = scmp.eq.s32.totalorder %s20, 1
      %p106 = scmp.ne.s32.totalorder %s101, %s103
      %p107 = scmp.eq.s32.totalorder %s20, 0
      %p108 = por %p106, %p107
      %p109 = scmp.ne.s32.totalorder %s101, %s103
      %p110 = scmp.eq.s32.totalorder %s25, 1
      %p111 = por %p109, %p110
      %p112 = scmp.ne.s32.totalorder %s103, %s104
      %p113 = scmp.eq.s32.totalorder %s25, 0
      %p114 = por %p112, %p113
      %p115 = scmp.ne.s32.totalorder %s103, %s104
      %p116 = scmp.eq.s32.totalorder %s26, 1
      %p117 = por %p115, %p116
      %p119 = scmp.ne.s32.totalorder %s104, %s118
      %p120 = scmp.eq.s32.totalorder %s26, 0
      %p121 = por %p119, %p120
      %s123 = sadd.s32 %s122, 1
      %p126 = scmp.eq.s32.totalorder %s20, 1
      %p127 = scmp.ne.s32.totalorder %s122, %s124
      %p128 = scmp.eq.s32.totalorder %s20, 0
      %p129 = por %p127, %p128
      %p130 = scmp.ne.s32.totalorder %s122, %s124
      %p131 = scmp.eq.s32.totalorder %s25, 1
      %p132 = por %p130, %p131
      %p133 = scmp.ne.s32.totalorder %s124, %s125
      %p134 = scmp.eq.s32.totalorder %s25, 0
      %p135 = por %p133, %p134
      %p136 = scmp.ne.s32.totalorder %s124, %s125
      %p137 = scmp.eq.s32.totalorder %s26, 1
      %p138 = por %p136, %p137
      %p140 = scmp.ne.s32.totalorder %s125, %s139
      %p141 = scmp.eq.s32.totalorder %s26, 0
      %p142 = por %p140, %p141
      %s144 = sadd.s32 %s143, 1
      %p147 = scmp.eq.s32.totalorder %s20, 1
      %p148 = scmp.ne.s32.totalorder %s143, %s145
      %p149 = scmp.eq.s32.totalorder %s20, 0
      %p150 = por %p148, %p149
      %p151 = scmp.ne.s32.totalorder %s143, %s145
      %p152 = scmp.eq.s32.totalorder %s25, 1
      %p153 = por %p151, %p152
      %p154 = scmp.ne.s32.totalorder %s145, %s146
      %p155 = scmp.eq.s32.totalorder %s25, 0
      %p156 = por %p154, %p155
      %p157 = scmp.ne.s32.totalorder %s145, %s146
      %p158 = scmp.eq.s32.totalorder %s26, 1
      %p159 = por %p157, %p158
      %p161 = scmp.ne.s32.totalorder %s146, %s160
      %p162 = scmp.eq.s32.totalorder %s26, 0
      %p163 = por %p161, %p162
      %s165 = sadd.s32 %s164, 1
      %p168 = scmp.eq.s32.totalorder %s20, 1
      %p169 = scmp.ne.s32.totalorder %s164, %s166
      %p170 = scmp.eq.s32.totalorder %s20, 0
      %p171 = por %p169, %p170
      %p172 = scmp.ne.s32.totalorder %s164, %s166
      %p173 = scmp.eq.s32.totalorder %s25, 1
      %p174 = por %p172, %p173
      %p175 = scmp.ne.s32.totalorder %s166, %s167
      %p176 = scmp.eq.s32.totalorder %s25, 0
      %p177 = por %p175, %p176
      %p178 = scmp.ne.s32.totalorder %s166, %s167
      %p179 = scmp.eq.s32.totalorder %s26, 1
      %p180 = por %p178, %p179
      %p182 = scmp.ne.s32.totalorder %s167, %s181
      %p183 = scmp.eq.s32.totalorder %s26, 0
      %p184 = por %p182, %p183
      %s185 = ssub.s32 %s20, %s27
      %p186 = scmp.eq.s32.totalorder %s185, 0
      %s188 = sadd.s32 %s187, 1
      %s189 = scalar_select %p186, %s187, %s188
      %p192 = pneg %p186
      %p193 = scmp.eq.s32.totalorder %s20, 1
      %p194 = por %p192, %p193
      %p195 = scmp.ne.s32.totalorder %s187, %s190
      %p196 = scmp.eq.s32.totalorder %s20, 0
      %p197 = por %p195, %p196
      %p198 = scmp.ne.s32.totalorder %s187, %s190
      %p199 = scmp.eq.s32.totalorder %s25, 1
      %p200 = por %p198, %p199
      %p201 = scmp.ne.s32.totalorder %s190, %s191
      %p202 = scmp.eq.s32.totalorder %s25, 0
      %p203 = por %p201, %p202
      %p204 = scmp.ne.s32.totalorder %s190, %s191
      %p205 = scmp.eq.s32.totalorder %s26, 1
      %p206 = por %p204, %p205
      %p208 = scmp.ne.s32.totalorder %s191, %s207
      %p209 = scmp.eq.s32.totalorder %s26, 0
      %p210 = por %p208, %p209
      %p211 = scmp.le.s32.totalorder 1, %s20
      %p212 = scmp.lt.s32.totalorder %s20, 3
      %p213 = pnand %p211, %p212
      %p214 = pneg %p213
      // Predicated region
      $region9: #{tpu_custom_call.1} parent=5 // pred_check
        _
      $region10: #{tpu_custom_call.1} parent=5 // pred_check_branch
        %216 = sbr.rel (%p213) target = $region12
      $region11: #{tpu_custom_call.1} parent=5 // pred_region
        %s217 = ssub.s32 %s20, 1
        // Predicated region
        $region13: #{tpu_custom_call.1} parent=11 // pred_check
          %p218 = pneg %p93
        $region14: #{tpu_custom_call.1} parent=11 // pred_check_branch
          %220 = sbr.rel (%p218) target = $region16
        $region15: #{tpu_custom_call.1} parent=11 // pred_region
          _
        $region16: #{tpu_custom_call.1} parent=11 // pred_fallthru
          _
        // Predicated region
        $region17: #{tpu_custom_call.1} parent=11 // pred_check
          %p221 = pneg %p114
        $region18: #{tpu_custom_call.1} parent=11 // pred_check_branch
          %223 = sbr.rel (%p221) target = $region20
        $region19: #{tpu_custom_call.1} parent=11 // pred_region
          _
        $region20: #{tpu_custom_call.1} parent=11 // pred_fallthru
          _
        // Predicated region
        $region21: #{tpu_custom_call.1} parent=11 // pred_check
          %p224 = pneg %p135
        $region22: #{tpu_custom_call.1} parent=11 // pred_check_branch
          %226 = sbr.rel (%p224) target = $region24
        $region23: #{tpu_custom_call.1} parent=11 // pred_region
          _
        $region24: #{tpu_custom_call.1} parent=11 // pred_fallthru
          _
        // Predicated region
        $region25: #{tpu_custom_call.1} parent=11 // pred_check
          %p227 = pneg %p156
        $region26: #{tpu_custom_call.1} parent=11 // pred_check_branch
          %229 = sbr.rel (%p227) target = $region28
        $region27: #{tpu_custom_call.1} parent=11 // pred_region
          _
        $region28: #{tpu_custom_call.1} parent=11 // pred_fallthru
          _
        // Predicated region
        $region29: #{tpu_custom_call.1} parent=11 // pred_check
          %p230 = pneg %p177
        $region30: #{tpu_custom_call.1} parent=11 // pred_check_branch
          %232 = sbr.rel (%p230) target = $region32
        $region31: #{tpu_custom_call.1} parent=11 // pred_region
          %s234 = ssub.s32 16, 16
          %235 = vsyncadd [#allocation5], %s234
          %s237 = sshll.u32 %s6, 4
          %s238 = int_to_ptr.vmem [resolvable:$true] %s237
          %240 = dma.vmem_to_smem %s238, 16, [#allocation6], [#allocation5]
        $region32: #{tpu_custom_call.1} parent=11 // pred_fallthru
          _
      $region12: #{tpu_custom_call.1} parent=5 // pred_fallthru
        _
      %p241 = scmp.lt.s32.totalorder %s20, 2
      // Predicated region
      $region33: #{tpu_custom_call.1} parent=5 // pred_check
        %p242 = pneg %p241
      $region34: #{tpu_custom_call.1} parent=5 // pred_check_branch
        %244 = sbr.rel (%p242) target = $region36
      $region35: #{tpu_custom_call.1} parent=5 // pred_region
        // Predicated region
        $region37: #{tpu_custom_call.1} parent=35 // pred_check
          %p245 = pneg %p40
        $region38: #{tpu_custom_call.1} parent=35 // pred_check_branch
          %247 = sbr.rel (%p245) target = $region40
        $region39: #{tpu_custom_call.1} parent=35 // pred_region
          %s248 = smul.u32 8, %s20
          %p249 = scmp.lt.s32.totalorder %s248, 15
          %s250 = scalar_select %p249, %s248, 15
          %s251 = smul.addr %s250, 8
          %s252 = scalar_lea.vmem %s0, %s251
          %s253 = smul.u32 8, %s20
        $region40: #{tpu_custom_call.1} parent=35 // pred_fallthru
          _
        // Predicated region
        $region41: #{tpu_custom_call.1} parent=35 // pred_check
          %p254 = pneg %p66
        $region42: #{tpu_custom_call.1} parent=35 // pred_check_branch
          %256 = sbr.rel (%p254) target = $region44
        $region43: #{tpu_custom_call.1} parent=35 // pred_region
          %s257 = sand.u32 %s56, 1
          %s258 = scalar_lea.sflag [#allocation3], %s257
          %s259 = sand.u32 %s56, 1
          %s260 = smul.addr %s259, 64
          %s261 = scalar_lea.vmem [#allocation2], %s260
          %s262 = smul.u32 8, %s20
          %s264 = ssub.s32 1024, 1024
          %265 = vsyncadd %s258, %s264
          %s266 = smul.addr %s262, 128
          %s267 = scalar_lea.hbm %s1, %s266
          %s268 = sshll.u32 %s261, 4
          %s269 = int_to_ptr.vmem [resolvable:$true] %s268
          %274 = dma.hbm_to_vmem [thread:$0]  %s267, 1024, %s269, %s258, 128, 128, 8
        $region44: #{tpu_custom_call.1} parent=35 // pred_fallthru
          _
      $region36: #{tpu_custom_call.1} parent=5 // pred_fallthru
        _
      %p275 = scmp.le.s32.totalorder 1, %s20
      %p276 = scmp.lt.s32.totalorder %s20, 3
      %p277 = pnand %p275, %p276
      %p278 = pneg %p277
      // Predicated region
      $region45: #{tpu_custom_call.1} parent=5 // pred_check
        _
      $region46: #{tpu_custom_call.1} parent=5 // pred_check_branch
        %280 = sbr.rel (%p277) target = $region48
      $region47: #{tpu_custom_call.1} parent=5 // pred_region
        %s281 = ssub.s32 %s20, 1
        %s282 = sand.u32 %s59, 1
        %s283 = scalar_lea.sflag [#allocation3], %s282
        %s284 = sand.u32 %s59, 1
        %s285 = smul.addr %s284, 64
        %s286 = scalar_lea.vmem [#allocation2], %s285
        // Predicated region
        $region49: #{tpu_custom_call.1} parent=47 // pred_check
          %p287 = pneg %p72
        $region50: #{tpu_custom_call.1} parent=47 // pred_check_branch
          %289 = sbr.rel (%p287) target = $region52
        $region51: #{tpu_custom_call.1} parent=47 // pred_region
          %290 = dma.done %s283, 1024
        $region52: #{tpu_custom_call.1} parent=47 // pred_fallthru
          _
        // Predicated region
        $region53: #{tpu_custom_call.1} parent=47 // pred_check
          %p291 = pneg %p177
        $region54: #{tpu_custom_call.1} parent=47 // pred_check_branch
          %293 = sbr.rel (%p291) target = $region56
        $region55: #{tpu_custom_call.1} parent=47 // pred_region
          %294 = dma.done [#allocation5], 16
        $region56: #{tpu_custom_call.1} parent=47 // pred_fallthru
          _
        %295 = sfence
        %s296 = smul.u32 8, %s25
        %p297 = scmp.lt.s32.totalorder %s296, 15
        %s298 = scalar_select %p297, %s296, 15
        %s299 = smul.addr %s298, 8
        %s300 = scalar_lea.vmem %s0, %s299
        %p301 = pneg %p46
        %p302 = pneg %p43
        %s303 = sand.u32 %s59, 1
        %s304 = scalar_lea.sflag [#allocation3], %s303
        %s305 = sand.u32 %s59, 1
        %s306 = smul.addr %s305, 64
        %s307 = scalar_lea.vmem [#allocation2], %s306
        %p308 = pneg %p72
        %p309 = pneg %p69
        %p310 = pneg %p93
        %p311 = pneg %p90
        %p312 = pneg %p114
        %p313 = pneg %p111
        %p314 = pneg %p135
        %p315 = pneg %p132
        %p316 = pneg %p156
        %p317 = pneg %p153
        %p318 = pneg %p177
        %p319 = pneg %p174
        %p320 = pneg %p203
        %p321 = pneg %p200
        %s322 = sand.u32 %s190, 1
        %s323 = scalar_lea.sflag [#allocation4], %s322
        %s324 = sand.u32 %s190, 1
        %s325 = smul.addr %s324, 8
        %s326 = scalar_lea.vmem [#allocation7], %s325
        %s327 = smul.u32 8, %s25
        %p328 = scmp.lt.s32.totalorder %s327, 15
        %s329 = scalar_select %p328, %s327, 15
        %s330 = smul.addr %s329, 8
        %s331 = scalar_lea.vmem %s0, %s330
        %s332 = smul.u32 8, %s25
        %s333 = smul.u32 8, %s25
        %v334 = vld [vmem:[%s331] sm:$0xff]
        %v335 = vld [vmem:[%s331 + $0x8] sm:$0xff]
        %v336 = vld [vmem:[%s331 + $0x10] sm:$0xff]
        %v337 = vld [vmem:[%s331 + $0x18] sm:$0xff]
        %v338 = vld [vmem:[%s331 + $0x20] sm:$0xff]
        %v339 = vld [vmem:[%s331 + $0x28] sm:$0xff]
        %v340 = vld [vmem:[%s331 + $0x30] sm:$0xff]
        %v341 = vld [vmem:[%s331 + $0x38] sm:$0xff]
        %v342 = vld [vmem:[%s286] sm:$0xff]
        %v343 = vld [vmem:[%s286 + $0x8] sm:$0xff]
        %v344 = vld [vmem:[%s286 + $0x10] sm:$0xff]
        %v345 = vld [vmem:[%s286 + $0x18] sm:$0xff]
        %v346 = vld [vmem:[%s286 + $0x20] sm:$0xff]
        %v347 = vld [vmem:[%s286 + $0x28] sm:$0xff]
        %v348 = vld [vmem:[%s286 + $0x30] sm:$0xff]
        %v349 = vld [vmem:[%s286 + $0x38] sm:$0xff]
        %v350 = vld [vmem:[%s3] sm:$0xff]
        %v351 = vld [vmem:[%s3 + $0x8] sm:$0xff]
        %v352 = vld [vmem:[%s3 + $0x10] sm:$0xff]
        %v353 = vld [vmem:[%s3 + $0x18] sm:$0xff]
        %v354 = vld [vmem:[%s5] sm:$0x1]
        %v356 = vlaneseq
        %v357 = vshrl.u32 %v356, 7
        %v358 = vsub.s32 0, %v357
        %v359 = vrot.slane %v354, %v358
        %vm361 = vcmask 261120
        %v363 = vsel %vm361, %v334, 0
        %v366 = vsel %vm361, %v335, 0
        %v369 = vsel %vm361, %v336, 0
        %v372 = vsel %vm361, %v337, 0
        %v375 = vsel %vm361, %v338, 0
        %v378 = vsel %vm361, %v339, 0
        %v381 = vsel %vm361, %v340, 0
        %v384 = vsel %vm361, %v341, 0
        %386 = vmatprep.subr.mxu0 0.0
        %387 = vmatpush1.msra.mxu0 0.0
        %388 = vmatprep.subr.mxu0 0.0
        %389 = vmatpush1.msra.mxu0 0.0
        %390 = vmatprep.subr.mxu0 0.0
        %391 = vmatpush1.msra.mxu0 0.0
        %392 = vmatprep.subr.mxu0 0.0
        %393 = vmatpush1.msra.mxu0 0.0
        %394 = vmatprep.subr.mxu0 0.0
        %395 = vmatpush1.msra.mxu0 0.0
        %396 = vmatprep.subr.mxu0 0.0
        %397 = vmatpush1.msra.mxu0 0.0
        %398 = vmatprep.subr.mxu0 0.0
        %399 = vmatpush1.msra.mxu0 0.0
        %400 = vmatprep.subr.mxu0 0.0
        %401 = vmatpush1.msra.mxu0 0.0
        %402 = vmatprep.subr.mxu0 0.0
        %403 = vmatpush1.msra.mxu0 0.0
        %404 = vmatprep.subr.mxu0 0.0
        %405 = vmatpush1.msra.mxu0 0.0
        %406 = vmatprep.subr.mxu0 0.0
        %407 = vmatpush1.msra.mxu0 0.0
        %408 = vmatprep.subr.mxu0 0.0
        %409 = vmatpush1.msra.mxu0 0.0
        %410 = vmatprep.subr.mxu0 0.0
        %411 = vmatpush1.msra.mxu0 %v353
        %412 = vmatprep.subr.mxu0 0.0
        %413 = vmatpush1.msra.mxu0 %v352
        %414 = vmatprep.subr.mxu0 0.0
        %415 = vmatpush1.msra.mxu0 %v351
        %416 = vmatprep.subr.mxu0 0.0
        %417 = vmatpush1.msra.mxu0 %v350
        %418 = vmatprep.subr.mxu0 0.0
        %419 = vmatpush2.msra.mxu0 0.0
        %420 = vmatprep.subr.mxu0 0.0
        %421 = vmatpush2.msra.mxu0 0.0
        %422 = vmatprep.subr.mxu0 0.0
        %423 = vmatpush2.msra.mxu0 0.0
        %424 = vmatprep.subr.mxu0 0.0
        %425 = vmatpush2.msra.mxu0 0.0
        %426 = vmatprep.subr.mxu0 0.0
        %427 = vmatpush2.msra.mxu0 0.0
        %428 = vmatprep.subr.mxu0 0.0
        %429 = vmatpush2.msra.mxu0 0.0
        %430 = vmatprep.subr.mxu0 0.0
        %431 = vmatpush2.msra.mxu0 0.0
        %432 = vmatprep.subr.mxu0 0.0
        %433 = vmatpush2.msra.mxu0 0.0
        %434 = vmatprep.subr.mxu0 0.0
        %435 = vmatpush2.msra.mxu0 0.0
        %436 = vmatprep.subr.mxu0 0.0
        %437 = vmatpush2.msra.mxu0 0.0
        %438 = vmatprep.subr.mxu0 0.0
        %439 = vmatpush2.msra.mxu0 0.0
        %440 = vmatprep.subr.mxu0 0.0
        %441 = vmatpush2.msra.mxu0 0.0
        %442 = vmatprep.subr.mxu0 0.0
        %443 = vmatpush2.msra.mxu0 0.0
        %444 = vmatprep.subr.mxu0 0.0
        %445 = vmatpush2.msra.mxu0 0.0
        %446 = vmatprep.subr.mxu0 0.0
        %447 = vmatpush2.msra.mxu0 0.0
        %448 = vmatprep.subr.mxu0 0.0
        %449 = vmatpush2.msra.mxu0 0.0
        %450 = vmatprep.mubr.f32.mxu0 0.0
        %451 = vmatmul.mubr.f32.gmra.mxu0 %v363
        %v452 = vpop.f32.mrf.mxu0
        %v453 = vadd.f32 %v359, %v452
        %v454 = vpop.f32.mrf.mxu0
        %455 = vmatprep.mubr.f32.mxu0 0.0
        %456 = vmatmul.mubr.f32.gmra.mxu0 %v366
        %v457 = vpop.f32.mrf.mxu0
        %v458 = vadd.f32 %v359, %v457
        %v459 = vpop.f32.mrf.mxu0
        %460 = vmatprep.mubr.f32.mxu0 0.0
        %461 = vmatmul.mubr.f32.gmra.mxu0 %v369
        %v462 = vpop.f32.mrf.mxu0
        %v463 = vadd.f32 %v359, %v462
        %v464 = vpop.f32.mrf.mxu0
        %465 = vmatprep.mubr.f32.mxu0 0.0
        %466 = vmatmul.mubr.f32.gmra.mxu0 %v372
        %v467 = vpop.f32.mrf.mxu0
        %v468 = vadd.f32 %v359, %v467
        %v469 = vpop.f32.mrf.mxu0
        %470 = vmatprep.mubr.f32.mxu0 0.0
        %471 = vmatmul.mubr.f32.gmra.mxu0 %v375
        %v472 = vpop.f32.mrf.mxu0
        %v473 = vadd.f32 %v359, %v472
        %v474 = vpop.f32.mrf.mxu0
        %475 = vmatprep.mubr.f32.mxu0 0.0
        %476 = vmatmul.mubr.f32.gmra.mxu0 %v378
        %v477 = vpop.f32.mrf.mxu0
        %v478 = vadd.f32 %v359, %v477
        %v479 = vpop.f32.mrf.mxu0
        %480 = vmatprep.mubr.f32.mxu0 0.0
        %481 = vmatmul.mubr.f32.gmra.mxu0 %v381
        %v482 = vpop.f32.mrf.mxu0
        %v483 = vadd.f32 %v359, %v482
        %v484 = vpop.f32.mrf.mxu0
        %485 = vmatprep.mubr.f32.mxu0 0.0
        %486 = vmatmul.mubr.f32.gmra.mxu0 %v384
        %v487 = vpop.f32.mrf.mxu0
        %v488 = vadd.f32 %v359, %v487
        %v489 = vpop.f32.mrf.mxu0
        %490 = vdwg.mxu0
        %v491 = vld [vmem:[%s2] sm:$0xff]
        %v492 = vld [vmem:[%s2 + $0x8] sm:$0xff]
        %v493 = vld [vmem:[%s2 + $0x10] sm:$0xff]
        %v494 = vld [vmem:[%s2 + $0x18] sm:$0xff]
        %v495 = vld [vmem:[%s2 + $0x20] sm:$0xff]
        %v496 = vld [vmem:[%s2 + $0x28] sm:$0xff]
        %v497 = vld [vmem:[%s2 + $0x30] sm:$0xff]
        %v498 = vld [vmem:[%s2 + $0x38] sm:$0xff]
        %v499 = vld [vmem:[%s2 + $0x40] sm:$0xff]
        %v500 = vld [vmem:[%s2 + $0x48] sm:$0xff]
        %v501 = vld [vmem:[%s2 + $0x50] sm:$0xff]
        %v502 = vld [vmem:[%s2 + $0x58] sm:$0xff]
        %v503 = vld [vmem:[%s2 + $0x60] sm:$0xff]
        %v504 = vld [vmem:[%s2 + $0x68] sm:$0xff]
        %v505 = vld [vmem:[%s2 + $0x70] sm:$0xff]
        %v506 = vld [vmem:[%s2 + $0x78] sm:$0xff]
        %v508 = vsel %vm361, %v491, 0
        %v511 = vsel %vm361, %v492, 0
        %v514 = vsel %vm361, %v493, 0
        %v517 = vsel %vm361, %v494, 0
        %v520 = vsel %vm361, %v495, 0
        %v523 = vsel %vm361, %v496, 0
        %v526 = vsel %vm361, %v497, 0
        %v529 = vsel %vm361, %v498, 0
        %v532 = vsel %vm361, %v499, 0
        %v535 = vsel %vm361, %v500, 0
        %v538 = vsel %vm361, %v501, 0
        %v541 = vsel %vm361, %v502, 0
        %v544 = vsel %vm361, %v503, 0
        %v547 = vsel %vm361, %v504, 0
        %v550 = vsel %vm361, %v505, 0
        %v553 = vsel %vm361, %v506, 0
        %v556 = vsel %vm361, %v342, 0
        %558 = vmatprep.subr.mxu0 0.0
        %559 = vmatpush1.xpose.msra.mxu0 0.0
        %560 = vmatprep.subr.mxu0 0.0
        %561 = vmatpush1.xpose.msra.mxu0 0.0
        %562 = vmatprep.subr.mxu0 0.0
        %563 = vmatpush1.xpose.msra.mxu0 0.0
        %564 = vmatprep.subr.mxu0 0.0
        %565 = vmatpush1.xpose.msra.mxu0 0.0
        %566 = vmatprep.subr.mxu0 0.0
        %567 = vmatpush1.xpose.msra.mxu0 0.0
        %568 = vmatprep.subr.mxu0 0.0
        %569 = vmatpush1.xpose.msra.mxu0 0.0
        %570 = vmatprep.subr.mxu0 0.0
        %571 = vmatpush1.xpose.msra.mxu0 0.0
        %572 = vmatprep.subr.mxu0 0.0
        %573 = vmatpush1.xpose.msra.mxu0 0.0
        %574 = vmatprep.subr.mxu0 0.0
        %575 = vmatpush1.xpose.msra.mxu0 0.0
        %576 = vmatprep.subr.mxu0 0.0
        %577 = vmatpush1.xpose.msra.mxu0 0.0
        %578 = vmatprep.subr.mxu0 0.0
        %579 = vmatpush1.xpose.msra.mxu0 0.0
        %580 = vmatprep.subr.mxu0 0.0
        %581 = vmatpush1.xpose.msra.mxu0 0.0
        %582 = vmatprep.subr.mxu0 0.0
        %583 = vmatpush1.xpose.msra.mxu0 0.0
        %584 = vmatprep.subr.mxu0 0.0
        %585 = vmatpush1.xpose.msra.mxu0 0.0
        %586 = vmatprep.subr.mxu0 0.0
        %587 = vmatpush1.xpose.msra.mxu0 0.0
        %588 = vmatprep.subr.mxu0 0.0
        %589 = vmatpush1.xpose.msra.mxu0 %v556
        %590 = vmatprep.subr.mxu0 0.0
        %591 = vmatpush2.xpose.msra.mxu0 0.0
        %592 = vmatprep.subr.mxu0 0.0
        %593 = vmatpush2.xpose.msra.mxu0 0.0
        %594 = vmatprep.subr.mxu0 0.0
        %595 = vmatpush2.xpose.msra.mxu0 0.0
        %596 = vmatprep.subr.mxu0 0.0
        %597 = vmatpush2.xpose.msra.mxu0 0.0
        %598 = vmatprep.subr.mxu0 0.0
        %599 = vmatpush2.xpose.msra.mxu0 0.0
        %600 = vmatprep.subr.mxu0 0.0
        %601 = vmatpush2.xpose.msra.mxu0 0.0
        %602 = vmatprep.subr.mxu0 0.0
        %603 = vmatpush2.xpose.msra.mxu0 0.0
        %604 = vmatprep.subr.mxu0 0.0
        %605 = vmatpush2.xpose.msra.mxu0 0.0
        %606 = vmatprep.subr.mxu0 0.0
        %607 = vmatpush2.xpose.msra.mxu0 0.0
        %608 = vmatprep.subr.mxu0 0.0
        %609 = vmatpush2.xpose.msra.mxu0 0.0
        %610 = vmatprep.subr.mxu0 0.0
        %611 = vmatpush2.xpose.msra.mxu0 0.0
        %612 = vmatprep.subr.mxu0 0.0
        %613 = vmatpush2.xpose.msra.mxu0 0.0
        %614 = vmatprep.subr.mxu0 0.0
        %615 = vmatpush2.xpose.msra.mxu0 0.0
        %616 = vmatprep.subr.mxu0 0.0
        %617 = vmatpush2.xpose.msra.mxu0 0.0
        %618 = vmatprep.subr.mxu0 0.0
        %619 = vmatpush2.xpose.msra.mxu0 0.0
        %620 = vmatprep.subr.mxu0 0.0
        %621 = vmatpush2.xpose.msra.mxu0 0.0
        %622 = vmatprep.mubr.f32.mxu0 0.0
        %623 = vmatmul.mubr.f32.gmra.mxu0 %v508
        %v624 = vpop.f32.mrf.mxu0
        %v625 = vadd.f32 0.0, %v624
        %v626 = vpop.f32.mrf.mxu0
        %627 = vmatprep.mubr.f32.mxu0 0.0
        %628 = vmatmul.mubr.f32.gmra.mxu0 %v511
        %v629 = vpop.f32.mrf.mxu0
        %v630 = vadd.f32 0.0, %v629
        %v631 = vpop.f32.mrf.mxu0
        %632 = vmatprep.mubr.f32.mxu0 0.0
        %633 = vmatmul.mubr.f32.gmra.mxu0 %v514
        %v634 = vpop.f32.mrf.mxu0
        %v635 = vadd.f32 0.0, %v634
        %v636 = vpop.f32.mrf.mxu0
        %637 = vmatprep.mubr.f32.mxu0 0.0
        %638 = vmatmul.mubr.f32.gmra.mxu0 %v517
        %v639 = vpop.f32.mrf.mxu0
        %v640 = vadd.f32 0.0, %v639
        %v641 = vpop.f32.mrf.mxu0
        %642 = vmatprep.mubr.f32.mxu0 0.0
        %643 = vmatmul.mubr.f32.gmra.mxu0 %v520
        %v644 = vpop.f32.mrf.mxu0
        %v645 = vadd.f32 0.0, %v644
        %v646 = vpop.f32.mrf.mxu0
        %647 = vmatprep.mubr.f32.mxu0 0.0
        %648 = vmatmul.mubr.f32.gmra.mxu0 %v523
        %v649 = vpop.f32.mrf.mxu0
        %v650 = vadd.f32 0.0, %v649
        %v651 = vpop.f32.mrf.mxu0
        %652 = vmatprep.mubr.f32.mxu0 0.0
        %653 = vmatmul.mubr.f32.gmra.mxu0 %v526
        %v654 = vpop.f32.mrf.mxu0
        %v655 = vadd.f32 0.0, %v654
        %v656 = vpop.f32.mrf.mxu0
        %657 = vmatprep.mubr.f32.mxu0 0.0
        %658 = vmatmul.mubr.f32.gmra.mxu0 %v529
        %v659 = vpop.f32.mrf.mxu0
        %v660 = vadd.f32 0.0, %v659
        %v661 = vpop.f32.mrf.mxu0
        %662 = vmatprep.mubr.f32.mxu0 0.0
        %663 = vmatmul.mubr.f32.gmra.mxu0 %v532
        %v664 = vpop.f32.mrf.mxu0
        %v665 = vadd.f32 0.0, %v664
        %v666 = vpop.f32.mrf.mxu0
        %667 = vmatprep.mubr.f32.mxu0 0.0
        %668 = vmatmul.mubr.f32.gmra.mxu0 %v535
        %v669 = vpop.f32.mrf.mxu0
        %v670 = vadd.f32 0.0, %v669
        %v671 = vpop.f32.mrf.mxu0
        %672 = vmatprep.mubr.f32.mxu0 0.0
        %673 = vmatmul.mubr.f32.gmra.mxu0 %v538
        %v674 = vpop.f32.mrf.mxu0
        %v675 = vadd.f32 0.0, %v674
        %v676 = vpop.f32.mrf.mxu0
        %677 = vmatprep.mubr.f32.mxu0 0.0
        %678 = vmatmul.mubr.f32.gmra.mxu0 %v541
        %v679 = vpop.f32.mrf.mxu0
        %v680 = vadd.f32 0.0, %v679
        %v681 = vpop.f32.mrf.mxu0
        %682 = vmatprep.mubr.f32.mxu0 0.0
        %683 = vmatmul.mubr.f32.gmra.mxu0 %v544
        %v684 = vpop.f32.mrf.mxu0
        %v685 = vadd.f32 0.0, %v684
        %v686 = vpop.f32.mrf.mxu0
        %687 = vmatprep.mubr.f32.mxu0 0.0
        %688 = vmatmul.mubr.f32.gmra.mxu0 %v547
        %v689 = vpop.f32.mrf.mxu0
        %v690 = vadd.f32 0.0, %v689
        %v691 = vpop.f32.mrf.mxu0
        %692 = vmatprep.mubr.f32.mxu0 0.0
        %693 = vmatmul.mubr.f32.gmra.mxu0 %v550
        %v694 = vpop.f32.mrf.mxu0
        %v695 = vadd.f32 0.0, %v694
        %v696 = vpop.f32.mrf.mxu0
        %697 = vmatprep.mubr.f32.mxu0 0.0
        %698 = vmatmul.mubr.f32.gmra.mxu0 %v553
        %v699 = vpop.f32.mrf.mxu0
        %v700 = vadd.f32 0.0, %v699
        %v701 = vpop.f32.mrf.mxu0
        %702 = vdwg.mxu0
        %v703 = vld [vmem:[%s4] sm:$0xff]
        %v704 = vld [vmem:[%s4 + $0x8] sm:$0xff]
        %v705 = vld [vmem:[%s4 + $0x10] sm:$0xff]
        %v706 = vld [vmem:[%s4 + $0x18] sm:$0xff]
        %707 = vxpose.xlu0.b32.start [1/16] %v703, 128
        %708 = vxpose.xlu0.b32.cont [2/16] %v704, 128
        %709 = vxpose.xlu0.b32.cont [3/16] %v705, 128
        %710 = vxpose.xlu0.b32.cont [4/16] %v706, 128
        %711 = vxpose.xlu0.b32.cont [5/16] 0.0, 128
        %712 = vxpose.xlu0.b32.cont [6/16] 0.0, 128
        %713 = vxpose.xlu0.b32.cont [7/16] 0.0, 128
        %714 = vxpose.xlu0.b32.cont [8/16] 0.0, 128
        %715 = vxpose.xlu0.b32.cont [9/16] 0.0, 128
        %716 = vxpose.xlu0.b32.cont [10/16] 0.0, 128
        %717 = vxpose.xlu0.b32.cont [11/16] 0.0, 128
        %718 = vxpose.xlu0.b32.cont [12/16] 0.0, 128
        %719 = vxpose.xlu0.b32.cont [13/16] 0.0, 128
        %720 = vxpose.xlu0.b32.cont [14/16] 0.0, 128
        %721 = vxpose.xlu0.b32.cont [15/16] 0.0, 128
        %722 = vxpose.xlu0.b32.end [16/16] 0.0, 128
        %v723 = vpop.trf.xlu0
        %v724 = vpop.trf.xlu0
        %v725 = vpop.trf.xlu0
        %v726 = vpop.trf.xlu0
        %v727 = vpop.trf.xlu0
        %v728 = vpop.trf.xlu0
        %v729 = vpop.trf.xlu0
        %v730 = vpop.trf.xlu0
        %v731 = vpop.trf.xlu0
        %v732 = vpop.trf.xlu0
        %v733 = vpop.trf.xlu0
        %v734 = vpop.trf.xlu0
        %v735 = vpop.trf.xlu0
        %v736 = vpop.trf.xlu0
        %v737 = vpop.trf.xlu0
        %v738 = vpop.trf.xlu0
        %v740 = vsel %vm361, %v723, 0
        %742 = vmatprep.subr.mxu0 0.0
        %743 = vmatpush1.xpose.msra.mxu0 0.0
        %744 = vmatprep.subr.mxu0 0.0
        %745 = vmatpush1.xpose.msra.mxu0 0.0
        %746 = vmatprep.subr.mxu0 0.0
        %747 = vmatpush1.xpose.msra.mxu0 0.0
        %748 = vmatprep.subr.mxu0 0.0
        %749 = vmatpush1.xpose.msra.mxu0 0.0
        %750 = vmatprep.subr.mxu0 0.0
        %751 = vmatpush1.xpose.msra.mxu0 0.0
        %752 = vmatprep.subr.mxu0 0.0
        %753 = vmatpush1.xpose.msra.mxu0 0.0
        %754 = vmatprep.subr.mxu0 0.0
        %755 = vmatpush1.xpose.msra.mxu0 0.0
        %756 = vmatprep.subr.mxu0 0.0
        %757 = vmatpush1.xpose.msra.mxu0 0.0
        %758 = vmatprep.subr.mxu0 0.0
        %759 = vmatpush1.xpose.msra.mxu0 0.0
        %760 = vmatprep.subr.mxu0 0.0
        %761 = vmatpush1.xpose.msra.mxu0 0.0
        %762 = vmatprep.subr.mxu0 0.0
        %763 = vmatpush1.xpose.msra.mxu0 0.0
        %764 = vmatprep.subr.mxu0 0.0
        %765 = vmatpush1.xpose.msra.mxu0 0.0
        %766 = vmatprep.subr.mxu0 0.0
        %767 = vmatpush1.xpose.msra.mxu0 0.0
        %768 = vmatprep.subr.mxu0 0.0
        %769 = vmatpush1.xpose.msra.mxu0 0.0
        %770 = vmatprep.subr.mxu0 0.0
        %771 = vmatpush1.xpose.msra.mxu0 0.0
        %772 = vmatprep.subr.mxu0 0.0
        %773 = vmatpush1.xpose.msra.mxu0 %v556
        %774 = vmatprep.subr.mxu0 0.0
        %775 = vmatpush2.xpose.msra.mxu0 0.0
        %776 = vmatprep.subr.mxu0 0.0
        %777 = vmatpush2.xpose.msra.mxu0 0.0
        %778 = vmatprep.subr.mxu0 0.0
        %779 = vmatpush2.xpose.msra.mxu0 0.0
        %780 = vmatprep.subr.mxu0 0.0
        %781 = vmatpush2.xpose.msra.mxu0 0.0
        %782 = vmatprep.subr.mxu0 0.0
        %783 = vmatpush2.xpose.msra.mxu0 0.0
        %784 = vmatprep.subr.mxu0 0.0
        %785 = vmatpush2.xpose.msra.mxu0 0.0
        %786 = vmatprep.subr.mxu0 0.0
        %787 = vmatpush2.xpose.msra.mxu0 0.0
        %788 = vmatprep.subr.mxu0 0.0
        %789 = vmatpush2.xpose.msra.mxu0 0.0
        %790 = vmatprep.subr.mxu0 0.0
        %791 = vmatpush2.xpose.msra.mxu0 0.0
        %792 = vmatprep.subr.mxu0 0.0
        %793 = vmatpush2.xpose.msra.mxu0 0.0
        %794 = vmatprep.subr.mxu0 0.0
        %795 = vmatpush2.xpose.msra.mxu0 0.0
        %796 = vmatprep.subr.mxu0 0.0
        %797 = vmatpush2.xpose.msra.mxu0 0.0
        %798 = vmatprep.subr.mxu0 0.0
        %799 = vmatpush2.xpose.msra.mxu0 0.0
        %800 = vmatprep.subr.mxu0 0.0
        %801 = vmatpush2.xpose.msra.mxu0 0.0
        %802 = vmatprep.subr.mxu0 0.0
        %803 = vmatpush2.xpose.msra.mxu0 0.0
        %804 = vmatprep.subr.mxu0 0.0
        %805 = vmatpush2.xpose.msra.mxu0 0.0
        %806 = vmatprep.mubr.f32.mxu0 0.0
        %807 = vmatmul.mubr.f32.gmra.mxu0 %v740
        %v808 = vpop.f32.mrf.mxu0
        %v809 = vadd.f32 0.0, %v808
        %v810 = vpop.f32.mrf.mxu0
        %811 = vdwg.mxu0
        %813 = vset.pattern.permute.xlu0 0
        %814 = vperm.xlu0 %813, %v453
        %v815 = vpop.permute.xlu0 %814
        %817 = vmatprep.subr.mxu0 0.0
        %818 = vmatpush1.msra.mxu0 0.0
        %819 = vmatprep.subr.mxu0 0.0
        %820 = vmatpush1.msra.mxu0 0.0
        %821 = vmatprep.subr.mxu0 0.0
        %822 = vmatpush1.msra.mxu0 0.0
        %823 = vmatprep.subr.mxu0 0.0
        %824 = vmatpush1.msra.mxu0 0.0
        %825 = vmatprep.subr.mxu0 0.0
        %826 = vmatpush1.msra.mxu0 0.0
        %827 = vmatprep.subr.mxu0 0.0
        %828 = vmatpush1.msra.mxu0 0.0
        %829 = vmatprep.subr.mxu0 0.0
        %830 = vmatpush1.msra.mxu0 0.0
        %831 = vmatprep.subr.mxu0 0.0
        %832 = vmatpush1.msra.mxu0 0.0
        %833 = vmatprep.subr.mxu0 0.0
        %834 = vmatpush1.msra.mxu0 0.0
        %835 = vmatprep.subr.mxu0 0.0
        %836 = vmatpush1.msra.mxu0 0.0
        %837 = vmatprep.subr.mxu0 0.0
        %838 = vmatpush1.msra.mxu0 0.0
        %839 = vmatprep.subr.mxu0 0.0
        %840 = vmatpush1.msra.mxu0 0.0
        %841 = vmatprep.subr.mxu0 0.0
        %842 = vmatpush1.msra.mxu0 %v640
        %843 = vmatprep.subr.mxu0 0.0
        %844 = vmatpush1.msra.mxu0 %v635
        %845 = vmatprep.subr.mxu0 0.0
        %846 = vmatpush1.msra.mxu0 %v630
        %847 = vmatprep.subr.mxu0 0.0
        %848 = vmatpush1.msra.mxu0 %v625
        %849 = vmatprep.subr.mxu0 0.0
        %850 = vmatpush2.msra.mxu0 0.0
        %851 = vmatprep.subr.mxu0 0.0
        %852 = vmatpush2.msra.mxu0 0.0
        %853 = vmatprep.subr.mxu0 0.0
        %854 = vmatpush2.msra.mxu0 0.0
        %855 = vmatprep.subr.mxu0 0.0
        %856 = vmatpush2.msra.mxu0 0.0
        %857 = vmatprep.subr.mxu0 0.0
        %858 = vmatpush2.msra.mxu0 0.0
        %859 = vmatprep.subr.mxu0 0.0
        %860 = vmatpush2.msra.mxu0 0.0
        %861 = vmatprep.subr.mxu0 0.0
        %862 = vmatpush2.msra.mxu0 0.0
        %863 = vmatprep.subr.mxu0 0.0
        %864 = vmatpush2.msra.mxu0 0.0
        %865 = vmatprep.subr.mxu0 0.0
        %866 = vmatpush2.msra.mxu0 0.0
        %867 = vmatprep.subr.mxu0 0.0
        %868 = vmatpush2.msra.mxu0 0.0
        %869 = vmatprep.subr.mxu0 0.0
        %870 = vmatpush2.msra.mxu0 0.0
        %871 = vmatprep.subr.mxu0 0.0
        %872 = vmatpush2.msra.mxu0 0.0
        %873 = vmatprep.subr.mxu0 0.0
        %874 = vmatpush2.msra.mxu0 0.0
        %875 = vmatprep.subr.mxu0 0.0
        %876 = vmatpush2.msra.mxu0 0.0
        %877 = vmatprep.subr.mxu0 0.0
        %878 = vmatpush2.msra.mxu0 0.0
        %879 = vmatprep.subr.mxu0 0.0
        %880 = vmatpush2.msra.mxu0 0.0
        %881 = vmatprep.mubr.f32.mxu0 0.0
        %882 = vmatmul.mubr.f32.gmra.mxu0 %v363
        %v883 = vpop.f32.mrf.mxu0
        %v884 = vadd.f32 %v815, %v883
        %v885 = vpop.f32.mrf.mxu0
        %886 = vdwg.mxu0
        %v887 = vlaneseq
        %v888 = vshrl.u32 %v887, 7
        %v889 = vsub.s32 0, %v888
        %v890 = vrot.slane %v809, %v889
        %v891 = vadd.f32 %v884, %v890
        %s892 = sld [smem:[#allocation6]]
        %v893 = vtanh.pop %v891
        %v894 = vstv %s892
        %v895 = vmul.f32 %v894, %v893
        %v896 = vadd.f32 %v895, 0.0
        %897 = vset.pattern.permute.xlu0 1
        %898 = vperm.xlu0 %897, %v453
        %v899 = vpop.permute.xlu0 %898
        %901 = vmatprep.subr.mxu0 0.0
        %902 = vmatpush1.msra.mxu0 0.0
        %903 = vmatprep.subr.mxu0 0.0
        %904 = vmatpush1.msra.mxu0 0.0
        %905 = vmatprep.subr.mxu0 0.0
        %906 = vmatpush1.msra.mxu0 0.0
        %907 = vmatprep.subr.mxu0 0.0
        %908 = vmatpush1.msra.mxu0 0.0
        %909 = vmatprep.subr.mxu0 0.0
        %910 = vmatpush1.msra.mxu0 0.0
        %911 = vmatprep.subr.mxu0 0.0
        %912 = vmatpush1.msra.mxu0 0.0
        %913 = vmatprep.subr.mxu0 0.0
        %914 = vmatpush1.msra.mxu0 0.0
        %915 = vmatprep.subr.mxu0 0.0
        %916 = vmatpush1.msra.mxu0 0.0
        %917 = vmatprep.subr.mxu0 0.0
        %918 = vmatpush1.msra.mxu0 0.0
        %919 = vmatprep.subr.mxu0 0.0
        %920 = vmatpush1.msra.mxu0 0.0
        %921 = vmatprep.subr.mxu0 0.0
        %922 = vmatpush1.msra.mxu0 0.0
        %923 = vmatprep.subr.mxu0 0.0
        %924 = vmatpush1.msra.mxu0 0.0
        %925 = vmatprep.subr.mxu0 0.0
        %926 = vmatpush1.msra.mxu0 %v660
        %927 = vmatprep.subr.mxu0 0.0
        %928 = vmatpush1.msra.mxu0 %v655
        %929 = vmatprep.subr.mxu0 0.0
        %930 = vmatpush1.msra.mxu0 %v650
        %931 = vmatprep.subr.mxu0 0.0
        %932 = vmatpush1.msra.mxu0 %v645
        %933 = vmatprep.subr.mxu0 0.0
        %934 = vmatpush2.msra.mxu0 0.0
        %935 = vmatprep.subr.mxu0 0.0
        %936 = vmatpush2.msra.mxu0 0.0
        %937 = vmatprep.subr.mxu0 0.0
        %938 = vmatpush2.msra.mxu0 0.0
        %939 = vmatprep.subr.mxu0 0.0
        %940 = vmatpush2.msra.mxu0 0.0
        %941 = vmatprep.subr.mxu0 0.0
        %942 = vmatpush2.msra.mxu0 0.0
        %943 = vmatprep.subr.mxu0 0.0
        %944 = vmatpush2.msra.mxu0 0.0
        %945 = vmatprep.subr.mxu0 0.0
        %946 = vmatpush2.msra.mxu0 0.0
        %947 = vmatprep.subr.mxu0 0.0
        %948 = vmatpush2.msra.mxu0 0.0
        %949 = vmatprep.subr.mxu0 0.0
        %950 = vmatpush2.msra.mxu0 0.0
        %951 = vmatprep.subr.mxu0 0.0
        %952 = vmatpush2.msra.mxu0 0.0
        %953 = vmatprep.subr.mxu0 0.0
        %954 = vmatpush2.msra.mxu0 0.0
        %955 = vmatprep.subr.mxu0 0.0
        %956 = vmatpush2.msra.mxu0 0.0
        %957 = vmatprep.subr.mxu0 0.0
        %958 = vmatpush2.msra.mxu0 0.0
        %959 = vmatprep.subr.mxu0 0.0
        %960 = vmatpush2.msra.mxu0 0.0
        %961 = vmatprep.subr.mxu0 0.0
        %962 = vmatpush2.msra.mxu0 0.0
        %963 = vmatprep.subr.mxu0 0.0
        %964 = vmatpush2.msra.mxu0 0.0
        %965 = vmatprep.mubr.f32.mxu0 0.0
        %966 = vmatmul.mubr.f32.gmra.mxu0 %v363
        %v967 = vpop.f32.mrf.mxu0
        %v968 = vadd.f32 %v899, %v967
        %v969 = vpop.f32.mrf.mxu0
        %970 = vdwg.mxu0
        %v971 = vlaneseq
        %v972 = vshrl.u32 %v971, 7
        %v973 = vsub.s32 1, %v972
        %v974 = vrot.slane %v809, %v973
        %v975 = vadd.f32 %v968, %v974
        %s976 = sld [smem:[#allocation6 + $0x1]]
        %v977 = vtanh.pop %v975
        %v978 = vstv %s976
        %v979 = vmul.f32 %v978, %v977
        %v980 = vadd.f32 %v896, %v979
        %981 = vset.pattern.permute.xlu0 2
        %982 = vperm.xlu0 %981, %v453
        %v983 = vpop.permute.xlu0 %982
        %985 = vmatprep.subr.mxu0 0.0
        %986 = vmatpush1.msra.mxu0 0.0
        %987 = vmatprep.subr.mxu0 0.0
        %988 = vmatpush1.msra.mxu0 0.0
        %989 = vmatprep.subr.mxu0 0.0
        %990 = vmatpush1.msra.mxu0 0.0
        %991 = vmatprep.subr.mxu0 0.0
        %992 = vmatpush1.msra.mxu0 0.0
        %993 = vmatprep.subr.mxu0 0.0
        %994 = vmatpush1.msra.mxu0 0.0
        %995 = vmatprep.subr.mxu0 0.0
        %996 = vmatpush1.msra.mxu0 0.0
        %997 = vmatprep.subr.mxu0 0.0
        %998 = vmatpush1.msra.mxu0 0.0
        %999 = vmatprep.subr.mxu0 0.0
        %1000 = vmatpush1.msra.mxu0 0.0
        %1001 = vmatprep.subr.mxu0 0.0
        %1002 = vmatpush1.msra.mxu0 0.0
        %1003 = vmatprep.subr.mxu0 0.0
        %1004 = vmatpush1.msra.mxu0 0.0
        %1005 = vmatprep.subr.mxu0 0.0
        %1006 = vmatpush1.msra.mxu0 0.0
        %1007 = vmatprep.subr.mxu0 0.0
        %1008 = vmatpush1.msra.mxu0 0.0
        %1009 = vmatprep.subr.mxu0 0.0
        %1010 = vmatpush1.msra.mxu0 %v680
        %1011 = vmatprep.subr.mxu0 0.0
        %1012 = vmatpush1.msra.mxu0 %v675
        %1013 = vmatprep.subr.mxu0 0.0
        %1014 = vmatpush1.msra.mxu0 %v670
        %1015 = vmatprep.subr.mxu0 0.0
        %1016 = vmatpush1.msra.mxu0 %v665
        %1017 = vmatprep.subr.mxu0 0.0
        %1018 = vmatpush2.msra.mxu0 0.0
        %1019 = vmatprep.subr.mxu0 0.0
        %1020 = vmatpush2.msra.mxu0 0.0
        %1021 = vmatprep.subr.mxu0 0.0
        %1022 = vmatpush2.msra.mxu0 0.0
        %1023 = vmatprep.subr.mxu0 0.0
        %1024 = vmatpush2.msra.mxu0 0.0
        %1025 = vmatprep.subr.mxu0 0.0
        %1026 = vmatpush2.msra.mxu0 0.0
        %1027 = vmatprep.subr.mxu0 0.0
        %1028 = vmatpush2.msra.mxu0 0.0
        %1029 = vmatprep.subr.mxu0 0.0
        %1030 = vmatpush2.msra.mxu0 0.0
        %1031 = vmatprep.subr.mxu0 0.0
        %1032 = vmatpush2.msra.mxu0 0.0
        %1033 = vmatprep.subr.mxu0 0.0
        %1034 = vmatpush2.msra.mxu0 0.0
        %1035 = vmatprep.subr.mxu0 0.0
        %1036 = vmatpush2.msra.mxu0 0.0
        %1037 = vmatprep.subr.mxu0 0.0
        %1038 = vmatpush2.msra.mxu0 0.0
        %1039 = vmatprep.subr.mxu0 0.0
        %1040 = vmatpush2.msra.mxu0 0.0
        %1041 = vmatprep.subr.mxu0 0.0
        %1042 = vmatpush2.msra.mxu0 0.0
        %1043 = vmatprep.subr.mxu0 0.0
        %1044 = vmatpush2.msra.mxu0 0.0
        %1045 = vmatprep.subr.mxu0 0.0
        %1046 = vmatpush2.msra.mxu0 0.0
        %1047 = vmatprep.subr.mxu0 0.0
        %1048 = vmatpush2.msra.mxu0 0.0
        %1049 = vmatprep.mubr.f32.mxu0 0.0
        %1050 = vmatmul.mubr.f32.gmra.mxu0 %v363
        %v1051 = vpop.f32.mrf.mxu0
        %v1052 = vadd.f32 %v983, %v1051
        %v1053 = vpop.f32.mrf.mxu0
        %1054 = vdwg.mxu0
        %v1055 = vlaneseq
        %v1056 = vshrl.u32 %v1055, 7
        %v1057 = vsub.s32 2, %v1056
        %v1058 = vrot.slane %v809, %v1057
        %v1059 = vadd.f32 %v1052, %v1058
        %s1060 = sld [smem:[#allocation6 + $0x2]]
        %v1061 = vtanh.pop %v1059
        %v1062 = vstv %s1060
        %v1063 = vmul.f32 %v1062, %v1061
        %v1064 = vadd.f32 %v980, %v1063
        %1065 = vset.pattern.permute.xlu0 3
        %1066 = vperm.xlu0 %1065, %v453
        %v1067 = vpop.permute.xlu0 %1066
        %1069 = vmatprep.subr.mxu0 0.0
        %1070 = vmatpush1.msra.mxu0 0.0
        %1071 = vmatprep.subr.mxu0 0.0
        %1072 = vmatpush1.msra.mxu0 0.0
        %1073 = vmatprep.subr.mxu0 0.0
        %1074 = vmatpush1.msra.mxu0 0.0
        %1075 = vmatprep.subr.mxu0 0.0
        %1076 = vmatpush1.msra.mxu0 0.0
        %1077 = vmatprep.subr.mxu0 0.0
        %1078 = vmatpush1.msra.mxu0 0.0
        %1079 = vmatprep.subr.mxu0 0.0
        %1080 = vmatpush1.msra.mxu0 0.0
        %1081 = vmatprep.subr.mxu0 0.0
        %1082 = vmatpush1.msra.mxu0 0.0
        %1083 = vmatprep.subr.mxu0 0.0
        %1084 = vmatpush1.msra.mxu0 0.0
        %1085 = vmatprep.subr.mxu0 0.0
        %1086 = vmatpush1.msra.mxu0 0.0
        %1087 = vmatprep.subr.mxu0 0.0
        %1088 = vmatpush1.msra.mxu0 0.0
        %1089 = vmatprep.subr.mxu0 0.0
        %1090 = vmatpush1.msra.mxu0 0.0
        %1091 = vmatprep.subr.mxu0 0.0
        %1092 = vmatpush1.msra.mxu0 0.0
        %1093 = vmatprep.subr.mxu0 0.0
        %1094 = vmatpush1.msra.mxu0 %v700
        %1095 = vmatprep.subr.mxu0 0.0
        %1096 = vmatpush1.msra.mxu0 %v695
        %1097 = vmatprep.subr.mxu0 0.0
        %1098 = vmatpush1.msra.mxu0 %v690
        %1099 = vmatprep.subr.mxu0 0.0
        %1100 = vmatpush1.msra.mxu0 %v685
        %1101 = vmatprep.subr.mxu0 0.0
        %1102 = vmatpush2.msra.mxu0 0.0
        %1103 = vmatprep.subr.mxu0 0.0
        %1104 = vmatpush2.msra.mxu0 0.0
        %1105 = vmatprep.subr.mxu0 0.0
        %1106 = vmatpush2.msra.mxu0 0.0
        %1107 = vmatprep.subr.mxu0 0.0
        %1108 = vmatpush2.msra.mxu0 0.0
        %1109 = vmatprep.subr.mxu0 0.0
        %1110 = vmatpush2.msra.mxu0 0.0
        %1111 = vmatprep.subr.mxu0 0.0
        %1112 = vmatpush2.msra.mxu0 0.0
        %1113 = vmatprep.subr.mxu0 0.0
        %1114 = vmatpush2.msra.mxu0 0.0
        %1115 = vmatprep.subr.mxu0 0.0
        %1116 = vmatpush2.msra.mxu0 0.0
        %1117 = vmatprep.subr.mxu0 0.0
        %1118 = vmatpush2.msra.mxu0 0.0
        %1119 = vmatprep.subr.mxu0 0.0
        %1120 = vmatpush2.msra.mxu0 0.0
        %1121 = vmatprep.subr.mxu0 0.0
        %1122 = vmatpush2.msra.mxu0 0.0
        %1123 = vmatprep.subr.mxu0 0.0
        %1124 = vmatpush2.msra.mxu0 0.0
        %1125 = vmatprep.subr.mxu0 0.0
        %1126 = vmatpush2.msra.mxu0 0.0
        %1127 = vmatprep.subr.mxu0 0.0
        %1128 = vmatpush2.msra.mxu0 0.0
        %1129 = vmatprep.subr.mxu0 0.0
        %1130 = vmatpush2.msra.mxu0 0.0
        %1131 = vmatprep.subr.mxu0 0.0
        %1132 = vmatpush2.msra.mxu0 0.0
        %1133 = vmatprep.mubr.f32.mxu0 0.0
        %1134 = vmatmul.mubr.f32.gmra.mxu0 %v363
        %v1135 = vpop.f32.mrf.mxu0
        %v1136 = vadd.f32 %v1067, %v1135
        %v1137 = vpop.f32.mrf.mxu0
        %1138 = vdwg.mxu0
        %v1139 = vlaneseq
        %v1140 = vshrl.u32 %v1139, 7
        %v1141 = vsub.s32 3, %v1140
        %v1142 = vrot.slane %v809, %v1141
        %v1143 = vadd.f32 %v1136, %v1142
        %s1144 = sld [smem:[#allocation6 + $0x3]]
        %v1145 = vtanh.pop %v1143
        %v1146 = vstv %s1144
        %v1147 = vmul.f32 %v1146, %v1145
        %v1148 = vadd.f32 %v1064, %v1147
        %vm1149 = vcmask 64512
        %v1150 = vsel %vm1149, %v1148, -inf
        %1151 = vmax.xlane.f32.xlu0 %v1150
        %v1152 = vpop.xlane.xlu0 %1151
        %v1153 = vrot.slane %v1152, 4
        %v1154 = vmax.f32 %v1152, %v1153
        %v1155 = vrot.slane %v1154, 2
        %v1156 = vmax.f32 %v1154, %v1155
        %v1157 = vrot.slane %v1156, 1
        %v1158 = vmax.f32 %v1156, %v1157
        %s1159 = vtos %v1158
        %v1160 = vstv %s1159
        %v1161 = vsub.f32 %v1148, %v1160
        %v1162 = vmul.f32 %v1161, 1.442695
        %v1163 = vpow.pop %v1162
        %v1164 = vsel %vm1149, %v1163, 0.0
        %1165 = vadd.xlane.f32.xlu0 %v1164
        %v1166 = vpop.xlane.xlu0 %1165
        %v1167 = vrcp.pop %v1166
        %v1168 = vmul.f32 %v1163, %v1167
        %v1169 = vsel %vm1149, %v1168, 0.0
        %v1170 = vrot.slane %v1169, 4
        %v1171 = vadd.f32 %v1169, %v1170
        %v1172 = vrot.slane %v1171, 2
        %v1173 = vadd.f32 %v1171, %v1172
        %v1174 = vrot.slane %v1173, 1
        %v1175 = vadd.f32 %v1173, %v1174
        %v1176 = vrot.slane %v1164, 4
        %v1177 = vadd.f32 %v1164, %v1176
        %v1178 = vrot.slane %v1177, 2
        %v1179 = vadd.f32 %v1177, %v1178
        %v1180 = vrot.slane %v1179, 1
        %v1181 = vadd.f32 %v1179, %v1180
        %v1182 = vrcp.pop %v1181
        %v1183 = vmul.f32 %v1163, %v1182
        %v1184 = vsel %vm1149, %v1183, 0.0
        %1185 = vadd.xlane.f32.xlu0 %v1184
        %v1186 = vpop.xlane.xlu0 %1185
        %v1188 = vsel %vm1149, %v1175, 0
        %1190 = vmatprep.subr.mxu0 0.0
        %1191 = vmatpush1.msra.mxu0 0.0
        %1192 = vmatprep.subr.mxu0 0.0
        %1193 = vmatpush1.msra.mxu0 0.0
        %1194 = vmatprep.subr.mxu0 0.0
        %1195 = vmatpush1.msra.mxu0 0.0
        %1196 = vmatprep.subr.mxu0 0.0
        %1197 = vmatpush1.msra.mxu0 0.0
        %1198 = vmatprep.subr.mxu0 0.0
        %1199 = vmatpush1.msra.mxu0 0.0
        %1200 = vmatprep.subr.mxu0 0.0
        %1201 = vmatpush1.msra.mxu0 0.0
        %1202 = vmatprep.subr.mxu0 0.0
        %1203 = vmatpush1.msra.mxu0 0.0
        %1204 = vmatprep.subr.mxu0 0.0
        %1205 = vmatpush1.msra.mxu0 0.0
        %1206 = vmatprep.subr.mxu0 0.0
        %1207 = vmatpush1.msra.mxu0 0.0
        %1208 = vmatprep.subr.mxu0 0.0
        %1209 = vmatpush1.msra.mxu0 0.0
        %1210 = vmatprep.subr.mxu0 0.0
        %1211 = vmatpush1.msra.mxu0 0.0
        %1212 = vmatprep.subr.mxu0 0.0
        %1213 = vmatpush1.msra.mxu0 0.0
        %1214 = vmatprep.subr.mxu0 0.0
        %1215 = vmatpush1.msra.mxu0 0.0
        %1216 = vmatprep.subr.mxu0 0.0
        %1217 = vmatpush1.msra.mxu0 0.0
        %1218 = vmatprep.subr.mxu0 0.0
        %1219 = vmatpush1.msra.mxu0 0.0
        %1220 = vmatprep.subr.mxu0 0.0
        %1221 = vmatpush1.msra.mxu0 %v342
        %1222 = vmatprep.subr.mxu0 0.0
        %1223 = vmatpush2.msra.mxu0 0.0
        %1224 = vmatprep.subr.mxu0 0.0
        %1225 = vmatpush2.msra.mxu0 0.0
        %1226 = vmatprep.subr.mxu0 0.0
        %1227 = vmatpush2.msra.mxu0 0.0
        %1228 = vmatprep.subr.mxu0 0.0
        %1229 = vmatpush2.msra.mxu0 0.0
        %1230 = vmatprep.subr.mxu0 0.0
        %1231 = vmatpush2.msra.mxu0 0.0
        %1232 = vmatprep.subr.mxu0 0.0
        %1233 = vmatpush2.msra.mxu0 0.0
        %1234 = vmatprep.subr.mxu0 0.0
        %1235 = vmatpush2.msra.mxu0 0.0
        %1236 = vmatprep.subr.mxu0 0.0
        %1237 = vmatpush2.msra.mxu0 0.0
        %1238 = vmatprep.subr.mxu0 0.0
        %1239 = vmatpush2.msra.mxu0 0.0
        %1240 = vmatprep.subr.mxu0 0.0
        %1241 = vmatpush2.msra.mxu0 0.0
        %1242 = vmatprep.subr.mxu0 0.0
        %1243 = vmatpush2.msra.mxu0 0.0
        %1244 = vmatprep.subr.mxu0 0.0
        %1245 = vmatpush2.msra.mxu0 0.0
        %1246 = vmatprep.subr.mxu0 0.0
        %1247 = vmatpush2.msra.mxu0 0.0
        %1248 = vmatprep.subr.mxu0 0.0
        %1249 = vmatpush2.msra.mxu0 0.0
        %1250 = vmatprep.subr.mxu0 0.0
        %1251 = vmatpush2.msra.mxu0 0.0
        %1252 = vmatprep.subr.mxu0 0.0
        %1253 = vmatpush2.msra.mxu0 0.0
        %1254 = vmatprep.mubr.f32.mxu0 0.0
        %1255 = vmatmul.mubr.f32.gmra.mxu0 %v1188
        %v1256 = vpop.f32.mrf.mxu0
        %v1257 = vadd.f32 0.0, %v1256
        %v1258 = vpop.f32.mrf.mxu0
        %1259 = vdwg.mxu0
        %v1260 = vmul.f32 %v1186, %v334
        %v1261 = vsel %vm361, %v1260, 0.0
        %v1262 = vrot.slane %v1261, 4
        %v1263 = vadd.f32 %v1261, %v1262
        %v1264 = vrot.slane %v1263, 2
        %v1265 = vadd.f32 %v1263, %v1264
        %v1266 = vrot.slane %v1265, 1
        %v1267 = vadd.f32 %v1265, %v1266
        %v1269 = vsel %vm361, %v343, 0
        %1271 = vmatprep.subr.mxu0 0.0
        %1272 = vmatpush1.xpose.msra.mxu0 0.0
        %1273 = vmatprep.subr.mxu0 0.0
        %1274 = vmatpush1.xpose.msra.mxu0 0.0
        %1275 = vmatprep.subr.mxu0 0.0
        %1276 = vmatpush1.xpose.msra.mxu0 0.0
        %1277 = vmatprep.subr.mxu0 0.0
        %1278 = vmatpush1.xpose.msra.mxu0 0.0
        %1279 = vmatprep.subr.mxu0 0.0
        %1280 = vmatpush1.xpose.msra.mxu0 0.0
        %1281 = vmatprep.subr.mxu0 0.0
        %1282 = vmatpush1.xpose.msra.mxu0 0.0
        %1283 = vmatprep.subr.mxu0 0.0
        %1284 = vmatpush1.xpose.msra.mxu0 0.0
        %1285 = vmatprep.subr.mxu0 0.0
        %1286 = vmatpush1.xpose.msra.mxu0 0.0
        %1287 = vmatprep.subr.mxu0 0.0
        %1288 = vmatpush1.xpose.msra.mxu0 0.0
        %1289 = vmatprep.subr.mxu0 0.0
        %1290 = vmatpush1.xpose.msra.mxu0 0.0
        %1291 = vmatprep.subr.mxu0 0.0
        %1292 = vmatpush1.xpose.msra.mxu0 0.0
        %1293 = vmatprep.subr.mxu0 0.0
        %1294 = vmatpush1.xpose.msra.mxu0 0.0
        %1295 = vmatprep.subr.mxu0 0.0
        %1296 = vmatpush1.xpose.msra.mxu0 0.0
        %1297 = vmatprep.subr.mxu0 0.0
        %1298 = vmatpush1.xpose.msra.mxu0 0.0
        %1299 = vmatprep.subr.mxu0 0.0
        %1300 = vmatpush1.xpose.msra.mxu0 0.0
        %1301 = vmatprep.subr.mxu0 0.0
        %1302 = vmatpush1.xpose.msra.mxu0 %v1269
        %1303 = vmatprep.subr.mxu0 0.0
        %1304 = vmatpush2.xpose.msra.mxu0 0.0
        %1305 = vmatprep.subr.mxu0 0.0
        %1306 = vmatpush2.xpose.msra.mxu0 0.0
        %1307 = vmatprep.subr.mxu0 0.0
        %1308 = vmatpush2.xpose.msra.mxu0 0.0
        %1309 = vmatprep.subr.mxu0 0.0
        %1310 = vmatpush2.xpose.msra.mxu0 0.0
        %1311 = vmatprep.subr.mxu0 0.0
        %1312 = vmatpush2.xpose.msra.mxu0 0.0
        %1313 = vmatprep.subr.mxu0 0.0
        %1314 = vmatpush2.xpose.msra.mxu0 0.0
        %1315 = vmatprep.subr.mxu0 0.0
        %1316 = vmatpush2.xpose.msra.mxu0 0.0
        %1317 = vmatprep.subr.mxu0 0.0
        %1318 = vmatpush2.xpose.msra.mxu0 0.0
        %1319 = vmatprep.subr.mxu0 0.0
        %1320 = vmatpush2.xpose.msra.mxu0 0.0
        %1321 = vmatprep.subr.mxu0 0.0
        %1322 = vmatpush2.xpose.msra.mxu0 0.0
        %1323 = vmatprep.subr.mxu0 0.0
        %1324 = vmatpush2.xpose.msra.mxu0 0.0
        %1325 = vmatprep.subr.mxu0 0.0
        %1326 = vmatpush2.xpose.msra.mxu0 0.0
        %1327 = vmatprep.subr.mxu0 0.0
        %1328 = vmatpush2.xpose.msra.mxu0 0.0
        %1329 = vmatprep.subr.mxu0 0.0
        %1330 = vmatpush2.xpose.msra.mxu0 0.0
        %1331 = vmatprep.subr.mxu0 0.0
        %1332 = vmatpush2.xpose.msra.mxu0 0.0
        %1333 = vmatprep.subr.mxu0 0.0
        %1334 = vmatpush2.xpose.msra.mxu0 0.0
        %1335 = vmatprep.mubr.f32.mxu0 0.0
        %1336 = vmatmul.mubr.f32.gmra.mxu0 %v508
        %v1337 = vpop.f32.mrf.mxu0
        %v1338 = vadd.f32 0.0, %v1337
        %v1339 = vpop.f32.mrf.mxu0
        %1340 = vmatprep.mubr.f32.mxu0 0.0
        %1341 = vmatmul.mubr.f32.gmra.mxu0 %v511
        %v1342 = vpop.f32.mrf.mxu0
        %v1343 = vadd.f32 0.0, %v1342
        %v1344 = vpop.f32.mrf.mxu0
        %1345 = vmatprep.mubr.f32.mxu0 0.0
        %1346 = vmatmul.mubr.f32.gmra.mxu0 %v514
        %v1347 = vpop.f32.mrf.mxu0
        %v1348 = vadd.f32 0.0, %v1347
        %v1349 = vpop.f32.mrf.mxu0
        %1350 = vmatprep.mubr.f32.mxu0 0.0
        %1351 = vmatmul.mubr.f32.gmra.mxu0 %v517
        %v1352 = vpop.f32.mrf.mxu0
        %v1353 = vadd.f32 0.0, %v1352
        %v1354 = vpop.f32.mrf.mxu0
        %1355 = vmatprep.mubr.f32.mxu0 0.0
        %1356 = vmatmul.mubr.f32.gmra.mxu0 %v520
        %v1357 = vpop.f32.mrf.mxu0
        %v1358 = vadd.f32 0.0, %v1357
        %v1359 = vpop.f32.mrf.mxu0
        %1360 = vmatprep.mubr.f32.mxu0 0.0
        %1361 = vmatmul.mubr.f32.gmra.mxu0 %v523
        %v1362 = vpop.f32.mrf.mxu0
        %v1363 = vadd.f32 0.0, %v1362
        %v1364 = vpop.f32.mrf.mxu0
        %1365 = vmatprep.mubr.f32.mxu0 0.0
        %1366 = vmatmul.mubr.f32.gmra.mxu0 %v526
        %v1367 = vpop.f32.mrf.mxu0
        %v1368 = vadd.f32 0.0, %v1367
        %v1369 = vpop.f32.mrf.mxu0
        %1370 = vmatprep.mubr.f32.mxu0 0.0
        %1371 = vmatmul.mubr.f32.gmra.mxu0 %v529
        %v1372 = vpop.f32.mrf.mxu0
        %v1373 = vadd.f32 0.0, %v1372
        %v1374 = vpop.f32.mrf.mxu0
        %1375 = vmatprep.mubr.f32.mxu0 0.0
        %1376 = vmatmul.mubr.f32.gmra.mxu0 %v532
        %v1377 = vpop.f32.mrf.mxu0
        %v1378 = vadd.f32 0.0, %v1377
        %v1379 = vpop.f32.mrf.mxu0
        %1380 = vmatprep.mubr.f32.mxu0 0.0
        %1381 = vmatmul.mubr.f32.gmra.mxu0 %v535
        %v1382 = vpop.f32.mrf.mxu0
        %v1383 = vadd.f32 0.0, %v1382
        %v1384 = vpop.f32.mrf.mxu0
        %1385 = vmatprep.mubr.f32.mxu0 0.0
        %1386 = vmatmul.mubr.f32.gmra.mxu0 %v538
        %v1387 = vpop.f32.mrf.mxu0
        %v1388 = vadd.f32 0.0, %v1387
        %v1389 = vpop.f32.mrf.mxu0
        %1390 = vmatprep.mubr.f32.mxu0 0.0
        %1391 = vmatmul.mubr.f32.gmra.mxu0 %v541
        %v1392 = vpop.f32.mrf.mxu0
        %v1393 = vadd.f32 0.0, %v1392
        %v1394 = vpop.f32.mrf.mxu0
        %1395 = vmatprep.mubr.f32.mxu0 0.0
        %1396 = vmatmul.mubr.f32.gmra.mxu0 %v544
        %v1397 = vpop.f32.mrf.mxu0
        %v1398 = vadd.f32 0.0, %v1397
        %v1399 = vpop.f32.mrf.mxu0
        %1400 = vmatprep.mubr.f32.mxu0 0.0
        %1401 = vmatmul.mubr.f32.gmra.mxu0 %v547
        %v1402 = vpop.f32.mrf.mxu0
        %v1403 = vadd.f32 0.0, %v1402
        %v1404 = vpop.f32.mrf.mxu0
        %1405 = vmatprep.mubr.f32.mxu0 0.0
        %1406 = vmatmul.mubr.f32.gmra.mxu0 %v550
        %v1407 = vpop.f32.mrf.mxu0
        %v1408 = vadd.f32 0.0, %v1407
        %v1409 = vpop.f32.mrf.mxu0
        %1410 = vmatprep.mubr.f32.mxu0 0.0
        %1411 = vmatmul.mubr.f32.gmra.mxu0 %v553
        %v1412 = vpop.f32.mrf.mxu0
        %v1413 = vadd.f32 0.0, %v1412
        %v1414 = vpop.f32.mrf.mxu0
        %1415 = vdwg.mxu0
        %1416 = vmatprep.subr.mxu0 0.0
        %1417 = vmatpush1.xpose.msra.mxu0 0.0
        %1418 = vmatprep.subr.mxu0 0.0
        %1419 = vmatpush1.xpose.msra.mxu0 0.0
        %1420 = vmatprep.subr.mxu0 0.0
        %1421 = vmatpush1.xpose.msra.mxu0 0.0
        %1422 = vmatprep.subr.mxu0 0.0
        %1423 = vmatpush1.xpose.msra.mxu0 0.0
        %1424 = vmatprep.subr.mxu0 0.0
        %1425 = vmatpush1.xpose.msra.mxu0 0.0
        %1426 = vmatprep.subr.mxu0 0.0
        %1427 = vmatpush1.xpose.msra.mxu0 0.0
        %1428 = vmatprep.subr.mxu0 0.0
        %1429 = vmatpush1.xpose.msra.mxu0 0.0
        %1430 = vmatprep.subr.mxu0 0.0
        %1431 = vmatpush1.xpose.msra.mxu0 0.0
        %1432 = vmatprep.subr.mxu0 0.0
        %1433 = vmatpush1.xpose.msra.mxu0 0.0
        %1434 = vmatprep.subr.mxu0 0.0
        %1435 = vmatpush1.xpose.msra.mxu0 0.0
        %1436 = vmatprep.subr.mxu0 0.0
        %1437 = vmatpush1.xpose.msra.mxu0 0.0
        %1438 = vmatprep.subr.mxu0 0.0
        %1439 = vmatpush1.xpose.msra.mxu0 0.0
        %1440 = vmatprep.subr.mxu0 0.0
        %1441 = vmatpush1.xpose.msra.mxu0 0.0
        %1442 = vmatprep.subr.mxu0 0.0
        %1443 = vmatpush1.xpose.msra.mxu0 0.0
        %1444 = vmatprep.subr.mxu0 0.0
        %1445 = vmatpush1.xpose.msra.mxu0 0.0
        %1446 = vmatprep.subr.mxu0 0.0
        %1447 = vmatpush1.xpose.msra.mxu0 %v1269
        %1448 = vmatprep.subr.mxu0 0.0
        %1449 = vmatpush2.xpose.msra.mxu0 0.0
        %1450 = vmatprep.subr.mxu0 0.0
        %1451 = vmatpush2.xpose.msra.mxu0 0.0
        %1452 = vmatprep.subr.mxu0 0.0
        %1453 = vmatpush2.xpose.msra.mxu0 0.0
        %1454 = vmatprep.subr.mxu0 0.0
        %1455 = vmatpush2.xpose.msra.mxu0 0.0
        %1456 = vmatprep.subr.mxu0 0.0
        %1457 = vmatpush2.xpose.msra.mxu0 0.0
        %1458 = vmatprep.subr.mxu0 0.0
        %1459 = vmatpush2.xpose.msra.mxu0 0.0
        %1460 = vmatprep.subr.mxu0 0.0
        %1461 = vmatpush2.xpose.msra.mxu0 0.0
        %1462 = vmatprep.subr.mxu0 0.0
        %1463 = vmatpush2.xpose.msra.mxu0 0.0
        %1464 = vmatprep.subr.mxu0 0.0
        %1465 = vmatpush2.xpose.msra.mxu0 0.0
        %1466 = vmatprep.subr.mxu0 0.0
        %1467 = vmatpush2.xpose.msra.mxu0 0.0
        %1468 = vmatprep.subr.mxu0 0.0
        %1469 = vmatpush2.xpose.msra.mxu0 0.0
        %1470 = vmatprep.subr.mxu0 0.0
        %1471 = vmatpush2.xpose.msra.mxu0 0.0
        %1472 = vmatprep.subr.mxu0 0.0
        %1473 = vmatpush2.xpose.msra.mxu0 0.0
        %1474 = vmatprep.subr.mxu0 0.0
        %1475 = vmatpush2.xpose.msra.mxu0 0.0
        %1476 = vmatprep.subr.mxu0 0.0
        %1477 = vmatpush2.xpose.msra.mxu0 0.0
        %1478 = vmatprep.subr.mxu0 0.0
        %1479 = vmatpush2.xpose.msra.mxu0 0.0
        %1480 = vmatprep.mubr.f32.mxu0 0.0
        %1481 = vmatmul.mubr.f32.gmra.mxu0 %v740
        %v1482 = vpop.f32.mrf.mxu0
        %v1483 = vadd.f32 0.0, %v1482
        %v1484 = vpop.f32.mrf.mxu0
        %1485 = vdwg.mxu0
        %1487 = vset.pattern.permute.xlu0 0
        %1488 = vperm.xlu0 %1487, %v458
        %v1489 = vpop.permute.xlu0 %1488
        %1491 = vmatprep.subr.mxu0 0.0
        %1492 = vmatpush1.msra.mxu0 0.0
        %1493 = vmatprep.subr.mxu0 0.0
        %1494 = vmatpush1.msra.mxu0 0.0
        %1495 = vmatprep.subr.mxu0 0.0
        %1496 = vmatpush1.msra.mxu0 0.0
        %1497 = vmatprep.subr.mxu0 0.0
        %1498 = vmatpush1.msra.mxu0 0.0
        %1499 = vmatprep.subr.mxu0 0.0
        %1500 = vmatpush1.msra.mxu0 0.0
        %1501 = vmatprep.subr.mxu0 0.0
        %1502 = vmatpush1.msra.mxu0 0.0
        %1503 = vmatprep.subr.mxu0 0.0
        %1504 = vmatpush1.msra.mxu0 0.0
        %1505 = vmatprep.subr.mxu0 0.0
        %1506 = vmatpush1.msra.mxu0 0.0
        %1507 = vmatprep.subr.mxu0 0.0
        %1508 = vmatpush1.msra.mxu0 0.0
        %1509 = vmatprep.subr.mxu0 0.0
        %1510 = vmatpush1.msra.mxu0 0.0
        %1511 = vmatprep.subr.mxu0 0.0
        %1512 = vmatpush1.msra.mxu0 0.0
        %1513 = vmatprep.subr.mxu0 0.0
        %1514 = vmatpush1.msra.mxu0 0.0
        %1515 = vmatprep.subr.mxu0 0.0
        %1516 = vmatpush1.msra.mxu0 %v1353
        %1517 = vmatprep.subr.mxu0 0.0
        %1518 = vmatpush1.msra.mxu0 %v1348
        %1519 = vmatprep.subr.mxu0 0.0
        %1520 = vmatpush1.msra.mxu0 %v1343
        %1521 = vmatprep.subr.mxu0 0.0
        %1522 = vmatpush1.msra.mxu0 %v1338
        %1523 = vmatprep.subr.mxu0 0.0
        %1524 = vmatpush2.msra.mxu0 0.0
        %1525 = vmatprep.subr.mxu0 0.0
        %1526 = vmatpush2.msra.mxu0 0.0
        %1527 = vmatprep.subr.mxu0 0.0
        %1528 = vmatpush2.msra.mxu0 0.0
        %1529 = vmatprep.subr.mxu0 0.0
        %1530 = vmatpush2.msra.mxu0 0.0
        %1531 = vmatprep.subr.mxu0 0.0
        %1532 = vmatpush2.msra.mxu0 0.0
        %1533 = vmatprep.subr.mxu0 0.0
        %1534 = vmatpush2.msra.mxu0 0.0
        %1535 = vmatprep.subr.mxu0 0.0
        %1536 = vmatpush2.msra.mxu0 0.0
        %1537 = vmatprep.subr.mxu0 0.0
        %1538 = vmatpush2.msra.mxu0 0.0
        %1539 = vmatprep.subr.mxu0 0.0
        %1540 = vmatpush2.msra.mxu0 0.0
        %1541 = vmatprep.subr.mxu0 0.0
        %1542 = vmatpush2.msra.mxu0 0.0
        %1543 = vmatprep.subr.mxu0 0.0
        %1544 = vmatpush2.msra.mxu0 0.0
        %1545 = vmatprep.subr.mxu0 0.0
        %1546 = vmatpush2.msra.mxu0 0.0
        %1547 = vmatprep.subr.mxu0 0.0
        %1548 = vmatpush2.msra.mxu0 0.0
        %1549 = vmatprep.subr.mxu0 0.0
        %1550 = vmatpush2.msra.mxu0 0.0
        %1551 = vmatprep.subr.mxu0 0.0
        %1552 = vmatpush2.msra.mxu0 0.0
        %1553 = vmatprep.subr.mxu0 0.0
        %1554 = vmatpush2.msra.mxu0 0.0
        %1555 = vmatprep.mubr.f32.mxu0 0.0
        %1556 = vmatmul.mubr.f32.gmra.mxu0 %v366
        %v1557 = vpop.f32.mrf.mxu0
        %v1558 = vadd.f32 %v1489, %v1557
        %v1559 = vpop.f32.mrf.mxu0
        %1560 = vdwg.mxu0
        %v1561 = vlaneseq
        %v1562 = vshrl.u32 %v1561, 7
        %v1563 = vsub.s32 0, %v1562
        %v1564 = vrot.slane %v1483, %v1563
        %v1565 = vadd.f32 %v1558, %v1564
        %v1566 = vtanh.pop %v1565
        %v1567 = vmul.f32 %v894, %v1566
        %v1568 = vadd.f32 %v1567, 0.0
        %1569 = vset.pattern.permute.xlu0 1
        %1570 = vperm.xlu0 %1569, %v458
        %v1571 = vpop.permute.xlu0 %1570
        %1573 = vmatprep.subr.mxu0 0.0
        %1574 = vmatpush1.msra.mxu0 0.0
        %1575 = vmatprep.subr.mxu0 0.0
        %1576 = vmatpush1.msra.mxu0 0.0
        %1577 = vmatprep.subr.mxu0 0.0
        %1578 = vmatpush1.msra.mxu0 0.0
        %1579 = vmatprep.subr.mxu0 0.0
        %1580 = vmatpush1.msra.mxu0 0.0
        %1581 = vmatprep.subr.mxu0 0.0
        %1582 = vmatpush1.msra.mxu0 0.0
        %1583 = vmatprep.subr.mxu0 0.0
        %1584 = vmatpush1.msra.mxu0 0.0
        %1585 = vmatprep.subr.mxu0 0.0
        %1586 = vmatpush1.msra.mxu0 0.0
        %1587 = vmatprep.subr.mxu0 0.0
        %1588 = vmatpush1.msra.mxu0 0.0
        %1589 = vmatprep.subr.mxu0 0.0
        %1590 = vmatpush1.msra.mxu0 0.0
        %1591 = vmatprep.subr.mxu0 0.0
        %1592 = vmatpush1.msra.mxu0 0.0
        %1593 = vmatprep.subr.mxu0 0.0
        %1594 = vmatpush1.msra.mxu0 0.0
        %1595 = vmatprep.subr.mxu0 0.0
        %1596 = vmatpush1.msra.mxu0 0.0
        %1597 = vmatprep.subr.mxu0 0.0
        %1598 = vmatpush1.msra.mxu0 %v1373
        %1599 = vmatprep.subr.mxu0 0.0
        %1600 = vmatpush1.msra.mxu0 %v1368
        %1601 = vmatprep.subr.mxu0 0.0
        %1602 = vmatpush1.msra.mxu0 %v1363
        %1603 = vmatprep.subr.mxu0 0.0
        %1604 = vmatpush1.msra.mxu0 %v1358
        %1605 = vmatprep.subr.mxu0 0.0
        %1606 = vmatpush2.msra.mxu0 0.0
        %1607 = vmatprep.subr.mxu0 0.0
        %1608 = vmatpush2.msra.mxu0 0.0
        %1609 = vmatprep.subr.mxu0 0.0
        %1610 = vmatpush2.msra.mxu0 0.0
        %1611 = vmatprep.subr.mxu0 0.0
        %1612 = vmatpush2.msra.mxu0 0.0
        %1613 = vmatprep.subr.mxu0 0.0
        %1614 = vmatpush2.msra.mxu0 0.0
        %1615 = vmatprep.subr.mxu0 0.0
        %1616 = vmatpush2.msra.mxu0 0.0
        %1617 = vmatprep.subr.mxu0 0.0
        %1618 = vmatpush2.msra.mxu0 0.0
        %1619 = vmatprep.subr.mxu0 0.0
        %1620 = vmatpush2.msra.mxu0 0.0
        %1621 = vmatprep.subr.mxu0 0.0
        %1622 = vmatpush2.msra.mxu0 0.0
        %1623 = vmatprep.subr.mxu0 0.0
        %1624 = vmatpush2.msra.mxu0 0.0
        %1625 = vmatprep.subr.mxu0 0.0
        %1626 = vmatpush2.msra.mxu0 0.0
        %1627 = vmatprep.subr.mxu0 0.0
        %1628 = vmatpush2.msra.mxu0 0.0
        %1629 = vmatprep.subr.mxu0 0.0
        %1630 = vmatpush2.msra.mxu0 0.0
        %1631 = vmatprep.subr.mxu0 0.0
        %1632 = vmatpush2.msra.mxu0 0.0
        %1633 = vmatprep.subr.mxu0 0.0
        %1634 = vmatpush2.msra.mxu0 0.0
        %1635 = vmatprep.subr.mxu0 0.0
        %1636 = vmatpush2.msra.mxu0 0.0
        %1637 = vmatprep.mubr.f32.mxu0 0.0
        %1638 = vmatmul.mubr.f32.gmra.mxu0 %v366
        %v1639 = vpop.f32.mrf.mxu0
        %v1640 = vadd.f32 %v1571, %v1639
        %v1641 = vpop.f32.mrf.mxu0
        %1642 = vdwg.mxu0
        %v1643 = vlaneseq
        %v1644 = vshrl.u32 %v1643, 7
        %v1645 = vsub.s32 1, %v1644
        %v1646 = vrot.slane %v1483, %v1645
        %v1647 = vadd.f32 %v1640, %v1646
        %v1648 = vtanh.pop %v1647
        %v1649 = vmul.f32 %v978, %v1648
        %v1650 = vadd.f32 %v1568, %v1649
        %1651 = vset.pattern.permute.xlu0 2
        %1652 = vperm.xlu0 %1651, %v458
        %v1653 = vpop.permute.xlu0 %1652
        %1655 = vmatprep.subr.mxu0 0.0
        %1656 = vmatpush1.msra.mxu0 0.0
        %1657 = vmatprep.subr.mxu0 0.0
        %1658 = vmatpush1.msra.mxu0 0.0
        %1659 = vmatprep.subr.mxu0 0.0
        %1660 = vmatpush1.msra.mxu0 0.0
        %1661 = vmatprep.subr.mxu0 0.0
        %1662 = vmatpush1.msra.mxu0 0.0
        %1663 = vmatprep.subr.mxu0 0.0
        %1664 = vmatpush1.msra.mxu0 0.0
        %1665 = vmatprep.subr.mxu0 0.0
        %1666 = vmatpush1.msra.mxu0 0.0
        %1667 = vmatprep.subr.mxu0 0.0
        %1668 = vmatpush1.msra.mxu0 0.0
        %1669 = vmatprep.subr.mxu0 0.0
        %1670 = vmatpush1.msra.mxu0 0.0
        %1671 = vmatprep.subr.mxu0 0.0
        %1672 = vmatpush1.msra.mxu0 0.0
        %1673 = vmatprep.subr.mxu0 0.0
        %1674 = vmatpush1.msra.mxu0 0.0
        %1675 = vmatprep.subr.mxu0 0.0
        %1676 = vmatpush1.msra.mxu0 0.0
        %1677 = vmatprep.subr.mxu0 0.0
        %1678 = vmatpush1.msra.mxu0 0.0
        %1679 = vmatprep.subr.mxu0 0.0
        %1680 = vmatpush1.msra.mxu0 %v1393
        %1681 = vmatprep.subr.mxu0 0.0
        %1682 = vmatpush1.msra.mxu0 %v1388
        %1683 = vmatprep.subr.mxu0 0.0
        %1684 = vmatpush1.msra.mxu0 %v1383
        %1685 = vmatprep.subr.mxu0 0.0
        %1686 = vmatpush1.msra.mxu0 %v1378
        %1687 = vmatprep.subr.mxu0 0.0
        %1688 = vmatpush2.msra.mxu0 0.0
        %1689 = vmatprep.subr.mxu0 0.0
        %1690 = vmatpush2.msra.mxu0 0.0
        %1691 = vmatprep.subr.mxu0 0.0
        %1692 = vmatpush2.msra.mxu0 0.0
        %1693 = vmatprep.subr.mxu0 0.0
        %1694 = vmatpush2.msra.mxu0 0.0
        %1695 = vmatprep.subr.mxu0 0.0
        %1696 = vmatpush2.msra.mxu0 0.0
        %1697 = vmatprep.subr.mxu0 0.0
        %1698 = vmatpush2.msra.mxu0 0.0
        %1699 = vmatprep.subr.mxu0 0.0
        %1700 = vmatpush2.msra.mxu0 0.0
        %1701 = vmatprep.subr.mxu0 0.0
        %1702 = vmatpush2.msra.mxu0 0.0
        %1703 = vmatprep.subr.mxu0 0.0
        %1704 = vmatpush2.msra.mxu0 0.0
        %1705 = vmatprep.subr.mxu0 0.0
        %1706 = vmatpush2.msra.mxu0 0.0
        %1707 = vmatprep.subr.mxu0 0.0
        %1708 = vmatpush2.msra.mxu0 0.0
        %1709 = vmatprep.subr.mxu0 0.0
        %1710 = vmatpush2.msra.mxu0 0.0
        %1711 = vmatprep.subr.mxu0 0.0
        %1712 = vmatpush2.msra.mxu0 0.0
        %1713 = vmatprep.subr.mxu0 0.0
        %1714 = vmatpush2.msra.mxu0 0.0
        %1715 = vmatprep.subr.mxu0 0.0
        %1716 = vmatpush2.msra.mxu0 0.0
        %1717 = vmatprep.subr.mxu0 0.0
        %1718 = vmatpush2.msra.mxu0 0.0
        %1719 = vmatprep.mubr.f32.mxu0 0.0
        %1720 = vmatmul.mubr.f32.gmra.mxu0 %v366
        %v1721 = vpop.f32.mrf.mxu0
        %v1722 = vadd.f32 %v1653, %v1721
        %v1723 = vpop.f32.mrf.mxu0
        %1724 = vdwg.mxu0
        %v1725 = vlaneseq
        %v1726 = vshrl.u32 %v1725, 7
        %v1727 = vsub.s32 2, %v1726
        %v1728 = vrot.slane %v1483, %v1727
        %v1729 = vadd.f32 %v1722, %v1728
        %v1730 = vtanh.pop %v1729
        %v1731 = vmul.f32 %v1062, %v1730
        %v1732 = vadd.f32 %v1650, %v1731
        %1733 = vset.pattern.permute.xlu0 3
        %1734 = vperm.xlu0 %1733, %v458
        %v1735 = vpop.permute.xlu0 %1734
        %1737 = vmatprep.subr.mxu0 0.0
        %1738 = vmatpush1.msra.mxu0 0.0
        %1739 = vmatprep.subr.mxu0 0.0
        %1740 = vmatpush1.msra.mxu0 0.0
        %1741 = vmatprep.subr.mxu0 0.0
        %1742 = vmatpush1.msra.mxu0 0.0
        %1743 = vmatprep.subr.mxu0 0.0
        %1744 = vmatpush1.msra.mxu0 0.0
        %1745 = vmatprep.subr.mxu0 0.0
        %1746 = vmatpush1.msra.mxu0 0.0
        %1747 = vmatprep.subr.mxu0 0.0
        %1748 = vmatpush1.msra.mxu0 0.0
        %1749 = vmatprep.subr.mxu0 0.0
        %1750 = vmatpush1.msra.mxu0 0.0
        %1751 = vmatprep.subr.mxu0 0.0
        %1752 = vmatpush1.msra.mxu0 0.0
        %1753 = vmatprep.subr.mxu0 0.0
        %1754 = vmatpush1.msra.mxu0 0.0
        %1755 = vmatprep.subr.mxu0 0.0
        %1756 = vmatpush1.msra.mxu0 0.0
        %1757 = vmatprep.subr.mxu0 0.0
        %1758 = vmatpush1.msra.mxu0 0.0
        %1759 = vmatprep.subr.mxu0 0.0
        %1760 = vmatpush1.msra.mxu0 0.0
        %1761 = vmatprep.subr.mxu0 0.0
        %1762 = vmatpush1.msra.mxu0 %v1413
        %1763 = vmatprep.subr.mxu0 0.0
        %1764 = vmatpush1.msra.mxu0 %v1408
        %1765 = vmatprep.subr.mxu0 0.0
        %1766 = vmatpush1.msra.mxu0 %v1403
        %1767 = vmatprep.subr.mxu0 0.0
        %1768 = vmatpush1.msra.mxu0 %v1398
        %1769 = vmatprep.subr.mxu0 0.0
        %1770 = vmatpush2.msra.mxu0 0.0
        %1771 = vmatprep.subr.mxu0 0.0
        %1772 = vmatpush2.msra.mxu0 0.0
        %1773 = vmatprep.subr.mxu0 0.0
        %1774 = vmatpush2.msra.mxu0 0.0
        %1775 = vmatprep.subr.mxu0 0.0
        %1776 = vmatpush2.msra.mxu0 0.0
        %1777 = vmatprep.subr.mxu0 0.0
        %1778 = vmatpush2.msra.mxu0 0.0
        %1779 = vmatprep.subr.mxu0 0.0
        %1780 = vmatpush2.msra.mxu0 0.0
        %1781 = vmatprep.subr.mxu0 0.0
        %1782 = vmatpush2.msra.mxu0 0.0
        %1783 = vmatprep.subr.mxu0 0.0
        %1784 = vmatpush2.msra.mxu0 0.0
        %1785 = vmatprep.subr.mxu0 0.0
        %1786 = vmatpush2.msra.mxu0 0.0
        %1787 = vmatprep.subr.mxu0 0.0
        %1788 = vmatpush2.msra.mxu0 0.0
        %1789 = vmatprep.subr.mxu0 0.0
        %1790 = vmatpush2.msra.mxu0 0.0
        %1791 = vmatprep.subr.mxu0 0.0
        %1792 = vmatpush2.msra.mxu0 0.0
        %1793 = vmatprep.subr.mxu0 0.0
        %1794 = vmatpush2.msra.mxu0 0.0
        %1795 = vmatprep.subr.mxu0 0.0
        %1796 = vmatpush2.msra.mxu0 0.0
        %1797 = vmatprep.subr.mxu0 0.0
        %1798 = vmatpush2.msra.mxu0 0.0
        %1799 = vmatprep.subr.mxu0 0.0
        %1800 = vmatpush2.msra.mxu0 0.0
        %1801 = vmatprep.mubr.f32.mxu0 0.0
        %1802 = vmatmul.mubr.f32.gmra.mxu0 %v366
        %v1803 = vpop.f32.mrf.mxu0
        %v1804 = vadd.f32 %v1735, %v1803
        %v1805 = vpop.f32.mrf.mxu0
        %1806 = vdwg.mxu0
        %v1807 = vlaneseq
        %v1808 = vshrl.u32 %v1807, 7
        %v1809 = vsub.s32 3, %v1808
        %v1810 = vrot.slane %v1483, %v1809
        %v1811 = vadd.f32 %v1804, %v1810
        %v1812 = vtanh.pop %v1811
        %v1813 = vmul.f32 %v1146, %v1812
        %v1814 = vadd.f32 %v1732, %v1813
        %v1815 = vsel %vm1149, %v1814, -inf
        %1816 = vmax.xlane.f32.xlu0 %v1815
        %v1817 = vpop.xlane.xlu0 %1816
        %v1818 = vrot.slane %v1817, 4
        %v1819 = vmax.f32 %v1817, %v1818
        %v1820 = vrot.slane %v1819, 2
        %v1821 = vmax.f32 %v1819, %v1820
        %v1822 = vrot.slane %v1821, 1
        %v1823 = vmax.f32 %v1821, %v1822
        %s1824 = vtos %v1823
        %v1825 = vstv %s1824
        %v1826 = vsub.f32 %v1814, %v1825
        %v1827 = vmul.f32 %v1826, 1.442695
        %v1828 = vpow.pop %v1827
        %v1829 = vsel %vm1149, %v1828, 0.0
        %1830 = vadd.xlane.f32.xlu0 %v1829
        %v1831 = vpop.xlane.xlu0 %1830
        %v1832 = vrcp.pop %v1831
        %v1833 = vmul.f32 %v1828, %v1832
        %v1834 = vsel %vm1149, %v1833, 0.0
        %v1835 = vrot.slane %v1834, 4
        %v1836 = vadd.f32 %v1834, %v1835
        %v1837 = vrot.slane %v1836, 2
        %v1838 = vadd.f32 %v1836, %v1837
        %v1839 = vrot.slane %v1838, 1
        %v1840 = vadd.f32 %v1838, %v1839
        %v1841 = vrot.slane %v1829, 4
        %v1842 = vadd.f32 %v1829, %v1841
        %v1843 = vrot.slane %v1842, 2
        %v1844 = vadd.f32 %v1842, %v1843
        %v1845 = vrot.slane %v1844, 1
        %v1846 = vadd.f32 %v1844, %v1845
        %v1847 = vrcp.pop %v1846
        %v1848 = vmul.f32 %v1828, %v1847
        %v1849 = vsel %vm1149, %v1848, 0.0
        %1850 = vadd.xlane.f32.xlu0 %v1849
        %v1851 = vpop.xlane.xlu0 %1850
        %v1853 = vsel %vm1149, %v1840, 0
        %1855 = vmatprep.subr.mxu0 0.0
        %1856 = vmatpush1.msra.mxu0 0.0
        %1857 = vmatprep.subr.mxu0 0.0
        %1858 = vmatpush1.msra.mxu0 0.0
        %1859 = vmatprep.subr.mxu0 0.0
        %1860 = vmatpush1.msra.mxu0 0.0
        %1861 = vmatprep.subr.mxu0 0.0
        %1862 = vmatpush1.msra.mxu0 0.0
        %1863 = vmatprep.subr.mxu0 0.0
        %1864 = vmatpush1.msra.mxu0 0.0
        %1865 = vmatprep.subr.mxu0 0.0
        %1866 = vmatpush1.msra.mxu0 0.0
        %1867 = vmatprep.subr.mxu0 0.0
        %1868 = vmatpush1.msra.mxu0 0.0
        %1869 = vmatprep.subr.mxu0 0.0
        %1870 = vmatpush1.msra.mxu0 0.0
        %1871 = vmatprep.subr.mxu0 0.0
        %1872 = vmatpush1.msra.mxu0 0.0
        %1873 = vmatprep.subr.mxu0 0.0
        %1874 = vmatpush1.msra.mxu0 0.0
        %1875 = vmatprep.subr.mxu0 0.0
        %1876 = vmatpush1.msra.mxu0 0.0
        %1877 = vmatprep.subr.mxu0 0.0
        %1878 = vmatpush1.msra.mxu0 0.0
        %1879 = vmatprep.subr.mxu0 0.0
        %1880 = vmatpush1.msra.mxu0 0.0
        %1881 = vmatprep.subr.mxu0 0.0
        %1882 = vmatpush1.msra.mxu0 0.0
        %1883 = vmatprep.subr.mxu0 0.0
        %1884 = vmatpush1.msra.mxu0 0.0
        %1885 = vmatprep.subr.mxu0 0.0
        %1886 = vmatpush1.msra.mxu0 %v343
        %1887 = vmatprep.subr.mxu0 0.0
        %1888 = vmatpush2.msra.mxu0 0.0
        %1889 = vmatprep.subr.mxu0 0.0
        %1890 = vmatpush2.msra.mxu0 0.0
        %1891 = vmatprep.subr.mxu0 0.0
        %1892 = vmatpush2.msra.mxu0 0.0
        %1893 = vmatprep.subr.mxu0 0.0
        %1894 = vmatpush2.msra.mxu0 0.0
        %1895 = vmatprep.subr.mxu0 0.0
        %1896 = vmatpush2.msra.mxu0 0.0
        %1897 = vmatprep.subr.mxu0 0.0
        %1898 = vmatpush2.msra.mxu0 0.0
        %1899 = vmatprep.subr.mxu0 0.0
        %1900 = vmatpush2.msra.mxu0 0.0
        %1901 = vmatprep.subr.mxu0 0.0
        %1902 = vmatpush2.msra.mxu0 0.0
        %1903 = vmatprep.subr.mxu0 0.0
        %1904 = vmatpush2.msra.mxu0 0.0
        %1905 = vmatprep.subr.mxu0 0.0
        %1906 = vmatpush2.msra.mxu0 0.0
        %1907 = vmatprep.subr.mxu0 0.0
        %1908 = vmatpush2.msra.mxu0 0.0
        %1909 = vmatprep.subr.mxu0 0.0
        %1910 = vmatpush2.msra.mxu0 0.0
        %1911 = vmatprep.subr.mxu0 0.0
        %1912 = vmatpush2.msra.mxu0 0.0
        %1913 = vmatprep.subr.mxu0 0.0
        %1914 = vmatpush2.msra.mxu0 0.0
        %1915 = vmatprep.subr.mxu0 0.0
        %1916 = vmatpush2.msra.mxu0 0.0
        %1917 = vmatprep.subr.mxu0 0.0
        %1918 = vmatpush2.msra.mxu0 0.0
        %1919 = vmatprep.mubr.f32.mxu0 0.0
        %1920 = vmatmul.mubr.f32.gmra.mxu0 %v1853
        %v1921 = vpop.f32.mrf.mxu0
        %v1922 = vadd.f32 0.0, %v1921
        %v1923 = vpop.f32.mrf.mxu0
        %1924 = vdwg.mxu0
        %v1925 = vmul.f32 %v1851, %v335
        %v1926 = vsel %vm361, %v1925, 0.0
        %v1927 = vrot.slane %v1926, 4
        %v1928 = vadd.f32 %v1926, %v1927
        %v1929 = vrot.slane %v1928, 2
        %v1930 = vadd.f32 %v1928, %v1929
        %v1931 = vrot.slane %v1930, 1
        %v1932 = vadd.f32 %v1930, %v1931
        %v1934 = vsel %vm361, %v344, 0
        %1936 = vmatprep.subr.mxu0 0.0
        %1937 = vmatpush1.xpose.msra.mxu0 0.0
        %1938 = vmatprep.subr.mxu0 0.0
        %1939 = vmatpush1.xpose.msra.mxu0 0.0
        %1940 = vmatprep.subr.mxu0 0.0
        %1941 = vmatpush1.xpose.msra.mxu0 0.0
        %1942 = vmatprep.subr.mxu0 0.0
        %1943 = vmatpush1.xpose.msra.mxu0 0.0
        %1944 = vmatprep.subr.mxu0 0.0
        %1945 = vmatpush1.xpose.msra.mxu0 0.0
        %1946 = vmatprep.subr.mxu0 0.0
        %1947 = vmatpush1.xpose.msra.mxu0 0.0
        %1948 = vmatprep.subr.mxu0 0.0
        %1949 = vmatpush1.xpose.msra.mxu0 0.0
        %1950 = vmatprep.subr.mxu0 0.0
        %1951 = vmatpush1.xpose.msra.mxu0 0.0
        %1952 = vmatprep.subr.mxu0 0.0
        %1953 = vmatpush1.xpose.msra.mxu0 0.0
        %1954 = vmatprep.subr.mxu0 0.0
        %1955 = vmatpush1.xpose.msra.mxu0 0.0
        %1956 = vmatprep.subr.mxu0 0.0
        %1957 = vmatpush1.xpose.msra.mxu0 0.0
        %1958 = vmatprep.subr.mxu0 0.0
        %1959 = vmatpush1.xpose.msra.mxu0 0.0
        %1960 = vmatprep.subr.mxu0 0.0
        %1961 = vmatpush1.xpose.msra.mxu0 0.0
        %1962 = vmatprep.subr.mxu0 0.0
        %1963 = vmatpush1.xpose.msra.mxu0 0.0
        %1964 = vmatprep.subr.mxu0 0.0
        %1965 = vmatpush1.xpose.msra.mxu0 0.0
        %1966 = vmatprep.subr.mxu0 0.0
        %1967 = vmatpush1.xpose.msra.mxu0 %v1934
        %1968 = vmatprep.subr.mxu0 0.0
        %1969 = vmatpush2.xpose.msra.mxu0 0.0
        %1970 = vmatprep.subr.mxu0 0.0
        %1971 = vmatpush2.xpose.msra.mxu0 0.0
        %1972 = vmatprep.subr.mxu0 0.0
        %1973 = vmatpush2.xpose.msra.mxu0 0.0
        %1974 = vmatprep.subr.mxu0 0.0
        %1975 = vmatpush2.xpose.msra.mxu0 0.0
        %1976 = vmatprep.subr.mxu0 0.0
        %1977 = vmatpush2.xpose.msra.mxu0 0.0
        %1978 = vmatprep.subr.mxu0 0.0
        %1979 = vmatpush2.xpose.msra.mxu0 0.0
        %1980 = vmatprep.subr.mxu0 0.0
        %1981 = vmatpush2.xpose.msra.mxu0 0.0
        %1982 = vmatprep.subr.mxu0 0.0
        %1983 = vmatpush2.xpose.msra.mxu0 0.0
        %1984 = vmatprep.subr.mxu0 0.0
        %1985 = vmatpush2.xpose.msra.mxu0 0.0
        %1986 = vmatprep.subr.mxu0 0.0
        %1987 = vmatpush2.xpose.msra.mxu0 0.0
        %1988 = vmatprep.subr.mxu0 0.0
        %1989 = vmatpush2.xpose.msra.mxu0 0.0
        %1990 = vmatprep.subr.mxu0 0.0
        %1991 = vmatpush2.xpose.msra.mxu0 0.0
        %1992 = vmatprep.subr.mxu0 0.0
        %1993 = vmatpush2.xpose.msra.mxu0 0.0
        %1994 = vmatprep.subr.mxu0 0.0
        %1995 = vmatpush2.xpose.msra.mxu0 0.0
        %1996 = vmatprep.subr.mxu0 0.0
        %1997 = vmatpush2.xpose.msra.mxu0 0.0
        %1998 = vmatprep.subr.mxu0 0.0
        %1999 = vmatpush2.xpose.msra.mxu0 0.0
        %2000 = vmatprep.mubr.f32.mxu0 0.0
        %2001 = vmatmul.mubr.f32.gmra.mxu0 %v508
        %v2002 = vpop.f32.mrf.mxu0
        %v2003 = vadd.f32 0.0, %v2002
        %v2004 = vpop.f32.mrf.mxu0
        %2005 = vmatprep.mubr.f32.mxu0 0.0
        %2006 = vmatmul.mubr.f32.gmra.mxu0 %v511
        %v2007 = vpop.f32.mrf.mxu0
        %v2008 = vadd.f32 0.0, %v2007
        %v2009 = vpop.f32.mrf.mxu0
        %2010 = vmatprep.mubr.f32.mxu0 0.0
        %2011 = vmatmul.mubr.f32.gmra.mxu0 %v514
        %v2012 = vpop.f32.mrf.mxu0
        %v2013 = vadd.f32 0.0, %v2012
        %v2014 = vpop.f32.mrf.mxu0
        %2015 = vmatprep.mubr.f32.mxu0 0.0
        %2016 = vmatmul.mubr.f32.gmra.mxu0 %v517
        %v2017 = vpop.f32.mrf.mxu0
        %v2018 = vadd.f32 0.0, %v2017
        %v2019 = vpop.f32.mrf.mxu0
        %2020 = vmatprep.mubr.f32.mxu0 0.0
        %2021 = vmatmul.mubr.f32.gmra.mxu0 %v520
        %v2022 = vpop.f32.mrf.mxu0
        %v2023 = vadd.f32 0.0, %v2022
        %v2024 = vpop.f32.mrf.mxu0
        %2025 = vmatprep.mubr.f32.mxu0 0.0
        %2026 = vmatmul.mubr.f32.gmra.mxu0 %v523
        %v2027 = vpop.f32.mrf.mxu0
        %v2028 = vadd.f32 0.0, %v2027
        %v2029 = vpop.f32.mrf.mxu0
        %2030 = vmatprep.mubr.f32.mxu0 0.0
        %2031 = vmatmul.mubr.f32.gmra.mxu0 %v526
        %v2032 = vpop.f32.mrf.mxu0
        %v2033 = vadd.f32 0.0, %v2032
        %v2034 = vpop.f32.mrf.mxu0
        %2035 = vmatprep.mubr.f32.mxu0 0.0
        %2036 = vmatmul.mubr.f32.gmra.mxu0 %v529
        %v2037 = vpop.f32.mrf.mxu0
        %v2038 = vadd.f32 0.0, %v2037
        %v2039 = vpop.f32.mrf.mxu0
        %2040 = vmatprep.mubr.f32.mxu0 0.0
        %2041 = vmatmul.mubr.f32.gmra.mxu0 %v532
        %v2042 = vpop.f32.mrf.mxu0
        %v2043 = vadd.f32 0.0, %v2042
        %v2044 = vpop.f32.mrf.mxu0
        %2045 = vmatprep.mubr.f32.mxu0 0.0
        %2046 = vmatmul.mubr.f32.gmra.mxu0 %v535
        %v2047 = vpop.f32.mrf.mxu0
        %v2048 = vadd.f32 0.0, %v2047
        %v2049 = vpop.f32.mrf.mxu0
        %2050 = vmatprep.mubr.f32.mxu0 0.0
        %2051 = vmatmul.mubr.f32.gmra.mxu0 %v538
        %v2052 = vpop.f32.mrf.mxu0
        %v2053 = vadd.f32 0.0, %v2052
        %v2054 = vpop.f32.mrf.mxu0
        %2055 = vmatprep.mubr.f32.mxu0 0.0
        %2056 = vmatmul.mubr.f32.gmra.mxu0 %v541
        %v2057 = vpop.f32.mrf.mxu0
        %v2058 = vadd.f32 0.0, %v2057
        %v2059 = vpop.f32.mrf.mxu0
        %2060 = vmatprep.mubr.f32.mxu0 0.0
        %2061 = vmatmul.mubr.f32.gmra.mxu0 %v544
        %v2062 = vpop.f32.mrf.mxu0
        %v2063 = vadd.f32 0.0, %v2062
        %v2064 = vpop.f32.mrf.mxu0
        %2065 = vmatprep.mubr.f32.mxu0 0.0
        %2066 = vmatmul.mubr.f32.gmra.mxu0 %v547
        %v2067 = vpop.f32.mrf.mxu0
        %v2068 = vadd.f32 0.0, %v2067
        %v2069 = vpop.f32.mrf.mxu0
        %2070 = vmatprep.mubr.f32.mxu0 0.0
        %2071 = vmatmul.mubr.f32.gmra.mxu0 %v550
        %v2072 = vpop.f32.mrf.mxu0
        %v2073 = vadd.f32 0.0, %v2072
        %v2074 = vpop.f32.mrf.mxu0
        %2075 = vmatprep.mubr.f32.mxu0 0.0
        %2076 = vmatmul.mubr.f32.gmra.mxu0 %v553
        %v2077 = vpop.f32.mrf.mxu0
        %v2078 = vadd.f32 0.0, %v2077
        %v2079 = vpop.f32.mrf.mxu0
        %2080 = vdwg.mxu0
        %2081 = vmatprep.subr.mxu0 0.0
        %2082 = vmatpush1.xpose.msra.mxu0 0.0
        %2083 = vmatprep.subr.mxu0 0.0
        %2084 = vmatpush1.xpose.msra.mxu0 0.0
        %2085 = vmatprep.subr.mxu0 0.0
        %2086 = vmatpush1.xpose.msra.mxu0 0.0
        %2087 = vmatprep.subr.mxu0 0.0
        %2088 = vmatpush1.xpose.msra.mxu0 0.0
        %2089 = vmatprep.subr.mxu0 0.0
        %2090 = vmatpush1.xpose.msra.mxu0 0.0
        %2091 = vmatprep.subr.mxu0 0.0
        %2092 = vmatpush1.xpose.msra.mxu0 0.0
        %2093 = vmatprep.subr.mxu0 0.0
        %2094 = vmatpush1.xpose.msra.mxu0 0.0
        %2095 = vmatprep.subr.mxu0 0.0
        %2096 = vmatpush1.xpose.msra.mxu0 0.0
        %2097 = vmatprep.subr.mxu0 0.0
        %2098 = vmatpush1.xpose.msra.mxu0 0.0
        %2099 = vmatprep.subr.mxu0 0.0
        %2100 = vmatpush1.xpose.msra.mxu0 0.0
        %2101 = vmatprep.subr.mxu0 0.0
        %2102 = vmatpush1.xpose.msra.mxu0 0.0
        %2103 = vmatprep.subr.mxu0 0.0
        %2104 = vmatpush1.xpose.msra.mxu0 0.0
        %2105 = vmatprep.subr.mxu0 0.0
        %2106 = vmatpush1.xpose.msra.mxu0 0.0
        %2107 = vmatprep.subr.mxu0 0.0
        %2108 = vmatpush1.xpose.msra.mxu0 0.0
        %2109 = vmatprep.subr.mxu0 0.0
        %2110 = vmatpush1.xpose.msra.mxu0 0.0
        %2111 = vmatprep.subr.mxu0 0.0
        %2112 = vmatpush1.xpose.msra.mxu0 %v1934
        %2113 = vmatprep.subr.mxu0 0.0
        %2114 = vmatpush2.xpose.msra.mxu0 0.0
        %2115 = vmatprep.subr.mxu0 0.0
        %2116 = vmatpush2.xpose.msra.mxu0 0.0
        %2117 = vmatprep.subr.mxu0 0.0
        %2118 = vmatpush2.xpose.msra.mxu0 0.0
        %2119 = vmatprep.subr.mxu0 0.0
        %2120 = vmatpush2.xpose.msra.mxu0 0.0
        %2121 = vmatprep.subr.mxu0 0.0
        %2122 = vmatpush2.xpose.msra.mxu0 0.0
        %2123 = vmatprep.subr.mxu0 0.0
        %2124 = vmatpush2.xpose.msra.mxu0 0.0
        %2125 = vmatprep.subr.mxu0 0.0
        %2126 = vmatpush2.xpose.msra.mxu0 0.0
        %2127 = vmatprep.subr.mxu0 0.0
        %2128 = vmatpush2.xpose.msra.mxu0 0.0
        %2129 = vmatprep.subr.mxu0 0.0
        %2130 = vmatpush2.xpose.msra.mxu0 0.0
        %2131 = vmatprep.subr.mxu0 0.0
        %2132 = vmatpush2.xpose.msra.mxu0 0.0
        %2133 = vmatprep.subr.mxu0 0.0
        %2134 = vmatpush2.xpose.msra.mxu0 0.0
        %2135 = vmatprep.subr.mxu0 0.0
        %2136 = vmatpush2.xpose.msra.mxu0 0.0
        %2137 = vmatprep.subr.mxu0 0.0
        %2138 = vmatpush2.xpose.msra.mxu0 0.0
        %2139 = vmatprep.subr.mxu0 0.0
        %2140 = vmatpush2.xpose.msra.mxu0 0.0
        %2141 = vmatprep.subr.mxu0 0.0
        %2142 = vmatpush2.xpose.msra.mxu0 0.0
        %2143 = vmatprep.subr.mxu0 0.0
        %2144 = vmatpush2.xpose.msra.mxu0 0.0
        %2145 = vmatprep.mubr.f32.mxu0 0.0
        %2146 = vmatmul.mubr.f32.gmra.mxu0 %v740
        %v2147 = vpop.f32.mrf.mxu0
        %v2148 = vadd.f32 0.0, %v2147
        %v2149 = vpop.f32.mrf.mxu0
        %2150 = vdwg.mxu0
        %2152 = vset.pattern.permute.xlu0 0
        %2153 = vperm.xlu0 %2152, %v463
        %v2154 = vpop.permute.xlu0 %2153
        %2156 = vmatprep.subr.mxu0 0.0
        %2157 = vmatpush1.msra.mxu0 0.0
        %2158 = vmatprep.subr.mxu0 0.0
        %2159 = vmatpush1.msra.mxu0 0.0
        %2160 = vmatprep.subr.mxu0 0.0
        %2161 = vmatpush1.msra.mxu0 0.0
        %2162 = vmatprep.subr.mxu0 0.0
        %2163 = vmatpush1.msra.mxu0 0.0
        %2164 = vmatprep.subr.mxu0 0.0
        %2165 = vmatpush1.msra.mxu0 0.0
        %2166 = vmatprep.subr.mxu0 0.0
        %2167 = vmatpush1.msra.mxu0 0.0
        %2168 = vmatprep.subr.mxu0 0.0
        %2169 = vmatpush1.msra.mxu0 0.0
        %2170 = vmatprep.subr.mxu0 0.0
        %2171 = vmatpush1.msra.mxu0 0.0
        %2172 = vmatprep.subr.mxu0 0.0
        %2173 = vmatpush1.msra.mxu0 0.0
        %2174 = vmatprep.subr.mxu0 0.0
        %2175 = vmatpush1.msra.mxu0 0.0
        %2176 = vmatprep.subr.mxu0 0.0
        %2177 = vmatpush1.msra.mxu0 0.0
        %2178 = vmatprep.subr.mxu0 0.0
        %2179 = vmatpush1.msra.mxu0 0.0
        %2180 = vmatprep.subr.mxu0 0.0
        %2181 = vmatpush1.msra.mxu0 %v2018
        %2182 = vmatprep.subr.mxu0 0.0
        %2183 = vmatpush1.msra.mxu0 %v2013
        %2184 = vmatprep.subr.mxu0 0.0
        %2185 = vmatpush1.msra.mxu0 %v2008
        %2186 = vmatprep.subr.mxu0 0.0
        %2187 = vmatpush1.msra.mxu0 %v2003
        %2188 = vmatprep.subr.mxu0 0.0
        %2189 = vmatpush2.msra.mxu0 0.0
        %2190 = vmatprep.subr.mxu0 0.0
        %2191 = vmatpush2.msra.mxu0 0.0
        %2192 = vmatprep.subr.mxu0 0.0
        %2193 = vmatpush2.msra.mxu0 0.0
        %2194 = vmatprep.subr.mxu0 0.0
        %2195 = vmatpush2.msra.mxu0 0.0
        %2196 = vmatprep.subr.mxu0 0.0
        %2197 = vmatpush2.msra.mxu0 0.0
        %2198 = vmatprep.subr.mxu0 0.0
        %2199 = vmatpush2.msra.mxu0 0.0
        %2200 = vmatprep.subr.mxu0 0.0
        %2201 = vmatpush2.msra.mxu0 0.0
        %2202 = vmatprep.subr.mxu0 0.0
        %2203 = vmatpush2.msra.mxu0 0.0
        %2204 = vmatprep.subr.mxu0 0.0
        %2205 = vmatpush2.msra.mxu0 0.0
        %2206 = vmatprep.subr.mxu0 0.0
        %2207 = vmatpush2.msra.mxu0 0.0
        %2208 = vmatprep.subr.mxu0 0.0
        %2209 = vmatpush2.msra.mxu0 0.0
        %2210 = vmatprep.subr.mxu0 0.0
        %2211 = vmatpush2.msra.mxu0 0.0
        %2212 = vmatprep.subr.mxu0 0.0
        %2213 = vmatpush2.msra.mxu0 0.0
        %2214 = vmatprep.subr.mxu0 0.0
        %2215 = vmatpush2.msra.mxu0 0.0
        %2216 = vmatprep.subr.mxu0 0.0
        %2217 = vmatpush2.msra.mxu0 0.0
        %2218 = vmatprep.subr.mxu0 0.0
        %2219 = vmatpush2.msra.mxu0 0.0
        %2220 = vmatprep.mubr.f32.mxu0 0.0
        %2221 = vmatmul.mubr.f32.gmra.mxu0 %v369
        %v2222 = vpop.f32.mrf.mxu0
        %v2223 = vadd.f32 %v2154, %v2222
        %v2224 = vpop.f32.mrf.mxu0
        %2225 = vdwg.mxu0
        %v2226 = vlaneseq
        %v2227 = vshrl.u32 %v2226, 7
        %v2228 = vsub.s32 0, %v2227
        %v2229 = vrot.slane %v2148, %v2228
        %v2230 = vadd.f32 %v2223, %v2229
        %v2231 = vtanh.pop %v2230
        %v2232 = vmul.f32 %v894, %v2231
        %v2233 = vadd.f32 %v2232, 0.0
        %2234 = vset.pattern.permute.xlu0 1
        %2235 = vperm.xlu0 %2234, %v463
        %v2236 = vpop.permute.xlu0 %2235
        %2238 = vmatprep.subr.mxu0 0.0
        %2239 = vmatpush1.msra.mxu0 0.0
        %2240 = vmatprep.subr.mxu0 0.0
        %2241 = vmatpush1.msra.mxu0 0.0
        %2242 = vmatprep.subr.mxu0 0.0
        %2243 = vmatpush1.msra.mxu0 0.0
        %2244 = vmatprep.subr.mxu0 0.0
        %2245 = vmatpush1.msra.mxu0 0.0
        %2246 = vmatprep.subr.mxu0 0.0
        %2247 = vmatpush1.msra.mxu0 0.0
        %2248 = vmatprep.subr.mxu0 0.0
        %2249 = vmatpush1.msra.mxu0 0.0
        %2250 = vmatprep.subr.mxu0 0.0
        %2251 = vmatpush1.msra.mxu0 0.0
        %2252 = vmatprep.subr.mxu0 0.0
        %2253 = vmatpush1.msra.mxu0 0.0
        %2254 = vmatprep.subr.mxu0 0.0
        %2255 = vmatpush1.msra.mxu0 0.0
        %2256 = vmatprep.subr.mxu0 0.0
        %2257 = vmatpush1.msra.mxu0 0.0
        %2258 = vmatprep.subr.mxu0 0.0
        %2259 = vmatpush1.msra.mxu0 0.0
        %2260 = vmatprep.subr.mxu0 0.0
        %2261 = vmatpush1.msra.mxu0 0.0
        %2262 = vmatprep.subr.mxu0 0.0
        %2263 = vmatpush1.msra.mxu0 %v2038
        %2264 = vmatprep.subr.mxu0 0.0
        %2265 = vmatpush1.msra.mxu0 %v2033
        %2266 = vmatprep.subr.mxu0 0.0
        %2267 = vmatpush1.msra.mxu0 %v2028
        %2268 = vmatprep.subr.mxu0 0.0
        %2269 = vmatpush1.msra.mxu0 %v2023
        %2270 = vmatprep.subr.mxu0 0.0
        %2271 = vmatpush2.msra.mxu0 0.0
        %2272 = vmatprep.subr.mxu0 0.0
        %2273 = vmatpush2.msra.mxu0 0.0
        %2274 = vmatprep.subr.mxu0 0.0
        %2275 = vmatpush2.msra.mxu0 0.0
        %2276 = vmatprep.subr.mxu0 0.0
        %2277 = vmatpush2.msra.mxu0 0.0
        %2278 = vmatprep.subr.mxu0 0.0
        %2279 = vmatpush2.msra.mxu0 0.0
        %2280 = vmatprep.subr.mxu0 0.0
        %2281 = vmatpush2.msra.mxu0 0.0
        %2282 = vmatprep.subr.mxu0 0.0
        %2283 = vmatpush2.msra.mxu0 0.0
        %2284 = vmatprep.subr.mxu0 0.0
        %2285 = vmatpush2.msra.mxu0 0.0
        %2286 = vmatprep.subr.mxu0 0.0
        %2287 = vmatpush2.msra.mxu0 0.0
        %2288 = vmatprep.subr.mxu0 0.0
        %2289 = vmatpush2.msra.mxu0 0.0
        %2290 = vmatprep.subr.mxu0 0.0
        %2291 = vmatpush2.msra.mxu0 0.0
        %2292 = vmatprep.subr.mxu0 0.0
        %2293 = vmatpush2.msra.mxu0 0.0
        %2294 = vmatprep.subr.mxu0 0.0
        %2295 = vmatpush2.msra.mxu0 0.0
        %2296 = vmatprep.subr.mxu0 0.0
        %2297 = vmatpush2.msra.mxu0 0.0
        %2298 = vmatprep.subr.mxu0 0.0
        %2299 = vmatpush2.msra.mxu0 0.0
        %2300 = vmatprep.subr.mxu0 0.0
        %2301 = vmatpush2.msra.mxu0 0.0
        %2302 = vmatprep.mubr.f32.mxu0 0.0
        %2303 = vmatmul.mubr.f32.gmra.mxu0 %v369
        %v2304 = vpop.f32.mrf.mxu0
        %v2305 = vadd.f32 %v2236, %v2304
        %v2306 = vpop.f32.mrf.mxu0
        %2307 = vdwg.mxu0
        %v2308 = vlaneseq
        %v2309 = vshrl.u32 %v2308, 7
        %v2310 = vsub.s32 1, %v2309
        %v2311 = vrot.slane %v2148, %v2310
        %v2312 = vadd.f32 %v2305, %v2311
        %v2313 = vtanh.pop %v2312
        %v2314 = vmul.f32 %v978, %v2313
        %v2315 = vadd.f32 %v2233, %v2314
        %2316 = vset.pattern.permute.xlu0 2
        %2317 = vperm.xlu0 %2316, %v463
        %v2318 = vpop.permute.xlu0 %2317
        %2320 = vmatprep.subr.mxu0 0.0
        %2321 = vmatpush1.msra.mxu0 0.0
        %2322 = vmatprep.subr.mxu0 0.0
        %2323 = vmatpush1.msra.mxu0 0.0
        %2324 = vmatprep.subr.mxu0 0.0
        %2325 = vmatpush1.msra.mxu0 0.0
        %2326 = vmatprep.subr.mxu0 0.0
        %2327 = vmatpush1.msra.mxu0 0.0
        %2328 = vmatprep.subr.mxu0 0.0
        %2329 = vmatpush1.msra.mxu0 0.0
        %2330 = vmatprep.subr.mxu0 0.0
        %2331 = vmatpush1.msra.mxu0 0.0
        %2332 = vmatprep.subr.mxu0 0.0
        %2333 = vmatpush1.msra.mxu0 0.0
        %2334 = vmatprep.subr.mxu0 0.0
        %2335 = vmatpush1.msra.mxu0 0.0
        %2336 = vmatprep.subr.mxu0 0.0
        %2337 = vmatpush1.msra.mxu0 0.0
        %2338 = vmatprep.subr.mxu0 0.0
        %2339 = vmatpush1.msra.mxu0 0.0
        %2340 = vmatprep.subr.mxu0 0.0
        %2341 = vmatpush1.msra.mxu0 0.0
        %2342 = vmatprep.subr.mxu0 0.0
        %2343 = vmatpush1.msra.mxu0 0.0
        %2344 = vmatprep.subr.mxu0 0.0
        %2345 = vmatpush1.msra.mxu0 %v2058
        %2346 = vmatprep.subr.mxu0 0.0
        %2347 = vmatpush1.msra.mxu0 %v2053
        %2348 = vmatprep.subr.mxu0 0.0
        %2349 = vmatpush1.msra.mxu0 %v2048
        %2350 = vmatprep.subr.mxu0 0.0
        %2351 = vmatpush1.msra.mxu0 %v2043
        %2352 = vmatprep.subr.mxu0 0.0
        %2353 = vmatpush2.msra.mxu0 0.0
        %2354 = vmatprep.subr.mxu0 0.0
        %2355 = vmatpush2.msra.mxu0 0.0
        %2356 = vmatprep.subr.mxu0 0.0
        %2357 = vmatpush2.msra.mxu0 0.0
        %2358 = vmatprep.subr.mxu0 0.0
        %2359 = vmatpush2.msra.mxu0 0.0
        %2360 = vmatprep.subr.mxu0 0.0
        %2361 = vmatpush2.msra.mxu0 0.0
        %2362 = vmatprep.subr.mxu0 0.0
        %2363 = vmatpush2.msra.mxu0 0.0
        %2364 = vmatprep.subr.mxu0 0.0
        %2365 = vmatpush2.msra.mxu0 0.0
        %2366 = vmatprep.subr.mxu0 0.0
        %2367 = vmatpush2.msra.mxu0 0.0
        %2368 = vmatprep.subr.mxu0 0.0
        %2369 = vmatpush2.msra.mxu0 0.0
        %2370 = vmatprep.subr.mxu0 0.0
        %2371 = vmatpush2.msra.mxu0 0.0
        %2372 = vmatprep.subr.mxu0 0.0
        %2373 = vmatpush2.msra.mxu0 0.0
        %2374 = vmatprep.subr.mxu0 0.0
        %2375 = vmatpush2.msra.mxu0 0.0
        %2376 = vmatprep.subr.mxu0 0.0
        %2377 = vmatpush2.msra.mxu0 0.0
        %2378 = vmatprep.subr.mxu0 0.0
        %2379 = vmatpush2.msra.mxu0 0.0
        %2380 = vmatprep.subr.mxu0 0.0
        %2381 = vmatpush2.msra.mxu0 0.0
        %2382 = vmatprep.subr.mxu0 0.0
        %2383 = vmatpush2.msra.mxu0 0.0
        %2384 = vmatprep.mubr.f32.mxu0 0.0
        %2385 = vmatmul.mubr.f32.gmra.mxu0 %v369
        %v2386 = vpop.f32.mrf.mxu0
        %v2387 = vadd.f32 %v2318, %v2386
        %v2388 = vpop.f32.mrf.mxu0
        %2389 = vdwg.mxu0
        %v2390 = vlaneseq
        %v2391 = vshrl.u32 %v2390, 7
        %v2392 = vsub.s32 2, %v2391
        %v2393 = vrot.slane %v2148, %v2392
        %v2394 = vadd.f32 %v2387, %v2393
        %v2395 = vtanh.pop %v2394
        %v2396 = vmul.f32 %v1062, %v2395
        %v2397 = vadd.f32 %v2315, %v2396
        %2398 = vset.pattern.permute.xlu0 3
        %2399 = vperm.xlu0 %2398, %v463
        %v2400 = vpop.permute.xlu0 %2399
        %2402 = vmatprep.subr.mxu0 0.0
        %2403 = vmatpush1.msra.mxu0 0.0
        %2404 = vmatprep.subr.mxu0 0.0
        %2405 = vmatpush1.msra.mxu0 0.0
        %2406 = vmatprep.subr.mxu0 0.0
        %2407 = vmatpush1.msra.mxu0 0.0
        %2408 = vmatprep.subr.mxu0 0.0
        %2409 = vmatpush1.msra.mxu0 0.0
        %2410 = vmatprep.subr.mxu0 0.0
        %2411 = vmatpush1.msra.mxu0 0.0
        %2412 = vmatprep.subr.mxu0 0.0
        %2413 = vmatpush1.msra.mxu0 0.0
        %2414 = vmatprep.subr.mxu0 0.0
        %2415 = vmatpush1.msra.mxu0 0.0
        %2416 = vmatprep.subr.mxu0 0.0
        %2417 = vmatpush1.msra.mxu0 0.0
        %2418 = vmatprep.subr.mxu0 0.0
        %2419 = vmatpush1.msra.mxu0 0.0
        %2420 = vmatprep.subr.mxu0 0.0
        %2421 = vmatpush1.msra.mxu0 0.0
        %2422 = vmatprep.subr.mxu0 0.0
        %2423 = vmatpush1.msra.mxu0 0.0
        %2424 = vmatprep.subr.mxu0 0.0
        %2425 = vmatpush1.msra.mxu0 0.0
        %2426 = vmatprep.subr.mxu0 0.0
        %2427 = vmatpush1.msra.mxu0 %v2078
        %2428 = vmatprep.subr.mxu0 0.0
        %2429 = vmatpush1.msra.mxu0 %v2073
        %2430 = vmatprep.subr.mxu0 0.0
        %2431 = vmatpush1.msra.mxu0 %v2068
        %2432 = vmatprep.subr.mxu0 0.0
        %2433 = vmatpush1.msra.mxu0 %v2063
        %2434 = vmatprep.subr.mxu0 0.0
        %2435 = vmatpush2.msra.mxu0 0.0
        %2436 = vmatprep.subr.mxu0 0.0
        %2437 = vmatpush2.msra.mxu0 0.0
        %2438 = vmatprep.subr.mxu0 0.0
        %2439 = vmatpush2.msra.mxu0 0.0
        %2440 = vmatprep.subr.mxu0 0.0
        %2441 = vmatpush2.msra.mxu0 0.0
        %2442 = vmatprep.subr.mxu0 0.0
        %2443 = vmatpush2.msra.mxu0 0.0
        %2444 = vmatprep.subr.mxu0 0.0
        %2445 = vmatpush2.msra.mxu0 0.0
        %2446 = vmatprep.subr.mxu0 0.0
        %2447 = vmatpush2.msra.mxu0 0.0
        %2448 = vmatprep.subr.mxu0 0.0
        %2449 = vmatpush2.msra.mxu0 0.0
        %2450 = vmatprep.subr.mxu0 0.0
        %2451 = vmatpush2.msra.mxu0 0.0
        %2452 = vmatprep.subr.mxu0 0.0
        %2453 = vmatpush2.msra.mxu0 0.0
        %2454 = vmatprep.subr.mxu0 0.0
        %2455 = vmatpush2.msra.mxu0 0.0
        %2456 = vmatprep.subr.mxu0 0.0
        %2457 = vmatpush2.msra.mxu0 0.0
        %2458 = vmatprep.subr.mxu0 0.0
        %2459 = vmatpush2.msra.mxu0 0.0
        %2460 = vmatprep.subr.mxu0 0.0
        %2461 = vmatpush2.msra.mxu0 0.0
        %2462 = vmatprep.subr.mxu0 0.0
        %2463 = vmatpush2.msra.mxu0 0.0
        %2464 = vmatprep.subr.mxu0 0.0
        %2465 = vmatpush2.msra.mxu0 0.0
        %2466 = vmatprep.mubr.f32.mxu0 0.0
        %2467 = vmatmul.mubr.f32.gmra.mxu0 %v369
        %v2468 = vpop.f32.mrf.mxu0
        %v2469 = vadd.f32 %v2400, %v2468
        %v2470 = vpop.f32.mrf.mxu0
        %2471 = vdwg.mxu0
        %v2472 = vlaneseq
        %v2473 = vshrl.u32 %v2472, 7
        %v2474 = vsub.s32 3, %v2473
        %v2475 = vrot.slane %v2148, %v2474
        %v2476 = vadd.f32 %v2469, %v2475
        %v2477 = vtanh.pop %v2476
        %v2478 = vmul.f32 %v1146, %v2477
        %v2479 = vadd.f32 %v2397, %v2478
        %v2480 = vsel %vm1149, %v2479, -inf
        %2481 = vmax.xlane.f32.xlu0 %v2480
        %v2482 = vpop.xlane.xlu0 %2481
        %v2483 = vrot.slane %v2482, 4
        %v2484 = vmax.f32 %v2482, %v2483
        %v2485 = vrot.slane %v2484, 2
        %v2486 = vmax.f32 %v2484, %v2485
        %v2487 = vrot.slane %v2486, 1
        %v2488 = vmax.f32 %v2486, %v2487
        %s2489 = vtos %v2488
        %v2490 = vstv %s2489
        %v2491 = vsub.f32 %v2479, %v2490
        %v2492 = vmul.f32 %v2491, 1.442695
        %v2493 = vpow.pop %v2492
        %v2494 = vsel %vm1149, %v2493, 0.0
        %2495 = vadd.xlane.f32.xlu0 %v2494
        %v2496 = vpop.xlane.xlu0 %2495
        %v2497 = vrcp.pop %v2496
        %v2498 = vmul.f32 %v2493, %v2497
        %v2499 = vsel %vm1149, %v2498, 0.0
        %v2500 = vrot.slane %v2499, 4
        %v2501 = vadd.f32 %v2499, %v2500
        %v2502 = vrot.slane %v2501, 2
        %v2503 = vadd.f32 %v2501, %v2502
        %v2504 = vrot.slane %v2503, 1
        %v2505 = vadd.f32 %v2503, %v2504
        %v2506 = vrot.slane %v2494, 4
        %v2507 = vadd.f32 %v2494, %v2506
        %v2508 = vrot.slane %v2507, 2
        %v2509 = vadd.f32 %v2507, %v2508
        %v2510 = vrot.slane %v2509, 1
        %v2511 = vadd.f32 %v2509, %v2510
        %v2512 = vrcp.pop %v2511
        %v2513 = vmul.f32 %v2493, %v2512
        %v2514 = vsel %vm1149, %v2513, 0.0
        %2515 = vadd.xlane.f32.xlu0 %v2514
        %v2516 = vpop.xlane.xlu0 %2515
        %v2518 = vsel %vm1149, %v2505, 0
        %2520 = vmatprep.subr.mxu0 0.0
        %2521 = vmatpush1.msra.mxu0 0.0
        %2522 = vmatprep.subr.mxu0 0.0
        %2523 = vmatpush1.msra.mxu0 0.0
        %2524 = vmatprep.subr.mxu0 0.0
        %2525 = vmatpush1.msra.mxu0 0.0
        %2526 = vmatprep.subr.mxu0 0.0
        %2527 = vmatpush1.msra.mxu0 0.0
        %2528 = vmatprep.subr.mxu0 0.0
        %2529 = vmatpush1.msra.mxu0 0.0
        %2530 = vmatprep.subr.mxu0 0.0
        %2531 = vmatpush1.msra.mxu0 0.0
        %2532 = vmatprep.subr.mxu0 0.0
        %2533 = vmatpush1.msra.mxu0 0.0
        %2534 = vmatprep.subr.mxu0 0.0
        %2535 = vmatpush1.msra.mxu0 0.0
        %2536 = vmatprep.subr.mxu0 0.0
        %2537 = vmatpush1.msra.mxu0 0.0
        %2538 = vmatprep.subr.mxu0 0.0
        %2539 = vmatpush1.msra.mxu0 0.0
        %2540 = vmatprep.subr.mxu0 0.0
        %2541 = vmatpush1.msra.mxu0 0.0
        %2542 = vmatprep.subr.mxu0 0.0
        %2543 = vmatpush1.msra.mxu0 0.0
        %2544 = vmatprep.subr.mxu0 0.0
        %2545 = vmatpush1.msra.mxu0 0.0
        %2546 = vmatprep.subr.mxu0 0.0
        %2547 = vmatpush1.msra.mxu0 0.0
        %2548 = vmatprep.subr.mxu0 0.0
        %2549 = vmatpush1.msra.mxu0 0.0
        %2550 = vmatprep.subr.mxu0 0.0
        %2551 = vmatpush1.msra.mxu0 %v344
        %2552 = vmatprep.subr.mxu0 0.0
        %2553 = vmatpush2.msra.mxu0 0.0
        %2554 = vmatprep.subr.mxu0 0.0
        %2555 = vmatpush2.msra.mxu0 0.0
        %2556 = vmatprep.subr.mxu0 0.0
        %2557 = vmatpush2.msra.mxu0 0.0
        %2558 = vmatprep.subr.mxu0 0.0
        %2559 = vmatpush2.msra.mxu0 0.0
        %2560 = vmatprep.subr.mxu0 0.0
        %2561 = vmatpush2.msra.mxu0 0.0
        %2562 = vmatprep.subr.mxu0 0.0
        %2563 = vmatpush2.msra.mxu0 0.0
        %2564 = vmatprep.subr.mxu0 0.0
        %2565 = vmatpush2.msra.mxu0 0.0
        %2566 = vmatprep.subr.mxu0 0.0
        %2567 = vmatpush2.msra.mxu0 0.0
        %2568 = vmatprep.subr.mxu0 0.0
        %2569 = vmatpush2.msra.mxu0 0.0
        %2570 = vmatprep.subr.mxu0 0.0
        %2571 = vmatpush2.msra.mxu0 0.0
        %2572 = vmatprep.subr.mxu0 0.0
        %2573 = vmatpush2.msra.mxu0 0.0
        %2574 = vmatprep.subr.mxu0 0.0
        %2575 = vmatpush2.msra.mxu0 0.0
        %2576 = vmatprep.subr.mxu0 0.0
        %2577 = vmatpush2.msra.mxu0 0.0
        %2578 = vmatprep.subr.mxu0 0.0
        %2579 = vmatpush2.msra.mxu0 0.0
        %2580 = vmatprep.subr.mxu0 0.0
        %2581 = vmatpush2.msra.mxu0 0.0
        %2582 = vmatprep.subr.mxu0 0.0
        %2583 = vmatpush2.msra.mxu0 0.0
        %2584 = vmatprep.mubr.f32.mxu0 0.0
        %2585 = vmatmul.mubr.f32.gmra.mxu0 %v2518
        %v2586 = vpop.f32.mrf.mxu0
        %v2587 = vadd.f32 0.0, %v2586
        %v2588 = vpop.f32.mrf.mxu0
        %2589 = vdwg.mxu0
        %v2590 = vmul.f32 %v2516, %v336
        %v2591 = vsel %vm361, %v2590, 0.0
        %v2592 = vrot.slane %v2591, 4
        %v2593 = vadd.f32 %v2591, %v2592
        %v2594 = vrot.slane %v2593, 2
        %v2595 = vadd.f32 %v2593, %v2594
        %v2596 = vrot.slane %v2595, 1
        %v2597 = vadd.f32 %v2595, %v2596
        %v2599 = vsel %vm361, %v345, 0
        %2601 = vmatprep.subr.mxu0 0.0
        %2602 = vmatpush1.xpose.msra.mxu0 0.0
        %2603 = vmatprep.subr.mxu0 0.0
        %2604 = vmatpush1.xpose.msra.mxu0 0.0
        %2605 = vmatprep.subr.mxu0 0.0
        %2606 = vmatpush1.xpose.msra.mxu0 0.0
        %2607 = vmatprep.subr.mxu0 0.0
        %2608 = vmatpush1.xpose.msra.mxu0 0.0
        %2609 = vmatprep.subr.mxu0 0.0
        %2610 = vmatpush1.xpose.msra.mxu0 0.0
        %2611 = vmatprep.subr.mxu0 0.0
        %2612 = vmatpush1.xpose.msra.mxu0 0.0
        %2613 = vmatprep.subr.mxu0 0.0
        %2614 = vmatpush1.xpose.msra.mxu0 0.0
        %2615 = vmatprep.subr.mxu0 0.0
        %2616 = vmatpush1.xpose.msra.mxu0 0.0
        %2617 = vmatprep.subr.mxu0 0.0
        %2618 = vmatpush1.xpose.msra.mxu0 0.0
        %2619 = vmatprep.subr.mxu0 0.0
        %2620 = vmatpush1.xpose.msra.mxu0 0.0
        %2621 = vmatprep.subr.mxu0 0.0
        %2622 = vmatpush1.xpose.msra.mxu0 0.0
        %2623 = vmatprep.subr.mxu0 0.0
        %2624 = vmatpush1.xpose.msra.mxu0 0.0
        %2625 = vmatprep.subr.mxu0 0.0
        %2626 = vmatpush1.xpose.msra.mxu0 0.0
        %2627 = vmatprep.subr.mxu0 0.0
        %2628 = vmatpush1.xpose.msra.mxu0 0.0
        %2629 = vmatprep.subr.mxu0 0.0
        %2630 = vmatpush1.xpose.msra.mxu0 0.0
        %2631 = vmatprep.subr.mxu0 0.0
        %2632 = vmatpush1.xpose.msra.mxu0 %v2599
        %2633 = vmatprep.subr.mxu0 0.0
        %2634 = vmatpush2.xpose.msra.mxu0 0.0
        %2635 = vmatprep.subr.mxu0 0.0
        %2636 = vmatpush2.xpose.msra.mxu0 0.0
        %2637 = vmatprep.subr.mxu0 0.0
        %2638 = vmatpush2.xpose.msra.mxu0 0.0
        %2639 = vmatprep.subr.mxu0 0.0
        %2640 = vmatpush2.xpose.msra.mxu0 0.0
        %2641 = vmatprep.subr.mxu0 0.0
        %2642 = vmatpush2.xpose.msra.mxu0 0.0
        %2643 = vmatprep.subr.mxu0 0.0
        %2644 = vmatpush2.xpose.msra.mxu0 0.0
        %2645 = vmatprep.subr.mxu0 0.0
        %2646 = vmatpush2.xpose.msra.mxu0 0.0
        %2647 = vmatprep.subr.mxu0 0.0
        %2648 = vmatpush2.xpose.msra.mxu0 0.0
        %2649 = vmatprep.subr.mxu0 0.0
        %2650 = vmatpush2.xpose.msra.mxu0 0.0
        %2651 = vmatprep.subr.mxu0 0.0
        %2652 = vmatpush2.xpose.msra.mxu0 0.0
        %2653 = vmatprep.subr.mxu0 0.0
        %2654 = vmatpush2.xpose.msra.mxu0 0.0
        %2655 = vmatprep.subr.mxu0 0.0
        %2656 = vmatpush2.xpose.msra.mxu0 0.0
        %2657 = vmatprep.subr.mxu0 0.0
        %2658 = vmatpush2.xpose.msra.mxu0 0.0
        %2659 = vmatprep.subr.mxu0 0.0
        %2660 = vmatpush2.xpose.msra.mxu0 0.0
        %2661 = vmatprep.subr.mxu0 0.0
        %2662 = vmatpush2.xpose.msra.mxu0 0.0
        %2663 = vmatprep.subr.mxu0 0.0
        %2664 = vmatpush2.xpose.msra.mxu0 0.0
        %2665 = vmatprep.mubr.f32.mxu0 0.0
        %2666 = vmatmul.mubr.f32.gmra.mxu0 %v508
        %v2667 = vpop.f32.mrf.mxu0
        %v2668 = vadd.f32 0.0, %v2667
        %v2669 = vpop.f32.mrf.mxu0
        %2670 = vmatprep.mubr.f32.mxu0 0.0
        %2671 = vmatmul.mubr.f32.gmra.mxu0 %v511
        %v2672 = vpop.f32.mrf.mxu0
        %v2673 = vadd.f32 0.0, %v2672
        %v2674 = vpop.f32.mrf.mxu0
        %2675 = vmatprep.mubr.f32.mxu0 0.0
        %2676 = vmatmul.mubr.f32.gmra.mxu0 %v514
        %v2677 = vpop.f32.mrf.mxu0
        %v2678 = vadd.f32 0.0, %v2677
        %v2679 = vpop.f32.mrf.mxu0
        %2680 = vmatprep.mubr.f32.mxu0 0.0
        %2681 = vmatmul.mubr.f32.gmra.mxu0 %v517
        %v2682 = vpop.f32.mrf.mxu0
        %v2683 = vadd.f32 0.0, %v2682
        %v2684 = vpop.f32.mrf.mxu0
        %2685 = vmatprep.mubr.f32.mxu0 0.0
        %2686 = vmatmul.mubr.f32.gmra.mxu0 %v520
        %v2687 = vpop.f32.mrf.mxu0
        %v2688 = vadd.f32 0.0, %v2687
        %v2689 = vpop.f32.mrf.mxu0
        %2690 = vmatprep.mubr.f32.mxu0 0.0
        %2691 = vmatmul.mubr.f32.gmra.mxu0 %v523
        %v2692 = vpop.f32.mrf.mxu0
        %v2693 = vadd.f32 0.0, %v2692
        %v2694 = vpop.f32.mrf.mxu0
        %2695 = vmatprep.mubr.f32.mxu0 0.0
        %2696 = vmatmul.mubr.f32.gmra.mxu0 %v526
        %v2697 = vpop.f32.mrf.mxu0
        %v2698 = vadd.f32 0.0, %v2697
        %v2699 = vpop.f32.mrf.mxu0
        %2700 = vmatprep.mubr.f32.mxu0 0.0
        %2701 = vmatmul.mubr.f32.gmra.mxu0 %v529
        %v2702 = vpop.f32.mrf.mxu0
        %v2703 = vadd.f32 0.0, %v2702
        %v2704 = vpop.f32.mrf.mxu0
        %2705 = vmatprep.mubr.f32.mxu0 0.0
        %2706 = vmatmul.mubr.f32.gmra.mxu0 %v532
        %v2707 = vpop.f32.mrf.mxu0
        %v2708 = vadd.f32 0.0, %v2707
        %v2709 = vpop.f32.mrf.mxu0
        %2710 = vmatprep.mubr.f32.mxu0 0.0
        %2711 = vmatmul.mubr.f32.gmra.mxu0 %v535
        %v2712 = vpop.f32.mrf.mxu0
        %v2713 = vadd.f32 0.0, %v2712
        %v2714 = vpop.f32.mrf.mxu0
        %2715 = vmatprep.mubr.f32.mxu0 0.0
        %2716 = vmatmul.mubr.f32.gmra.mxu0 %v538
        %v2717 = vpop.f32.mrf.mxu0
        %v2718 = vadd.f32 0.0, %v2717
        %v2719 = vpop.f32.mrf.mxu0
        %2720 = vmatprep.mubr.f32.mxu0 0.0
        %2721 = vmatmul.mubr.f32.gmra.mxu0 %v541
        %v2722 = vpop.f32.mrf.mxu0
        %v2723 = vadd.f32 0.0, %v2722
        %v2724 = vpop.f32.mrf.mxu0
        %2725 = vmatprep.mubr.f32.mxu0 0.0
        %2726 = vmatmul.mubr.f32.gmra.mxu0 %v544
        %v2727 = vpop.f32.mrf.mxu0
        %v2728 = vadd.f32 0.0, %v2727
        %v2729 = vpop.f32.mrf.mxu0
        %2730 = vmatprep.mubr.f32.mxu0 0.0
        %2731 = vmatmul.mubr.f32.gmra.mxu0 %v547
        %v2732 = vpop.f32.mrf.mxu0
        %v2733 = vadd.f32 0.0, %v2732
        %v2734 = vpop.f32.mrf.mxu0
        %2735 = vmatprep.mubr.f32.mxu0 0.0
        %2736 = vmatmul.mubr.f32.gmra.mxu0 %v550
        %v2737 = vpop.f32.mrf.mxu0
        %v2738 = vadd.f32 0.0, %v2737
        %v2739 = vpop.f32.mrf.mxu0
        %2740 = vmatprep.mubr.f32.mxu0 0.0
        %2741 = vmatmul.mubr.f32.gmra.mxu0 %v553
        %v2742 = vpop.f32.mrf.mxu0
        %v2743 = vadd.f32 0.0, %v2742
        %v2744 = vpop.f32.mrf.mxu0
        %2745 = vdwg.mxu0
        %2746 = vmatprep.subr.mxu0 0.0
        %2747 = vmatpush1.xpose.msra.mxu0 0.0
        %2748 = vmatprep.subr.mxu0 0.0
        %2749 = vmatpush1.xpose.msra.mxu0 0.0
        %2750 = vmatprep.subr.mxu0 0.0
        %2751 = vmatpush1.xpose.msra.mxu0 0.0
        %2752 = vmatprep.subr.mxu0 0.0
        %2753 = vmatpush1.xpose.msra.mxu0 0.0
        %2754 = vmatprep.subr.mxu0 0.0
        %2755 = vmatpush1.xpose.msra.mxu0 0.0
        %2756 = vmatprep.subr.mxu0 0.0
        %2757 = vmatpush1.xpose.msra.mxu0 0.0
        %2758 = vmatprep.subr.mxu0 0.0
        %2759 = vmatpush1.xpose.msra.mxu0 0.0
        %2760 = vmatprep.subr.mxu0 0.0
        %2761 = vmatpush1.xpose.msra.mxu0 0.0
        %2762 = vmatprep.subr.mxu0 0.0
        %2763 = vmatpush1.xpose.msra.mxu0 0.0
        %2764 = vmatprep.subr.mxu0 0.0
        %2765 = vmatpush1.xpose.msra.mxu0 0.0
        %2766 = vmatprep.subr.mxu0 0.0
        %2767 = vmatpush1.xpose.msra.mxu0 0.0
        %2768 = vmatprep.subr.mxu0 0.0
        %2769 = vmatpush1.xpose.msra.mxu0 0.0
        %2770 = vmatprep.subr.mxu0 0.0
        %2771 = vmatpush1.xpose.msra.mxu0 0.0
        %2772 = vmatprep.subr.mxu0 0.0
        %2773 = vmatpush1.xpose.msra.mxu0 0.0
        %2774 = vmatprep.subr.mxu0 0.0
        %2775 = vmatpush1.xpose.msra.mxu0 0.0
        %2776 = vmatprep.subr.mxu0 0.0
        %2777 = vmatpush1.xpose.msra.mxu0 %v2599
        %2778 = vmatprep.subr.mxu0 0.0
        %2779 = vmatpush2.xpose.msra.mxu0 0.0
        %2780 = vmatprep.subr.mxu0 0.0
        %2781 = vmatpush2.xpose.msra.mxu0 0.0
        %2782 = vmatprep.subr.mxu0 0.0
        %2783 = vmatpush2.xpose.msra.mxu0 0.0
        %2784 = vmatprep.subr.mxu0 0.0
        %2785 = vmatpush2.xpose.msra.mxu0 0.0
        %2786 = vmatprep.subr.mxu0 0.0
        %2787 = vmatpush2.xpose.msra.mxu0 0.0
        %2788 = vmatprep.subr.mxu0 0.0
        %2789 = vmatpush2.xpose.msra.mxu0 0.0
        %2790 = vmatprep.subr.mxu0 0.0
        %2791 = vmatpush2.xpose.msra.mxu0 0.0
        %2792 = vmatprep.subr.mxu0 0.0
        %2793 = vmatpush2.xpose.msra.mxu0 0.0
        %2794 = vmatprep.subr.mxu0 0.0
        %2795 = vmatpush2.xpose.msra.mxu0 0.0
        %2796 = vmatprep.subr.mxu0 0.0
        %2797 = vmatpush2.xpose.msra.mxu0 0.0
        %2798 = vmatprep.subr.mxu0 0.0
        %2799 = vmatpush2.xpose.msra.mxu0 0.0
        %2800 = vmatprep.subr.mxu0 0.0
        %2801 = vmatpush2.xpose.msra.mxu0 0.0
        %2802 = vmatprep.subr.mxu0 0.0
        %2803 = vmatpush2.xpose.msra.mxu0 0.0
        %2804 = vmatprep.subr.mxu0 0.0
        %2805 = vmatpush2.xpose.msra.mxu0 0.0
        %2806 = vmatprep.subr.mxu0 0.0
        %2807 = vmatpush2.xpose.msra.mxu0 0.0
        %2808 = vmatprep.subr.mxu0 0.0
        %2809 = vmatpush2.xpose.msra.mxu0 0.0
        %2810 = vmatprep.mubr.f32.mxu0 0.0
        %2811 = vmatmul.mubr.f32.gmra.mxu0 %v740
        %v2812 = vpop.f32.mrf.mxu0
        %v2813 = vadd.f32 0.0, %v2812
        %v2814 = vpop.f32.mrf.mxu0
        %2815 = vdwg.mxu0
        %2817 = vset.pattern.permute.xlu0 0
        %2818 = vperm.xlu0 %2817, %v468
        %v2819 = vpop.permute.xlu0 %2818
        %2821 = vmatprep.subr.mxu0 0.0
        %2822 = vmatpush1.msra.mxu0 0.0
        %2823 = vmatprep.subr.mxu0 0.0
        %2824 = vmatpush1.msra.mxu0 0.0
        %2825 = vmatprep.subr.mxu0 0.0
        %2826 = vmatpush1.msra.mxu0 0.0
        %2827 = vmatprep.subr.mxu0 0.0
        %2828 = vmatpush1.msra.mxu0 0.0
        %2829 = vmatprep.subr.mxu0 0.0
        %2830 = vmatpush1.msra.mxu0 0.0
        %2831 = vmatprep.subr.mxu0 0.0
        %2832 = vmatpush1.msra.mxu0 0.0
        %2833 = vmatprep.subr.mxu0 0.0
        %2834 = vmatpush1.msra.mxu0 0.0
        %2835 = vmatprep.subr.mxu0 0.0
        %2836 = vmatpush1.msra.mxu0 0.0
        %2837 = vmatprep.subr.mxu0 0.0
        %2838 = vmatpush1.msra.mxu0 0.0
        %2839 = vmatprep.subr.mxu0 0.0
        %2840 = vmatpush1.msra.mxu0 0.0
        %2841 = vmatprep.subr.mxu0 0.0
        %2842 = vmatpush1.msra.mxu0 0.0
        %2843 = vmatprep.subr.mxu0 0.0
        %2844 = vmatpush1.msra.mxu0 0.0
        %2845 = vmatprep.subr.mxu0 0.0
        %2846 = vmatpush1.msra.mxu0 %v2683
        %2847 = vmatprep.subr.mxu0 0.0
        %2848 = vmatpush1.msra.mxu0 %v2678
        %2849 = vmatprep.subr.mxu0 0.0
        %2850 = vmatpush1.msra.mxu0 %v2673
        %2851 = vmatprep.subr.mxu0 0.0
        %2852 = vmatpush1.msra.mxu0 %v2668
        %2853 = vmatprep.subr.mxu0 0.0
        %2854 = vmatpush2.msra.mxu0 0.0
        %2855 = vmatprep.subr.mxu0 0.0
        %2856 = vmatpush2.msra.mxu0 0.0
        %2857 = vmatprep.subr.mxu0 0.0
        %2858 = vmatpush2.msra.mxu0 0.0
        %2859 = vmatprep.subr.mxu0 0.0
        %2860 = vmatpush2.msra.mxu0 0.0
        %2861 = vmatprep.subr.mxu0 0.0
        %2862 = vmatpush2.msra.mxu0 0.0
        %2863 = vmatprep.subr.mxu0 0.0
        %2864 = vmatpush2.msra.mxu0 0.0
        %2865 = vmatprep.subr.mxu0 0.0
        %2866 = vmatpush2.msra.mxu0 0.0
        %2867 = vmatprep.subr.mxu0 0.0
        %2868 = vmatpush2.msra.mxu0 0.0
        %2869 = vmatprep.subr.mxu0 0.0
        %2870 = vmatpush2.msra.mxu0 0.0
        %2871 = vmatprep.subr.mxu0 0.0
        %2872 = vmatpush2.msra.mxu0 0.0
        %2873 = vmatprep.subr.mxu0 0.0
        %2874 = vmatpush2.msra.mxu0 0.0
        %2875 = vmatprep.subr.mxu0 0.0
        %2876 = vmatpush2.msra.mxu0 0.0
        %2877 = vmatprep.subr.mxu0 0.0
        %2878 = vmatpush2.msra.mxu0 0.0
        %2879 = vmatprep.subr.mxu0 0.0
        %2880 = vmatpush2.msra.mxu0 0.0
        %2881 = vmatprep.subr.mxu0 0.0
        %2882 = vmatpush2.msra.mxu0 0.0
        %2883 = vmatprep.subr.mxu0 0.0
        %2884 = vmatpush2.msra.mxu0 0.0
        %2885 = vmatprep.mubr.f32.mxu0 0.0
        %2886 = vmatmul.mubr.f32.gmra.mxu0 %v372
        %v2887 = vpop.f32.mrf.mxu0
        %v2888 = vadd.f32 %v2819, %v2887
        %v2889 = vpop.f32.mrf.mxu0
        %2890 = vdwg.mxu0
        %v2891 = vlaneseq
        %v2892 = vshrl.u32 %v2891, 7
        %v2893 = vsub.s32 0, %v2892
        %v2894 = vrot.slane %v2813, %v2893
        %v2895 = vadd.f32 %v2888, %v2894
        %v2896 = vtanh.pop %v2895
        %v2897 = vmul.f32 %v894, %v2896
        %v2898 = vadd.f32 %v2897, 0.0
        %2899 = vset.pattern.permute.xlu0 1
        %2900 = vperm.xlu0 %2899, %v468
        %v2901 = vpop.permute.xlu0 %2900
        %2903 = vmatprep.subr.mxu0 0.0
        %2904 = vmatpush1.msra.mxu0 0.0
        %2905 = vmatprep.subr.mxu0 0.0
        %2906 = vmatpush1.msra.mxu0 0.0
        %2907 = vmatprep.subr.mxu0 0.0
        %2908 = vmatpush1.msra.mxu0 0.0
        %2909 = vmatprep.subr.mxu0 0.0
        %2910 = vmatpush1.msra.mxu0 0.0
        %2911 = vmatprep.subr.mxu0 0.0
        %2912 = vmatpush1.msra.mxu0 0.0
        %2913 = vmatprep.subr.mxu0 0.0
        %2914 = vmatpush1.msra.mxu0 0.0
        %2915 = vmatprep.subr.mxu0 0.0
        %2916 = vmatpush1.msra.mxu0 0.0
        %2917 = vmatprep.subr.mxu0 0.0
        %2918 = vmatpush1.msra.mxu0 0.0
        %2919 = vmatprep.subr.mxu0 0.0
        %2920 = vmatpush1.msra.mxu0 0.0
        %2921 = vmatprep.subr.mxu0 0.0
        %2922 = vmatpush1.msra.mxu0 0.0
        %2923 = vmatprep.subr.mxu0 0.0
        %2924 = vmatpush1.msra.mxu0 0.0
        %2925 = vmatprep.subr.mxu0 0.0
        %2926 = vmatpush1.msra.mxu0 0.0
        %2927 = vmatprep.subr.mxu0 0.0
        %2928 = vmatpush1.msra.mxu0 %v2703
        %2929 = vmatprep.subr.mxu0 0.0
        %2930 = vmatpush1.msra.mxu0 %v2698
        %2931 = vmatprep.subr.mxu0 0.0
        %2932 = vmatpush1.msra.mxu0 %v2693
        %2933 = vmatprep.subr.mxu0 0.0
        %2934 = vmatpush1.msra.mxu0 %v2688
        %2935 = vmatprep.subr.mxu0 0.0
        %2936 = vmatpush2.msra.mxu0 0.0
        %2937 = vmatprep.subr.mxu0 0.0
        %2938 = vmatpush2.msra.mxu0 0.0
        %2939 = vmatprep.subr.mxu0 0.0
        %2940 = vmatpush2.msra.mxu0 0.0
        %2941 = vmatprep.subr.mxu0 0.0
        %2942 = vmatpush2.msra.mxu0 0.0
        %2943 = vmatprep.subr.mxu0 0.0
        %2944 = vmatpush2.msra.mxu0 0.0
        %2945 = vmatprep.subr.mxu0 0.0
        %2946 = vmatpush2.msra.mxu0 0.0
        %2947 = vmatprep.subr.mxu0 0.0
        %2948 = vmatpush2.msra.mxu0 0.0
        %2949 = vmatprep.subr.mxu0 0.0
        %2950 = vmatpush2.msra.mxu0 0.0
        %2951 = vmatprep.subr.mxu0 0.0
        %2952 = vmatpush2.msra.mxu0 0.0
        %2953 = vmatprep.subr.mxu0 0.0
        %2954 = vmatpush2.msra.mxu0 0.0
        %2955 = vmatprep.subr.mxu0 0.0
        %2956 = vmatpush2.msra.mxu0 0.0
        %2957 = vmatprep.subr.mxu0 0.0
        %2958 = vmatpush2.msra.mxu0 0.0
        %2959 = vmatprep.subr.mxu0 0.0
        %2960 = vmatpush2.msra.mxu0 0.0
        %2961 = vmatprep.subr.mxu0 0.0
        %2962 = vmatpush2.msra.mxu0 0.0
        %2963 = vmatprep.subr.mxu0 0.0
        %2964 = vmatpush2.msra.mxu0 0.0
        %2965 = vmatprep.subr.mxu0 0.0
        %2966 = vmatpush2.msra.mxu0 0.0
        %2967 = vmatprep.mubr.f32.mxu0 0.0
        %2968 = vmatmul.mubr.f32.gmra.mxu0 %v372
        %v2969 = vpop.f32.mrf.mxu0
        %v2970 = vadd.f32 %v2901, %v2969
        %v2971 = vpop.f32.mrf.mxu0
        %2972 = vdwg.mxu0
        %v2973 = vlaneseq
        %v2974 = vshrl.u32 %v2973, 7
        %v2975 = vsub.s32 1, %v2974
        %v2976 = vrot.slane %v2813, %v2975
        %v2977 = vadd.f32 %v2970, %v2976
        %v2978 = vtanh.pop %v2977
        %v2979 = vmul.f32 %v978, %v2978
        %v2980 = vadd.f32 %v2898, %v2979
        %2981 = vset.pattern.permute.xlu0 2
        %2982 = vperm.xlu0 %2981, %v468
        %v2983 = vpop.permute.xlu0 %2982
        %2985 = vmatprep.subr.mxu0 0.0
        %2986 = vmatpush1.msra.mxu0 0.0
        %2987 = vmatprep.subr.mxu0 0.0
        %2988 = vmatpush1.msra.mxu0 0.0
        %2989 = vmatprep.subr.mxu0 0.0
        %2990 = vmatpush1.msra.mxu0 0.0
        %2991 = vmatprep.subr.mxu0 0.0
        %2992 = vmatpush1.msra.mxu0 0.0
        %2993 = vmatprep.subr.mxu0 0.0
        %2994 = vmatpush1.msra.mxu0 0.0
        %2995 = vmatprep.subr.mxu0 0.0
        %2996 = vmatpush1.msra.mxu0 0.0
        %2997 = vmatprep.subr.mxu0 0.0
        %2998 = vmatpush1.msra.mxu0 0.0
        %2999 = vmatprep.subr.mxu0 0.0
        %3000 = vmatpush1.msra.mxu0 0.0
        %3001 = vmatprep.subr.mxu0 0.0
        %3002 = vmatpush1.msra.mxu0 0.0
        %3003 = vmatprep.subr.mxu0 0.0
        %3004 = vmatpush1.msra.mxu0 0.0
        %3005 = vmatprep.subr.mxu0 0.0
        %3006 = vmatpush1.msra.mxu0 0.0
        %3007 = vmatprep.subr.mxu0 0.0
        %3008 = vmatpush1.msra.mxu0 0.0
        %3009 = vmatprep.subr.mxu0 0.0
        %3010 = vmatpush1.msra.mxu0 %v2723
        %3011 = vmatprep.subr.mxu0 0.0
        %3012 = vmatpush1.msra.mxu0 %v2718
        %3013 = vmatprep.subr.mxu0 0.0
        %3014 = vmatpush1.msra.mxu0 %v2713
        %3015 = vmatprep.subr.mxu0 0.0
        %3016 = vmatpush1.msra.mxu0 %v2708
        %3017 = vmatprep.subr.mxu0 0.0
        %3018 = vmatpush2.msra.mxu0 0.0
        %3019 = vmatprep.subr.mxu0 0.0
        %3020 = vmatpush2.msra.mxu0 0.0
        %3021 = vmatprep.subr.mxu0 0.0
        %3022 = vmatpush2.msra.mxu0 0.0
        %3023 = vmatprep.subr.mxu0 0.0
        %3024 = vmatpush2.msra.mxu0 0.0
        %3025 = vmatprep.subr.mxu0 0.0
        %3026 = vmatpush2.msra.mxu0 0.0
        %3027 = vmatprep.subr.mxu0 0.0
        %3028 = vmatpush2.msra.mxu0 0.0
        %3029 = vmatprep.subr.mxu0 0.0
        %3030 = vmatpush2.msra.mxu0 0.0
        %3031 = vmatprep.subr.mxu0 0.0
        %3032 = vmatpush2.msra.mxu0 0.0
        %3033 = vmatprep.subr.mxu0 0.0
        %3034 = vmatpush2.msra.mxu0 0.0
        %3035 = vmatprep.subr.mxu0 0.0
        %3036 = vmatpush2.msra.mxu0 0.0
        %3037 = vmatprep.subr.mxu0 0.0
        %3038 = vmatpush2.msra.mxu0 0.0
        %3039 = vmatprep.subr.mxu0 0.0
        %3040 = vmatpush2.msra.mxu0 0.0
        %3041 = vmatprep.subr.mxu0 0.0
        %3042 = vmatpush2.msra.mxu0 0.0
        %3043 = vmatprep.subr.mxu0 0.0
        %3044 = vmatpush2.msra.mxu0 0.0
        %3045 = vmatprep.subr.mxu0 0.0
        %3046 = vmatpush2.msra.mxu0 0.0
        %3047 = vmatprep.subr.mxu0 0.0
        %3048 = vmatpush2.msra.mxu0 0.0
        %3049 = vmatprep.mubr.f32.mxu0 0.0
        %3050 = vmatmul.mubr.f32.gmra.mxu0 %v372
        %v3051 = vpop.f32.mrf.mxu0
        %v3052 = vadd.f32 %v2983, %v3051
        %v3053 = vpop.f32.mrf.mxu0
        %3054 = vdwg.mxu0
        %v3055 = vlaneseq
        %v3056 = vshrl.u32 %v3055, 7
        %v3057 = vsub.s32 2, %v3056
        %v3058 = vrot.slane %v2813, %v3057
        %v3059 = vadd.f32 %v3052, %v3058
        %v3060 = vtanh.pop %v3059
        %v3061 = vmul.f32 %v1062, %v3060
        %v3062 = vadd.f32 %v2980, %v3061
        %3063 = vset.pattern.permute.xlu0 3
        %3064 = vperm.xlu0 %3063, %v468
        %v3065 = vpop.permute.xlu0 %3064
        %3067 = vmatprep.subr.mxu0 0.0
        %3068 = vmatpush1.msra.mxu0 0.0
        %3069 = vmatprep.subr.mxu0 0.0
        %3070 = vmatpush1.msra.mxu0 0.0
        %3071 = vmatprep.subr.mxu0 0.0
        %3072 = vmatpush1.msra.mxu0 0.0
        %3073 = vmatprep.subr.mxu0 0.0
        %3074 = vmatpush1.msra.mxu0 0.0
        %3075 = vmatprep.subr.mxu0 0.0
        %3076 = vmatpush1.msra.mxu0 0.0
        %3077 = vmatprep.subr.mxu0 0.0
        %3078 = vmatpush1.msra.mxu0 0.0
        %3079 = vmatprep.subr.mxu0 0.0
        %3080 = vmatpush1.msra.mxu0 0.0
        %3081 = vmatprep.subr.mxu0 0.0
        %3082 = vmatpush1.msra.mxu0 0.0
        %3083 = vmatprep.subr.mxu0 0.0
        %3084 = vmatpush1.msra.mxu0 0.0
        %3085 = vmatprep.subr.mxu0 0.0
        %3086 = vmatpush1.msra.mxu0 0.0
        %3087 = vmatprep.subr.mxu0 0.0
        %3088 = vmatpush1.msra.mxu0 0.0
        %3089 = vmatprep.subr.mxu0 0.0
        %3090 = vmatpush1.msra.mxu0 0.0
        %3091 = vmatprep.subr.mxu0 0.0
        %3092 = vmatpush1.msra.mxu0 %v2743
        %3093 = vmatprep.subr.mxu0 0.0
        %3094 = vmatpush1.msra.mxu0 %v2738
        %3095 = vmatprep.subr.mxu0 0.0
        %3096 = vmatpush1.msra.mxu0 %v2733
        %3097 = vmatprep.subr.mxu0 0.0
        %3098 = vmatpush1.msra.mxu0 %v2728
        %3099 = vmatprep.subr.mxu0 0.0
        %3100 = vmatpush2.msra.mxu0 0.0
        %3101 = vmatprep.subr.mxu0 0.0
        %3102 = vmatpush2.msra.mxu0 0.0
        %3103 = vmatprep.subr.mxu0 0.0
        %3104 = vmatpush2.msra.mxu0 0.0
        %3105 = vmatprep.subr.mxu0 0.0
        %3106 = vmatpush2.msra.mxu0 0.0
        %3107 = vmatprep.subr.mxu0 0.0
        %3108 = vmatpush2.msra.mxu0 0.0
        %3109 = vmatprep.subr.mxu0 0.0
        %3110 = vmatpush2.msra.mxu0 0.0
        %3111 = vmatprep.subr.mxu0 0.0
        %3112 = vmatpush2.msra.mxu0 0.0
        %3113 = vmatprep.subr.mxu0 0.0
        %3114 = vmatpush2.msra.mxu0 0.0
        %3115 = vmatprep.subr.mxu0 0.0
        %3116 = vmatpush2.msra.mxu0 0.0
        %3117 = vmatprep.subr.mxu0 0.0
        %3118 = vmatpush2.msra.mxu0 0.0
        %3119 = vmatprep.subr.mxu0 0.0
        %3120 = vmatpush2.msra.mxu0 0.0
        %3121 = vmatprep.subr.mxu0 0.0
        %3122 = vmatpush2.msra.mxu0 0.0
        %3123 = vmatprep.subr.mxu0 0.0
        %3124 = vmatpush2.msra.mxu0 0.0
        %3125 = vmatprep.subr.mxu0 0.0
        %3126 = vmatpush2.msra.mxu0 0.0
        %3127 = vmatprep.subr.mxu0 0.0
        %3128 = vmatpush2.msra.mxu0 0.0
        %3129 = vmatprep.subr.mxu0 0.0
        %3130 = vmatpush2.msra.mxu0 0.0
        %3131 = vmatprep.mubr.f32.mxu0 0.0
        %3132 = vmatmul.mubr.f32.gmra.mxu0 %v372
        %v3133 = vpop.f32.mrf.mxu0
        %v3134 = vadd.f32 %v3065, %v3133
        %v3135 = vpop.f32.mrf.mxu0
        %3136 = vdwg.mxu0
        %v3137 = vlaneseq
        %v3138 = vshrl.u32 %v3137, 7
        %v3139 = vsub.s32 3, %v3138
        %v3140 = vrot.slane %v2813, %v3139
        %v3141 = vadd.f32 %v3134, %v3140
        %v3142 = vtanh.pop %v3141
        %v3143 = vmul.f32 %v1146, %v3142
        %v3144 = vadd.f32 %v3062, %v3143
        %v3145 = vsel %vm1149, %v3144, -inf
        %3146 = vmax.xlane.f32.xlu0 %v3145
        %v3147 = vpop.xlane.xlu0 %3146
        %v3148 = vrot.slane %v3147, 4
        %v3149 = vmax.f32 %v3147, %v3148
        %v3150 = vrot.slane %v3149, 2
        %v3151 = vmax.f32 %v3149, %v3150
        %v3152 = vrot.slane %v3151, 1
        %v3153 = vmax.f32 %v3151, %v3152
        %s3154 = vtos %v3153
        %v3155 = vstv %s3154
        %v3156 = vsub.f32 %v3144, %v3155
        %v3157 = vmul.f32 %v3156, 1.442695
        %v3158 = vpow.pop %v3157
        %v3159 = vsel %vm1149, %v3158, 0.0
        %3160 = vadd.xlane.f32.xlu0 %v3159
        %v3161 = vpop.xlane.xlu0 %3160
        %v3162 = vrcp.pop %v3161
        %v3163 = vmul.f32 %v3158, %v3162
        %v3164 = vsel %vm1149, %v3163, 0.0
        %v3165 = vrot.slane %v3164, 4
        %v3166 = vadd.f32 %v3164, %v3165
        %v3167 = vrot.slane %v3166, 2
        %v3168 = vadd.f32 %v3166, %v3167
        %v3169 = vrot.slane %v3168, 1
        %v3170 = vadd.f32 %v3168, %v3169
        %v3171 = vrot.slane %v3159, 4
        %v3172 = vadd.f32 %v3159, %v3171
        %v3173 = vrot.slane %v3172, 2
        %v3174 = vadd.f32 %v3172, %v3173
        %v3175 = vrot.slane %v3174, 1
        %v3176 = vadd.f32 %v3174, %v3175
        %v3177 = vrcp.pop %v3176
        %v3178 = vmul.f32 %v3158, %v3177
        %v3179 = vsel %vm1149, %v3178, 0.0
        %3180 = vadd.xlane.f32.xlu0 %v3179
        %v3181 = vpop.xlane.xlu0 %3180
        %v3183 = vsel %vm1149, %v3170, 0
        %3185 = vmatprep.subr.mxu0 0.0
        %3186 = vmatpush1.msra.mxu0 0.0
        %3187 = vmatprep.subr.mxu0 0.0
        %3188 = vmatpush1.msra.mxu0 0.0
        %3189 = vmatprep.subr.mxu0 0.0
        %3190 = vmatpush1.msra.mxu0 0.0
        %3191 = vmatprep.subr.mxu0 0.0
        %3192 = vmatpush1.msra.mxu0 0.0
        %3193 = vmatprep.subr.mxu0 0.0
        %3194 = vmatpush1.msra.mxu0 0.0
        %3195 = vmatprep.subr.mxu0 0.0
        %3196 = vmatpush1.msra.mxu0 0.0
        %3197 = vmatprep.subr.mxu0 0.0
        %3198 = vmatpush1.msra.mxu0 0.0
        %3199 = vmatprep.subr.mxu0 0.0
        %3200 = vmatpush1.msra.mxu0 0.0
        %3201 = vmatprep.subr.mxu0 0.0
        %3202 = vmatpush1.msra.mxu0 0.0
        %3203 = vmatprep.subr.mxu0 0.0
        %3204 = vmatpush1.msra.mxu0 0.0
        %3205 = vmatprep.subr.mxu0 0.0
        %3206 = vmatpush1.msra.mxu0 0.0
        %3207 = vmatprep.subr.mxu0 0.0
        %3208 = vmatpush1.msra.mxu0 0.0
        %3209 = vmatprep.subr.mxu0 0.0
        %3210 = vmatpush1.msra.mxu0 0.0
        %3211 = vmatprep.subr.mxu0 0.0
        %3212 = vmatpush1.msra.mxu0 0.0
        %3213 = vmatprep.subr.mxu0 0.0
        %3214 = vmatpush1.msra.mxu0 0.0
        %3215 = vmatprep.subr.mxu0 0.0
        %3216 = vmatpush1.msra.mxu0 %v345
        %3217 = vmatprep.subr.mxu0 0.0
        %3218 = vmatpush2.msra.mxu0 0.0
        %3219 = vmatprep.subr.mxu0 0.0
        %3220 = vmatpush2.msra.mxu0 0.0
        %3221 = vmatprep.subr.mxu0 0.0
        %3222 = vmatpush2.msra.mxu0 0.0
        %3223 = vmatprep.subr.mxu0 0.0
        %3224 = vmatpush2.msra.mxu0 0.0
        %3225 = vmatprep.subr.mxu0 0.0
        %3226 = vmatpush2.msra.mxu0 0.0
        %3227 = vmatprep.subr.mxu0 0.0
        %3228 = vmatpush2.msra.mxu0 0.0
        %3229 = vmatprep.subr.mxu0 0.0
        %3230 = vmatpush2.msra.mxu0 0.0
        %3231 = vmatprep.subr.mxu0 0.0
        %3232 = vmatpush2.msra.mxu0 0.0
        %3233 = vmatprep.subr.mxu0 0.0
        %3234 = vmatpush2.msra.mxu0 0.0
        %3235 = vmatprep.subr.mxu0 0.0
        %3236 = vmatpush2.msra.mxu0 0.0
        %3237 = vmatprep.subr.mxu0 0.0
        %3238 = vmatpush2.msra.mxu0 0.0
        %3239 = vmatprep.subr.mxu0 0.0
        %3240 = vmatpush2.msra.mxu0 0.0
        %3241 = vmatprep.subr.mxu0 0.0
        %3242 = vmatpush2.msra.mxu0 0.0
        %3243 = vmatprep.subr.mxu0 0.0
        %3244 = vmatpush2.msra.mxu0 0.0
        %3245 = vmatprep.subr.mxu0 0.0
        %3246 = vmatpush2.msra.mxu0 0.0
        %3247 = vmatprep.subr.mxu0 0.0
        %3248 = vmatpush2.msra.mxu0 0.0
        %3249 = vmatprep.mubr.f32.mxu0 0.0
        %3250 = vmatmul.mubr.f32.gmra.mxu0 %v3183
        %v3251 = vpop.f32.mrf.mxu0
        %v3252 = vadd.f32 0.0, %v3251
        %v3253 = vpop.f32.mrf.mxu0
        %3254 = vdwg.mxu0
        %v3255 = vmul.f32 %v3181, %v337
        %v3256 = vsel %vm361, %v3255, 0.0
        %v3257 = vrot.slane %v3256, 4
        %v3258 = vadd.f32 %v3256, %v3257
        %v3259 = vrot.slane %v3258, 2
        %v3260 = vadd.f32 %v3258, %v3259
        %v3261 = vrot.slane %v3260, 1
        %v3262 = vadd.f32 %v3260, %v3261
        %v3264 = vsel %vm361, %v346, 0
        %3266 = vmatprep.subr.mxu0 0.0
        %3267 = vmatpush1.xpose.msra.mxu0 0.0
        %3268 = vmatprep.subr.mxu0 0.0
        %3269 = vmatpush1.xpose.msra.mxu0 0.0
        %3270 = vmatprep.subr.mxu0 0.0
        %3271 = vmatpush1.xpose.msra.mxu0 0.0
        %3272 = vmatprep.subr.mxu0 0.0
        %3273 = vmatpush1.xpose.msra.mxu0 0.0
        %3274 = vmatprep.subr.mxu0 0.0
        %3275 = vmatpush1.xpose.msra.mxu0 0.0
        %3276 = vmatprep.subr.mxu0 0.0
        %3277 = vmatpush1.xpose.msra.mxu0 0.0
        %3278 = vmatprep.subr.mxu0 0.0
        %3279 = vmatpush1.xpose.msra.mxu0 0.0
        %3280 = vmatprep.subr.mxu0 0.0
        %3281 = vmatpush1.xpose.msra.mxu0 0.0
        %3282 = vmatprep.subr.mxu0 0.0
        %3283 = vmatpush1.xpose.msra.mxu0 0.0
        %3284 = vmatprep.subr.mxu0 0.0
        %3285 = vmatpush1.xpose.msra.mxu0 0.0
        %3286 = vmatprep.subr.mxu0 0.0
        %3287 = vmatpush1.xpose.msra.mxu0 0.0
        %3288 = vmatprep.subr.mxu0 0.0
        %3289 = vmatpush1.xpose.msra.mxu0 0.0
        %3290 = vmatprep.subr.mxu0 0.0
        %3291 = vmatpush1.xpose.msra.mxu0 0.0
        %3292 = vmatprep.subr.mxu0 0.0
        %3293 = vmatpush1.xpose.msra.mxu0 0.0
        %3294 = vmatprep.subr.mxu0 0.0
        %3295 = vmatpush1.xpose.msra.mxu0 0.0
        %3296 = vmatprep.subr.mxu0 0.0
        %3297 = vmatpush1.xpose.msra.mxu0 %v3264
        %3298 = vmatprep.subr.mxu0 0.0
        %3299 = vmatpush2.xpose.msra.mxu0 0.0
        %3300 = vmatprep.subr.mxu0 0.0
        %3301 = vmatpush2.xpose.msra.mxu0 0.0
        %3302 = vmatprep.subr.mxu0 0.0
        %3303 = vmatpush2.xpose.msra.mxu0 0.0
        %3304 = vmatprep.subr.mxu0 0.0
        %3305 = vmatpush2.xpose.msra.mxu0 0.0
        %3306 = vmatprep.subr.mxu0 0.0
        %3307 = vmatpush2.xpose.msra.mxu0 0.0
        %3308 = vmatprep.subr.mxu0 0.0
        %3309 = vmatpush2.xpose.msra.mxu0 0.0
        %3310 = vmatprep.subr.mxu0 0.0
        %3311 = vmatpush2.xpose.msra.mxu0 0.0
        %3312 = vmatprep.subr.mxu0 0.0
        %3313 = vmatpush2.xpose.msra.mxu0 0.0
        %3314 = vmatprep.subr.mxu0 0.0
        %3315 = vmatpush2.xpose.msra.mxu0 0.0
        %3316 = vmatprep.subr.mxu0 0.0
        %3317 = vmatpush2.xpose.msra.mxu0 0.0
        %3318 = vmatprep.subr.mxu0 0.0
        %3319 = vmatpush2.xpose.msra.mxu0 0.0
        %3320 = vmatprep.subr.mxu0 0.0
        %3321 = vmatpush2.xpose.msra.mxu0 0.0
        %3322 = vmatprep.subr.mxu0 0.0
        %3323 = vmatpush2.xpose.msra.mxu0 0.0
        %3324 = vmatprep.subr.mxu0 0.0
        %3325 = vmatpush2.xpose.msra.mxu0 0.0
        %3326 = vmatprep.subr.mxu0 0.0
        %3327 = vmatpush2.xpose.msra.mxu0 0.0
        %3328 = vmatprep.subr.mxu0 0.0
        %3329 = vmatpush2.xpose.msra.mxu0 0.0
        %3330 = vmatprep.mubr.f32.mxu0 0.0
        %3331 = vmatmul.mubr.f32.gmra.mxu0 %v508
        %v3332 = vpop.f32.mrf.mxu0
        %v3333 = vadd.f32 0.0, %v3332
        %v3334 = vpop.f32.mrf.mxu0
        %3335 = vmatprep.mubr.f32.mxu0 0.0
        %3336 = vmatmul.mubr.f32.gmra.mxu0 %v511
        %v3337 = vpop.f32.mrf.mxu0
        %v3338 = vadd.f32 0.0, %v3337
        %v3339 = vpop.f32.mrf.mxu0
        %3340 = vmatprep.mubr.f32.mxu0 0.0
        %3341 = vmatmul.mubr.f32.gmra.mxu0 %v514
        %v3342 = vpop.f32.mrf.mxu0
        %v3343 = vadd.f32 0.0, %v3342
        %v3344 = vpop.f32.mrf.mxu0
        %3345 = vmatprep.mubr.f32.mxu0 0.0
        %3346 = vmatmul.mubr.f32.gmra.mxu0 %v517
        %v3347 = vpop.f32.mrf.mxu0
        %v3348 = vadd.f32 0.0, %v3347
        %v3349 = vpop.f32.mrf.mxu0
        %3350 = vmatprep.mubr.f32.mxu0 0.0
        %3351 = vmatmul.mubr.f32.gmra.mxu0 %v520
        %v3352 = vpop.f32.mrf.mxu0
        %v3353 = vadd.f32 0.0, %v3352
        %v3354 = vpop.f32.mrf.mxu0
        %3355 = vmatprep.mubr.f32.mxu0 0.0
        %3356 = vmatmul.mubr.f32.gmra.mxu0 %v523
        %v3357 = vpop.f32.mrf.mxu0
        %v3358 = vadd.f32 0.0, %v3357
        %v3359 = vpop.f32.mrf.mxu0
        %3360 = vmatprep.mubr.f32.mxu0 0.0
        %3361 = vmatmul.mubr.f32.gmra.mxu0 %v526
        %v3362 = vpop.f32.mrf.mxu0
        %v3363 = vadd.f32 0.0, %v3362
        %v3364 = vpop.f32.mrf.mxu0
        %3365 = vmatprep.mubr.f32.mxu0 0.0
        %3366 = vmatmul.mubr.f32.gmra.mxu0 %v529
        %v3367 = vpop.f32.mrf.mxu0
        %v3368 = vadd.f32 0.0, %v3367
        %v3369 = vpop.f32.mrf.mxu0
        %3370 = vmatprep.mubr.f32.mxu0 0.0
        %3371 = vmatmul.mubr.f32.gmra.mxu0 %v532
        %v3372 = vpop.f32.mrf.mxu0
        %v3373 = vadd.f32 0.0, %v3372
        %v3374 = vpop.f32.mrf.mxu0
        %3375 = vmatprep.mubr.f32.mxu0 0.0
        %3376 = vmatmul.mubr.f32.gmra.mxu0 %v535
        %v3377 = vpop.f32.mrf.mxu0
        %v3378 = vadd.f32 0.0, %v3377
        %v3379 = vpop.f32.mrf.mxu0
        %3380 = vmatprep.mubr.f32.mxu0 0.0
        %3381 = vmatmul.mubr.f32.gmra.mxu0 %v538
        %v3382 = vpop.f32.mrf.mxu0
        %v3383 = vadd.f32 0.0, %v3382
        %v3384 = vpop.f32.mrf.mxu0
        %3385 = vmatprep.mubr.f32.mxu0 0.0
        %3386 = vmatmul.mubr.f32.gmra.mxu0 %v541
        %v3387 = vpop.f32.mrf.mxu0
        %v3388 = vadd.f32 0.0, %v3387
        %v3389 = vpop.f32.mrf.mxu0
        %3390 = vmatprep.mubr.f32.mxu0 0.0
        %3391 = vmatmul.mubr.f32.gmra.mxu0 %v544
        %v3392 = vpop.f32.mrf.mxu0
        %v3393 = vadd.f32 0.0, %v3392
        %v3394 = vpop.f32.mrf.mxu0
        %3395 = vmatprep.mubr.f32.mxu0 0.0
        %3396 = vmatmul.mubr.f32.gmra.mxu0 %v547
        %v3397 = vpop.f32.mrf.mxu0
        %v3398 = vadd.f32 0.0, %v3397
        %v3399 = vpop.f32.mrf.mxu0
        %3400 = vmatprep.mubr.f32.mxu0 0.0
        %3401 = vmatmul.mubr.f32.gmra.mxu0 %v550
        %v3402 = vpop.f32.mrf.mxu0
        %v3403 = vadd.f32 0.0, %v3402
        %v3404 = vpop.f32.mrf.mxu0
        %3405 = vmatprep.mubr.f32.mxu0 0.0
        %3406 = vmatmul.mubr.f32.gmra.mxu0 %v553
        %v3407 = vpop.f32.mrf.mxu0
        %v3408 = vadd.f32 0.0, %v3407
        %v3409 = vpop.f32.mrf.mxu0
        %3410 = vdwg.mxu0
        %3411 = vmatprep.subr.mxu0 0.0
        %3412 = vmatpush1.xpose.msra.mxu0 0.0
        %3413 = vmatprep.subr.mxu0 0.0
        %3414 = vmatpush1.xpose.msra.mxu0 0.0
        %3415 = vmatprep.subr.mxu0 0.0
        %3416 = vmatpush1.xpose.msra.mxu0 0.0
        %3417 = vmatprep.subr.mxu0 0.0
        %3418 = vmatpush1.xpose.msra.mxu0 0.0
        %3419 = vmatprep.subr.mxu0 0.0
        %3420 = vmatpush1.xpose.msra.mxu0 0.0
        %3421 = vmatprep.subr.mxu0 0.0
        %3422 = vmatpush1.xpose.msra.mxu0 0.0
        %3423 = vmatprep.subr.mxu0 0.0
        %3424 = vmatpush1.xpose.msra.mxu0 0.0
        %3425 = vmatprep.subr.mxu0 0.0
        %3426 = vmatpush1.xpose.msra.mxu0 0.0
        %3427 = vmatprep.subr.mxu0 0.0
        %3428 = vmatpush1.xpose.msra.mxu0 0.0
        %3429 = vmatprep.subr.mxu0 0.0
        %3430 = vmatpush1.xpose.msra.mxu0 0.0
        %3431 = vmatprep.subr.mxu0 0.0
        %3432 = vmatpush1.xpose.msra.mxu0 0.0
        %3433 = vmatprep.subr.mxu0 0.0
        %3434 = vmatpush1.xpose.msra.mxu0 0.0
        %3435 = vmatprep.subr.mxu0 0.0
        %3436 = vmatpush1.xpose.msra.mxu0 0.0
        %3437 = vmatprep.subr.mxu0 0.0
        %3438 = vmatpush1.xpose.msra.mxu0 0.0
        %3439 = vmatprep.subr.mxu0 0.0
        %3440 = vmatpush1.xpose.msra.mxu0 0.0
        %3441 = vmatprep.subr.mxu0 0.0
        %3442 = vmatpush1.xpose.msra.mxu0 %v3264
        %3443 = vmatprep.subr.mxu0 0.0
        %3444 = vmatpush2.xpose.msra.mxu0 0.0
        %3445 = vmatprep.subr.mxu0 0.0
        %3446 = vmatpush2.xpose.msra.mxu0 0.0
        %3447 = vmatprep.subr.mxu0 0.0
        %3448 = vmatpush2.xpose.msra.mxu0 0.0
        %3449 = vmatprep.subr.mxu0 0.0
        %3450 = vmatpush2.xpose.msra.mxu0 0.0
        %3451 = vmatprep.subr.mxu0 0.0
        %3452 = vmatpush2.xpose.msra.mxu0 0.0
        %3453 = vmatprep.subr.mxu0 0.0
        %3454 = vmatpush2.xpose.msra.mxu0 0.0
        %3455 = vmatprep.subr.mxu0 0.0
        %3456 = vmatpush2.xpose.msra.mxu0 0.0
        %3457 = vmatprep.subr.mxu0 0.0
        %3458 = vmatpush2.xpose.msra.mxu0 0.0
        %3459 = vmatprep.subr.mxu0 0.0
        %3460 = vmatpush2.xpose.msra.mxu0 0.0
        %3461 = vmatprep.subr.mxu0 0.0
        %3462 = vmatpush2.xpose.msra.mxu0 0.0
        %3463 = vmatprep.subr.mxu0 0.0
        %3464 = vmatpush2.xpose.msra.mxu0 0.0
        %3465 = vmatprep.subr.mxu0 0.0
        %3466 = vmatpush2.xpose.msra.mxu0 0.0
        %3467 = vmatprep.subr.mxu0 0.0
        %3468 = vmatpush2.xpose.msra.mxu0 0.0
        %3469 = vmatprep.subr.mxu0 0.0
        %3470 = vmatpush2.xpose.msra.mxu0 0.0
        %3471 = vmatprep.subr.mxu0 0.0
        %3472 = vmatpush2.xpose.msra.mxu0 0.0
        %3473 = vmatprep.subr.mxu0 0.0
        %3474 = vmatpush2.xpose.msra.mxu0 0.0
        %3475 = vmatprep.mubr.f32.mxu0 0.0
        %3476 = vmatmul.mubr.f32.gmra.mxu0 %v740
        %v3477 = vpop.f32.mrf.mxu0
        %v3478 = vadd.f32 0.0, %v3477
        %v3479 = vpop.f32.mrf.mxu0
        %3480 = vdwg.mxu0
        %3482 = vset.pattern.permute.xlu0 0
        %3483 = vperm.xlu0 %3482, %v473
        %v3484 = vpop.permute.xlu0 %3483
        %3486 = vmatprep.subr.mxu0 0.0
        %3487 = vmatpush1.msra.mxu0 0.0
        %3488 = vmatprep.subr.mxu0 0.0
        %3489 = vmatpush1.msra.mxu0 0.0
        %3490 = vmatprep.subr.mxu0 0.0
        %3491 = vmatpush1.msra.mxu0 0.0
        %3492 = vmatprep.subr.mxu0 0.0
        %3493 = vmatpush1.msra.mxu0 0.0
        %3494 = vmatprep.subr.mxu0 0.0
        %3495 = vmatpush1.msra.mxu0 0.0
        %3496 = vmatprep.subr.mxu0 0.0
        %3497 = vmatpush1.msra.mxu0 0.0
        %3498 = vmatprep.subr.mxu0 0.0
        %3499 = vmatpush1.msra.mxu0 0.0
        %3500 = vmatprep.subr.mxu0 0.0
        %3501 = vmatpush1.msra.mxu0 0.0
        %3502 = vmatprep.subr.mxu0 0.0
        %3503 = vmatpush1.msra.mxu0 0.0
        %3504 = vmatprep.subr.mxu0 0.0
        %3505 = vmatpush1.msra.mxu0 0.0
        %3506 = vmatprep.subr.mxu0 0.0
        %3507 = vmatpush1.msra.mxu0 0.0
        %3508 = vmatprep.subr.mxu0 0.0
        %3509 = vmatpush1.msra.mxu0 0.0
        %3510 = vmatprep.subr.mxu0 0.0
        %3511 = vmatpush1.msra.mxu0 %v3348
        %3512 = vmatprep.subr.mxu0 0.0
        %3513 = vmatpush1.msra.mxu0 %v3343
        %3514 = vmatprep.subr.mxu0 0.0
        %3515 = vmatpush1.msra.mxu0 %v3338
        %3516 = vmatprep.subr.mxu0 0.0
        %3517 = vmatpush1.msra.mxu0 %v3333
        %3518 = vmatprep.subr.mxu0 0.0
        %3519 = vmatpush2.msra.mxu0 0.0
        %3520 = vmatprep.subr.mxu0 0.0
        %3521 = vmatpush2.msra.mxu0 0.0
        %3522 = vmatprep.subr.mxu0 0.0
        %3523 = vmatpush2.msra.mxu0 0.0
        %3524 = vmatprep.subr.mxu0 0.0
        %3525 = vmatpush2.msra.mxu0 0.0
        %3526 = vmatprep.subr.mxu0 0.0
        %3527 = vmatpush2.msra.mxu0 0.0
        %3528 = vmatprep.subr.mxu0 0.0
        %3529 = vmatpush2.msra.mxu0 0.0
        %3530 = vmatprep.subr.mxu0 0.0
        %3531 = vmatpush2.msra.mxu0 0.0
        %3532 = vmatprep.subr.mxu0 0.0
        %3533 = vmatpush2.msra.mxu0 0.0
        %3534 = vmatprep.subr.mxu0 0.0
        %3535 = vmatpush2.msra.mxu0 0.0
        %3536 = vmatprep.subr.mxu0 0.0
        %3537 = vmatpush2.msra.mxu0 0.0
        %3538 = vmatprep.subr.mxu0 0.0
        %3539 = vmatpush2.msra.mxu0 0.0
        %3540 = vmatprep.subr.mxu0 0.0
        %3541 = vmatpush2.msra.mxu0 0.0
        %3542 = vmatprep.subr.mxu0 0.0
        %3543 = vmatpush2.msra.mxu0 0.0
        %3544 = vmatprep.subr.mxu0 0.0
        %3545 = vmatpush2.msra.mxu0 0.0
        %3546 = vmatprep.subr.mxu0 0.0
        %3547 = vmatpush2.msra.mxu0 0.0
        %3548 = vmatprep.subr.mxu0 0.0
        %3549 = vmatpush2.msra.mxu0 0.0
        %3550 = vmatprep.mubr.f32.mxu0 0.0
        %3551 = vmatmul.mubr.f32.gmra.mxu0 %v375
        %v3552 = vpop.f32.mrf.mxu0
        %v3553 = vadd.f32 %v3484, %v3552
        %v3554 = vpop.f32.mrf.mxu0
        %3555 = vdwg.mxu0
        %v3556 = vlaneseq
        %v3557 = vshrl.u32 %v3556, 7
        %v3558 = vsub.s32 0, %v3557
        %v3559 = vrot.slane %v3478, %v3558
        %v3560 = vadd.f32 %v3553, %v3559
        %v3561 = vtanh.pop %v3560
        %v3562 = vmul.f32 %v894, %v3561
        %v3563 = vadd.f32 %v3562, 0.0
        %3564 = vset.pattern.permute.xlu0 1
        %3565 = vperm.xlu0 %3564, %v473
        %v3566 = vpop.permute.xlu0 %3565
        %3568 = vmatprep.subr.mxu0 0.0
        %3569 = vmatpush1.msra.mxu0 0.0
        %3570 = vmatprep.subr.mxu0 0.0
        %3571 = vmatpush1.msra.mxu0 0.0
        %3572 = vmatprep.subr.mxu0 0.0
        %3573 = vmatpush1.msra.mxu0 0.0
        %3574 = vmatprep.subr.mxu0 0.0
        %3575 = vmatpush1.msra.mxu0 0.0
        %3576 = vmatprep.subr.mxu0 0.0
        %3577 = vmatpush1.msra.mxu0 0.0
        %3578 = vmatprep.subr.mxu0 0.0
        %3579 = vmatpush1.msra.mxu0 0.0
        %3580 = vmatprep.subr.mxu0 0.0
        %3581 = vmatpush1.msra.mxu0 0.0
        %3582 = vmatprep.subr.mxu0 0.0
        %3583 = vmatpush1.msra.mxu0 0.0
        %3584 = vmatprep.subr.mxu0 0.0
        %3585 = vmatpush1.msra.mxu0 0.0
        %3586 = vmatprep.subr.mxu0 0.0
        %3587 = vmatpush1.msra.mxu0 0.0
        %3588 = vmatprep.subr.mxu0 0.0
        %3589 = vmatpush1.msra.mxu0 0.0
        %3590 = vmatprep.subr.mxu0 0.0
        %3591 = vmatpush1.msra.mxu0 0.0
        %3592 = vmatprep.subr.mxu0 0.0
        %3593 = vmatpush1.msra.mxu0 %v3368
        %3594 = vmatprep.subr.mxu0 0.0
        %3595 = vmatpush1.msra.mxu0 %v3363
        %3596 = vmatprep.subr.mxu0 0.0
        %3597 = vmatpush1.msra.mxu0 %v3358
        %3598 = vmatprep.subr.mxu0 0.0
        %3599 = vmatpush1.msra.mxu0 %v3353
        %3600 = vmatprep.subr.mxu0 0.0
        %3601 = vmatpush2.msra.mxu0 0.0
        %3602 = vmatprep.subr.mxu0 0.0
        %3603 = vmatpush2.msra.mxu0 0.0
        %3604 = vmatprep.subr.mxu0 0.0
        %3605 = vmatpush2.msra.mxu0 0.0
        %3606 = vmatprep.subr.mxu0 0.0
        %3607 = vmatpush2.msra.mxu0 0.0
        %3608 = vmatprep.subr.mxu0 0.0
        %3609 = vmatpush2.msra.mxu0 0.0
        %3610 = vmatprep.subr.mxu0 0.0
        %3611 = vmatpush2.msra.mxu0 0.0
        %3612 = vmatprep.subr.mxu0 0.0
        %3613 = vmatpush2.msra.mxu0 0.0
        %3614 = vmatprep.subr.mxu0 0.0
        %3615 = vmatpush2.msra.mxu0 0.0
        %3616 = vmatprep.subr.mxu0 0.0
        %3617 = vmatpush2.msra.mxu0 0.0
        %3618 = vmatprep.subr.mxu0 0.0
        %3619 = vmatpush2.msra.mxu0 0.0
        %3620 = vmatprep.subr.mxu0 0.0
        %3621 = vmatpush2.msra.mxu0 0.0
        %3622 = vmatprep.subr.mxu0 0.0
        %3623 = vmatpush2.msra.mxu0 0.0
        %3624 = vmatprep.subr.mxu0 0.0
        %3625 = vmatpush2.msra.mxu0 0.0
        %3626 = vmatprep.subr.mxu0 0.0
        %3627 = vmatpush2.msra.mxu0 0.0
        %3628 = vmatprep.subr.mxu0 0.0
        %3629 = vmatpush2.msra.mxu0 0.0
        %3630 = vmatprep.subr.mxu0 0.0
        %3631 = vmatpush2.msra.mxu0 0.0
        %3632 = vmatprep.mubr.f32.mxu0 0.0
        %3633 = vmatmul.mubr.f32.gmra.mxu0 %v375
        %v3634 = vpop.f32.mrf.mxu0
        %v3635 = vadd.f32 %v3566, %v3634
        %v3636 = vpop.f32.mrf.mxu0
        %3637 = vdwg.mxu0
        %v3638 = vlaneseq
        %v3639 = vshrl.u32 %v3638, 7
        %v3640 = vsub.s32 1, %v3639
        %v3641 = vrot.slane %v3478, %v3640
        %v3642 = vadd.f32 %v3635, %v3641
        %v3643 = vtanh.pop %v3642
        %v3644 = vmul.f32 %v978, %v3643
        %v3645 = vadd.f32 %v3563, %v3644
        %3646 = vset.pattern.permute.xlu0 2
        %3647 = vperm.xlu0 %3646, %v473
        %v3648 = vpop.permute.xlu0 %3647
        %3650 = vmatprep.subr.mxu0 0.0
        %3651 = vmatpush1.msra.mxu0 0.0
        %3652 = vmatprep.subr.mxu0 0.0
        %3653 = vmatpush1.msra.mxu0 0.0
        %3654 = vmatprep.subr.mxu0 0.0
        %3655 = vmatpush1.msra.mxu0 0.0
        %3656 = vmatprep.subr.mxu0 0.0
        %3657 = vmatpush1.msra.mxu0 0.0
        %3658 = vmatprep.subr.mxu0 0.0
        %3659 = vmatpush1.msra.mxu0 0.0
        %3660 = vmatprep.subr.mxu0 0.0
        %3661 = vmatpush1.msra.mxu0 0.0
        %3662 = vmatprep.subr.mxu0 0.0
        %3663 = vmatpush1.msra.mxu0 0.0
        %3664 = vmatprep.subr.mxu0 0.0
        %3665 = vmatpush1.msra.mxu0 0.0
        %3666 = vmatprep.subr.mxu0 0.0
        %3667 = vmatpush1.msra.mxu0 0.0
        %3668 = vmatprep.subr.mxu0 0.0
        %3669 = vmatpush1.msra.mxu0 0.0
        %3670 = vmatprep.subr.mxu0 0.0
        %3671 = vmatpush1.msra.mxu0 0.0
        %3672 = vmatprep.subr.mxu0 0.0
        %3673 = vmatpush1.msra.mxu0 0.0
        %3674 = vmatprep.subr.mxu0 0.0
        %3675 = vmatpush1.msra.mxu0 %v3388
        %3676 = vmatprep.subr.mxu0 0.0
        %3677 = vmatpush1.msra.mxu0 %v3383
        %3678 = vmatprep.subr.mxu0 0.0
        %3679 = vmatpush1.msra.mxu0 %v3378
        %3680 = vmatprep.subr.mxu0 0.0
        %3681 = vmatpush1.msra.mxu0 %v3373
        %3682 = vmatprep.subr.mxu0 0.0
        %3683 = vmatpush2.msra.mxu0 0.0
        %3684 = vmatprep.subr.mxu0 0.0
        %3685 = vmatpush2.msra.mxu0 0.0
        %3686 = vmatprep.subr.mxu0 0.0
        %3687 = vmatpush2.msra.mxu0 0.0
        %3688 = vmatprep.subr.mxu0 0.0
        %3689 = vmatpush2.msra.mxu0 0.0
        %3690 = vmatprep.subr.mxu0 0.0
        %3691 = vmatpush2.msra.mxu0 0.0
        %3692 = vmatprep.subr.mxu0 0.0
        %3693 = vmatpush2.msra.mxu0 0.0
        %3694 = vmatprep.subr.mxu0 0.0
        %3695 = vmatpush2.msra.mxu0 0.0
        %3696 = vmatprep.subr.mxu0 0.0
        %3697 = vmatpush2.msra.mxu0 0.0
        %3698 = vmatprep.subr.mxu0 0.0
        %3699 = vmatpush2.msra.mxu0 0.0
        %3700 = vmatprep.subr.mxu0 0.0
        %3701 = vmatpush2.msra.mxu0 0.0
        %3702 = vmatprep.subr.mxu0 0.0
        %3703 = vmatpush2.msra.mxu0 0.0
        %3704 = vmatprep.subr.mxu0 0.0
        %3705 = vmatpush2.msra.mxu0 0.0
        %3706 = vmatprep.subr.mxu0 0.0
        %3707 = vmatpush2.msra.mxu0 0.0
        %3708 = vmatprep.subr.mxu0 0.0
        %3709 = vmatpush2.msra.mxu0 0.0
        %3710 = vmatprep.subr.mxu0 0.0
        %3711 = vmatpush2.msra.mxu0 0.0
        %3712 = vmatprep.subr.mxu0 0.0
        %3713 = vmatpush2.msra.mxu0 0.0
        %3714 = vmatprep.mubr.f32.mxu0 0.0
        %3715 = vmatmul.mubr.f32.gmra.mxu0 %v375
        %v3716 = vpop.f32.mrf.mxu0
        %v3717 = vadd.f32 %v3648, %v3716
        %v3718 = vpop.f32.mrf.mxu0
        %3719 = vdwg.mxu0
        %v3720 = vlaneseq
        %v3721 = vshrl.u32 %v3720, 7
        %v3722 = vsub.s32 2, %v3721
        %v3723 = vrot.slane %v3478, %v3722
        %v3724 = vadd.f32 %v3717, %v3723
        %v3725 = vtanh.pop %v3724
        %v3726 = vmul.f32 %v1062, %v3725
        %v3727 = vadd.f32 %v3645, %v3726
        %3728 = vset.pattern.permute.xlu0 3
        %3729 = vperm.xlu0 %3728, %v473
        %v3730 = vpop.permute.xlu0 %3729
        %3732 = vmatprep.subr.mxu0 0.0
        %3733 = vmatpush1.msra.mxu0 0.0
        %3734 = vmatprep.subr.mxu0 0.0
        %3735 = vmatpush1.msra.mxu0 0.0
        %3736 = vmatprep.subr.mxu0 0.0
        %3737 = vmatpush1.msra.mxu0 0.0
        %3738 = vmatprep.subr.mxu0 0.0
        %3739 = vmatpush1.msra.mxu0 0.0
        %3740 = vmatprep.subr.mxu0 0.0
        %3741 = vmatpush1.msra.mxu0 0.0
        %3742 = vmatprep.subr.mxu0 0.0
        %3743 = vmatpush1.msra.mxu0 0.0
        %3744 = vmatprep.subr.mxu0 0.0
        %3745 = vmatpush1.msra.mxu0 0.0
        %3746 = vmatprep.subr.mxu0 0.0
        %3747 = vmatpush1.msra.mxu0 0.0
        %3748 = vmatprep.subr.mxu0 0.0
        %3749 = vmatpush1.msra.mxu0 0.0
        %3750 = vmatprep.subr.mxu0 0.0
        %3751 = vmatpush1.msra.mxu0 0.0
        %3752 = vmatprep.subr.mxu0 0.0
        %3753 = vmatpush1.msra.mxu0 0.0
        %3754 = vmatprep.subr.mxu0 0.0
        %3755 = vmatpush1.msra.mxu0 0.0
        %3756 = vmatprep.subr.mxu0 0.0
        %3757 = vmatpush1.msra.mxu0 %v3408
        %3758 = vmatprep.subr.mxu0 0.0
        %3759 = vmatpush1.msra.mxu0 %v3403
        %3760 = vmatprep.subr.mxu0 0.0
        %3761 = vmatpush1.msra.mxu0 %v3398
        %3762 = vmatprep.subr.mxu0 0.0
        %3763 = vmatpush1.msra.mxu0 %v3393
        %3764 = vmatprep.subr.mxu0 0.0
        %3765 = vmatpush2.msra.mxu0 0.0
        %3766 = vmatprep.subr.mxu0 0.0
        %3767 = vmatpush2.msra.mxu0 0.0
        %3768 = vmatprep.subr.mxu0 0.0
        %3769 = vmatpush2.msra.mxu0 0.0
        %3770 = vmatprep.subr.mxu0 0.0
        %3771 = vmatpush2.msra.mxu0 0.0
        %3772 = vmatprep.subr.mxu0 0.0
        %3773 = vmatpush2.msra.mxu0 0.0
        %3774 = vmatprep.subr.mxu0 0.0
        %3775 = vmatpush2.msra.mxu0 0.0
        %3776 = vmatprep.subr.mxu0 0.0
        %3777 = vmatpush2.msra.mxu0 0.0
        %3778 = vmatprep.subr.mxu0 0.0
        %3779 = vmatpush2.msra.mxu0 0.0
        %3780 = vmatprep.subr.mxu0 0.0
        %3781 = vmatpush2.msra.mxu0 0.0
        %3782 = vmatprep.subr.mxu0 0.0
        %3783 = vmatpush2.msra.mxu0 0.0
        %3784 = vmatprep.subr.mxu0 0.0
        %3785 = vmatpush2.msra.mxu0 0.0
        %3786 = vmatprep.subr.mxu0 0.0
        %3787 = vmatpush2.msra.mxu0 0.0
        %3788 = vmatprep.subr.mxu0 0.0
        %3789 = vmatpush2.msra.mxu0 0.0
        %3790 = vmatprep.subr.mxu0 0.0
        %3791 = vmatpush2.msra.mxu0 0.0
        %3792 = vmatprep.subr.mxu0 0.0
        %3793 = vmatpush2.msra.mxu0 0.0
        %3794 = vmatprep.subr.mxu0 0.0
        %3795 = vmatpush2.msra.mxu0 0.0
        %3796 = vmatprep.mubr.f32.mxu0 0.0
        %3797 = vmatmul.mubr.f32.gmra.mxu0 %v375
        %v3798 = vpop.f32.mrf.mxu0
        %v3799 = vadd.f32 %v3730, %v3798
        %v3800 = vpop.f32.mrf.mxu0
        %3801 = vdwg.mxu0
        %v3802 = vlaneseq
        %v3803 = vshrl.u32 %v3802, 7
        %v3804 = vsub.s32 3, %v3803
        %v3805 = vrot.slane %v3478, %v3804
        %v3806 = vadd.f32 %v3799, %v3805
        %v3807 = vtanh.pop %v3806
        %v3808 = vmul.f32 %v1146, %v3807
        %v3809 = vadd.f32 %v3727, %v3808
        %v3810 = vsel %vm1149, %v3809, -inf
        %3811 = vmax.xlane.f32.xlu0 %v3810
        %v3812 = vpop.xlane.xlu0 %3811
        %v3813 = vrot.slane %v3812, 4
        %v3814 = vmax.f32 %v3812, %v3813
        %v3815 = vrot.slane %v3814, 2
        %v3816 = vmax.f32 %v3814, %v3815
        %v3817 = vrot.slane %v3816, 1
        %v3818 = vmax.f32 %v3816, %v3817
        %s3819 = vtos %v3818
        %v3820 = vstv %s3819
        %v3821 = vsub.f32 %v3809, %v3820
        %v3822 = vmul.f32 %v3821, 1.442695
        %v3823 = vpow.pop %v3822
        %v3824 = vsel %vm1149, %v3823, 0.0
        %3825 = vadd.xlane.f32.xlu0 %v3824
        %v3826 = vpop.xlane.xlu0 %3825
        %v3827 = vrcp.pop %v3826
        %v3828 = vmul.f32 %v3823, %v3827
        %v3829 = vsel %vm1149, %v3828, 0.0
        %v3830 = vrot.slane %v3829, 4
        %v3831 = vadd.f32 %v3829, %v3830
        %v3832 = vrot.slane %v3831, 2
        %v3833 = vadd.f32 %v3831, %v3832
        %v3834 = vrot.slane %v3833, 1
        %v3835 = vadd.f32 %v3833, %v3834
        %v3836 = vrot.slane %v3824, 4
        %v3837 = vadd.f32 %v3824, %v3836
        %v3838 = vrot.slane %v3837, 2
        %v3839 = vadd.f32 %v3837, %v3838
        %v3840 = vrot.slane %v3839, 1
        %v3841 = vadd.f32 %v3839, %v3840
        %v3842 = vrcp.pop %v3841
        %v3843 = vmul.f32 %v3823, %v3842
        %v3844 = vsel %vm1149, %v3843, 0.0
        %3845 = vadd.xlane.f32.xlu0 %v3844
        %v3846 = vpop.xlane.xlu0 %3845
        %v3848 = vsel %vm1149, %v3835, 0
        %3850 = vmatprep.subr.mxu0 0.0
        %3851 = vmatpush1.msra.mxu0 0.0
        %3852 = vmatprep.subr.mxu0 0.0
        %3853 = vmatpush1.msra.mxu0 0.0
        %3854 = vmatprep.subr.mxu0 0.0
        %3855 = vmatpush1.msra.mxu0 0.0
        %3856 = vmatprep.subr.mxu0 0.0
        %3857 = vmatpush1.msra.mxu0 0.0
        %3858 = vmatprep.subr.mxu0 0.0
        %3859 = vmatpush1.msra.mxu0 0.0
        %3860 = vmatprep.subr.mxu0 0.0
        %3861 = vmatpush1.msra.mxu0 0.0
        %3862 = vmatprep.subr.mxu0 0.0
        %3863 = vmatpush1.msra.mxu0 0.0
        %3864 = vmatprep.subr.mxu0 0.0
        %3865 = vmatpush1.msra.mxu0 0.0
        %3866 = vmatprep.subr.mxu0 0.0
        %3867 = vmatpush1.msra.mxu0 0.0
        %3868 = vmatprep.subr.mxu0 0.0
        %3869 = vmatpush1.msra.mxu0 0.0
        %3870 = vmatprep.subr.mxu0 0.0
        %3871 = vmatpush1.msra.mxu0 0.0
        %3872 = vmatprep.subr.mxu0 0.0
        %3873 = vmatpush1.msra.mxu0 0.0
        %3874 = vmatprep.subr.mxu0 0.0
        %3875 = vmatpush1.msra.mxu0 0.0
        %3876 = vmatprep.subr.mxu0 0.0
        %3877 = vmatpush1.msra.mxu0 0.0
        %3878 = vmatprep.subr.mxu0 0.0
        %3879 = vmatpush1.msra.mxu0 0.0
        %3880 = vmatprep.subr.mxu0 0.0
        %3881 = vmatpush1.msra.mxu0 %v346
        %3882 = vmatprep.subr.mxu0 0.0
        %3883 = vmatpush2.msra.mxu0 0.0
        %3884 = vmatprep.subr.mxu0 0.0
        %3885 = vmatpush2.msra.mxu0 0.0
        %3886 = vmatprep.subr.mxu0 0.0
        %3887 = vmatpush2.msra.mxu0 0.0
        %3888 = vmatprep.subr.mxu0 0.0
        %3889 = vmatpush2.msra.mxu0 0.0
        %3890 = vmatprep.subr.mxu0 0.0
        %3891 = vmatpush2.msra.mxu0 0.0
        %3892 = vmatprep.subr.mxu0 0.0
        %3893 = vmatpush2.msra.mxu0 0.0
        %3894 = vmatprep.subr.mxu0 0.0
        %3895 = vmatpush2.msra.mxu0 0.0
        %3896 = vmatprep.subr.mxu0 0.0
        %3897 = vmatpush2.msra.mxu0 0.0
        %3898 = vmatprep.subr.mxu0 0.0
        %3899 = vmatpush2.msra.mxu0 0.0
        %3900 = vmatprep.subr.mxu0 0.0
        %3901 = vmatpush2.msra.mxu0 0.0
        %3902 = vmatprep.subr.mxu0 0.0
        %3903 = vmatpush2.msra.mxu0 0.0
        %3904 = vmatprep.subr.mxu0 0.0
        %3905 = vmatpush2.msra.mxu0 0.0
        %3906 = vmatprep.subr.mxu0 0.0
        %3907 = vmatpush2.msra.mxu0 0.0
        %3908 = vmatprep.subr.mxu0 0.0
        %3909 = vmatpush2.msra.mxu0 0.0
        %3910 = vmatprep.subr.mxu0 0.0
        %3911 = vmatpush2.msra.mxu0 0.0
        %3912 = vmatprep.subr.mxu0 0.0
        %3913 = vmatpush2.msra.mxu0 0.0
        %3914 = vmatprep.mubr.f32.mxu0 0.0
        %3915 = vmatmul.mubr.f32.gmra.mxu0 %v3848
        %v3916 = vpop.f32.mrf.mxu0
        %v3917 = vadd.f32 0.0, %v3916
        %v3918 = vpop.f32.mrf.mxu0
        %3919 = vdwg.mxu0
        %v3920 = vmul.f32 %v3846, %v338
        %v3921 = vsel %vm361, %v3920, 0.0
        %v3922 = vrot.slane %v3921, 4
        %v3923 = vadd.f32 %v3921, %v3922
        %v3924 = vrot.slane %v3923, 2
        %v3925 = vadd.f32 %v3923, %v3924
        %v3926 = vrot.slane %v3925, 1
        %v3927 = vadd.f32 %v3925, %v3926
        %v3929 = vsel %vm361, %v347, 0
        %3931 = vmatprep.subr.mxu0 0.0
        %3932 = vmatpush1.xpose.msra.mxu0 0.0
        %3933 = vmatprep.subr.mxu0 0.0
        %3934 = vmatpush1.xpose.msra.mxu0 0.0
        %3935 = vmatprep.subr.mxu0 0.0
        %3936 = vmatpush1.xpose.msra.mxu0 0.0
        %3937 = vmatprep.subr.mxu0 0.0
        %3938 = vmatpush1.xpose.msra.mxu0 0.0
        %3939 = vmatprep.subr.mxu0 0.0
        %3940 = vmatpush1.xpose.msra.mxu0 0.0
        %3941 = vmatprep.subr.mxu0 0.0
        %3942 = vmatpush1.xpose.msra.mxu0 0.0
        %3943 = vmatprep.subr.mxu0 0.0
        %3944 = vmatpush1.xpose.msra.mxu0 0.0
        %3945 = vmatprep.subr.mxu0 0.0
        %3946 = vmatpush1.xpose.msra.mxu0 0.0
        %3947 = vmatprep.subr.mxu0 0.0
        %3948 = vmatpush1.xpose.msra.mxu0 0.0
        %3949 = vmatprep.subr.mxu0 0.0
        %3950 = vmatpush1.xpose.msra.mxu0 0.0
        %3951 = vmatprep.subr.mxu0 0.0
        %3952 = vmatpush1.xpose.msra.mxu0 0.0
        %3953 = vmatprep.subr.mxu0 0.0
        %3954 = vmatpush1.xpose.msra.mxu0 0.0
        %3955 = vmatprep.subr.mxu0 0.0
        %3956 = vmatpush1.xpose.msra.mxu0 0.0
        %3957 = vmatprep.subr.mxu0 0.0
        %3958 = vmatpush1.xpose.msra.mxu0 0.0
        %3959 = vmatprep.subr.mxu0 0.0
        %3960 = vmatpush1.xpose.msra.mxu0 0.0
        %3961 = vmatprep.subr.mxu0 0.0
        %3962 = vmatpush1.xpose.msra.mxu0 %v3929
        %3963 = vmatprep.subr.mxu0 0.0
        %3964 = vmatpush2.xpose.msra.mxu0 0.0
        %3965 = vmatprep.subr.mxu0 0.0
        %3966 = vmatpush2.xpose.msra.mxu0 0.0
        %3967 = vmatprep.subr.mxu0 0.0
        %3968 = vmatpush2.xpose.msra.mxu0 0.0
        %3969 = vmatprep.subr.mxu0 0.0
        %3970 = vmatpush2.xpose.msra.mxu0 0.0
        %3971 = vmatprep.subr.mxu0 0.0
        %3972 = vmatpush2.xpose.msra.mxu0 0.0
        %3973 = vmatprep.subr.mxu0 0.0
        %3974 = vmatpush2.xpose.msra.mxu0 0.0
        %3975 = vmatprep.subr.mxu0 0.0
        %3976 = vmatpush2.xpose.msra.mxu0 0.0
        %3977 = vmatprep.subr.mxu0 0.0
        %3978 = vmatpush2.xpose.msra.mxu0 0.0
        %3979 = vmatprep.subr.mxu0 0.0
        %3980 = vmatpush2.xpose.msra.mxu0 0.0
        %3981 = vmatprep.subr.mxu0 0.0
        %3982 = vmatpush2.xpose.msra.mxu0 0.0
        %3983 = vmatprep.subr.mxu0 0.0
        %3984 = vmatpush2.xpose.msra.mxu0 0.0
        %3985 = vmatprep.subr.mxu0 0.0
        %3986 = vmatpush2.xpose.msra.mxu0 0.0
        %3987 = vmatprep.subr.mxu0 0.0
        %3988 = vmatpush2.xpose.msra.mxu0 0.0
        %3989 = vmatprep.subr.mxu0 0.0
        %3990 = vmatpush2.xpose.msra.mxu0 0.0
        %3991 = vmatprep.subr.mxu0 0.0
        %3992 = vmatpush2.xpose.msra.mxu0 0.0
        %3993 = vmatprep.subr.mxu0 0.0
        %3994 = vmatpush2.xpose.msra.mxu0 0.0
        %3995 = vmatprep.mubr.f32.mxu0 0.0
        %3996 = vmatmul.mubr.f32.gmra.mxu0 %v508
        %v3997 = vpop.f32.mrf.mxu0
        %v3998 = vadd.f32 0.0, %v3997
        %v3999 = vpop.f32.mrf.mxu0
        %4000 = vmatprep.mubr.f32.mxu0 0.0
        %4001 = vmatmul.mubr.f32.gmra.mxu0 %v511
        %v4002 = vpop.f32.mrf.mxu0
        %v4003 = vadd.f32 0.0, %v4002
        %v4004 = vpop.f32.mrf.mxu0
        %4005 = vmatprep.mubr.f32.mxu0 0.0
        %4006 = vmatmul.mubr.f32.gmra.mxu0 %v514
        %v4007 = vpop.f32.mrf.mxu0
        %v4008 = vadd.f32 0.0, %v4007
        %v4009 = vpop.f32.mrf.mxu0
        %4010 = vmatprep.mubr.f32.mxu0 0.0
        %4011 = vmatmul.mubr.f32.gmra.mxu0 %v517
        %v4012 = vpop.f32.mrf.mxu0
        %v4013 = vadd.f32 0.0, %v4012
        %v4014 = vpop.f32.mrf.mxu0
        %4015 = vmatprep.mubr.f32.mxu0 0.0
        %4016 = vmatmul.mubr.f32.gmra.mxu0 %v520
        %v4017 = vpop.f32.mrf.mxu0
        %v4018 = vadd.f32 0.0, %v4017
        %v4019 = vpop.f32.mrf.mxu0
        %4020 = vmatprep.mubr.f32.mxu0 0.0
        %4021 = vmatmul.mubr.f32.gmra.mxu0 %v523
        %v4022 = vpop.f32.mrf.mxu0
        %v4023 = vadd.f32 0.0, %v4022
        %v4024 = vpop.f32.mrf.mxu0
        %4025 = vmatprep.mubr.f32.mxu0 0.0
        %4026 = vmatmul.mubr.f32.gmra.mxu0 %v526
        %v4027 = vpop.f32.mrf.mxu0
        %v4028 = vadd.f32 0.0, %v4027
        %v4029 = vpop.f32.mrf.mxu0
        %4030 = vmatprep.mubr.f32.mxu0 0.0
        %4031 = vmatmul.mubr.f32.gmra.mxu0 %v529
        %v4032 = vpop.f32.mrf.mxu0
        %v4033 = vadd.f32 0.0, %v4032
        %v4034 = vpop.f32.mrf.mxu0
        %4035 = vmatprep.mubr.f32.mxu0 0.0
        %4036 = vmatmul.mubr.f32.gmra.mxu0 %v532
        %v4037 = vpop.f32.mrf.mxu0
        %v4038 = vadd.f32 0.0, %v4037
        %v4039 = vpop.f32.mrf.mxu0
        %4040 = vmatprep.mubr.f32.mxu0 0.0
        %4041 = vmatmul.mubr.f32.gmra.mxu0 %v535
        %v4042 = vpop.f32.mrf.mxu0
        %v4043 = vadd.f32 0.0, %v4042
        %v4044 = vpop.f32.mrf.mxu0
        %4045 = vmatprep.mubr.f32.mxu0 0.0
        %4046 = vmatmul.mubr.f32.gmra.mxu0 %v538
        %v4047 = vpop.f32.mrf.mxu0
        %v4048 = vadd.f32 0.0, %v4047
        %v4049 = vpop.f32.mrf.mxu0
        %4050 = vmatprep.mubr.f32.mxu0 0.0
        %4051 = vmatmul.mubr.f32.gmra.mxu0 %v541
        %v4052 = vpop.f32.mrf.mxu0
        %v4053 = vadd.f32 0.0, %v4052
        %v4054 = vpop.f32.mrf.mxu0
        %4055 = vmatprep.mubr.f32.mxu0 0.0
        %4056 = vmatmul.mubr.f32.gmra.mxu0 %v544
        %v4057 = vpop.f32.mrf.mxu0
        %v4058 = vadd.f32 0.0, %v4057
        %v4059 = vpop.f32.mrf.mxu0
        %4060 = vmatprep.mubr.f32.mxu0 0.0
        %4061 = vmatmul.mubr.f32.gmra.mxu0 %v547
        %v4062 = vpop.f32.mrf.mxu0
        %v4063 = vadd.f32 0.0, %v4062
        %v4064 = vpop.f32.mrf.mxu0
        %4065 = vmatprep.mubr.f32.mxu0 0.0
        %4066 = vmatmul.mubr.f32.gmra.mxu0 %v550
        %v4067 = vpop.f32.mrf.mxu0
        %v4068 = vadd.f32 0.0, %v4067
        %v4069 = vpop.f32.mrf.mxu0
        %4070 = vmatprep.mubr.f32.mxu0 0.0
        %4071 = vmatmul.mubr.f32.gmra.mxu0 %v553
        %v4072 = vpop.f32.mrf.mxu0
        %v4073 = vadd.f32 0.0, %v4072
        %v4074 = vpop.f32.mrf.mxu0
        %4075 = vdwg.mxu0
        %4076 = vmatprep.subr.mxu0 0.0
        %4077 = vmatpush1.xpose.msra.mxu0 0.0
        %4078 = vmatprep.subr.mxu0 0.0
        %4079 = vmatpush1.xpose.msra.mxu0 0.0
        %4080 = vmatprep.subr.mxu0 0.0
        %4081 = vmatpush1.xpose.msra.mxu0 0.0
        %4082 = vmatprep.subr.mxu0 0.0
        %4083 = vmatpush1.xpose.msra.mxu0 0.0
        %4084 = vmatprep.subr.mxu0 0.0
        %4085 = vmatpush1.xpose.msra.mxu0 0.0
        %4086 = vmatprep.subr.mxu0 0.0
        %4087 = vmatpush1.xpose.msra.mxu0 0.0
        %4088 = vmatprep.subr.mxu0 0.0
        %4089 = vmatpush1.xpose.msra.mxu0 0.0
        %4090 = vmatprep.subr.mxu0 0.0
        %4091 = vmatpush1.xpose.msra.mxu0 0.0
        %4092 = vmatprep.subr.mxu0 0.0
        %4093 = vmatpush1.xpose.msra.mxu0 0.0
        %4094 = vmatprep.subr.mxu0 0.0
        %4095 = vmatpush1.xpose.msra.mxu0 0.0
        %4096 = vmatprep.subr.mxu0 0.0
        %4097 = vmatpush1.xpose.msra.mxu0 0.0
        %4098 = vmatprep.subr.mxu0 0.0
        %4099 = vmatpush1.xpose.msra.mxu0 0.0
        %4100 = vmatprep.subr.mxu0 0.0
        %4101 = vmatpush1.xpose.msra.mxu0 0.0
        %4102 = vmatprep.subr.mxu0 0.0
        %4103 = vmatpush1.xpose.msra.mxu0 0.0
        %4104 = vmatprep.subr.mxu0 0.0
        %4105 = vmatpush1.xpose.msra.mxu0 0.0
        %4106 = vmatprep.subr.mxu0 0.0
        %4107 = vmatpush1.xpose.msra.mxu0 %v3929
        %4108 = vmatprep.subr.mxu0 0.0
        %4109 = vmatpush2.xpose.msra.mxu0 0.0
        %4110 = vmatprep.subr.mxu0 0.0
        %4111 = vmatpush2.xpose.msra.mxu0 0.0
        %4112 = vmatprep.subr.mxu0 0.0
        %4113 = vmatpush2.xpose.msra.mxu0 0.0
        %4114 = vmatprep.subr.mxu0 0.0
        %4115 = vmatpush2.xpose.msra.mxu0 0.0
        %4116 = vmatprep.subr.mxu0 0.0
        %4117 = vmatpush2.xpose.msra.mxu0 0.0
        %4118 = vmatprep.subr.mxu0 0.0
        %4119 = vmatpush2.xpose.msra.mxu0 0.0
        %4120 = vmatprep.subr.mxu0 0.0
        %4121 = vmatpush2.xpose.msra.mxu0 0.0
        %4122 = vmatprep.subr.mxu0 0.0
        %4123 = vmatpush2.xpose.msra.mxu0 0.0
        %4124 = vmatprep.subr.mxu0 0.0
        %4125 = vmatpush2.xpose.msra.mxu0 0.0
        %4126 = vmatprep.subr.mxu0 0.0
        %4127 = vmatpush2.xpose.msra.mxu0 0.0
        %4128 = vmatprep.subr.mxu0 0.0
        %4129 = vmatpush2.xpose.msra.mxu0 0.0
        %4130 = vmatprep.subr.mxu0 0.0
        %4131 = vmatpush2.xpose.msra.mxu0 0.0
        %4132 = vmatprep.subr.mxu0 0.0
        %4133 = vmatpush2.xpose.msra.mxu0 0.0
        %4134 = vmatprep.subr.mxu0 0.0
        %4135 = vmatpush2.xpose.msra.mxu0 0.0
        %4136 = vmatprep.subr.mxu0 0.0
        %4137 = vmatpush2.xpose.msra.mxu0 0.0
        %4138 = vmatprep.subr.mxu0 0.0
        %4139 = vmatpush2.xpose.msra.mxu0 0.0
        %4140 = vmatprep.mubr.f32.mxu0 0.0
        %4141 = vmatmul.mubr.f32.gmra.mxu0 %v740
        %v4142 = vpop.f32.mrf.mxu0
        %v4143 = vadd.f32 0.0, %v4142
        %v4144 = vpop.f32.mrf.mxu0
        %4145 = vdwg.mxu0
        %4147 = vset.pattern.permute.xlu0 0
        %4148 = vperm.xlu0 %4147, %v478
        %v4149 = vpop.permute.xlu0 %4148
        %4151 = vmatprep.subr.mxu0 0.0
        %4152 = vmatpush1.msra.mxu0 0.0
        %4153 = vmatprep.subr.mxu0 0.0
        %4154 = vmatpush1.msra.mxu0 0.0
        %4155 = vmatprep.subr.mxu0 0.0
        %4156 = vmatpush1.msra.mxu0 0.0
        %4157 = vmatprep.subr.mxu0 0.0
        %4158 = vmatpush1.msra.mxu0 0.0
        %4159 = vmatprep.subr.mxu0 0.0
        %4160 = vmatpush1.msra.mxu0 0.0
        %4161 = vmatprep.subr.mxu0 0.0
        %4162 = vmatpush1.msra.mxu0 0.0
        %4163 = vmatprep.subr.mxu0 0.0
        %4164 = vmatpush1.msra.mxu0 0.0
        %4165 = vmatprep.subr.mxu0 0.0
        %4166 = vmatpush1.msra.mxu0 0.0
        %4167 = vmatprep.subr.mxu0 0.0
        %4168 = vmatpush1.msra.mxu0 0.0
        %4169 = vmatprep.subr.mxu0 0.0
        %4170 = vmatpush1.msra.mxu0 0.0
        %4171 = vmatprep.subr.mxu0 0.0
        %4172 = vmatpush1.msra.mxu0 0.0
        %4173 = vmatprep.subr.mxu0 0.0
        %4174 = vmatpush1.msra.mxu0 0.0
        %4175 = vmatprep.subr.mxu0 0.0
        %4176 = vmatpush1.msra.mxu0 %v4013
        %4177 = vmatprep.subr.mxu0 0.0
        %4178 = vmatpush1.msra.mxu0 %v4008
        %4179 = vmatprep.subr.mxu0 0.0
        %4180 = vmatpush1.msra.mxu0 %v4003
        %4181 = vmatprep.subr.mxu0 0.0
        %4182 = vmatpush1.msra.mxu0 %v3998
        %4183 = vmatprep.subr.mxu0 0.0
        %4184 = vmatpush2.msra.mxu0 0.0
        %4185 = vmatprep.subr.mxu0 0.0
        %4186 = vmatpush2.msra.mxu0 0.0
        %4187 = vmatprep.subr.mxu0 0.0
        %4188 = vmatpush2.msra.mxu0 0.0
        %4189 = vmatprep.subr.mxu0 0.0
        %4190 = vmatpush2.msra.mxu0 0.0
        %4191 = vmatprep.subr.mxu0 0.0
        %4192 = vmatpush2.msra.mxu0 0.0
        %4193 = vmatprep.subr.mxu0 0.0
        %4194 = vmatpush2.msra.mxu0 0.0
        %4195 = vmatprep.subr.mxu0 0.0
        %4196 = vmatpush2.msra.mxu0 0.0
        %4197 = vmatprep.subr.mxu0 0.0
        %4198 = vmatpush2.msra.mxu0 0.0
        %4199 = vmatprep.subr.mxu0 0.0
        %4200 = vmatpush2.msra.mxu0 0.0
        %4201 = vmatprep.subr.mxu0 0.0
        %4202 = vmatpush2.msra.mxu0 0.0
        %4203 = vmatprep.subr.mxu0 0.0
        %4204 = vmatpush2.msra.mxu0 0.0
        %4205 = vmatprep.subr.mxu0 0.0
        %4206 = vmatpush2.msra.mxu0 0.0
        %4207 = vmatprep.subr.mxu0 0.0
        %4208 = vmatpush2.msra.mxu0 0.0
        %4209 = vmatprep.subr.mxu0 0.0
        %4210 = vmatpush2.msra.mxu0 0.0
        %4211 = vmatprep.subr.mxu0 0.0
        %4212 = vmatpush2.msra.mxu0 0.0
        %4213 = vmatprep.subr.mxu0 0.0
        %4214 = vmatpush2.msra.mxu0 0.0
        %4215 = vmatprep.mubr.f32.mxu0 0.0
        %4216 = vmatmul.mubr.f32.gmra.mxu0 %v378
        %v4217 = vpop.f32.mrf.mxu0
        %v4218 = vadd.f32 %v4149, %v4217
        %v4219 = vpop.f32.mrf.mxu0
        %4220 = vdwg.mxu0
        %v4221 = vlaneseq
        %v4222 = vshrl.u32 %v4221, 7
        %v4223 = vsub.s32 0, %v4222
        %v4224 = vrot.slane %v4143, %v4223
        %v4225 = vadd.f32 %v4218, %v4224
        %v4226 = vtanh.pop %v4225
        %v4227 = vmul.f32 %v894, %v4226
        %v4228 = vadd.f32 %v4227, 0.0
        %4229 = vset.pattern.permute.xlu0 1
        %4230 = vperm.xlu0 %4229, %v478
        %v4231 = vpop.permute.xlu0 %4230
        %4233 = vmatprep.subr.mxu0 0.0
        %4234 = vmatpush1.msra.mxu0 0.0
        %4235 = vmatprep.subr.mxu0 0.0
        %4236 = vmatpush1.msra.mxu0 0.0
        %4237 = vmatprep.subr.mxu0 0.0
        %4238 = vmatpush1.msra.mxu0 0.0
        %4239 = vmatprep.subr.mxu0 0.0
        %4240 = vmatpush1.msra.mxu0 0.0
        %4241 = vmatprep.subr.mxu0 0.0
        %4242 = vmatpush1.msra.mxu0 0.0
        %4243 = vmatprep.subr.mxu0 0.0
        %4244 = vmatpush1.msra.mxu0 0.0
        %4245 = vmatprep.subr.mxu0 0.0
        %4246 = vmatpush1.msra.mxu0 0.0
        %4247 = vmatprep.subr.mxu0 0.0
        %4248 = vmatpush1.msra.mxu0 0.0
        %4249 = vmatprep.subr.mxu0 0.0
        %4250 = vmatpush1.msra.mxu0 0.0
        %4251 = vmatprep.subr.mxu0 0.0
        %4252 = vmatpush1.msra.mxu0 0.0
        %4253 = vmatprep.subr.mxu0 0.0
        %4254 = vmatpush1.msra.mxu0 0.0
        %4255 = vmatprep.subr.mxu0 0.0
        %4256 = vmatpush1.msra.mxu0 0.0
        %4257 = vmatprep.subr.mxu0 0.0
        %4258 = vmatpush1.msra.mxu0 %v4033
        %4259 = vmatprep.subr.mxu0 0.0
        %4260 = vmatpush1.msra.mxu0 %v4028
        %4261 = vmatprep.subr.mxu0 0.0
        %4262 = vmatpush1.msra.mxu0 %v4023
        %4263 = vmatprep.subr.mxu0 0.0
        %4264 = vmatpush1.msra.mxu0 %v4018
        %4265 = vmatprep.subr.mxu0 0.0
        %4266 = vmatpush2.msra.mxu0 0.0
        %4267 = vmatprep.subr.mxu0 0.0
        %4268 = vmatpush2.msra.mxu0 0.0
        %4269 = vmatprep.subr.mxu0 0.0
        %4270 = vmatpush2.msra.mxu0 0.0
        %4271 = vmatprep.subr.mxu0 0.0
        %4272 = vmatpush2.msra.mxu0 0.0
        %4273 = vmatprep.subr.mxu0 0.0
        %4274 = vmatpush2.msra.mxu0 0.0
        %4275 = vmatprep.subr.mxu0 0.0
        %4276 = vmatpush2.msra.mxu0 0.0
        %4277 = vmatprep.subr.mxu0 0.0
        %4278 = vmatpush2.msra.mxu0 0.0
        %4279 = vmatprep.subr.mxu0 0.0
        %4280 = vmatpush2.msra.mxu0 0.0
        %4281 = vmatprep.subr.mxu0 0.0
        %4282 = vmatpush2.msra.mxu0 0.0
        %4283 = vmatprep.subr.mxu0 0.0
        %4284 = vmatpush2.msra.mxu0 0.0
        %4285 = vmatprep.subr.mxu0 0.0
        %4286 = vmatpush2.msra.mxu0 0.0
        %4287 = vmatprep.subr.mxu0 0.0
        %4288 = vmatpush2.msra.mxu0 0.0
        %4289 = vmatprep.subr.mxu0 0.0
        %4290 = vmatpush2.msra.mxu0 0.0
        %4291 = vmatprep.subr.mxu0 0.0
        %4292 = vmatpush2.msra.mxu0 0.0
        %4293 = vmatprep.subr.mxu0 0.0
        %4294 = vmatpush2.msra.mxu0 0.0
        %4295 = vmatprep.subr.mxu0 0.0
        %4296 = vmatpush2.msra.mxu0 0.0
        %4297 = vmatprep.mubr.f32.mxu0 0.0
        %4298 = vmatmul.mubr.f32.gmra.mxu0 %v378
        %v4299 = vpop.f32.mrf.mxu0
        %v4300 = vadd.f32 %v4231, %v4299
        %v4301 = vpop.f32.mrf.mxu0
        %4302 = vdwg.mxu0
        %v4303 = vlaneseq
        %v4304 = vshrl.u32 %v4303, 7
        %v4305 = vsub.s32 1, %v4304
        %v4306 = vrot.slane %v4143, %v4305
        %v4307 = vadd.f32 %v4300, %v4306
        %v4308 = vtanh.pop %v4307
        %v4309 = vmul.f32 %v978, %v4308
        %v4310 = vadd.f32 %v4228, %v4309
        %4311 = vset.pattern.permute.xlu0 2
        %4312 = vperm.xlu0 %4311, %v478
        %v4313 = vpop.permute.xlu0 %4312
        %4315 = vmatprep.subr.mxu0 0.0
        %4316 = vmatpush1.msra.mxu0 0.0
        %4317 = vmatprep.subr.mxu0 0.0
        %4318 = vmatpush1.msra.mxu0 0.0
        %4319 = vmatprep.subr.mxu0 0.0
        %4320 = vmatpush1.msra.mxu0 0.0
        %4321 = vmatprep.subr.mxu0 0.0
        %4322 = vmatpush1.msra.mxu0 0.0
        %4323 = vmatprep.subr.mxu0 0.0
        %4324 = vmatpush1.msra.mxu0 0.0
        %4325 = vmatprep.subr.mxu0 0.0
        %4326 = vmatpush1.msra.mxu0 0.0
        %4327 = vmatprep.subr.mxu0 0.0
        %4328 = vmatpush1.msra.mxu0 0.0
        %4329 = vmatprep.subr.mxu0 0.0
        %4330 = vmatpush1.msra.mxu0 0.0
        %4331 = vmatprep.subr.mxu0 0.0
        %4332 = vmatpush1.msra.mxu0 0.0
        %4333 = vmatprep.subr.mxu0 0.0
        %4334 = vmatpush1.msra.mxu0 0.0
        %4335 = vmatprep.subr.mxu0 0.0
        %4336 = vmatpush1.msra.mxu0 0.0
        %4337 = vmatprep.subr.mxu0 0.0
        %4338 = vmatpush1.msra.mxu0 0.0
        %4339 = vmatprep.subr.mxu0 0.0
        %4340 = vmatpush1.msra.mxu0 %v4053
        %4341 = vmatprep.subr.mxu0 0.0
        %4342 = vmatpush1.msra.mxu0 %v4048
        %4343 = vmatprep.subr.mxu0 0.0
        %4344 = vmatpush1.msra.mxu0 %v4043
        %4345 = vmatprep.subr.mxu0 0.0
        %4346 = vmatpush1.msra.mxu0 %v4038
        %4347 = vmatprep.subr.mxu0 0.0
        %4348 = vmatpush2.msra.mxu0 0.0
        %4349 = vmatprep.subr.mxu0 0.0
        %4350 = vmatpush2.msra.mxu0 0.0
        %4351 = vmatprep.subr.mxu0 0.0
        %4352 = vmatpush2.msra.mxu0 0.0
        %4353 = vmatprep.subr.mxu0 0.0
        %4354 = vmatpush2.msra.mxu0 0.0
        %4355 = vmatprep.subr.mxu0 0.0
        %4356 = vmatpush2.msra.mxu0 0.0
        %4357 = vmatprep.subr.mxu0 0.0
        %4358 = vmatpush2.msra.mxu0 0.0
        %4359 = vmatprep.subr.mxu0 0.0
        %4360 = vmatpush2.msra.mxu0 0.0
        %4361 = vmatprep.subr.mxu0 0.0
        %4362 = vmatpush2.msra.mxu0 0.0
        %4363 = vmatprep.subr.mxu0 0.0
        %4364 = vmatpush2.msra.mxu0 0.0
        %4365 = vmatprep.subr.mxu0 0.0
        %4366 = vmatpush2.msra.mxu0 0.0
        %4367 = vmatprep.subr.mxu0 0.0
        %4368 = vmatpush2.msra.mxu0 0.0
        %4369 = vmatprep.subr.mxu0 0.0
        %4370 = vmatpush2.msra.mxu0 0.0
        %4371 = vmatprep.subr.mxu0 0.0
        %4372 = vmatpush2.msra.mxu0 0.0
        %4373 = vmatprep.subr.mxu0 0.0
        %4374 = vmatpush2.msra.mxu0 0.0
        %4375 = vmatprep.subr.mxu0 0.0
        %4376 = vmatpush2.msra.mxu0 0.0
        %4377 = vmatprep.subr.mxu0 0.0
        %4378 = vmatpush2.msra.mxu0 0.0
        %4379 = vmatprep.mubr.f32.mxu0 0.0
        %4380 = vmatmul.mubr.f32.gmra.mxu0 %v378
        %v4381 = vpop.f32.mrf.mxu0
        %v4382 = vadd.f32 %v4313, %v4381
        %v4383 = vpop.f32.mrf.mxu0
        %4384 = vdwg.mxu0
        %v4385 = vlaneseq
        %v4386 = vshrl.u32 %v4385, 7
        %v4387 = vsub.s32 2, %v4386
        %v4388 = vrot.slane %v4143, %v4387
        %v4389 = vadd.f32 %v4382, %v4388
        %v4390 = vtanh.pop %v4389
        %v4391 = vmul.f32 %v1062, %v4390
        %v4392 = vadd.f32 %v4310, %v4391
        %4393 = vset.pattern.permute.xlu0 3
        %4394 = vperm.xlu0 %4393, %v478
        %v4395 = vpop.permute.xlu0 %4394
        %4397 = vmatprep.subr.mxu0 0.0
        %4398 = vmatpush1.msra.mxu0 0.0
        %4399 = vmatprep.subr.mxu0 0.0
        %4400 = vmatpush1.msra.mxu0 0.0
        %4401 = vmatprep.subr.mxu0 0.0
        %4402 = vmatpush1.msra.mxu0 0.0
        %4403 = vmatprep.subr.mxu0 0.0
        %4404 = vmatpush1.msra.mxu0 0.0
        %4405 = vmatprep.subr.mxu0 0.0
        %4406 = vmatpush1.msra.mxu0 0.0
        %4407 = vmatprep.subr.mxu0 0.0
        %4408 = vmatpush1.msra.mxu0 0.0
        %4409 = vmatprep.subr.mxu0 0.0
        %4410 = vmatpush1.msra.mxu0 0.0
        %4411 = vmatprep.subr.mxu0 0.0
        %4412 = vmatpush1.msra.mxu0 0.0
        %4413 = vmatprep.subr.mxu0 0.0
        %4414 = vmatpush1.msra.mxu0 0.0
        %4415 = vmatprep.subr.mxu0 0.0
        %4416 = vmatpush1.msra.mxu0 0.0
        %4417 = vmatprep.subr.mxu0 0.0
        %4418 = vmatpush1.msra.mxu0 0.0
        %4419 = vmatprep.subr.mxu0 0.0
        %4420 = vmatpush1.msra.mxu0 0.0
        %4421 = vmatprep.subr.mxu0 0.0
        %4422 = vmatpush1.msra.mxu0 %v4073
        %4423 = vmatprep.subr.mxu0 0.0
        %4424 = vmatpush1.msra.mxu0 %v4068
        %4425 = vmatprep.subr.mxu0 0.0
        %4426 = vmatpush1.msra.mxu0 %v4063
        %4427 = vmatprep.subr.mxu0 0.0
        %4428 = vmatpush1.msra.mxu0 %v4058
        %4429 = vmatprep.subr.mxu0 0.0
        %4430 = vmatpush2.msra.mxu0 0.0
        %4431 = vmatprep.subr.mxu0 0.0
        %4432 = vmatpush2.msra.mxu0 0.0
        %4433 = vmatprep.subr.mxu0 0.0
        %4434 = vmatpush2.msra.mxu0 0.0
        %4435 = vmatprep.subr.mxu0 0.0
        %4436 = vmatpush2.msra.mxu0 0.0
        %4437 = vmatprep.subr.mxu0 0.0
        %4438 = vmatpush2.msra.mxu0 0.0
        %4439 = vmatprep.subr.mxu0 0.0
        %4440 = vmatpush2.msra.mxu0 0.0
        %4441 = vmatprep.subr.mxu0 0.0
        %4442 = vmatpush2.msra.mxu0 0.0
        %4443 = vmatprep.subr.mxu0 0.0
        %4444 = vmatpush2.msra.mxu0 0.0
        %4445 = vmatprep.subr.mxu0 0.0
        %4446 = vmatpush2.msra.mxu0 0.0
        %4447 = vmatprep.subr.mxu0 0.0
        %4448 = vmatpush2.msra.mxu0 0.0
        %4449 = vmatprep.subr.mxu0 0.0
        %4450 = vmatpush2.msra.mxu0 0.0
        %4451 = vmatprep.subr.mxu0 0.0
        %4452 = vmatpush2.msra.mxu0 0.0
        %4453 = vmatprep.subr.mxu0 0.0
        %4454 = vmatpush2.msra.mxu0 0.0
        %4455 = vmatprep.subr.mxu0 0.0
        %4456 = vmatpush2.msra.mxu0 0.0
        %4457 = vmatprep.subr.mxu0 0.0
        %4458 = vmatpush2.msra.mxu0 0.0
        %4459 = vmatprep.subr.mxu0 0.0
        %4460 = vmatpush2.msra.mxu0 0.0
        %4461 = vmatprep.mubr.f32.mxu0 0.0
        %4462 = vmatmul.mubr.f32.gmra.mxu0 %v378
        %v4463 = vpop.f32.mrf.mxu0
        %v4464 = vadd.f32 %v4395, %v4463
        %v4465 = vpop.f32.mrf.mxu0
        %4466 = vdwg.mxu0
        %v4467 = vlaneseq
        %v4468 = vshrl.u32 %v4467, 7
        %v4469 = vsub.s32 3, %v4468
        %v4470 = vrot.slane %v4143, %v4469
        %v4471 = vadd.f32 %v4464, %v4470
        %v4472 = vtanh.pop %v4471
        %v4473 = vmul.f32 %v1146, %v4472
        %v4474 = vadd.f32 %v4392, %v4473
        %v4475 = vsel %vm1149, %v4474, -inf
        %4476 = vmax.xlane.f32.xlu0 %v4475
        %v4477 = vpop.xlane.xlu0 %4476
        %v4478 = vrot.slane %v4477, 4
        %v4479 = vmax.f32 %v4477, %v4478
        %v4480 = vrot.slane %v4479, 2
        %v4481 = vmax.f32 %v4479, %v4480
        %v4482 = vrot.slane %v4481, 1
        %v4483 = vmax.f32 %v4481, %v4482
        %s4484 = vtos %v4483
        %v4485 = vstv %s4484
        %v4486 = vsub.f32 %v4474, %v4485
        %v4487 = vmul.f32 %v4486, 1.442695
        %v4488 = vpow.pop %v4487
        %v4489 = vsel %vm1149, %v4488, 0.0
        %4490 = vadd.xlane.f32.xlu0 %v4489
        %v4491 = vpop.xlane.xlu0 %4490
        %v4492 = vrcp.pop %v4491
        %v4493 = vmul.f32 %v4488, %v4492
        %v4494 = vsel %vm1149, %v4493, 0.0
        %v4495 = vrot.slane %v4494, 4
        %v4496 = vadd.f32 %v4494, %v4495
        %v4497 = vrot.slane %v4496, 2
        %v4498 = vadd.f32 %v4496, %v4497
        %v4499 = vrot.slane %v4498, 1
        %v4500 = vadd.f32 %v4498, %v4499
        %v4501 = vrot.slane %v4489, 4
        %v4502 = vadd.f32 %v4489, %v4501
        %v4503 = vrot.slane %v4502, 2
        %v4504 = vadd.f32 %v4502, %v4503
        %v4505 = vrot.slane %v4504, 1
        %v4506 = vadd.f32 %v4504, %v4505
        %v4507 = vrcp.pop %v4506
        %v4508 = vmul.f32 %v4488, %v4507
        %v4509 = vsel %vm1149, %v4508, 0.0
        %4510 = vadd.xlane.f32.xlu0 %v4509
        %v4511 = vpop.xlane.xlu0 %4510
        %v4513 = vsel %vm1149, %v4500, 0
        %4515 = vmatprep.subr.mxu0 0.0
        %4516 = vmatpush1.msra.mxu0 0.0
        %4517 = vmatprep.subr.mxu0 0.0
        %4518 = vmatpush1.msra.mxu0 0.0
        %4519 = vmatprep.subr.mxu0 0.0
        %4520 = vmatpush1.msra.mxu0 0.0
        %4521 = vmatprep.subr.mxu0 0.0
        %4522 = vmatpush1.msra.mxu0 0.0
        %4523 = vmatprep.subr.mxu0 0.0
        %4524 = vmatpush1.msra.mxu0 0.0
        %4525 = vmatprep.subr.mxu0 0.0
        %4526 = vmatpush1.msra.mxu0 0.0
        %4527 = vmatprep.subr.mxu0 0.0
        %4528 = vmatpush1.msra.mxu0 0.0
        %4529 = vmatprep.subr.mxu0 0.0
        %4530 = vmatpush1.msra.mxu0 0.0
        %4531 = vmatprep.subr.mxu0 0.0
        %4532 = vmatpush1.msra.mxu0 0.0
        %4533 = vmatprep.subr.mxu0 0.0
        %4534 = vmatpush1.msra.mxu0 0.0
        %4535 = vmatprep.subr.mxu0 0.0
        %4536 = vmatpush1.msra.mxu0 0.0
        %4537 = vmatprep.subr.mxu0 0.0
        %4538 = vmatpush1.msra.mxu0 0.0
        %4539 = vmatprep.subr.mxu0 0.0
        %4540 = vmatpush1.msra.mxu0 0.0
        %4541 = vmatprep.subr.mxu0 0.0
        %4542 = vmatpush1.msra.mxu0 0.0
        %4543 = vmatprep.subr.mxu0 0.0
        %4544 = vmatpush1.msra.mxu0 0.0
        %4545 = vmatprep.subr.mxu0 0.0
        %4546 = vmatpush1.msra.mxu0 %v347
        %4547 = vmatprep.subr.mxu0 0.0
        %4548 = vmatpush2.msra.mxu0 0.0
        %4549 = vmatprep.subr.mxu0 0.0
        %4550 = vmatpush2.msra.mxu0 0.0
        %4551 = vmatprep.subr.mxu0 0.0
        %4552 = vmatpush2.msra.mxu0 0.0
        %4553 = vmatprep.subr.mxu0 0.0
        %4554 = vmatpush2.msra.mxu0 0.0
        %4555 = vmatprep.subr.mxu0 0.0
        %4556 = vmatpush2.msra.mxu0 0.0
        %4557 = vmatprep.subr.mxu0 0.0
        %4558 = vmatpush2.msra.mxu0 0.0
        %4559 = vmatprep.subr.mxu0 0.0
        %4560 = vmatpush2.msra.mxu0 0.0
        %4561 = vmatprep.subr.mxu0 0.0
        %4562 = vmatpush2.msra.mxu0 0.0
        %4563 = vmatprep.subr.mxu0 0.0
        %4564 = vmatpush2.msra.mxu0 0.0
        %4565 = vmatprep.subr.mxu0 0.0
        %4566 = vmatpush2.msra.mxu0 0.0
        %4567 = vmatprep.subr.mxu0 0.0
        %4568 = vmatpush2.msra.mxu0 0.0
        %4569 = vmatprep.subr.mxu0 0.0
        %4570 = vmatpush2.msra.mxu0 0.0
        %4571 = vmatprep.subr.mxu0 0.0
        %4572 = vmatpush2.msra.mxu0 0.0
        %4573 = vmatprep.subr.mxu0 0.0
        %4574 = vmatpush2.msra.mxu0 0.0
        %4575 = vmatprep.subr.mxu0 0.0
        %4576 = vmatpush2.msra.mxu0 0.0
        %4577 = vmatprep.subr.mxu0 0.0
        %4578 = vmatpush2.msra.mxu0 0.0
        %4579 = vmatprep.mubr.f32.mxu0 0.0
        %4580 = vmatmul.mubr.f32.gmra.mxu0 %v4513
        %v4581 = vpop.f32.mrf.mxu0
        %v4582 = vadd.f32 0.0, %v4581
        %v4583 = vpop.f32.mrf.mxu0
        %4584 = vdwg.mxu0
        %v4585 = vmul.f32 %v4511, %v339
        %v4586 = vsel %vm361, %v4585, 0.0
        %v4587 = vrot.slane %v4586, 4
        %v4588 = vadd.f32 %v4586, %v4587
        %v4589 = vrot.slane %v4588, 2
        %v4590 = vadd.f32 %v4588, %v4589
        %v4591 = vrot.slane %v4590, 1
        %v4592 = vadd.f32 %v4590, %v4591
        %v4594 = vsel %vm361, %v348, 0
        %4596 = vmatprep.subr.mxu0 0.0
        %4597 = vmatpush1.xpose.msra.mxu0 0.0
        %4598 = vmatprep.subr.mxu0 0.0
        %4599 = vmatpush1.xpose.msra.mxu0 0.0
        %4600 = vmatprep.subr.mxu0 0.0
        %4601 = vmatpush1.xpose.msra.mxu0 0.0
        %4602 = vmatprep.subr.mxu0 0.0
        %4603 = vmatpush1.xpose.msra.mxu0 0.0
        %4604 = vmatprep.subr.mxu0 0.0
        %4605 = vmatpush1.xpose.msra.mxu0 0.0
        %4606 = vmatprep.subr.mxu0 0.0
        %4607 = vmatpush1.xpose.msra.mxu0 0.0
        %4608 = vmatprep.subr.mxu0 0.0
        %4609 = vmatpush1.xpose.msra.mxu0 0.0
        %4610 = vmatprep.subr.mxu0 0.0
        %4611 = vmatpush1.xpose.msra.mxu0 0.0
        %4612 = vmatprep.subr.mxu0 0.0
        %4613 = vmatpush1.xpose.msra.mxu0 0.0
        %4614 = vmatprep.subr.mxu0 0.0
        %4615 = vmatpush1.xpose.msra.mxu0 0.0
        %4616 = vmatprep.subr.mxu0 0.0
        %4617 = vmatpush1.xpose.msra.mxu0 0.0
        %4618 = vmatprep.subr.mxu0 0.0
        %4619 = vmatpush1.xpose.msra.mxu0 0.0
        %4620 = vmatprep.subr.mxu0 0.0
        %4621 = vmatpush1.xpose.msra.mxu0 0.0
        %4622 = vmatprep.subr.mxu0 0.0
        %4623 = vmatpush1.xpose.msra.mxu0 0.0
        %4624 = vmatprep.subr.mxu0 0.0
        %4625 = vmatpush1.xpose.msra.mxu0 0.0
        %4626 = vmatprep.subr.mxu0 0.0
        %4627 = vmatpush1.xpose.msra.mxu0 %v4594
        %4628 = vmatprep.subr.mxu0 0.0
        %4629 = vmatpush2.xpose.msra.mxu0 0.0
        %4630 = vmatprep.subr.mxu0 0.0
        %4631 = vmatpush2.xpose.msra.mxu0 0.0
        %4632 = vmatprep.subr.mxu0 0.0
        %4633 = vmatpush2.xpose.msra.mxu0 0.0
        %4634 = vmatprep.subr.mxu0 0.0
        %4635 = vmatpush2.xpose.msra.mxu0 0.0
        %4636 = vmatprep.subr.mxu0 0.0
        %4637 = vmatpush2.xpose.msra.mxu0 0.0
        %4638 = vmatprep.subr.mxu0 0.0
        %4639 = vmatpush2.xpose.msra.mxu0 0.0
        %4640 = vmatprep.subr.mxu0 0.0
        %4641 = vmatpush2.xpose.msra.mxu0 0.0
        %4642 = vmatprep.subr.mxu0 0.0
        %4643 = vmatpush2.xpose.msra.mxu0 0.0
        %4644 = vmatprep.subr.mxu0 0.0
        %4645 = vmatpush2.xpose.msra.mxu0 0.0
        %4646 = vmatprep.subr.mxu0 0.0
        %4647 = vmatpush2.xpose.msra.mxu0 0.0
        %4648 = vmatprep.subr.mxu0 0.0
        %4649 = vmatpush2.xpose.msra.mxu0 0.0
        %4650 = vmatprep.subr.mxu0 0.0
        %4651 = vmatpush2.xpose.msra.mxu0 0.0
        %4652 = vmatprep.subr.mxu0 0.0
        %4653 = vmatpush2.xpose.msra.mxu0 0.0
        %4654 = vmatprep.subr.mxu0 0.0
        %4655 = vmatpush2.xpose.msra.mxu0 0.0
        %4656 = vmatprep.subr.mxu0 0.0
        %4657 = vmatpush2.xpose.msra.mxu0 0.0
        %4658 = vmatprep.subr.mxu0 0.0
        %4659 = vmatpush2.xpose.msra.mxu0 0.0
        %4660 = vmatprep.mubr.f32.mxu0 0.0
        %4661 = vmatmul.mubr.f32.gmra.mxu0 %v508
        %v4662 = vpop.f32.mrf.mxu0
        %v4663 = vadd.f32 0.0, %v4662
        %v4664 = vpop.f32.mrf.mxu0
        %4665 = vmatprep.mubr.f32.mxu0 0.0
        %4666 = vmatmul.mubr.f32.gmra.mxu0 %v511
        %v4667 = vpop.f32.mrf.mxu0
        %v4668 = vadd.f32 0.0, %v4667
        %v4669 = vpop.f32.mrf.mxu0
        %4670 = vmatprep.mubr.f32.mxu0 0.0
        %4671 = vmatmul.mubr.f32.gmra.mxu0 %v514
        %v4672 = vpop.f32.mrf.mxu0
        %v4673 = vadd.f32 0.0, %v4672
        %v4674 = vpop.f32.mrf.mxu0
        %4675 = vmatprep.mubr.f32.mxu0 0.0
        %4676 = vmatmul.mubr.f32.gmra.mxu0 %v517
        %v4677 = vpop.f32.mrf.mxu0
        %v4678 = vadd.f32 0.0, %v4677
        %v4679 = vpop.f32.mrf.mxu0
        %4680 = vmatprep.mubr.f32.mxu0 0.0
        %4681 = vmatmul.mubr.f32.gmra.mxu0 %v520
        %v4682 = vpop.f32.mrf.mxu0
        %v4683 = vadd.f32 0.0, %v4682
        %v4684 = vpop.f32.mrf.mxu0
        %4685 = vmatprep.mubr.f32.mxu0 0.0
        %4686 = vmatmul.mubr.f32.gmra.mxu0 %v523
        %v4687 = vpop.f32.mrf.mxu0
        %v4688 = vadd.f32 0.0, %v4687
        %v4689 = vpop.f32.mrf.mxu0
        %4690 = vmatprep.mubr.f32.mxu0 0.0
        %4691 = vmatmul.mubr.f32.gmra.mxu0 %v526
        %v4692 = vpop.f32.mrf.mxu0
        %v4693 = vadd.f32 0.0, %v4692
        %v4694 = vpop.f32.mrf.mxu0
        %4695 = vmatprep.mubr.f32.mxu0 0.0
        %4696 = vmatmul.mubr.f32.gmra.mxu0 %v529
        %v4697 = vpop.f32.mrf.mxu0
        %v4698 = vadd.f32 0.0, %v4697
        %v4699 = vpop.f32.mrf.mxu0
        %4700 = vmatprep.mubr.f32.mxu0 0.0
        %4701 = vmatmul.mubr.f32.gmra.mxu0 %v532
        %v4702 = vpop.f32.mrf.mxu0
        %v4703 = vadd.f32 0.0, %v4702
        %v4704 = vpop.f32.mrf.mxu0
        %4705 = vmatprep.mubr.f32.mxu0 0.0
        %4706 = vmatmul.mubr.f32.gmra.mxu0 %v535
        %v4707 = vpop.f32.mrf.mxu0
        %v4708 = vadd.f32 0.0, %v4707
        %v4709 = vpop.f32.mrf.mxu0
        %4710 = vmatprep.mubr.f32.mxu0 0.0
        %4711 = vmatmul.mubr.f32.gmra.mxu0 %v538
        %v4712 = vpop.f32.mrf.mxu0
        %v4713 = vadd.f32 0.0, %v4712
        %v4714 = vpop.f32.mrf.mxu0
        %4715 = vmatprep.mubr.f32.mxu0 0.0
        %4716 = vmatmul.mubr.f32.gmra.mxu0 %v541
        %v4717 = vpop.f32.mrf.mxu0
        %v4718 = vadd.f32 0.0, %v4717
        %v4719 = vpop.f32.mrf.mxu0
        %4720 = vmatprep.mubr.f32.mxu0 0.0
        %4721 = vmatmul.mubr.f32.gmra.mxu0 %v544
        %v4722 = vpop.f32.mrf.mxu0
        %v4723 = vadd.f32 0.0, %v4722
        %v4724 = vpop.f32.mrf.mxu0
        %4725 = vmatprep.mubr.f32.mxu0 0.0
        %4726 = vmatmul.mubr.f32.gmra.mxu0 %v547
        %v4727 = vpop.f32.mrf.mxu0
        %v4728 = vadd.f32 0.0, %v4727
        %v4729 = vpop.f32.mrf.mxu0
        %4730 = vmatprep.mubr.f32.mxu0 0.0
        %4731 = vmatmul.mubr.f32.gmra.mxu0 %v550
        %v4732 = vpop.f32.mrf.mxu0
        %v4733 = vadd.f32 0.0, %v4732
        %v4734 = vpop.f32.mrf.mxu0
        %4735 = vmatprep.mubr.f32.mxu0 0.0
        %4736 = vmatmul.mubr.f32.gmra.mxu0 %v553
        %v4737 = vpop.f32.mrf.mxu0
        %v4738 = vadd.f32 0.0, %v4737
        %v4739 = vpop.f32.mrf.mxu0
        %4740 = vdwg.mxu0
        %4741 = vmatprep.subr.mxu0 0.0
        %4742 = vmatpush1.xpose.msra.mxu0 0.0
        %4743 = vmatprep.subr.mxu0 0.0
        %4744 = vmatpush1.xpose.msra.mxu0 0.0
        %4745 = vmatprep.subr.mxu0 0.0
        %4746 = vmatpush1.xpose.msra.mxu0 0.0
        %4747 = vmatprep.subr.mxu0 0.0
        %4748 = vmatpush1.xpose.msra.mxu0 0.0
        %4749 = vmatprep.subr.mxu0 0.0
        %4750 = vmatpush1.xpose.msra.mxu0 0.0
        %4751 = vmatprep.subr.mxu0 0.0
        %4752 = vmatpush1.xpose.msra.mxu0 0.0
        %4753 = vmatprep.subr.mxu0 0.0
        %4754 = vmatpush1.xpose.msra.mxu0 0.0
        %4755 = vmatprep.subr.mxu0 0.0
        %4756 = vmatpush1.xpose.msra.mxu0 0.0
        %4757 = vmatprep.subr.mxu0 0.0
        %4758 = vmatpush1.xpose.msra.mxu0 0.0
        %4759 = vmatprep.subr.mxu0 0.0
        %4760 = vmatpush1.xpose.msra.mxu0 0.0
        %4761 = vmatprep.subr.mxu0 0.0
        %4762 = vmatpush1.xpose.msra.mxu0 0.0
        %4763 = vmatprep.subr.mxu0 0.0
        %4764 = vmatpush1.xpose.msra.mxu0 0.0
        %4765 = vmatprep.subr.mxu0 0.0
        %4766 = vmatpush1.xpose.msra.mxu0 0.0
        %4767 = vmatprep.subr.mxu0 0.0
        %4768 = vmatpush1.xpose.msra.mxu0 0.0
        %4769 = vmatprep.subr.mxu0 0.0
        %4770 = vmatpush1.xpose.msra.mxu0 0.0
        %4771 = vmatprep.subr.mxu0 0.0
        %4772 = vmatpush1.xpose.msra.mxu0 %v4594
        %4773 = vmatprep.subr.mxu0 0.0
        %4774 = vmatpush2.xpose.msra.mxu0 0.0
        %4775 = vmatprep.subr.mxu0 0.0
        %4776 = vmatpush2.xpose.msra.mxu0 0.0
        %4777 = vmatprep.subr.mxu0 0.0
        %4778 = vmatpush2.xpose.msra.mxu0 0.0
        %4779 = vmatprep.subr.mxu0 0.0
        %4780 = vmatpush2.xpose.msra.mxu0 0.0
        %4781 = vmatprep.subr.mxu0 0.0
        %4782 = vmatpush2.xpose.msra.mxu0 0.0
        %4783 = vmatprep.subr.mxu0 0.0
        %4784 = vmatpush2.xpose.msra.mxu0 0.0
        %4785 = vmatprep.subr.mxu0 0.0
        %4786 = vmatpush2.xpose.msra.mxu0 0.0
        %4787 = vmatprep.subr.mxu0 0.0
        %4788 = vmatpush2.xpose.msra.mxu0 0.0
        %4789 = vmatprep.subr.mxu0 0.0
        %4790 = vmatpush2.xpose.msra.mxu0 0.0
        %4791 = vmatprep.subr.mxu0 0.0
        %4792 = vmatpush2.xpose.msra.mxu0 0.0
        %4793 = vmatprep.subr.mxu0 0.0
        %4794 = vmatpush2.xpose.msra.mxu0 0.0
        %4795 = vmatprep.subr.mxu0 0.0
        %4796 = vmatpush2.xpose.msra.mxu0 0.0
        %4797 = vmatprep.subr.mxu0 0.0
        %4798 = vmatpush2.xpose.msra.mxu0 0.0
        %4799 = vmatprep.subr.mxu0 0.0
        %4800 = vmatpush2.xpose.msra.mxu0 0.0
        %4801 = vmatprep.subr.mxu0 0.0
        %4802 = vmatpush2.xpose.msra.mxu0 0.0
        %4803 = vmatprep.subr.mxu0 0.0
        %4804 = vmatpush2.xpose.msra.mxu0 0.0
        %4805 = vmatprep.mubr.f32.mxu0 0.0
        %4806 = vmatmul.mubr.f32.gmra.mxu0 %v740
        %v4807 = vpop.f32.mrf.mxu0
        %v4808 = vadd.f32 0.0, %v4807
        %v4809 = vpop.f32.mrf.mxu0
        %4810 = vdwg.mxu0
        %4812 = vset.pattern.permute.xlu0 0
        %4813 = vperm.xlu0 %4812, %v483
        %v4814 = vpop.permute.xlu0 %4813
        %4816 = vmatprep.subr.mxu0 0.0
        %4817 = vmatpush1.msra.mxu0 0.0
        %4818 = vmatprep.subr.mxu0 0.0
        %4819 = vmatpush1.msra.mxu0 0.0
        %4820 = vmatprep.subr.mxu0 0.0
        %4821 = vmatpush1.msra.mxu0 0.0
        %4822 = vmatprep.subr.mxu0 0.0
        %4823 = vmatpush1.msra.mxu0 0.0
        %4824 = vmatprep.subr.mxu0 0.0
        %4825 = vmatpush1.msra.mxu0 0.0
        %4826 = vmatprep.subr.mxu0 0.0
        %4827 = vmatpush1.msra.mxu0 0.0
        %4828 = vmatprep.subr.mxu0 0.0
        %4829 = vmatpush1.msra.mxu0 0.0
        %4830 = vmatprep.subr.mxu0 0.0
        %4831 = vmatpush1.msra.mxu0 0.0
        %4832 = vmatprep.subr.mxu0 0.0
        %4833 = vmatpush1.msra.mxu0 0.0
        %4834 = vmatprep.subr.mxu0 0.0
        %4835 = vmatpush1.msra.mxu0 0.0
        %4836 = vmatprep.subr.mxu0 0.0
        %4837 = vmatpush1.msra.mxu0 0.0
        %4838 = vmatprep.subr.mxu0 0.0
        %4839 = vmatpush1.msra.mxu0 0.0
        %4840 = vmatprep.subr.mxu0 0.0
        %4841 = vmatpush1.msra.mxu0 %v4678
        %4842 = vmatprep.subr.mxu0 0.0
        %4843 = vmatpush1.msra.mxu0 %v4673
        %4844 = vmatprep.subr.mxu0 0.0
        %4845 = vmatpush1.msra.mxu0 %v4668
        %4846 = vmatprep.subr.mxu0 0.0
        %4847 = vmatpush1.msra.mxu0 %v4663
        %4848 = vmatprep.subr.mxu0 0.0
        %4849 = vmatpush2.msra.mxu0 0.0
        %4850 = vmatprep.subr.mxu0 0.0
        %4851 = vmatpush2.msra.mxu0 0.0
        %4852 = vmatprep.subr.mxu0 0.0
        %4853 = vmatpush2.msra.mxu0 0.0
        %4854 = vmatprep.subr.mxu0 0.0
        %4855 = vmatpush2.msra.mxu0 0.0
        %4856 = vmatprep.subr.mxu0 0.0
        %4857 = vmatpush2.msra.mxu0 0.0
        %4858 = vmatprep.subr.mxu0 0.0
        %4859 = vmatpush2.msra.mxu0 0.0
        %4860 = vmatprep.subr.mxu0 0.0
        %4861 = vmatpush2.msra.mxu0 0.0
        %4862 = vmatprep.subr.mxu0 0.0
        %4863 = vmatpush2.msra.mxu0 0.0
        %4864 = vmatprep.subr.mxu0 0.0
        %4865 = vmatpush2.msra.mxu0 0.0
        %4866 = vmatprep.subr.mxu0 0.0
        %4867 = vmatpush2.msra.mxu0 0.0
        %4868 = vmatprep.subr.mxu0 0.0
        %4869 = vmatpush2.msra.mxu0 0.0
        %4870 = vmatprep.subr.mxu0 0.0
        %4871 = vmatpush2.msra.mxu0 0.0
        %4872 = vmatprep.subr.mxu0 0.0
        %4873 = vmatpush2.msra.mxu0 0.0
        %4874 = vmatprep.subr.mxu0 0.0
        %4875 = vmatpush2.msra.mxu0 0.0
        %4876 = vmatprep.subr.mxu0 0.0
        %4877 = vmatpush2.msra.mxu0 0.0
        %4878 = vmatprep.subr.mxu0 0.0
        %4879 = vmatpush2.msra.mxu0 0.0
        %4880 = vmatprep.mubr.f32.mxu0 0.0
        %4881 = vmatmul.mubr.f32.gmra.mxu0 %v381
        %v4882 = vpop.f32.mrf.mxu0
        %v4883 = vadd.f32 %v4814, %v4882
        %v4884 = vpop.f32.mrf.mxu0
        %4885 = vdwg.mxu0
        %v4886 = vlaneseq
        %v4887 = vshrl.u32 %v4886, 7
        %v4888 = vsub.s32 0, %v4887
        %v4889 = vrot.slane %v4808, %v4888
        %v4890 = vadd.f32 %v4883, %v4889
        %v4891 = vtanh.pop %v4890
        %v4892 = vmul.f32 %v894, %v4891
        %v4893 = vadd.f32 %v4892, 0.0
        %4894 = vset.pattern.permute.xlu0 1
        %4895 = vperm.xlu0 %4894, %v483
        %v4896 = vpop.permute.xlu0 %4895
        %4898 = vmatprep.subr.mxu0 0.0
        %4899 = vmatpush1.msra.mxu0 0.0
        %4900 = vmatprep.subr.mxu0 0.0
        %4901 = vmatpush1.msra.mxu0 0.0
        %4902 = vmatprep.subr.mxu0 0.0
        %4903 = vmatpush1.msra.mxu0 0.0
        %4904 = vmatprep.subr.mxu0 0.0
        %4905 = vmatpush1.msra.mxu0 0.0
        %4906 = vmatprep.subr.mxu0 0.0
        %4907 = vmatpush1.msra.mxu0 0.0
        %4908 = vmatprep.subr.mxu0 0.0
        %4909 = vmatpush1.msra.mxu0 0.0
        %4910 = vmatprep.subr.mxu0 0.0
        %4911 = vmatpush1.msra.mxu0 0.0
        %4912 = vmatprep.subr.mxu0 0.0
        %4913 = vmatpush1.msra.mxu0 0.0
        %4914 = vmatprep.subr.mxu0 0.0
        %4915 = vmatpush1.msra.mxu0 0.0
        %4916 = vmatprep.subr.mxu0 0.0
        %4917 = vmatpush1.msra.mxu0 0.0
        %4918 = vmatprep.subr.mxu0 0.0
        %4919 = vmatpush1.msra.mxu0 0.0
        %4920 = vmatprep.subr.mxu0 0.0
        %4921 = vmatpush1.msra.mxu0 0.0
        %4922 = vmatprep.subr.mxu0 0.0
        %4923 = vmatpush1.msra.mxu0 %v4698
        %4924 = vmatprep.subr.mxu0 0.0
        %4925 = vmatpush1.msra.mxu0 %v4693
        %4926 = vmatprep.subr.mxu0 0.0
        %4927 = vmatpush1.msra.mxu0 %v4688
        %4928 = vmatprep.subr.mxu0 0.0
        %4929 = vmatpush1.msra.mxu0 %v4683
        %4930 = vmatprep.subr.mxu0 0.0
        %4931 = vmatpush2.msra.mxu0 0.0
        %4932 = vmatprep.subr.mxu0 0.0
        %4933 = vmatpush2.msra.mxu0 0.0
        %4934 = vmatprep.subr.mxu0 0.0
        %4935 = vmatpush2.msra.mxu0 0.0
        %4936 = vmatprep.subr.mxu0 0.0
        %4937 = vmatpush2.msra.mxu0 0.0
        %4938 = vmatprep.subr.mxu0 0.0
        %4939 = vmatpush2.msra.mxu0 0.0
        %4940 = vmatprep.subr.mxu0 0.0
        %4941 = vmatpush2.msra.mxu0 0.0
        %4942 = vmatprep.subr.mxu0 0.0
        %4943 = vmatpush2.msra.mxu0 0.0
        %4944 = vmatprep.subr.mxu0 0.0
        %4945 = vmatpush2.msra.mxu0 0.0
        %4946 = vmatprep.subr.mxu0 0.0
        %4947 = vmatpush2.msra.mxu0 0.0
        %4948 = vmatprep.subr.mxu0 0.0
        %4949 = vmatpush2.msra.mxu0 0.0
        %4950 = vmatprep.subr.mxu0 0.0
        %4951 = vmatpush2.msra.mxu0 0.0
        %4952 = vmatprep.subr.mxu0 0.0
        %4953 = vmatpush2.msra.mxu0 0.0
        %4954 = vmatprep.subr.mxu0 0.0
        %4955 = vmatpush2.msra.mxu0 0.0
        %4956 = vmatprep.subr.mxu0 0.0
        %4957 = vmatpush2.msra.mxu0 0.0
        %4958 = vmatprep.subr.mxu0 0.0
        %4959 = vmatpush2.msra.mxu0 0.0
        %4960 = vmatprep.subr.mxu0 0.0
        %4961 = vmatpush2.msra.mxu0 0.0
        %4962 = vmatprep.mubr.f32.mxu0 0.0
        %4963 = vmatmul.mubr.f32.gmra.mxu0 %v381
        %v4964 = vpop.f32.mrf.mxu0
        %v4965 = vadd.f32 %v4896, %v4964
        %v4966 = vpop.f32.mrf.mxu0
        %4967 = vdwg.mxu0
        %v4968 = vlaneseq
        %v4969 = vshrl.u32 %v4968, 7
        %v4970 = vsub.s32 1, %v4969
        %v4971 = vrot.slane %v4808, %v4970
        %v4972 = vadd.f32 %v4965, %v4971
        %v4973 = vtanh.pop %v4972
        %v4974 = vmul.f32 %v978, %v4973
        %v4975 = vadd.f32 %v4893, %v4974
        %4976 = vset.pattern.permute.xlu0 2
        %4977 = vperm.xlu0 %4976, %v483
        %v4978 = vpop.permute.xlu0 %4977
        %4980 = vmatprep.subr.mxu0 0.0
        %4981 = vmatpush1.msra.mxu0 0.0
        %4982 = vmatprep.subr.mxu0 0.0
        %4983 = vmatpush1.msra.mxu0 0.0
        %4984 = vmatprep.subr.mxu0 0.0
        %4985 = vmatpush1.msra.mxu0 0.0
        %4986 = vmatprep.subr.mxu0 0.0
        %4987 = vmatpush1.msra.mxu0 0.0
        %4988 = vmatprep.subr.mxu0 0.0
        %4989 = vmatpush1.msra.mxu0 0.0
        %4990 = vmatprep.subr.mxu0 0.0
        %4991 = vmatpush1.msra.mxu0 0.0
        %4992 = vmatprep.subr.mxu0 0.0
        %4993 = vmatpush1.msra.mxu0 0.0
        %4994 = vmatprep.subr.mxu0 0.0
        %4995 = vmatpush1.msra.mxu0 0.0
        %4996 = vmatprep.subr.mxu0 0.0
        %4997 = vmatpush1.msra.mxu0 0.0
        %4998 = vmatprep.subr.mxu0 0.0
        %4999 = vmatpush1.msra.mxu0 0.0
        %5000 = vmatprep.subr.mxu0 0.0
        %5001 = vmatpush1.msra.mxu0 0.0
        %5002 = vmatprep.subr.mxu0 0.0
        %5003 = vmatpush1.msra.mxu0 0.0
        %5004 = vmatprep.subr.mxu0 0.0
        %5005 = vmatpush1.msra.mxu0 %v4718
        %5006 = vmatprep.subr.mxu0 0.0
        %5007 = vmatpush1.msra.mxu0 %v4713
        %5008 = vmatprep.subr.mxu0 0.0
        %5009 = vmatpush1.msra.mxu0 %v4708
        %5010 = vmatprep.subr.mxu0 0.0
        %5011 = vmatpush1.msra.mxu0 %v4703
        %5012 = vmatprep.subr.mxu0 0.0
        %5013 = vmatpush2.msra.mxu0 0.0
        %5014 = vmatprep.subr.mxu0 0.0
        %5015 = vmatpush2.msra.mxu0 0.0
        %5016 = vmatprep.subr.mxu0 0.0
        %5017 = vmatpush2.msra.mxu0 0.0
        %5018 = vmatprep.subr.mxu0 0.0
        %5019 = vmatpush2.msra.mxu0 0.0
        %5020 = vmatprep.subr.mxu0 0.0
        %5021 = vmatpush2.msra.mxu0 0.0
        %5022 = vmatprep.subr.mxu0 0.0
        %5023 = vmatpush2.msra.mxu0 0.0
        %5024 = vmatprep.subr.mxu0 0.0
        %5025 = vmatpush2.msra.mxu0 0.0
        %5026 = vmatprep.subr.mxu0 0.0
        %5027 = vmatpush2.msra.mxu0 0.0
        %5028 = vmatprep.subr.mxu0 0.0
        %5029 = vmatpush2.msra.mxu0 0.0
        %5030 = vmatprep.subr.mxu0 0.0
        %5031 = vmatpush2.msra.mxu0 0.0
        %5032 = vmatprep.subr.mxu0 0.0
        %5033 = vmatpush2.msra.mxu0 0.0
        %5034 = vmatprep.subr.mxu0 0.0
        %5035 = vmatpush2.msra.mxu0 0.0
        %5036 = vmatprep.subr.mxu0 0.0
        %5037 = vmatpush2.msra.mxu0 0.0
        %5038 = vmatprep.subr.mxu0 0.0
        %5039 = vmatpush2.msra.mxu0 0.0
        %5040 = vmatprep.subr.mxu0 0.0
        %5041 = vmatpush2.msra.mxu0 0.0
        %5042 = vmatprep.subr.mxu0 0.0
        %5043 = vmatpush2.msra.mxu0 0.0
        %5044 = vmatprep.mubr.f32.mxu0 0.0
        %5045 = vmatmul.mubr.f32.gmra.mxu0 %v381
        %v5046 = vpop.f32.mrf.mxu0
        %v5047 = vadd.f32 %v4978, %v5046
        %v5048 = vpop.f32.mrf.mxu0
        %5049 = vdwg.mxu0
        %v5050 = vlaneseq
        %v5051 = vshrl.u32 %v5050, 7
        %v5052 = vsub.s32 2, %v5051
        %v5053 = vrot.slane %v4808, %v5052
        %v5054 = vadd.f32 %v5047, %v5053
        %v5055 = vtanh.pop %v5054
        %v5056 = vmul.f32 %v1062, %v5055
        %v5057 = vadd.f32 %v4975, %v5056
        %5058 = vset.pattern.permute.xlu0 3
        %5059 = vperm.xlu0 %5058, %v483
        %v5060 = vpop.permute.xlu0 %5059
        %5062 = vmatprep.subr.mxu0 0.0
        %5063 = vmatpush1.msra.mxu0 0.0
        %5064 = vmatprep.subr.mxu0 0.0
        %5065 = vmatpush1.msra.mxu0 0.0
        %5066 = vmatprep.subr.mxu0 0.0
        %5067 = vmatpush1.msra.mxu0 0.0
        %5068 = vmatprep.subr.mxu0 0.0
        %5069 = vmatpush1.msra.mxu0 0.0
        %5070 = vmatprep.subr.mxu0 0.0
        %5071 = vmatpush1.msra.mxu0 0.0
        %5072 = vmatprep.subr.mxu0 0.0
        %5073 = vmatpush1.msra.mxu0 0.0
        %5074 = vmatprep.subr.mxu0 0.0
        %5075 = vmatpush1.msra.mxu0 0.0
        %5076 = vmatprep.subr.mxu0 0.0
        %5077 = vmatpush1.msra.mxu0 0.0
        %5078 = vmatprep.subr.mxu0 0.0
        %5079 = vmatpush1.msra.mxu0 0.0
        %5080 = vmatprep.subr.mxu0 0.0
        %5081 = vmatpush1.msra.mxu0 0.0
        %5082 = vmatprep.subr.mxu0 0.0
        %5083 = vmatpush1.msra.mxu0 0.0
        %5084 = vmatprep.subr.mxu0 0.0
        %5085 = vmatpush1.msra.mxu0 0.0
        %5086 = vmatprep.subr.mxu0 0.0
        %5087 = vmatpush1.msra.mxu0 %v4738
        %5088 = vmatprep.subr.mxu0 0.0
        %5089 = vmatpush1.msra.mxu0 %v4733
        %5090 = vmatprep.subr.mxu0 0.0
        %5091 = vmatpush1.msra.mxu0 %v4728
        %5092 = vmatprep.subr.mxu0 0.0
        %5093 = vmatpush1.msra.mxu0 %v4723
        %5094 = vmatprep.subr.mxu0 0.0
        %5095 = vmatpush2.msra.mxu0 0.0
        %5096 = vmatprep.subr.mxu0 0.0
        %5097 = vmatpush2.msra.mxu0 0.0
        %5098 = vmatprep.subr.mxu0 0.0
        %5099 = vmatpush2.msra.mxu0 0.0
        %5100 = vmatprep.subr.mxu0 0.0
        %5101 = vmatpush2.msra.mxu0 0.0
        %5102 = vmatprep.subr.mxu0 0.0
        %5103 = vmatpush2.msra.mxu0 0.0
        %5104 = vmatprep.subr.mxu0 0.0
        %5105 = vmatpush2.msra.mxu0 0.0
        %5106 = vmatprep.subr.mxu0 0.0
        %5107 = vmatpush2.msra.mxu0 0.0
        %5108 = vmatprep.subr.mxu0 0.0
        %5109 = vmatpush2.msra.mxu0 0.0
        %5110 = vmatprep.subr.mxu0 0.0
        %5111 = vmatpush2.msra.mxu0 0.0
        %5112 = vmatprep.subr.mxu0 0.0
        %5113 = vmatpush2.msra.mxu0 0.0
        %5114 = vmatprep.subr.mxu0 0.0
        %5115 = vmatpush2.msra.mxu0 0.0
        %5116 = vmatprep.subr.mxu0 0.0
        %5117 = vmatpush2.msra.mxu0 0.0
        %5118 = vmatprep.subr.mxu0 0.0
        %5119 = vmatpush2.msra.mxu0 0.0
        %5120 = vmatprep.subr.mxu0 0.0
        %5121 = vmatpush2.msra.mxu0 0.0
        %5122 = vmatprep.subr.mxu0 0.0
        %5123 = vmatpush2.msra.mxu0 0.0
        %5124 = vmatprep.subr.mxu0 0.0
        %5125 = vmatpush2.msra.mxu0 0.0
        %5126 = vmatprep.mubr.f32.mxu0 0.0
        %5127 = vmatmul.mubr.f32.gmra.mxu0 %v381
        %v5128 = vpop.f32.mrf.mxu0
        %v5129 = vadd.f32 %v5060, %v5128
        %v5130 = vpop.f32.mrf.mxu0
        %5131 = vdwg.mxu0
        %v5132 = vlaneseq
        %v5133 = vshrl.u32 %v5132, 7
        %v5134 = vsub.s32 3, %v5133
        %v5135 = vrot.slane %v4808, %v5134
        %v5136 = vadd.f32 %v5129, %v5135
        %v5137 = vtanh.pop %v5136
        %v5138 = vmul.f32 %v1146, %v5137
        %v5139 = vadd.f32 %v5057, %v5138
        %v5140 = vsel %vm1149, %v5139, -inf
        %5141 = vmax.xlane.f32.xlu0 %v5140
        %v5142 = vpop.xlane.xlu0 %5141
        %v5143 = vrot.slane %v5142, 4
        %v5144 = vmax.f32 %v5142, %v5143
        %v5145 = vrot.slane %v5144, 2
        %v5146 = vmax.f32 %v5144, %v5145
        %v5147 = vrot.slane %v5146, 1
        %v5148 = vmax.f32 %v5146, %v5147
        %s5149 = vtos %v5148
        %v5150 = vstv %s5149
        %v5151 = vsub.f32 %v5139, %v5150
        %v5152 = vmul.f32 %v5151, 1.442695
        %v5153 = vpow.pop %v5152
        %v5154 = vsel %vm1149, %v5153, 0.0
        %5155 = vadd.xlane.f32.xlu0 %v5154
        %v5156 = vpop.xlane.xlu0 %5155
        %v5157 = vrcp.pop %v5156
        %v5158 = vmul.f32 %v5153, %v5157
        %v5159 = vsel %vm1149, %v5158, 0.0
        %v5160 = vrot.slane %v5159, 4
        %v5161 = vadd.f32 %v5159, %v5160
        %v5162 = vrot.slane %v5161, 2
        %v5163 = vadd.f32 %v5161, %v5162
        %v5164 = vrot.slane %v5163, 1
        %v5165 = vadd.f32 %v5163, %v5164
        %v5166 = vrot.slane %v5154, 4
        %v5167 = vadd.f32 %v5154, %v5166
        %v5168 = vrot.slane %v5167, 2
        %v5169 = vadd.f32 %v5167, %v5168
        %v5170 = vrot.slane %v5169, 1
        %v5171 = vadd.f32 %v5169, %v5170
        %v5172 = vrcp.pop %v5171
        %v5173 = vmul.f32 %v5153, %v5172
        %v5174 = vsel %vm1149, %v5173, 0.0
        %5175 = vadd.xlane.f32.xlu0 %v5174
        %v5176 = vpop.xlane.xlu0 %5175
        %v5178 = vsel %vm1149, %v5165, 0
        %5180 = vmatprep.subr.mxu0 0.0
        %5181 = vmatpush1.msra.mxu0 0.0
        %5182 = vmatprep.subr.mxu0 0.0
        %5183 = vmatpush1.msra.mxu0 0.0
        %5184 = vmatprep.subr.mxu0 0.0
        %5185 = vmatpush1.msra.mxu0 0.0
        %5186 = vmatprep.subr.mxu0 0.0
        %5187 = vmatpush1.msra.mxu0 0.0
        %5188 = vmatprep.subr.mxu0 0.0
        %5189 = vmatpush1.msra.mxu0 0.0
        %5190 = vmatprep.subr.mxu0 0.0
        %5191 = vmatpush1.msra.mxu0 0.0
        %5192 = vmatprep.subr.mxu0 0.0
        %5193 = vmatpush1.msra.mxu0 0.0
        %5194 = vmatprep.subr.mxu0 0.0
        %5195 = vmatpush1.msra.mxu0 0.0
        %5196 = vmatprep.subr.mxu0 0.0
        %5197 = vmatpush1.msra.mxu0 0.0
        %5198 = vmatprep.subr.mxu0 0.0
        %5199 = vmatpush1.msra.mxu0 0.0
        %5200 = vmatprep.subr.mxu0 0.0
        %5201 = vmatpush1.msra.mxu0 0.0
        %5202 = vmatprep.subr.mxu0 0.0
        %5203 = vmatpush1.msra.mxu0 0.0
        %5204 = vmatprep.subr.mxu0 0.0
        %5205 = vmatpush1.msra.mxu0 0.0
        %5206 = vmatprep.subr.mxu0 0.0
        %5207 = vmatpush1.msra.mxu0 0.0
        %5208 = vmatprep.subr.mxu0 0.0
        %5209 = vmatpush1.msra.mxu0 0.0
        %5210 = vmatprep.subr.mxu0 0.0
        %5211 = vmatpush1.msra.mxu0 %v348
        %5212 = vmatprep.subr.mxu0 0.0
        %5213 = vmatpush2.msra.mxu0 0.0
        %5214 = vmatprep.subr.mxu0 0.0
        %5215 = vmatpush2.msra.mxu0 0.0
        %5216 = vmatprep.subr.mxu0 0.0
        %5217 = vmatpush2.msra.mxu0 0.0
        %5218 = vmatprep.subr.mxu0 0.0
        %5219 = vmatpush2.msra.mxu0 0.0
        %5220 = vmatprep.subr.mxu0 0.0
        %5221 = vmatpush2.msra.mxu0 0.0
        %5222 = vmatprep.subr.mxu0 0.0
        %5223 = vmatpush2.msra.mxu0 0.0
        %5224 = vmatprep.subr.mxu0 0.0
        %5225 = vmatpush2.msra.mxu0 0.0
        %5226 = vmatprep.subr.mxu0 0.0
        %5227 = vmatpush2.msra.mxu0 0.0
        %5228 = vmatprep.subr.mxu0 0.0
        %5229 = vmatpush2.msra.mxu0 0.0
        %5230 = vmatprep.subr.mxu0 0.0
        %5231 = vmatpush2.msra.mxu0 0.0
        %5232 = vmatprep.subr.mxu0 0.0
        %5233 = vmatpush2.msra.mxu0 0.0
        %5234 = vmatprep.subr.mxu0 0.0
        %5235 = vmatpush2.msra.mxu0 0.0
        %5236 = vmatprep.subr.mxu0 0.0
        %5237 = vmatpush2.msra.mxu0 0.0
        %5238 = vmatprep.subr.mxu0 0.0
        %5239 = vmatpush2.msra.mxu0 0.0
        %5240 = vmatprep.subr.mxu0 0.0
        %5241 = vmatpush2.msra.mxu0 0.0
        %5242 = vmatprep.subr.mxu0 0.0
        %5243 = vmatpush2.msra.mxu0 0.0
        %5244 = vmatprep.mubr.f32.mxu0 0.0
        %5245 = vmatmul.mubr.f32.gmra.mxu0 %v5178
        %v5246 = vpop.f32.mrf.mxu0
        %v5247 = vadd.f32 0.0, %v5246
        %v5248 = vpop.f32.mrf.mxu0
        %5249 = vdwg.mxu0
        %v5250 = vmul.f32 %v5176, %v340
        %v5251 = vsel %vm361, %v5250, 0.0
        %v5252 = vrot.slane %v5251, 4
        %v5253 = vadd.f32 %v5251, %v5252
        %v5254 = vrot.slane %v5253, 2
        %v5255 = vadd.f32 %v5253, %v5254
        %v5256 = vrot.slane %v5255, 1
        %v5257 = vadd.f32 %v5255, %v5256
        %v5259 = vsel %vm361, %v349, 0
        %5261 = vmatprep.subr.mxu0 0.0
        %5262 = vmatpush1.xpose.msra.mxu0 0.0
        %5263 = vmatprep.subr.mxu0 0.0
        %5264 = vmatpush1.xpose.msra.mxu0 0.0
        %5265 = vmatprep.subr.mxu0 0.0
        %5266 = vmatpush1.xpose.msra.mxu0 0.0
        %5267 = vmatprep.subr.mxu0 0.0
        %5268 = vmatpush1.xpose.msra.mxu0 0.0
        %5269 = vmatprep.subr.mxu0 0.0
        %5270 = vmatpush1.xpose.msra.mxu0 0.0
        %5271 = vmatprep.subr.mxu0 0.0
        %5272 = vmatpush1.xpose.msra.mxu0 0.0
        %5273 = vmatprep.subr.mxu0 0.0
        %5274 = vmatpush1.xpose.msra.mxu0 0.0
        %5275 = vmatprep.subr.mxu0 0.0
        %5276 = vmatpush1.xpose.msra.mxu0 0.0
        %5277 = vmatprep.subr.mxu0 0.0
        %5278 = vmatpush1.xpose.msra.mxu0 0.0
        %5279 = vmatprep.subr.mxu0 0.0
        %5280 = vmatpush1.xpose.msra.mxu0 0.0
        %5281 = vmatprep.subr.mxu0 0.0
        %5282 = vmatpush1.xpose.msra.mxu0 0.0
        %5283 = vmatprep.subr.mxu0 0.0
        %5284 = vmatpush1.xpose.msra.mxu0 0.0
        %5285 = vmatprep.subr.mxu0 0.0
        %5286 = vmatpush1.xpose.msra.mxu0 0.0
        %5287 = vmatprep.subr.mxu0 0.0
        %5288 = vmatpush1.xpose.msra.mxu0 0.0
        %5289 = vmatprep.subr.mxu0 0.0
        %5290 = vmatpush1.xpose.msra.mxu0 0.0
        %5291 = vmatprep.subr.mxu0 0.0
        %5292 = vmatpush1.xpose.msra.mxu0 %v5259
        %5293 = vmatprep.subr.mxu0 0.0
        %5294 = vmatpush2.xpose.msra.mxu0 0.0
        %5295 = vmatprep.subr.mxu0 0.0
        %5296 = vmatpush2.xpose.msra.mxu0 0.0
        %5297 = vmatprep.subr.mxu0 0.0
        %5298 = vmatpush2.xpose.msra.mxu0 0.0
        %5299 = vmatprep.subr.mxu0 0.0
        %5300 = vmatpush2.xpose.msra.mxu0 0.0
        %5301 = vmatprep.subr.mxu0 0.0
        %5302 = vmatpush2.xpose.msra.mxu0 0.0
        %5303 = vmatprep.subr.mxu0 0.0
        %5304 = vmatpush2.xpose.msra.mxu0 0.0
        %5305 = vmatprep.subr.mxu0 0.0
        %5306 = vmatpush2.xpose.msra.mxu0 0.0
        %5307 = vmatprep.subr.mxu0 0.0
        %5308 = vmatpush2.xpose.msra.mxu0 0.0
        %5309 = vmatprep.subr.mxu0 0.0
        %5310 = vmatpush2.xpose.msra.mxu0 0.0
        %5311 = vmatprep.subr.mxu0 0.0
        %5312 = vmatpush2.xpose.msra.mxu0 0.0
        %5313 = vmatprep.subr.mxu0 0.0
        %5314 = vmatpush2.xpose.msra.mxu0 0.0
        %5315 = vmatprep.subr.mxu0 0.0
        %5316 = vmatpush2.xpose.msra.mxu0 0.0
        %5317 = vmatprep.subr.mxu0 0.0
        %5318 = vmatpush2.xpose.msra.mxu0 0.0
        %5319 = vmatprep.subr.mxu0 0.0
        %5320 = vmatpush2.xpose.msra.mxu0 0.0
        %5321 = vmatprep.subr.mxu0 0.0
        %5322 = vmatpush2.xpose.msra.mxu0 0.0
        %5323 = vmatprep.subr.mxu0 0.0
        %5324 = vmatpush2.xpose.msra.mxu0 0.0
        %5325 = vmatprep.mubr.f32.mxu0 0.0
        %5326 = vmatmul.mubr.f32.gmra.mxu0 %v508
        %v5327 = vpop.f32.mrf.mxu0
        %v5328 = vadd.f32 0.0, %v5327
        %v5329 = vpop.f32.mrf.mxu0
        %5330 = vmatprep.mubr.f32.mxu0 0.0
        %5331 = vmatmul.mubr.f32.gmra.mxu0 %v511
        %v5332 = vpop.f32.mrf.mxu0
        %v5333 = vadd.f32 0.0, %v5332
        %v5334 = vpop.f32.mrf.mxu0
        %5335 = vmatprep.mubr.f32.mxu0 0.0
        %5336 = vmatmul.mubr.f32.gmra.mxu0 %v514
        %v5337 = vpop.f32.mrf.mxu0
        %v5338 = vadd.f32 0.0, %v5337
        %v5339 = vpop.f32.mrf.mxu0
        %5340 = vmatprep.mubr.f32.mxu0 0.0
        %5341 = vmatmul.mubr.f32.gmra.mxu0 %v517
        %v5342 = vpop.f32.mrf.mxu0
        %v5343 = vadd.f32 0.0, %v5342
        %v5344 = vpop.f32.mrf.mxu0
        %5345 = vmatprep.mubr.f32.mxu0 0.0
        %5346 = vmatmul.mubr.f32.gmra.mxu0 %v520
        %v5347 = vpop.f32.mrf.mxu0
        %v5348 = vadd.f32 0.0, %v5347
        %v5349 = vpop.f32.mrf.mxu0
        %5350 = vmatprep.mubr.f32.mxu0 0.0
        %5351 = vmatmul.mubr.f32.gmra.mxu0 %v523
        %v5352 = vpop.f32.mrf.mxu0
        %v5353 = vadd.f32 0.0, %v5352
        %v5354 = vpop.f32.mrf.mxu0
        %5355 = vmatprep.mubr.f32.mxu0 0.0
        %5356 = vmatmul.mubr.f32.gmra.mxu0 %v526
        %v5357 = vpop.f32.mrf.mxu0
        %v5358 = vadd.f32 0.0, %v5357
        %v5359 = vpop.f32.mrf.mxu0
        %5360 = vmatprep.mubr.f32.mxu0 0.0
        %5361 = vmatmul.mubr.f32.gmra.mxu0 %v529
        %v5362 = vpop.f32.mrf.mxu0
        %v5363 = vadd.f32 0.0, %v5362
        %v5364 = vpop.f32.mrf.mxu0
        %5365 = vmatprep.mubr.f32.mxu0 0.0
        %5366 = vmatmul.mubr.f32.gmra.mxu0 %v532
        %v5367 = vpop.f32.mrf.mxu0
        %v5368 = vadd.f32 0.0, %v5367
        %v5369 = vpop.f32.mrf.mxu0
        %5370 = vmatprep.mubr.f32.mxu0 0.0
        %5371 = vmatmul.mubr.f32.gmra.mxu0 %v535
        %v5372 = vpop.f32.mrf.mxu0
        %v5373 = vadd.f32 0.0, %v5372
        %v5374 = vpop.f32.mrf.mxu0
        %5375 = vmatprep.mubr.f32.mxu0 0.0
        %5376 = vmatmul.mubr.f32.gmra.mxu0 %v538
        %v5377 = vpop.f32.mrf.mxu0
        %v5378 = vadd.f32 0.0, %v5377
        %v5379 = vpop.f32.mrf.mxu0
        %5380 = vmatprep.mubr.f32.mxu0 0.0
        %5381 = vmatmul.mubr.f32.gmra.mxu0 %v541
        %v5382 = vpop.f32.mrf.mxu0
        %v5383 = vadd.f32 0.0, %v5382
        %v5384 = vpop.f32.mrf.mxu0
        %5385 = vmatprep.mubr.f32.mxu0 0.0
        %5386 = vmatmul.mubr.f32.gmra.mxu0 %v544
        %v5387 = vpop.f32.mrf.mxu0
        %v5388 = vadd.f32 0.0, %v5387
        %v5389 = vpop.f32.mrf.mxu0
        %5390 = vmatprep.mubr.f32.mxu0 0.0
        %5391 = vmatmul.mubr.f32.gmra.mxu0 %v547
        %v5392 = vpop.f32.mrf.mxu0
        %v5393 = vadd.f32 0.0, %v5392
        %v5394 = vpop.f32.mrf.mxu0
        %5395 = vmatprep.mubr.f32.mxu0 0.0
        %5396 = vmatmul.mubr.f32.gmra.mxu0 %v550
        %v5397 = vpop.f32.mrf.mxu0
        %v5398 = vadd.f32 0.0, %v5397
        %v5399 = vpop.f32.mrf.mxu0
        %5400 = vmatprep.mubr.f32.mxu0 0.0
        %5401 = vmatmul.mubr.f32.gmra.mxu0 %v553
        %v5402 = vpop.f32.mrf.mxu0
        %v5403 = vadd.f32 0.0, %v5402
        %v5404 = vpop.f32.mrf.mxu0
        %5405 = vdwg.mxu0
        %5406 = vmatprep.subr.mxu0 0.0
        %5407 = vmatpush1.xpose.msra.mxu0 0.0
        %5408 = vmatprep.subr.mxu0 0.0
        %5409 = vmatpush1.xpose.msra.mxu0 0.0
        %5410 = vmatprep.subr.mxu0 0.0
        %5411 = vmatpush1.xpose.msra.mxu0 0.0
        %5412 = vmatprep.subr.mxu0 0.0
        %5413 = vmatpush1.xpose.msra.mxu0 0.0
        %5414 = vmatprep.subr.mxu0 0.0
        %5415 = vmatpush1.xpose.msra.mxu0 0.0
        %5416 = vmatprep.subr.mxu0 0.0
        %5417 = vmatpush1.xpose.msra.mxu0 0.0
        %5418 = vmatprep.subr.mxu0 0.0
        %5419 = vmatpush1.xpose.msra.mxu0 0.0
        %5420 = vmatprep.subr.mxu0 0.0
        %5421 = vmatpush1.xpose.msra.mxu0 0.0
        %5422 = vmatprep.subr.mxu0 0.0
        %5423 = vmatpush1.xpose.msra.mxu0 0.0
        %5424 = vmatprep.subr.mxu0 0.0
        %5425 = vmatpush1.xpose.msra.mxu0 0.0
        %5426 = vmatprep.subr.mxu0 0.0
        %5427 = vmatpush1.xpose.msra.mxu0 0.0
        %5428 = vmatprep.subr.mxu0 0.0
        %5429 = vmatpush1.xpose.msra.mxu0 0.0
        %5430 = vmatprep.subr.mxu0 0.0
        %5431 = vmatpush1.xpose.msra.mxu0 0.0
        %5432 = vmatprep.subr.mxu0 0.0
        %5433 = vmatpush1.xpose.msra.mxu0 0.0
        %5434 = vmatprep.subr.mxu0 0.0
        %5435 = vmatpush1.xpose.msra.mxu0 0.0
        %5436 = vmatprep.subr.mxu0 0.0
        %5437 = vmatpush1.xpose.msra.mxu0 %v5259
        %5438 = vmatprep.subr.mxu0 0.0
        %5439 = vmatpush2.xpose.msra.mxu0 0.0
        %5440 = vmatprep.subr.mxu0 0.0
        %5441 = vmatpush2.xpose.msra.mxu0 0.0
        %5442 = vmatprep.subr.mxu0 0.0
        %5443 = vmatpush2.xpose.msra.mxu0 0.0
        %5444 = vmatprep.subr.mxu0 0.0
        %5445 = vmatpush2.xpose.msra.mxu0 0.0
        %5446 = vmatprep.subr.mxu0 0.0
        %5447 = vmatpush2.xpose.msra.mxu0 0.0
        %5448 = vmatprep.subr.mxu0 0.0
        %5449 = vmatpush2.xpose.msra.mxu0 0.0
        %5450 = vmatprep.subr.mxu0 0.0
        %5451 = vmatpush2.xpose.msra.mxu0 0.0
        %5452 = vmatprep.subr.mxu0 0.0
        %5453 = vmatpush2.xpose.msra.mxu0 0.0
        %5454 = vmatprep.subr.mxu0 0.0
        %5455 = vmatpush2.xpose.msra.mxu0 0.0
        %5456 = vmatprep.subr.mxu0 0.0
        %5457 = vmatpush2.xpose.msra.mxu0 0.0
        %5458 = vmatprep.subr.mxu0 0.0
        %5459 = vmatpush2.xpose.msra.mxu0 0.0
        %5460 = vmatprep.subr.mxu0 0.0
        %5461 = vmatpush2.xpose.msra.mxu0 0.0
        %5462 = vmatprep.subr.mxu0 0.0
        %5463 = vmatpush2.xpose.msra.mxu0 0.0
        %5464 = vmatprep.subr.mxu0 0.0
        %5465 = vmatpush2.xpose.msra.mxu0 0.0
        %5466 = vmatprep.subr.mxu0 0.0
        %5467 = vmatpush2.xpose.msra.mxu0 0.0
        %5468 = vmatprep.subr.mxu0 0.0
        %5469 = vmatpush2.xpose.msra.mxu0 0.0
        %5470 = vmatprep.mubr.f32.mxu0 0.0
        %5471 = vmatmul.mubr.f32.gmra.mxu0 %v740
        %v5472 = vpop.f32.mrf.mxu0
        %v5473 = vadd.f32 0.0, %v5472
        %v5474 = vpop.f32.mrf.mxu0
        %5475 = vdwg.mxu0
        %5477 = vset.pattern.permute.xlu0 0
        %5478 = vperm.xlu0 %5477, %v488
        %v5479 = vpop.permute.xlu0 %5478
        %5481 = vmatprep.subr.mxu0 0.0
        %5482 = vmatpush1.msra.mxu0 0.0
        %5483 = vmatprep.subr.mxu0 0.0
        %5484 = vmatpush1.msra.mxu0 0.0
        %5485 = vmatprep.subr.mxu0 0.0
        %5486 = vmatpush1.msra.mxu0 0.0
        %5487 = vmatprep.subr.mxu0 0.0
        %5488 = vmatpush1.msra.mxu0 0.0
        %5489 = vmatprep.subr.mxu0 0.0
        %5490 = vmatpush1.msra.mxu0 0.0
        %5491 = vmatprep.subr.mxu0 0.0
        %5492 = vmatpush1.msra.mxu0 0.0
        %5493 = vmatprep.subr.mxu0 0.0
        %5494 = vmatpush1.msra.mxu0 0.0
        %5495 = vmatprep.subr.mxu0 0.0
        %5496 = vmatpush1.msra.mxu0 0.0
        %5497 = vmatprep.subr.mxu0 0.0
        %5498 = vmatpush1.msra.mxu0 0.0
        %5499 = vmatprep.subr.mxu0 0.0
        %5500 = vmatpush1.msra.mxu0 0.0
        %5501 = vmatprep.subr.mxu0 0.0
        %5502 = vmatpush1.msra.mxu0 0.0
        %5503 = vmatprep.subr.mxu0 0.0
        %5504 = vmatpush1.msra.mxu0 0.0
        %5505 = vmatprep.subr.mxu0 0.0
        %5506 = vmatpush1.msra.mxu0 %v5343
        %5507 = vmatprep.subr.mxu0 0.0
        %5508 = vmatpush1.msra.mxu0 %v5338
        %5509 = vmatprep.subr.mxu0 0.0
        %5510 = vmatpush1.msra.mxu0 %v5333
        %5511 = vmatprep.subr.mxu0 0.0
        %5512 = vmatpush1.msra.mxu0 %v5328
        %5513 = vmatprep.subr.mxu0 0.0
        %5514 = vmatpush2.msra.mxu0 0.0
        %5515 = vmatprep.subr.mxu0 0.0
        %5516 = vmatpush2.msra.mxu0 0.0
        %5517 = vmatprep.subr.mxu0 0.0
        %5518 = vmatpush2.msra.mxu0 0.0
        %5519 = vmatprep.subr.mxu0 0.0
        %5520 = vmatpush2.msra.mxu0 0.0
        %5521 = vmatprep.subr.mxu0 0.0
        %5522 = vmatpush2.msra.mxu0 0.0
        %5523 = vmatprep.subr.mxu0 0.0
        %5524 = vmatpush2.msra.mxu0 0.0
        %5525 = vmatprep.subr.mxu0 0.0
        %5526 = vmatpush2.msra.mxu0 0.0
        %5527 = vmatprep.subr.mxu0 0.0
        %5528 = vmatpush2.msra.mxu0 0.0
        %5529 = vmatprep.subr.mxu0 0.0
        %5530 = vmatpush2.msra.mxu0 0.0
        %5531 = vmatprep.subr.mxu0 0.0
        %5532 = vmatpush2.msra.mxu0 0.0
        %5533 = vmatprep.subr.mxu0 0.0
        %5534 = vmatpush2.msra.mxu0 0.0
        %5535 = vmatprep.subr.mxu0 0.0
        %5536 = vmatpush2.msra.mxu0 0.0
        %5537 = vmatprep.subr.mxu0 0.0
        %5538 = vmatpush2.msra.mxu0 0.0
        %5539 = vmatprep.subr.mxu0 0.0
        %5540 = vmatpush2.msra.mxu0 0.0
        %5541 = vmatprep.subr.mxu0 0.0
        %5542 = vmatpush2.msra.mxu0 0.0
        %5543 = vmatprep.subr.mxu0 0.0
        %5544 = vmatpush2.msra.mxu0 0.0
        %5545 = vmatprep.mubr.f32.mxu0 0.0
        %5546 = vmatmul.mubr.f32.gmra.mxu0 %v384
        %v5547 = vpop.f32.mrf.mxu0
        %v5548 = vadd.f32 %v5479, %v5547
        %v5549 = vpop.f32.mrf.mxu0
        %5550 = vdwg.mxu0
        %v5551 = vlaneseq
        %v5552 = vshrl.u32 %v5551, 7
        %v5553 = vsub.s32 0, %v5552
        %v5554 = vrot.slane %v5473, %v5553
        %v5555 = vadd.f32 %v5548, %v5554
        %v5556 = vtanh.pop %v5555
        %v5557 = vmul.f32 %v894, %v5556
        %v5558 = vadd.f32 %v5557, 0.0
        %5559 = vset.pattern.permute.xlu0 1
        %5560 = vperm.xlu0 %5559, %v488
        %v5561 = vpop.permute.xlu0 %5560
        %5563 = vmatprep.subr.mxu0 0.0
        %5564 = vmatpush1.msra.mxu0 0.0
        %5565 = vmatprep.subr.mxu0 0.0
        %5566 = vmatpush1.msra.mxu0 0.0
        %5567 = vmatprep.subr.mxu0 0.0
        %5568 = vmatpush1.msra.mxu0 0.0
        %5569 = vmatprep.subr.mxu0 0.0
        %5570 = vmatpush1.msra.mxu0 0.0
        %5571 = vmatprep.subr.mxu0 0.0
        %5572 = vmatpush1.msra.mxu0 0.0
        %5573 = vmatprep.subr.mxu0 0.0
        %5574 = vmatpush1.msra.mxu0 0.0
        %5575 = vmatprep.subr.mxu0 0.0
        %5576 = vmatpush1.msra.mxu0 0.0
        %5577 = vmatprep.subr.mxu0 0.0
        %5578 = vmatpush1.msra.mxu0 0.0
        %5579 = vmatprep.subr.mxu0 0.0
        %5580 = vmatpush1.msra.mxu0 0.0
        %5581 = vmatprep.subr.mxu0 0.0
        %5582 = vmatpush1.msra.mxu0 0.0
        %5583 = vmatprep.subr.mxu0 0.0
        %5584 = vmatpush1.msra.mxu0 0.0
        %5585 = vmatprep.subr.mxu0 0.0
        %5586 = vmatpush1.msra.mxu0 0.0
        %5587 = vmatprep.subr.mxu0 0.0
        %5588 = vmatpush1.msra.mxu0 %v5363
        %5589 = vmatprep.subr.mxu0 0.0
        %5590 = vmatpush1.msra.mxu0 %v5358
        %5591 = vmatprep.subr.mxu0 0.0
        %5592 = vmatpush1.msra.mxu0 %v5353
        %5593 = vmatprep.subr.mxu0 0.0
        %5594 = vmatpush1.msra.mxu0 %v5348
        %5595 = vmatprep.subr.mxu0 0.0
        %5596 = vmatpush2.msra.mxu0 0.0
        %5597 = vmatprep.subr.mxu0 0.0
        %5598 = vmatpush2.msra.mxu0 0.0
        %5599 = vmatprep.subr.mxu0 0.0
        %5600 = vmatpush2.msra.mxu0 0.0
        %5601 = vmatprep.subr.mxu0 0.0
        %5602 = vmatpush2.msra.mxu0 0.0
        %5603 = vmatprep.subr.mxu0 0.0
        %5604 = vmatpush2.msra.mxu0 0.0
        %5605 = vmatprep.subr.mxu0 0.0
        %5606 = vmatpush2.msra.mxu0 0.0
        %5607 = vmatprep.subr.mxu0 0.0
        %5608 = vmatpush2.msra.mxu0 0.0
        %5609 = vmatprep.subr.mxu0 0.0
        %5610 = vmatpush2.msra.mxu0 0.0
        %5611 = vmatprep.subr.mxu0 0.0
        %5612 = vmatpush2.msra.mxu0 0.0
        %5613 = vmatprep.subr.mxu0 0.0
        %5614 = vmatpush2.msra.mxu0 0.0
        %5615 = vmatprep.subr.mxu0 0.0
        %5616 = vmatpush2.msra.mxu0 0.0
        %5617 = vmatprep.subr.mxu0 0.0
        %5618 = vmatpush2.msra.mxu0 0.0
        %5619 = vmatprep.subr.mxu0 0.0
        %5620 = vmatpush2.msra.mxu0 0.0
        %5621 = vmatprep.subr.mxu0 0.0
        %5622 = vmatpush2.msra.mxu0 0.0
        %5623 = vmatprep.subr.mxu0 0.0
        %5624 = vmatpush2.msra.mxu0 0.0
        %5625 = vmatprep.subr.mxu0 0.0
        %5626 = vmatpush2.msra.mxu0 0.0
        %5627 = vmatprep.mubr.f32.mxu0 0.0
        %5628 = vmatmul.mubr.f32.gmra.mxu0 %v384
        %v5629 = vpop.f32.mrf.mxu0
        %v5630 = vadd.f32 %v5561, %v5629
        %v5631 = vpop.f32.mrf.mxu0
        %5632 = vdwg.mxu0
        %v5633 = vlaneseq
        %v5634 = vshrl.u32 %v5633, 7
        %v5635 = vsub.s32 1, %v5634
        %v5636 = vrot.slane %v5473, %v5635
        %v5637 = vadd.f32 %v5630, %v5636
        %v5638 = vtanh.pop %v5637
        %v5639 = vmul.f32 %v978, %v5638
        %v5640 = vadd.f32 %v5558, %v5639
        %5641 = vset.pattern.permute.xlu0 2
        %5642 = vperm.xlu0 %5641, %v488
        %v5643 = vpop.permute.xlu0 %5642
        %5645 = vmatprep.subr.mxu0 0.0
        %5646 = vmatpush1.msra.mxu0 0.0
        %5647 = vmatprep.subr.mxu0 0.0
        %5648 = vmatpush1.msra.mxu0 0.0
        %5649 = vmatprep.subr.mxu0 0.0
        %5650 = vmatpush1.msra.mxu0 0.0
        %5651 = vmatprep.subr.mxu0 0.0
        %5652 = vmatpush1.msra.mxu0 0.0
        %5653 = vmatprep.subr.mxu0 0.0
        %5654 = vmatpush1.msra.mxu0 0.0
        %5655 = vmatprep.subr.mxu0 0.0
        %5656 = vmatpush1.msra.mxu0 0.0
        %5657 = vmatprep.subr.mxu0 0.0
        %5658 = vmatpush1.msra.mxu0 0.0
        %5659 = vmatprep.subr.mxu0 0.0
        %5660 = vmatpush1.msra.mxu0 0.0
        %5661 = vmatprep.subr.mxu0 0.0
        %5662 = vmatpush1.msra.mxu0 0.0
        %5663 = vmatprep.subr.mxu0 0.0
        %5664 = vmatpush1.msra.mxu0 0.0
        %5665 = vmatprep.subr.mxu0 0.0
        %5666 = vmatpush1.msra.mxu0 0.0
        %5667 = vmatprep.subr.mxu0 0.0
        %5668 = vmatpush1.msra.mxu0 0.0
        %5669 = vmatprep.subr.mxu0 0.0
        %5670 = vmatpush1.msra.mxu0 %v5383
        %5671 = vmatprep.subr.mxu0 0.0
        %5672 = vmatpush1.msra.mxu0 %v5378
        %5673 = vmatprep.subr.mxu0 0.0
        %5674 = vmatpush1.msra.mxu0 %v5373
        %5675 = vmatprep.subr.mxu0 0.0
        %5676 = vmatpush1.msra.mxu0 %v5368
        %5677 = vmatprep.subr.mxu0 0.0
        %5678 = vmatpush2.msra.mxu0 0.0
        %5679 = vmatprep.subr.mxu0 0.0
        %5680 = vmatpush2.msra.mxu0 0.0
        %5681 = vmatprep.subr.mxu0 0.0
        %5682 = vmatpush2.msra.mxu0 0.0
        %5683 = vmatprep.subr.mxu0 0.0
        %5684 = vmatpush2.msra.mxu0 0.0
        %5685 = vmatprep.subr.mxu0 0.0
        %5686 = vmatpush2.msra.mxu0 0.0
        %5687 = vmatprep.subr.mxu0 0.0
        %5688 = vmatpush2.msra.mxu0 0.0
        %5689 = vmatprep.subr.mxu0 0.0
        %5690 = vmatpush2.msra.mxu0 0.0
        %5691 = vmatprep.subr.mxu0 0.0
        %5692 = vmatpush2.msra.mxu0 0.0
        %5693 = vmatprep.subr.mxu0 0.0
        %5694 = vmatpush2.msra.mxu0 0.0
        %5695 = vmatprep.subr.mxu0 0.0
        %5696 = vmatpush2.msra.mxu0 0.0
        %5697 = vmatprep.subr.mxu0 0.0
        %5698 = vmatpush2.msra.mxu0 0.0
        %5699 = vmatprep.subr.mxu0 0.0
        %5700 = vmatpush2.msra.mxu0 0.0
        %5701 = vmatprep.subr.mxu0 0.0
        %5702 = vmatpush2.msra.mxu0 0.0
        %5703 = vmatprep.subr.mxu0 0.0
        %5704 = vmatpush2.msra.mxu0 0.0
        %5705 = vmatprep.subr.mxu0 0.0
        %5706 = vmatpush2.msra.mxu0 0.0
        %5707 = vmatprep.subr.mxu0 0.0
        %5708 = vmatpush2.msra.mxu0 0.0
        %5709 = vmatprep.mubr.f32.mxu0 0.0
        %5710 = vmatmul.mubr.f32.gmra.mxu0 %v384
        %v5711 = vpop.f32.mrf.mxu0
        %v5712 = vadd.f32 %v5643, %v5711
        %v5713 = vpop.f32.mrf.mxu0
        %5714 = vdwg.mxu0
        %v5715 = vlaneseq
        %v5716 = vshrl.u32 %v5715, 7
        %v5717 = vsub.s32 2, %v5716
        %v5718 = vrot.slane %v5473, %v5717
        %v5719 = vadd.f32 %v5712, %v5718
        %v5720 = vtanh.pop %v5719
        %v5721 = vmul.f32 %v1062, %v5720
        %v5722 = vadd.f32 %v5640, %v5721
        %5723 = vset.pattern.permute.xlu0 3
        %5724 = vperm.xlu0 %5723, %v488
        %v5725 = vpop.permute.xlu0 %5724
        %5727 = vmatprep.subr.mxu0 0.0
        %5728 = vmatpush1.msra.mxu0 0.0
        %5729 = vmatprep.subr.mxu0 0.0
        %5730 = vmatpush1.msra.mxu0 0.0
        %5731 = vmatprep.subr.mxu0 0.0
        %5732 = vmatpush1.msra.mxu0 0.0
        %5733 = vmatprep.subr.mxu0 0.0
        %5734 = vmatpush1.msra.mxu0 0.0
        %5735 = vmatprep.subr.mxu0 0.0
        %5736 = vmatpush1.msra.mxu0 0.0
        %5737 = vmatprep.subr.mxu0 0.0
        %5738 = vmatpush1.msra.mxu0 0.0
        %5739 = vmatprep.subr.mxu0 0.0
        %5740 = vmatpush1.msra.mxu0 0.0
        %5741 = vmatprep.subr.mxu0 0.0
        %5742 = vmatpush1.msra.mxu0 0.0
        %5743 = vmatprep.subr.mxu0 0.0
        %5744 = vmatpush1.msra.mxu0 0.0
        %5745 = vmatprep.subr.mxu0 0.0
        %5746 = vmatpush1.msra.mxu0 0.0
        %5747 = vmatprep.subr.mxu0 0.0
        %5748 = vmatpush1.msra.mxu0 0.0
        %5749 = vmatprep.subr.mxu0 0.0
        %5750 = vmatpush1.msra.mxu0 0.0
        %5751 = vmatprep.subr.mxu0 0.0
        %5752 = vmatpush1.msra.mxu0 %v5403
        %5753 = vmatprep.subr.mxu0 0.0
        %5754 = vmatpush1.msra.mxu0 %v5398
        %5755 = vmatprep.subr.mxu0 0.0
        %5756 = vmatpush1.msra.mxu0 %v5393
        %5757 = vmatprep.subr.mxu0 0.0
        %5758 = vmatpush1.msra.mxu0 %v5388
        %5759 = vmatprep.subr.mxu0 0.0
        %5760 = vmatpush2.msra.mxu0 0.0
        %5761 = vmatprep.subr.mxu0 0.0
        %5762 = vmatpush2.msra.mxu0 0.0
        %5763 = vmatprep.subr.mxu0 0.0
        %5764 = vmatpush2.msra.mxu0 0.0
        %5765 = vmatprep.subr.mxu0 0.0
        %5766 = vmatpush2.msra.mxu0 0.0
        %5767 = vmatprep.subr.mxu0 0.0
        %5768 = vmatpush2.msra.mxu0 0.0
        %5769 = vmatprep.subr.mxu0 0.0
        %5770 = vmatpush2.msra.mxu0 0.0
        %5771 = vmatprep.subr.mxu0 0.0
        %5772 = vmatpush2.msra.mxu0 0.0
        %5773 = vmatprep.subr.mxu0 0.0
        %5774 = vmatpush2.msra.mxu0 0.0
        %5775 = vmatprep.subr.mxu0 0.0
        %5776 = vmatpush2.msra.mxu0 0.0
        %5777 = vmatprep.subr.mxu0 0.0
        %5778 = vmatpush2.msra.mxu0 0.0
        %5779 = vmatprep.subr.mxu0 0.0
        %5780 = vmatpush2.msra.mxu0 0.0
        %5781 = vmatprep.subr.mxu0 0.0
        %5782 = vmatpush2.msra.mxu0 0.0
        %5783 = vmatprep.subr.mxu0 0.0
        %5784 = vmatpush2.msra.mxu0 0.0
        %5785 = vmatprep.subr.mxu0 0.0
        %5786 = vmatpush2.msra.mxu0 0.0
        %5787 = vmatprep.subr.mxu0 0.0
        %5788 = vmatpush2.msra.mxu0 0.0
        %5789 = vmatprep.subr.mxu0 0.0
        %5790 = vmatpush2.msra.mxu0 0.0
        %5791 = vmatprep.mubr.f32.mxu0 0.0
        %5792 = vmatmul.mubr.f32.gmra.mxu0 %v384
        %v5793 = vpop.f32.mrf.mxu0
        %v5794 = vadd.f32 %v5725, %v5793
        %v5795 = vpop.f32.mrf.mxu0
        %5796 = vdwg.mxu0
        %v5797 = vlaneseq
        %v5798 = vshrl.u32 %v5797, 7
        %v5799 = vsub.s32 3, %v5798
        %v5800 = vrot.slane %v5473, %v5799
        %v5801 = vadd.f32 %v5794, %v5800
        %v5802 = vtanh.pop %v5801
        %v5803 = vmul.f32 %v1146, %v5802
        %v5804 = vadd.f32 %v5722, %v5803
        %v5805 = vsel %vm1149, %v5804, -inf
        %5806 = vmax.xlane.f32.xlu0 %v5805
        %v5807 = vpop.xlane.xlu0 %5806
        %v5808 = vrot.slane %v5807, 4
        %v5809 = vmax.f32 %v5807, %v5808
        %v5810 = vrot.slane %v5809, 2
        %v5811 = vmax.f32 %v5809, %v5810
        %v5812 = vrot.slane %v5811, 1
        %v5813 = vmax.f32 %v5811, %v5812
        %s5814 = vtos %v5813
        %v5815 = vstv %s5814
        %v5816 = vsub.f32 %v5804, %v5815
        %v5817 = vmul.f32 %v5816, 1.442695
        %v5818 = vpow.pop %v5817
        %v5819 = vsel %vm1149, %v5818, 0.0
        %5820 = vadd.xlane.f32.xlu0 %v5819
        %v5821 = vpop.xlane.xlu0 %5820
        %v5822 = vrcp.pop %v5821
        %v5823 = vmul.f32 %v5818, %v5822
        %v5824 = vsel %vm1149, %v5823, 0.0
        %v5825 = vrot.slane %v5824, 4
        %v5826 = vadd.f32 %v5824, %v5825
        %v5827 = vrot.slane %v5826, 2
        %v5828 = vadd.f32 %v5826, %v5827
        %v5829 = vrot.slane %v5828, 1
        %v5830 = vadd.f32 %v5828, %v5829
        %v5831 = vrot.slane %v5819, 4
        %v5832 = vadd.f32 %v5819, %v5831
        %v5833 = vrot.slane %v5832, 2
        %v5834 = vadd.f32 %v5832, %v5833
        %v5835 = vrot.slane %v5834, 1
        %v5836 = vadd.f32 %v5834, %v5835
        %v5837 = vrcp.pop %v5836
        %v5838 = vmul.f32 %v5818, %v5837
        %v5839 = vsel %vm1149, %v5838, 0.0
        %5840 = vadd.xlane.f32.xlu0 %v5839
        %v5841 = vpop.xlane.xlu0 %5840
        %v5843 = vsel %vm1149, %v5830, 0
        %5845 = vmatprep.subr.mxu0 0.0
        %5846 = vmatpush1.msra.mxu0 0.0
        %5847 = vmatprep.subr.mxu0 0.0
        %5848 = vmatpush1.msra.mxu0 0.0
        %5849 = vmatprep.subr.mxu0 0.0
        %5850 = vmatpush1.msra.mxu0 0.0
        %5851 = vmatprep.subr.mxu0 0.0
        %5852 = vmatpush1.msra.mxu0 0.0
        %5853 = vmatprep.subr.mxu0 0.0
        %5854 = vmatpush1.msra.mxu0 0.0
        %5855 = vmatprep.subr.mxu0 0.0
        %5856 = vmatpush1.msra.mxu0 0.0
        %5857 = vmatprep.subr.mxu0 0.0
        %5858 = vmatpush1.msra.mxu0 0.0
        %5859 = vmatprep.subr.mxu0 0.0
        %5860 = vmatpush1.msra.mxu0 0.0
        %5861 = vmatprep.subr.mxu0 0.0
        %5862 = vmatpush1.msra.mxu0 0.0
        %5863 = vmatprep.subr.mxu0 0.0
        %5864 = vmatpush1.msra.mxu0 0.0
        %5865 = vmatprep.subr.mxu0 0.0
        %5866 = vmatpush1.msra.mxu0 0.0
        %5867 = vmatprep.subr.mxu0 0.0
        %5868 = vmatpush1.msra.mxu0 0.0
        %5869 = vmatprep.subr.mxu0 0.0
        %5870 = vmatpush1.msra.mxu0 0.0
        %5871 = vmatprep.subr.mxu0 0.0
        %5872 = vmatpush1.msra.mxu0 0.0
        %5873 = vmatprep.subr.mxu0 0.0
        %5874 = vmatpush1.msra.mxu0 0.0
        %5875 = vmatprep.subr.mxu0 0.0
        %5876 = vmatpush1.msra.mxu0 %v349
        %5877 = vmatprep.subr.mxu0 0.0
        %5878 = vmatpush2.msra.mxu0 0.0
        %5879 = vmatprep.subr.mxu0 0.0
        %5880 = vmatpush2.msra.mxu0 0.0
        %5881 = vmatprep.subr.mxu0 0.0
        %5882 = vmatpush2.msra.mxu0 0.0
        %5883 = vmatprep.subr.mxu0 0.0
        %5884 = vmatpush2.msra.mxu0 0.0
        %5885 = vmatprep.subr.mxu0 0.0
        %5886 = vmatpush2.msra.mxu0 0.0
        %5887 = vmatprep.subr.mxu0 0.0
        %5888 = vmatpush2.msra.mxu0 0.0
        %5889 = vmatprep.subr.mxu0 0.0
        %5890 = vmatpush2.msra.mxu0 0.0
        %5891 = vmatprep.subr.mxu0 0.0
        %5892 = vmatpush2.msra.mxu0 0.0
        %5893 = vmatprep.subr.mxu0 0.0
        %5894 = vmatpush2.msra.mxu0 0.0
        %5895 = vmatprep.subr.mxu0 0.0
        %5896 = vmatpush2.msra.mxu0 0.0
        %5897 = vmatprep.subr.mxu0 0.0
        %5898 = vmatpush2.msra.mxu0 0.0
        %5899 = vmatprep.subr.mxu0 0.0
        %5900 = vmatpush2.msra.mxu0 0.0
        %5901 = vmatprep.subr.mxu0 0.0
        %5902 = vmatpush2.msra.mxu0 0.0
        %5903 = vmatprep.subr.mxu0 0.0
        %5904 = vmatpush2.msra.mxu0 0.0
        %5905 = vmatprep.subr.mxu0 0.0
        %5906 = vmatpush2.msra.mxu0 0.0
        %5907 = vmatprep.subr.mxu0 0.0
        %5908 = vmatpush2.msra.mxu0 0.0
        %5909 = vmatprep.mubr.f32.mxu0 0.0
        %5910 = vmatmul.mubr.f32.gmra.mxu0 %v5843
        %v5911 = vpop.f32.mrf.mxu0
        %v5912 = vadd.f32 0.0, %v5911
        %v5913 = vpop.f32.mrf.mxu0
        %5914 = vdwg.mxu0
        %v5915 = vmul.f32 %v5841, %v341
        %v5916 = vsel %vm361, %v5915, 0.0
        %v5917 = vrot.slane %v5916, 4
        %v5918 = vadd.f32 %v5916, %v5917
        %v5919 = vrot.slane %v5918, 2
        %v5920 = vadd.f32 %v5918, %v5919
        %v5921 = vrot.slane %v5920, 1
        %v5922 = vadd.f32 %v5920, %v5921
        %v5923 = vsel %vm361, %v334, 0.0
        %v5924 = vrot.slane %v5923, 4
        %v5925 = vadd.f32 %v5923, %v5924
        %v5926 = vrot.slane %v5925, 2
        %v5927 = vadd.f32 %v5925, %v5926
        %v5928 = vrot.slane %v5927, 1
        %v5929 = vadd.f32 %v5927, %v5928
        %v5930 = vsel %vm361, %v335, 0.0
        %v5931 = vrot.slane %v5930, 4
        %v5932 = vadd.f32 %v5930, %v5931
        %v5933 = vrot.slane %v5932, 2
        %v5934 = vadd.f32 %v5932, %v5933
        %v5935 = vrot.slane %v5934, 1
        %v5936 = vadd.f32 %v5934, %v5935
        %v5937 = vsel %vm361, %v336, 0.0
        %v5938 = vrot.slane %v5937, 4
        %v5939 = vadd.f32 %v5937, %v5938
        %v5940 = vrot.slane %v5939, 2
        %v5941 = vadd.f32 %v5939, %v5940
        %v5942 = vrot.slane %v5941, 1
        %v5943 = vadd.f32 %v5941, %v5942
        %v5944 = vsel %vm361, %v337, 0.0
        %v5945 = vrot.slane %v5944, 4
        %v5946 = vadd.f32 %v5944, %v5945
        %v5947 = vrot.slane %v5946, 2
        %v5948 = vadd.f32 %v5946, %v5947
        %v5949 = vrot.slane %v5948, 1
        %v5950 = vadd.f32 %v5948, %v5949
        %v5951 = vsel %vm361, %v338, 0.0
        %v5952 = vrot.slane %v5951, 4
        %v5953 = vadd.f32 %v5951, %v5952
        %v5954 = vrot.slane %v5953, 2
        %v5955 = vadd.f32 %v5953, %v5954
        %v5956 = vrot.slane %v5955, 1
        %v5957 = vadd.f32 %v5955, %v5956
        %v5958 = vsel %vm361, %v339, 0.0
        %v5959 = vrot.slane %v5958, 4
        %v5960 = vadd.f32 %v5958, %v5959
        %v5961 = vrot.slane %v5960, 2
        %v5962 = vadd.f32 %v5960, %v5961
        %v5963 = vrot.slane %v5962, 1
        %v5964 = vadd.f32 %v5962, %v5963
        %v5965 = vsel %vm361, %v340, 0.0
        %v5966 = vrot.slane %v5965, 4
        %v5967 = vadd.f32 %v5965, %v5966
        %v5968 = vrot.slane %v5967, 2
        %v5969 = vadd.f32 %v5967, %v5968
        %v5970 = vrot.slane %v5969, 1
        %v5971 = vadd.f32 %v5969, %v5970
        %v5972 = vsel %vm361, %v341, 0.0
        %v5973 = vrot.slane %v5972, 4
        %v5974 = vadd.f32 %v5972, %v5973
        %v5975 = vrot.slane %v5974, 2
        %v5976 = vadd.f32 %v5974, %v5975
        %v5977 = vrot.slane %v5976, 1
        %v5978 = vadd.f32 %v5976, %v5977
        %v5979 = vmul.f32 %v5929, 0.125
        %v5980 = vmul.f32 %v5936, 0.125
        %v5981 = vmul.f32 %v5943, 0.125
        %v5982 = vmul.f32 %v5950, 0.125
        %v5983 = vmul.f32 %v5957, 0.125
        %v5984 = vmul.f32 %v5964, 0.125
        %v5985 = vmul.f32 %v5971, 0.125
        %v5986 = vmul.f32 %v5978, 0.125
        %v5987 = vsel %vm361, %v342, 0.0
        %v5988 = vrot.slane %v5987, 4
        %v5989 = vadd.f32 %v5987, %v5988
        %v5990 = vrot.slane %v5989, 2
        %v5991 = vadd.f32 %v5989, %v5990
        %v5992 = vrot.slane %v5991, 1
        %v5993 = vadd.f32 %v5991, %v5992
        %v5994 = vsel %vm361, %v343, 0.0
        %v5995 = vrot.slane %v5994, 4
        %v5996 = vadd.f32 %v5994, %v5995
        %v5997 = vrot.slane %v5996, 2
        %v5998 = vadd.f32 %v5996, %v5997
        %v5999 = vrot.slane %v5998, 1
        %v6000 = vadd.f32 %v5998, %v5999
        %v6001 = vsel %vm361, %v344, 0.0
        %v6002 = vrot.slane %v6001, 4
        %v6003 = vadd.f32 %v6001, %v6002
        %v6004 = vrot.slane %v6003, 2
        %v6005 = vadd.f32 %v6003, %v6004
        %v6006 = vrot.slane %v6005, 1
        %v6007 = vadd.f32 %v6005, %v6006
        %v6008 = vsel %vm361, %v345, 0.0
        %v6009 = vrot.slane %v6008, 4
        %v6010 = vadd.f32 %v6008, %v6009
        %v6011 = vrot.slane %v6010, 2
        %v6012 = vadd.f32 %v6010, %v6011
        %v6013 = vrot.slane %v6012, 1
        %v6014 = vadd.f32 %v6012, %v6013
        %v6015 = vsel %vm361, %v346, 0.0
        %v6016 = vrot.slane %v6015, 4
        %v6017 = vadd.f32 %v6015, %v6016
        %v6018 = vrot.slane %v6017, 2
        %v6019 = vadd.f32 %v6017, %v6018
        %v6020 = vrot.slane %v6019, 1
        %v6021 = vadd.f32 %v6019, %v6020
        %v6022 = vsel %vm361, %v347, 0.0
        %v6023 = vrot.slane %v6022, 4
        %v6024 = vadd.f32 %v6022, %v6023
        %v6025 = vrot.slane %v6024, 2
        %v6026 = vadd.f32 %v6024, %v6025
        %v6027 = vrot.slane %v6026, 1
        %v6028 = vadd.f32 %v6026, %v6027
        %v6029 = vsel %vm361, %v348, 0.0
        %v6030 = vrot.slane %v6029, 4
        %v6031 = vadd.f32 %v6029, %v6030
        %v6032 = vrot.slane %v6031, 2
        %v6033 = vadd.f32 %v6031, %v6032
        %v6034 = vrot.slane %v6033, 1
        %v6035 = vadd.f32 %v6033, %v6034
        %v6036 = vsel %vm361, %v349, 0.0
        %v6037 = vrot.slane %v6036, 4
        %v6038 = vadd.f32 %v6036, %v6037
        %v6039 = vrot.slane %v6038, 2
        %v6040 = vadd.f32 %v6038, %v6039
        %v6041 = vrot.slane %v6040, 1
        %v6042 = vadd.f32 %v6040, %v6041
        %v6043 = vmul.f32 %v5993, 0.125
        %v6044 = vmul.f32 %v6000, 0.125
        %v6045 = vmul.f32 %v6007, 0.125
        %v6046 = vmul.f32 %v6014, 0.125
        %v6047 = vmul.f32 %v6021, 0.125
        %v6048 = vmul.f32 %v6028, 0.125
        %v6049 = vmul.f32 %v6035, 0.125
        %v6050 = vmul.f32 %v6042, 0.125
        %v6052 = vrot.slane %v1922, 7
        %v6055 = vrot.slane %v2587, 6
        %v6058 = vrot.slane %v3252, 5
        %v6061 = vrot.slane %v3917, 4
        %v6064 = vrot.slane %v4582, 3
        %v6067 = vrot.slane %v5247, 2
        %v6070 = vrot.slane %v5912, 1
        %vm6072 = vcmask 1040384
        %v6073 = vsel %vm6072, %v1257, %v6052
        %vm6074 = vcmask 1041408
        %v6075 = vsel %vm6074, %v6073, %v6055
        %vm6076 = vcmask 1042432
        %v6077 = vsel %vm6076, %v6075, %v6058
        %vm6078 = vcmask 1043456
        %v6079 = vsel %vm6078, %v6077, %v6061
        %vm6080 = vcmask 1044480
        %v6081 = vsel %vm6080, %v6079, %v6064
        %vm6082 = vcmask 1045504
        %v6083 = vsel %vm6082, %v6081, %v6067
        %vm6084 = vcmask 1046528
        %v6085 = vsel %vm6084, %v6083, %v6070
        %v6086 = vmul.f32 %v6085, 0.125
        %v6087 = vsel %vm6072, %v1267, %v1932
        %v6088 = vsel %vm6074, %v6087, %v2597
        %v6089 = vsel %vm6076, %v6088, %v3262
        %v6090 = vsel %vm6078, %v6089, %v3927
        %v6091 = vsel %vm6080, %v6090, %v4592
        %v6092 = vsel %vm6082, %v6091, %v5257
        %v6093 = vsel %vm6084, %v6092, %v5922
        %v6094 = vmul.f32 %v6093, 0.125
        %vm6103 = vcmask 1041409
        %v6104 = vsel %vm6103, %v5980, %v5979
        %vm6105 = vcmask 1042434
        %v6106 = vsel %vm6105, %v5981, %v6104
        %vm6107 = vcmask 1043459
        %v6108 = vsel %vm6107, %v5982, %v6106
        %vm6109 = vcmask 1044484
        %v6110 = vsel %vm6109, %v5983, %v6108
        %vm6111 = vcmask 1045509
        %v6112 = vsel %vm6111, %v5984, %v6110
        %vm6113 = vcmask 1046534
        %v6114 = vsel %vm6113, %v5985, %v6112
        %vm6115 = vcmask 1047559
        %v6116 = vsel %vm6115, %v5986, %v6114
        %6119 = vrot.lane.b32.xlu0 %v6086, 32
        %v6120 = vpop.permute.xlu0 %6119
        %v6130 = vsel %vm6103, %v6044, %v6043
        %v6131 = vsel %vm6105, %v6045, %v6130
        %v6132 = vsel %vm6107, %v6046, %v6131
        %v6133 = vsel %vm6109, %v6047, %v6132
        %v6134 = vsel %vm6111, %v6048, %v6133
        %v6135 = vsel %vm6113, %v6049, %v6134
        %v6136 = vsel %vm6115, %v6050, %v6135
        %6137 = vrot.lane.b32.xlu0 %v6136, 64
        %v6138 = vpop.permute.xlu0 %6137
        %6141 = vrot.lane.b32.xlu0 %v6094, 96
        %v6142 = vpop.permute.xlu0 %6141
        %v6144 = vsel %vm361, %v6116, %v6120
        %vm6145 = vcmask 523264
        %v6146 = vsel %vm6145, %v6144, %v6138
        %vm6147 = vcmask 785408
        %v6148 = vsel %vm6147, %v6146, %v6142
        %6149 = vst [vmem:[%s326] sm:$0xff] %v6148
        %s6150 = sand.u32 %s190, 1
        %s6151 = scalar_lea.sflag [#allocation4], %s6150
        %s6152 = sand.u32 %s190, 1
        %s6153 = smul.addr %s6152, 8
        %s6154 = scalar_lea.vmem [#allocation7], %s6153
        // Predicated region
        $region57: #{tpu_custom_call.1} parent=47 // pred_check
          %p6155 = pneg %p200
        $region58: #{tpu_custom_call.1} parent=47 // pred_check_branch
          %6157 = sbr.rel (%p6155) target = $region60
        $region59: #{tpu_custom_call.1} parent=47 // pred_region
          %s6159 = ssub.s32 128, 128
          %6160 = vsyncadd %s6151, %s6159
          %s6161 = smul.addr %s25, 128
          %s6162 = scalar_lea.hbm %s7, %s6161
          %s6164 = sshll.u32 %s6154, 4
          %s6165 = int_to_ptr.vmem [resolvable:$true] %s6164
          %6167 = dma.vmem_to_hbm [thread:$0]  %s6165, 128, %s6162, %s6151
        $region60: #{tpu_custom_call.1} parent=47 // pred_fallthru
          _
      $region48: #{tpu_custom_call.1} parent=5 // pred_fallthru
        _
      %p6168 = scmp.le.s32.totalorder 2, %s20
      // Predicated region
      $region61: #{tpu_custom_call.1} parent=5 // pred_check
        %p6169 = pneg %p6168
      $region62: #{tpu_custom_call.1} parent=5 // pred_check_branch
        %6171 = sbr.rel (%p6169) target = $region64
      $region63: #{tpu_custom_call.1} parent=5 // pred_region
        %s6172 = ssub.s32 %s20, 2
        // Predicated region
        $region65: #{tpu_custom_call.1} parent=63 // pred_check
          %p6173 = pneg %p206
        $region66: #{tpu_custom_call.1} parent=63 // pred_check_branch
          %6175 = sbr.rel (%p6173) target = $region68
        $region67: #{tpu_custom_call.1} parent=63 // pred_region
          %s6176 = sand.u32 %s191, 1
          %s6177 = scalar_lea.sflag [#allocation4], %s6176
          %s6178 = sand.u32 %s191, 1
          %s6179 = smul.addr %s6178, 8
          %s6180 = scalar_lea.vmem [#allocation7], %s6179
          %6181 = dma.done %s6177, 128
        $region68: #{tpu_custom_call.1} parent=63 // pred_fallthru
          _
      $region64: #{tpu_custom_call.1} parent=5 // pred_fallthru
        _
    $region6: #{tpu_custom_call.1} parent=1 // loop_footer
      %s24 = sadd.s32 1, %s20
    $region7: #{tpu_custom_call.1} parent=1 // loop_footer_branch
      %19 = sbr.rel target = $region3
    $region8: #{tpu_custom_call.1} parent=1 // loop_exit
      _
    %6182 = vsyncpa [#allocation3], 1
    %s6183 = scalar_lea.sflag [#allocation3], 1
    %6184 = vsyncpa %s6183, 1
    %6185 = vsyncpa [#allocation4], 1
    %s6186 = scalar_lea.sflag [#allocation4], 1
    %6187 = vsyncpa %s6186, 1
    %6188 = vsyncpa [#allocation5], 1
    %s6189 = scalar_lea.sflag [#allocation5], 1
    %6190 = vsyncpa %s6189, 1

</llo_original>
